<compile_context>
chip_gen: v6e
topology: v6e:2x2x1
jax: 0.10.0
libtpu: 0.0.40
codegen_flags: <defaults>
</compile_context>

<pallas_src>
import functools

import numpy as np
import jax
import jax.numpy as jnp
from jax import lax
from jax.experimental import pallas as pl
from jax.experimental.pallas import tpu as pltpu


def _tap_masks(block_n, H, W):
    """(block_n*H*W, 9) float32 validity masks; column t = ky*3 + kx."""
    yy, xx = np.meshgrid(np.arange(H), np.arange(W), indexing="ij")
    cols = []
    for ky in range(3):
        for kx in range(3):
            oy, ox = ky - 1, kx - 1
            valid = ((yy + oy >= 0) & (yy + oy < H) &
                     (xx + ox >= 0) & (xx + ox < W))
            cols.append(valid.reshape(-1))
    m = np.stack(cols, axis=-1).astype(np.float32)          # (H*W, 9)
    return np.tile(m, (block_n, 1))                         # (block_n*H*W, 9)


def basic_block_kernel(x_ref, w1_ref, w2_ref, sb_ref, mask_ref, out_ref,
                       xpad_ref, mid_ref, *, H, W, pad):
    NB, _, _, C = x_ref.shape
    M = NB * H * W

    # One-time zero of the persistent scratches: the halo rows stay 0 forever
    # (they are only ever read at masked tap positions); the [pad, pad+M)
    # interior is fully overwritten every grid step.
    @pl.when(pl.program_id(0) == 0)
    def _():
        xpad_ref[...] = jnp.zeros(xpad_ref.shape, xpad_ref.dtype)
        mid_ref[...] = jnp.zeros(mid_ref.shape, mid_ref.dtype)

    # Flat (M, C) view of this step's activations, written into the scratch
    # interior (single activation HBM stream; padding is built in-kernel).
    xpad_ref[pad:pad + M, :] = x_ref[...].reshape(M, C)

    def conv3x3(src_ref, w_ref):
        # 3x3 "SAME" conv as 9 shifted (M, C) @ (C, C) MXU matmuls.
        acc = jnp.zeros((M, C), jnp.float32)
        for ky in range(3):
            for kx in range(3):
                t = ky * 3 + kx
                off = (ky - 1) * W + (kx - 1)
                win = src_ref[pad + off:pad + off + M, :]    # contiguous slice
                win = (win * mask_ref[:, t:t + 1]).astype(jnp.bfloat16)
                acc = acc + jnp.dot(win, w_ref[ky, kx],
                                    preferred_element_type=jnp.float32)
        return acc

    # conv1 -> bn1 -> relu
    out1 = conv3x3(xpad_ref, w1_ref) * sb_ref[0:1, :] + sb_ref[1:2, :]
    out1 = jnp.maximum(out1, 0.0)
    mid_ref[pad:pad + M, :] = out1

    # conv2 -> bn2 -> +identity -> relu
    acc2 = conv3x3(mid_ref, w2_ref)
    identity = xpad_ref[pad:pad + M, :]
    out2 = jnp.maximum(acc2 * sb_ref[2:3, :] + sb_ref[3:4, :] + identity, 0.0)
    out_ref[...] = out2.reshape(NB, H, W, C).astype(out_ref.dtype)


@functools.partial(jax.jit, static_argnames=("block_n",))
def basic_block_forward(x_nhwc, w1, w2, scale1, bias1, scale2, bias2,
                        block_n=None):
    """x_nhwc: (N,H,W,C) f32.  w*: (3,3,C,C) HWIO.  scale/bias: (C,) folded BN."""
    N, H, W, C = x_nhwc.shape
    assert w1.shape == (3, 3, C, C) and w2.shape == (3, 3, C, C), (
        "stride=1 BasicBlock with inplanes == planes (no downsample) expected")

    # Images per grid step: fold batch into the matmul M dim (target M<=256).
    # TODO(synk): for large H*W (e.g. 56x56 ResNet stages) additionally tile
    # the spatial dim into row bands with a 1-row halo instead of one flat slab.
    if block_n is None:
        block_n = 1
        for d in range(1, N + 1):
            if N % d == 0 and d * H * W <= 256:
                block_n = d
    assert N % block_n == 0
    grid_n = N // block_n
    M = block_n * H * W
    pad = -(-(W + 1) // 8) * 8          # halo rows, rounded to a sublane multiple

    w1b = w1.astype(jnp.bfloat16)       # bf16 MXU operands, f32 accumulation
    w2b = w2.astype(jnp.bfloat16)
    sb = jnp.stack([scale1, bias1, scale2, bias2]).astype(jnp.float32)  # (4, C)
    tap_mask = jnp.asarray(_tap_masks(block_n, H, W))                   # (M, 9)

    kernel = functools.partial(basic_block_kernel, H=H, W=W, pad=pad)
    return pl.pallas_call(
        kernel,
        out_shape=jax.ShapeDtypeStruct((N, H, W, C), x_nhwc.dtype),
        grid_spec=pltpu.PrefetchScalarGridSpec(
            num_scalar_prefetch=0,
            grid=(grid_n,),
            in_specs=[
                pl.BlockSpec((block_n, H, W, C), lambda n: (n, 0, 0, 0)),
                pl.BlockSpec((3, 3, C, C), lambda n: (0, 0, 0, 0)),
                pl.BlockSpec((3, 3, C, C), lambda n: (0, 0, 0, 0)),
                pl.BlockSpec((4, C), lambda n: (0, 0)),
                pl.BlockSpec((M, 9), lambda n: (0, 0)),
            ],
            out_specs=pl.BlockSpec((block_n, H, W, C), lambda n: (n, 0, 0, 0)),
            scratch_shapes=[
                pltpu.VMEM((M + 2 * pad, C), jnp.float32),  # padded x (flat)
                pltpu.VMEM((M + 2 * pad, C), jnp.float32),  # padded conv1 output
            ],
        ),
        compiler_params=pltpu.CompilerParams(
            dimension_semantics=("parallel",),
            vmem_limit_bytes=32 * 1024 * 1024,
        ),
    )(x_nhwc, w1b, w2b, sb, tap_mask)


def reference_forward(x, w1, w2, scale1, bias1, scale2, bias2):
    """Pure-JAX reference with matching bf16-operand / f32-accumulate math."""
    dn = ("NHWC", "HWIO", "NHWC")
    xq = x.astype(jnp.bfloat16).astype(jnp.float32)
    w1q = w1.astype(jnp.bfloat16).astype(jnp.float32)
    w2q = w2.astype(jnp.bfloat16).astype(jnp.float32)
    y = lax.conv_general_dilated(xq, w1q, (1, 1), "SAME", dimension_numbers=dn,
                                 precision=lax.Precision.HIGHEST)
    y = jnp.maximum(y * scale1 + bias1, 0.0)
    yq = y.astype(jnp.bfloat16).astype(jnp.float32)
    y = lax.conv_general_dilated(yq, w2q, (1, 1), "SAME", dimension_numbers=dn,
                                 precision=lax.Precision.HIGHEST)
    y = y * scale2 + bias2 + x
    return jnp.maximum(y, 0.0)


if __name__ == "__main__":
    # BasicBlock(inplanes=8, planes=8, stride=1, downsample=None), NHWC input.
    N, H, W, C = 8, 8, 8, 8

    key = jax.random.PRNGKey(0)
    kx, kw1, kw2, kg1, kb1, km1, kv1, kg2, kb2, km2, kv2 = jax.random.split(key, 11)

    x = jax.random.normal(kx, (N, H, W, C), jnp.float32)
    w1 = jax.random.normal(kw1, (3, 3, C, C), jnp.float32) * 0.1
    w2 = jax.random.normal(kw2, (3, 3, C, C), jnp.float32) * 0.1

    # BatchNorm params (eval mode: fold running stats into scale/bias).
    eps = 1e-5
    gamma1 = jax.random.normal(kg1, (C,), jnp.float32) * 0.1 + 1.0
    beta1 = jax.random.normal(kb1, (C,), jnp.float32) * 0.1
    mean1 = jax.random.normal(km1, (C,), jnp.float32) * 0.1
    var1 = jnp.abs(jax.random.normal(kv1, (C,), jnp.float32)) * 0.1 + 1.0
    gamma2 = jax.random.normal(kg2, (C,), jnp.float32) * 0.1 + 1.0
    beta2 = jax.random.normal(kb2, (C,), jnp.float32) * 0.1
    mean2 = jax.random.normal(km2, (C,), jnp.float32) * 0.1
    var2 = jnp.abs(jax.random.normal(kv2, (C,), jnp.float32)) * 0.1 + 1.0

    scale1 = gamma1 / jnp.sqrt(var1 + eps)
    bias1 = beta1 - mean1 * scale1
    scale2 = gamma2 / jnp.sqrt(var2 + eps)
    bias2 = beta2 - mean2 * scale2

    out = jax.block_until_ready(
        basic_block_forward(x, w1, w2, scale1, bias1, scale2, bias2))
    ref = reference_forward(x, w1, w2, scale1, bias1, scale2, bias2)

    assert out.shape == (N, H, W, C)
    # Both paths use bf16 MXU operands with f32 accumulation; differences are
    # summation-order only.
    assert jnp.allclose(out, ref, atol=1e-3, rtol=1e-3), "mismatch vs reference"
    print("KERNEL_OK")
</pallas_src>

<mosaic_0001>
module attributes {stable_mosaic.version = 11 : i64} {
  func.func @basic_block_kernel(%arg0: i32, %arg1: memref<4x8x8x8xf32, #tpu.memory_space<vmem>>, %arg2: memref<3x3x8x8xbf16, #tpu.memory_space<vmem>>, %arg3: memref<3x3x8x8xbf16, #tpu.memory_space<vmem>>, %arg4: memref<4x8xf32, #tpu.memory_space<vmem>>, %arg5: memref<256x9xf32, #tpu.memory_space<vmem>>, %arg6: memref<4x8x8x8xf32, #tpu.memory_space<vmem>>, %arg7: memref<288x8xf32, #tpu.memory_space<vmem>>, %arg8: memref<288x8xf32, #tpu.memory_space<vmem>>) attributes {dimension_semantics = [#tpu.dimension_semantics<parallel>], iteration_bounds = array<i64: 2>, scalar_prefetch = 0 : i64, scratch_operands = 2 : i64, tpu.core_type = #tpu.core_type<tc>, window_params = [{transform_indices = @transform_0, window_bounds = array<i64: 4, 8, 8, 8>}, {pipeline_mode = #tpu.pipeline_mode<synchronous>, transform_indices = @transform_1, window_bounds = array<i64: 3, 3, 8, 8>}, {pipeline_mode = #tpu.pipeline_mode<synchronous>, transform_indices = @transform_2, window_bounds = array<i64: 3, 3, 8, 8>}, {pipeline_mode = #tpu.pipeline_mode<synchronous>, transform_indices = @transform_3, window_bounds = array<i64: 4, 8>}, {pipeline_mode = #tpu.pipeline_mode<synchronous>, transform_indices = @transform_4, window_bounds = array<i64: 256, 9>}, {transform_indices = @transform_5, window_bounds = array<i64: 4, 8, 8, 8>}]} {
    %c0_i32 = arith.constant 0 : i32
    %0 = arith.cmpi eq, %arg0, %c0_i32 : i32
    %1 = arith.extui %0 : i1 to i32
    %c0_i32_0 = arith.constant 0 : i32
    %2 = arith.cmpi ne, %1, %c0_i32_0 : i32
    scf.if %2 {
      %cst_172 = arith.constant 0.000000e+00 : f32
      %191 = vector.broadcast %cst_172 : f32 to vector<288x8xf32>
      %c0_173 = arith.constant 0 : index
      %c0_174 = arith.constant 0 : index
      %192 = vector.load %arg7[%c0_173, %c0_174] : memref<288x8xf32, #tpu.memory_space<vmem>>, vector<288x8xf32>
      tpu.vector_store %arg7[%c0_173, %c0_174], %191 {strides = array<i32>} : memref<288x8xf32, #tpu.memory_space<vmem>>, vector<288x8xf32>,
      %cst_175 = arith.constant 0.000000e+00 : f32
      %193 = vector.broadcast %cst_175 : f32 to vector<288x8xf32>
      %c0_176 = arith.constant 0 : index
      %c0_177 = arith.constant 0 : index
      %194 = vector.load %arg8[%c0_176, %c0_177] : memref<288x8xf32, #tpu.memory_space<vmem>>, vector<288x8xf32>
      tpu.vector_store %arg8[%c0_176, %c0_177], %193 {strides = array<i32>} : memref<288x8xf32, #tpu.memory_space<vmem>>, vector<288x8xf32>,
    } else {
    }
    %c0 = arith.constant 0 : index
    %c0_1 = arith.constant 0 : index
    %c0_2 = arith.constant 0 : index
    %c0_3 = arith.constant 0 : index
    %3 = vector.load %arg1[%c0, %c0_1, %c0_2, %c0_3] : memref<4x8x8x8xf32, #tpu.memory_space<vmem>>, vector<4x8x8x8xf32>
    %4 = vector.shape_cast %3 : vector<4x8x8x8xf32> to vector<256x8xf32>
    %c16 = arith.constant 16 : index
    %c0_4 = arith.constant 0 : index
    %5 = vector.load %arg7[%c16, %c0_4] : memref<288x8xf32, #tpu.memory_space<vmem>>, vector<256x8xf32>
    tpu.vector_store %arg7[%c16, %c0_4], %4 {strides = array<i32>} : memref<288x8xf32, #tpu.memory_space<vmem>>, vector<256x8xf32>,
    %cst = arith.constant 0.000000e+00 : f32
    %6 = vector.broadcast %cst : f32 to vector<256x8xf32>
    %c7 = arith.constant 7 : index
    %c0_5 = arith.constant 0 : index
    %7 = vector.load %arg7[%c7, %c0_5] : memref<288x8xf32, #tpu.memory_space<vmem>>, vector<256x8xf32>
    %c0_6 = arith.constant 0 : index
    %c0_7 = arith.constant 0 : index
    %8 = vector.load %arg5[%c0_6, %c0_7] : memref<256x9xf32, #tpu.memory_space<vmem>>, vector<256x1xf32>
    %9 = vector.broadcast %8 : vector<256x1xf32> to vector<256x8xf32>
    %10 = arith.mulf %7, %9 : vector<256x8xf32>
    %11 = arith.truncf %10 : vector<256x8xf32> to vector<256x8xbf16>
    %c0_8 = arith.constant 0 : index
    %c0_9 = arith.constant 0 : index
    %c0_10 = arith.constant 0 : index
    %c0_11 = arith.constant 0 : index
    %12 = vector.load %arg2[%c0_8, %c0_9, %c0_10, %c0_11] : memref<3x3x8x8xbf16, #tpu.memory_space<vmem>>, vector<1x1x8x8xbf16>
    %13 = vector.shape_cast %12 : vector<1x1x8x8xbf16> to vector<8x8xbf16>
    %cst_12 = arith.constant dense<0.000000e+00> : vector<256x8xf32>
    %14 = tpu.matmul %11, %13, %cst_12 {dimension_numbers = #tpu.dot_dimension_numbers<[1], [0], [0], [1], [0, 0, 1, 1], [], []>} : vector<256x8xbf16>, vector<8x8xbf16>, vector<256x8xf32> -> vector<256x8xf32>
    %15 = arith.addf %6, %14 : vector<256x8xf32>
    %c8 = arith.constant 8 : index
    %c0_13 = arith.constant 0 : index
    %16 = vector.load %arg7[%c8, %c0_13] : memref<288x8xf32, #tpu.memory_space<vmem>>, vector<256x8xf32>
    %c0_14 = arith.constant 0 : index
    %c1 = arith.constant 1 : index
    %17 = vector.load %arg5[%c0_14, %c1] : memref<256x9xf32, #tpu.memory_space<vmem>>, vector<256x1xf32>
    %18 = vector.broadcast %17 : vector<256x1xf32> to vector<256x8xf32>
    %19 = arith.mulf %16, %18 : vector<256x8xf32>
    %20 = arith.truncf %19 : vector<256x8xf32> to vector<256x8xbf16>
    %c0_15 = arith.constant 0 : index
    %c1_16 = arith.constant 1 : index
    %c0_17 = arith.constant 0 : index
    %c0_18 = arith.constant 0 : index
    %21 = vector.load %arg2[%c0_15, %c1_16, %c0_17, %c0_18] : memref<3x3x8x8xbf16, #tpu.memory_space<vmem>>, vector<1x1x8x8xbf16>
    %22 = vector.shape_cast %21 : vector<1x1x8x8xbf16> to vector<8x8xbf16>
    %cst_19 = arith.constant dense<0.000000e+00> : vector<256x8xf32>
    %23 = tpu.matmul %20, %22, %cst_19 {dimension_numbers = #tpu.dot_dimension_numbers<[1], [0], [0], [1], [0, 0, 1, 1], [], []>} : vector<256x8xbf16>, vector<8x8xbf16>, vector<256x8xf32> -> vector<256x8xf32>
    %24 = arith.addf %15, %23 : vector<256x8xf32>
    %c9 = arith.constant 9 : index
    %c0_20 = arith.constant 0 : index
    %25 = vector.load %arg7[%c9, %c0_20] : memref<288x8xf32, #tpu.memory_space<vmem>>, vector<256x8xf32>
    %c0_21 = arith.constant 0 : index
    %c2 = arith.constant 2 : index
    %26 = vector.load %arg5[%c0_21, %c2] : memref<256x9xf32, #tpu.memory_space<vmem>>, vector<256x1xf32>
    %27 = vector.broadcast %26 : vector<256x1xf32> to vector<256x8xf32>
    %28 = arith.mulf %25, %27 : vector<256x8xf32>
    %29 = arith.truncf %28 : vector<256x8xf32> to vector<256x8xbf16>
    %c0_22 = arith.constant 0 : index
    %c2_23 = arith.constant 2 : index
    %c0_24 = arith.constant 0 : index
    %c0_25 = arith.constant 0 : index
    %30 = vector.load %arg2[%c0_22, %c2_23, %c0_24, %c0_25] : memref<3x3x8x8xbf16, #tpu.memory_space<vmem>>, vector<1x1x8x8xbf16>
    %31 = vector.shape_cast %30 : vector<1x1x8x8xbf16> to vector<8x8xbf16>
    %cst_26 = arith.constant dense<0.000000e+00> : vector<256x8xf32>
    %32 = tpu.matmul %29, %31, %cst_26 {dimension_numbers = #tpu.dot_dimension_numbers<[1], [0], [0], [1], [0, 0, 1, 1], [], []>} : vector<256x8xbf16>, vector<8x8xbf16>, vector<256x8xf32> -> vector<256x8xf32>
    %33 = arith.addf %24, %32 : vector<256x8xf32>
    %c15 = arith.constant 15 : index
    %c0_27 = arith.constant 0 : index
    %34 = vector.load %arg7[%c15, %c0_27] : memref<288x8xf32, #tpu.memory_space<vmem>>, vector<256x8xf32>
    %c0_28 = arith.constant 0 : index
    %c3 = arith.constant 3 : index
    %35 = vector.load %arg5[%c0_28, %c3] : memref<256x9xf32, #tpu.memory_space<vmem>>, vector<256x1xf32>
    %36 = vector.broadcast %35 : vector<256x1xf32> to vector<256x8xf32>
    %37 = arith.mulf %34, %36 : vector<256x8xf32>
    %38 = arith.truncf %37 : vector<256x8xf32> to vector<256x8xbf16>
    %c1_29 = arith.constant 1 : index
    %c0_30 = arith.constant 0 : index
    %c0_31 = arith.constant 0 : index
    %c0_32 = arith.constant 0 : index
    %39 = vector.load %arg2[%c1_29, %c0_30, %c0_31, %c0_32] : memref<3x3x8x8xbf16, #tpu.memory_space<vmem>>, vector<1x1x8x8xbf16>
    %40 = vector.shape_cast %39 : vector<1x1x8x8xbf16> to vector<8x8xbf16>
    %cst_33 = arith.constant dense<0.000000e+00> : vector<256x8xf32>
    %41 = tpu.matmul %38, %40, %cst_33 {dimension_numbers = #tpu.dot_dimension_numbers<[1], [0], [0], [1], [0, 0, 1, 1], [], []>} : vector<256x8xbf16>, vector<8x8xbf16>, vector<256x8xf32> -> vector<256x8xf32>
    %42 = arith.addf %33, %41 : vector<256x8xf32>
    %c16_34 = arith.constant 16 : index
    %c0_35 = arith.constant 0 : index
    %43 = vector.load %arg7[%c16_34, %c0_35] : memref<288x8xf32, #tpu.memory_space<vmem>>, vector<256x8xf32>
    %c0_36 = arith.constant 0 : index
    %c4 = arith.constant 4 : index
    %44 = vector.load %arg5[%c0_36, %c4] : memref<256x9xf32, #tpu.memory_space<vmem>>, vector<256x1xf32>
    %45 = vector.broadcast %44 : vector<256x1xf32> to vector<256x8xf32>
    %46 = arith.mulf %43, %45 : vector<256x8xf32>
    %47 = arith.truncf %46 : vector<256x8xf32> to vector<256x8xbf16>
    %c1_37 = arith.constant 1 : index
    %c1_38 = arith.constant 1 : index
    %c0_39 = arith.constant 0 : index
    %c0_40 = arith.constant 0 : index
    %48 = vector.load %arg2[%c1_37, %c1_38, %c0_39, %c0_40] : memref<3x3x8x8xbf16, #tpu.memory_space<vmem>>, vector<1x1x8x8xbf16>
    %49 = vector.shape_cast %48 : vector<1x1x8x8xbf16> to vector<8x8xbf16>
    %cst_41 = arith.constant dense<0.000000e+00> : vector<256x8xf32>
    %50 = tpu.matmul %47, %49, %cst_41 {dimension_numbers = #tpu.dot_dimension_numbers<[1], [0], [0], [1], [0, 0, 1, 1], [], []>} : vector<256x8xbf16>, vector<8x8xbf16>, vector<256x8xf32> -> vector<256x8xf32>
    %51 = arith.addf %42, %50 : vector<256x8xf32>
    %c17 = arith.constant 17 : index
    %c0_42 = arith.constant 0 : index
    %52 = vector.load %arg7[%c17, %c0_42] : memref<288x8xf32, #tpu.memory_space<vmem>>, vector<256x8xf32>
    %c0_43 = arith.constant 0 : index
    %c5 = arith.constant 5 : index
    %53 = vector.load %arg5[%c0_43, %c5] : memref<256x9xf32, #tpu.memory_space<vmem>>, vector<256x1xf32>
    %54 = vector.broadcast %53 : vector<256x1xf32> to vector<256x8xf32>
    %55 = arith.mulf %52, %54 : vector<256x8xf32>
    %56 = arith.truncf %55 : vector<256x8xf32> to vector<256x8xbf16>
    %c1_44 = arith.constant 1 : index
    %c2_45 = arith.constant 2 : index
    %c0_46 = arith.constant 0 : index
    %c0_47 = arith.constant 0 : index
    %57 = vector.load %arg2[%c1_44, %c2_45, %c0_46, %c0_47] : memref<3x3x8x8xbf16, #tpu.memory_space<vmem>>, vector<1x1x8x8xbf16>
    %58 = vector.shape_cast %57 : vector<1x1x8x8xbf16> to vector<8x8xbf16>
    %cst_48 = arith.constant dense<0.000000e+00> : vector<256x8xf32>
    %59 = tpu.matmul %56, %58, %cst_48 {dimension_numbers = #tpu.dot_dimension_numbers<[1], [0], [0], [1], [0, 0, 1, 1], [], []>} : vector<256x8xbf16>, vector<8x8xbf16>, vector<256x8xf32> -> vector<256x8xf32>
    %60 = arith.addf %51, %59 : vector<256x8xf32>
    %c23 = arith.constant 23 : index
    %c0_49 = arith.constant 0 : index
    %61 = vector.load %arg7[%c23, %c0_49] : memref<288x8xf32, #tpu.memory_space<vmem>>, vector<256x8xf32>
    %c0_50 = arith.constant 0 : index
    %c6 = arith.constant 6 : index
    %62 = vector.load %arg5[%c0_50, %c6] : memref<256x9xf32, #tpu.memory_space<vmem>>, vector<256x1xf32>
    %63 = vector.broadcast %62 : vector<256x1xf32> to vector<256x8xf32>
    %64 = arith.mulf %61, %63 : vector<256x8xf32>
    %65 = arith.truncf %64 : vector<256x8xf32> to vector<256x8xbf16>
    %c2_51 = arith.constant 2 : index
    %c0_52 = arith.constant 0 : index
    %c0_53 = arith.constant 0 : index
    %c0_54 = arith.constant 0 : index
    %66 = vector.load %arg2[%c2_51, %c0_52, %c0_53, %c0_54] : memref<3x3x8x8xbf16, #tpu.memory_space<vmem>>, vector<1x1x8x8xbf16>
    %67 = vector.shape_cast %66 : vector<1x1x8x8xbf16> to vector<8x8xbf16>
    %cst_55 = arith.constant dense<0.000000e+00> : vector<256x8xf32>
    %68 = tpu.matmul %65, %67, %cst_55 {dimension_numbers = #tpu.dot_dimension_numbers<[1], [0], [0], [1], [0, 0, 1, 1], [], []>} : vector<256x8xbf16>, vector<8x8xbf16>, vector<256x8xf32> -> vector<256x8xf32>
    %69 = arith.addf %60, %68 : vector<256x8xf32>
    %c24 = arith.constant 24 : index
    %c0_56 = arith.constant 0 : index
    %70 = vector.load %arg7[%c24, %c0_56] : memref<288x8xf32, #tpu.memory_space<vmem>>, vector<256x8xf32>
    %c0_57 = arith.constant 0 : index
    %c7_58 = arith.constant 7 : index
    %71 = vector.load %arg5[%c0_57, %c7_58] : memref<256x9xf32, #tpu.memory_space<vmem>>, vector<256x1xf32>
    %72 = vector.broadcast %71 : vector<256x1xf32> to vector<256x8xf32>
    %73 = arith.mulf %70, %72 : vector<256x8xf32>
    %74 = arith.truncf %73 : vector<256x8xf32> to vector<256x8xbf16>
    %c2_59 = arith.constant 2 : index
    %c1_60 = arith.constant 1 : index
    %c0_61 = arith.constant 0 : index
    %c0_62 = arith.constant 0 : index
    %75 = vector.load %arg2[%c2_59, %c1_60, %c0_61, %c0_62] : memref<3x3x8x8xbf16, #tpu.memory_space<vmem>>, vector<1x1x8x8xbf16>
    %76 = vector.shape_cast %75 : vector<1x1x8x8xbf16> to vector<8x8xbf16>
    %cst_63 = arith.constant dense<0.000000e+00> : vector<256x8xf32>
    %77 = tpu.matmul %74, %76, %cst_63 {dimension_numbers = #tpu.dot_dimension_numbers<[1], [0], [0], [1], [0, 0, 1, 1], [], []>} : vector<256x8xbf16>, vector<8x8xbf16>, vector<256x8xf32> -> vector<256x8xf32>
    %78 = arith.addf %69, %77 : vector<256x8xf32>
    %c25 = arith.constant 25 : index
    %c0_64 = arith.constant 0 : index
    %79 = vector.load %arg7[%c25, %c0_64] : memref<288x8xf32, #tpu.memory_space<vmem>>, vector<256x8xf32>
    %c0_65 = arith.constant 0 : index
    %c8_66 = arith.constant 8 : index
    %80 = vector.load %arg5[%c0_65, %c8_66] : memref<256x9xf32, #tpu.memory_space<vmem>>, vector<256x1xf32>
    %81 = vector.broadcast %80 : vector<256x1xf32> to vector<256x8xf32>
    %82 = arith.mulf %79, %81 : vector<256x8xf32>
    %83 = arith.truncf %82 : vector<256x8xf32> to vector<256x8xbf16>
    %c2_67 = arith.constant 2 : index
    %c2_68 = arith.constant 2 : index
    %c0_69 = arith.constant 0 : index
    %c0_70 = arith.constant 0 : index
    %84 = vector.load %arg2[%c2_67, %c2_68, %c0_69, %c0_70] : memref<3x3x8x8xbf16, #tpu.memory_space<vmem>>, vector<1x1x8x8xbf16>
    %85 = vector.shape_cast %84 : vector<1x1x8x8xbf16> to vector<8x8xbf16>
    %cst_71 = arith.constant dense<0.000000e+00> : vector<256x8xf32>
    %86 = tpu.matmul %83, %85, %cst_71 {dimension_numbers = #tpu.dot_dimension_numbers<[1], [0], [0], [1], [0, 0, 1, 1], [], []>} : vector<256x8xbf16>, vector<8x8xbf16>, vector<256x8xf32> -> vector<256x8xf32>
    %87 = arith.addf %78, %86 : vector<256x8xf32>
    %c0_72 = arith.constant 0 : index
    %c0_73 = arith.constant 0 : index
    %88 = vector.load %arg4[%c0_72, %c0_73] : memref<4x8xf32, #tpu.memory_space<vmem>>, vector<1x8xf32>
    %89 = vector.broadcast %88 : vector<1x8xf32> to vector<256x8xf32>
    %90 = arith.mulf %87, %89 : vector<256x8xf32>
    %c1_74 = arith.constant 1 : index
    %c0_75 = arith.constant 0 : index
    %91 = vector.load %arg4[%c1_74, %c0_75] : memref<4x8xf32, #tpu.memory_space<vmem>>, vector<1x8xf32>
    %92 = vector.broadcast %91 : vector<1x8xf32> to vector<256x8xf32>
    %93 = arith.addf %90, %92 : vector<256x8xf32>
    %cst_76 = arith.constant 0.000000e+00 : f32
    %94 = vector.broadcast %cst_76 : f32 to vector<256x8xf32>
    %95 = arith.maximumf %93, %94 : vector<256x8xf32>
    %c16_77 = arith.constant 16 : index
    %c0_78 = arith.constant 0 : index
    %96 = vector.load %arg8[%c16_77, %c0_78] : memref<288x8xf32, #tpu.memory_space<vmem>>, vector<256x8xf32>
    tpu.vector_store %arg8[%c16_77, %c0_78], %95 {strides = array<i32>} : memref<288x8xf32, #tpu.memory_space<vmem>>, vector<256x8xf32>,
    %cst_79 = arith.constant 0.000000e+00 : f32
    %97 = vector.broadcast %cst_79 : f32 to vector<256x8xf32>
    %c7_80 = arith.constant 7 : index
    %c0_81 = arith.constant 0 : index
    %98 = vector.load %arg8[%c7_80, %c0_81] : memref<288x8xf32, #tpu.memory_space<vmem>>, vector<256x8xf32>
    %c0_82 = arith.constant 0 : index
    %c0_83 = arith.constant 0 : index
    %99 = vector.load %arg5[%c0_82, %c0_83] : memref<256x9xf32, #tpu.memory_space<vmem>>, vector<256x1xf32>
    %100 = vector.broadcast %99 : vector<256x1xf32> to vector<256x8xf32>
    %101 = arith.mulf %98, %100 : vector<256x8xf32>
    %102 = arith.truncf %101 : vector<256x8xf32> to vector<256x8xbf16>
    %c0_84 = arith.constant 0 : index
    %c0_85 = arith.constant 0 : index
    %c0_86 = arith.constant 0 : index
    %c0_87 = arith.constant 0 : index
    %103 = vector.load %arg3[%c0_84, %c0_85, %c0_86, %c0_87] : memref<3x3x8x8xbf16, #tpu.memory_space<vmem>>, vector<1x1x8x8xbf16>
    %104 = vector.shape_cast %103 : vector<1x1x8x8xbf16> to vector<8x8xbf16>
    %cst_88 = arith.constant dense<0.000000e+00> : vector<256x8xf32>
    %105 = tpu.matmul %102, %104, %cst_88 {dimension_numbers = #tpu.dot_dimension_numbers<[1], [0], [0], [1], [0, 0, 1, 1], [], []>} : vector<256x8xbf16>, vector<8x8xbf16>, vector<256x8xf32> -> vector<256x8xf32>
    %106 = arith.addf %97, %105 : vector<256x8xf32>
    %c8_89 = arith.constant 8 : index
    %c0_90 = arith.constant 0 : index
    %107 = vector.load %arg8[%c8_89, %c0_90] : memref<288x8xf32, #tpu.memory_space<vmem>>, vector<256x8xf32>
    %c0_91 = arith.constant 0 : index
    %c1_92 = arith.constant 1 : index
    %108 = vector.load %arg5[%c0_91, %c1_92] : memref<256x9xf32, #tpu.memory_space<vmem>>, vector<256x1xf32>
    %109 = vector.broadcast %108 : vector<256x1xf32> to vector<256x8xf32>
    %110 = arith.mulf %107, %109 : vector<256x8xf32>
    %111 = arith.truncf %110 : vector<256x8xf32> to vector<256x8xbf16>
    %c0_93 = arith.constant 0 : index
    %c1_94 = arith.constant 1 : index
    %c0_95 = arith.constant 0 : index
    %c0_96 = arith.constant 0 : index
    %112 = vector.load %arg3[%c0_93, %c1_94, %c0_95, %c0_96] : memref<3x3x8x8xbf16, #tpu.memory_space<vmem>>, vector<1x1x8x8xbf16>
    %113 = vector.shape_cast %112 : vector<1x1x8x8xbf16> to vector<8x8xbf16>
    %cst_97 = arith.constant dense<0.000000e+00> : vector<256x8xf32>
    %114 = tpu.matmul %111, %113, %cst_97 {dimension_numbers = #tpu.dot_dimension_numbers<[1], [0], [0], [1], [0, 0, 1, 1], [], []>} : vector<256x8xbf16>, vector<8x8xbf16>, vector<256x8xf32> -> vector<256x8xf32>
    %115 = arith.addf %106, %114 : vector<256x8xf32>
    %c9_98 = arith.constant 9 : index
    %c0_99 = arith.constant 0 : index
    %116 = vector.load %arg8[%c9_98, %c0_99] : memref<288x8xf32, #tpu.memory_space<vmem>>, vector<256x8xf32>
    %c0_100 = arith.constant 0 : index
    %c2_101 = arith.constant 2 : index
    %117 = vector.load %arg5[%c0_100, %c2_101] : memref<256x9xf32, #tpu.memory_space<vmem>>, vector<256x1xf32>
    %118 = vector.broadcast %117 : vector<256x1xf32> to vector<256x8xf32>
    %119 = arith.mulf %116, %118 : vector<256x8xf32>
    %120 = arith.truncf %119 : vector<256x8xf32> to vector<256x8xbf16>
    %c0_102 = arith.constant 0 : index
    %c2_103 = arith.constant 2 : index
    %c0_104 = arith.constant 0 : index
    %c0_105 = arith.constant 0 : index
    %121 = vector.load %arg3[%c0_102, %c2_103, %c0_104, %c0_105] : memref<3x3x8x8xbf16, #tpu.memory_space<vmem>>, vector<1x1x8x8xbf16>
    %122 = vector.shape_cast %121 : vector<1x1x8x8xbf16> to vector<8x8xbf16>
    %cst_106 = arith.constant dense<0.000000e+00> : vector<256x8xf32>
    %123 = tpu.matmul %120, %122, %cst_106 {dimension_numbers = #tpu.dot_dimension_numbers<[1], [0], [0], [1], [0, 0, 1, 1], [], []>} : vector<256x8xbf16>, vector<8x8xbf16>, vector<256x8xf32> -> vector<256x8xf32>
    %124 = arith.addf %115, %123 : vector<256x8xf32>
    %c15_107 = arith.constant 15 : index
    %c0_108 = arith.constant 0 : index
    %125 = vector.load %arg8[%c15_107, %c0_108] : memref<288x8xf32, #tpu.memory_space<vmem>>, vector<256x8xf32>
    %c0_109 = arith.constant 0 : index
    %c3_110 = arith.constant 3 : index
    %126 = vector.load %arg5[%c0_109, %c3_110] : memref<256x9xf32, #tpu.memory_space<vmem>>, vector<256x1xf32>
    %127 = vector.broadcast %126 : vector<256x1xf32> to vector<256x8xf32>
    %128 = arith.mulf %125, %127 : vector<256x8xf32>
    %129 = arith.truncf %128 : vector<256x8xf32> to vector<256x8xbf16>
    %c1_111 = arith.constant 1 : index
    %c0_112 = arith.constant 0 : index
    %c0_113 = arith.constant 0 : index
    %c0_114 = arith.constant 0 : index
    %130 = vector.load %arg3[%c1_111, %c0_112, %c0_113, %c0_114] : memref<3x3x8x8xbf16, #tpu.memory_space<vmem>>, vector<1x1x8x8xbf16>
    %131 = vector.shape_cast %130 : vector<1x1x8x8xbf16> to vector<8x8xbf16>
    %cst_115 = arith.constant dense<0.000000e+00> : vector<256x8xf32>
    %132 = tpu.matmul %129, %131, %cst_115 {dimension_numbers = #tpu.dot_dimension_numbers<[1], [0], [0], [1], [0, 0, 1, 1], [], []>} : vector<256x8xbf16>, vector<8x8xbf16>, vector<256x8xf32> -> vector<256x8xf32>
    %133 = arith.addf %124, %132 : vector<256x8xf32>
    %c16_116 = arith.constant 16 : index
    %c0_117 = arith.constant 0 : index
    %134 = vector.load %arg8[%c16_116, %c0_117] : memref<288x8xf32, #tpu.memory_space<vmem>>, vector<256x8xf32>
    %c0_118 = arith.constant 0 : index
    %c4_119 = arith.constant 4 : index
    %135 = vector.load %arg5[%c0_118, %c4_119] : memref<256x9xf32, #tpu.memory_space<vmem>>, vector<256x1xf32>
    %136 = vector.broadcast %135 : vector<256x1xf32> to vector<256x8xf32>
    %137 = arith.mulf %134, %136 : vector<256x8xf32>
    %138 = arith.truncf %137 : vector<256x8xf32> to vector<256x8xbf16>
    %c1_120 = arith.constant 1 : index
    %c1_121 = arith.constant 1 : index
    %c0_122 = arith.constant 0 : index
    %c0_123 = arith.constant 0 : index
    %139 = vector.load %arg3[%c1_120, %c1_121, %c0_122, %c0_123] : memref<3x3x8x8xbf16, #tpu.memory_space<vmem>>, vector<1x1x8x8xbf16>
    %140 = vector.shape_cast %139 : vector<1x1x8x8xbf16> to vector<8x8xbf16>
    %cst_124 = arith.constant dense<0.000000e+00> : vector<256x8xf32>
    %141 = tpu.matmul %138, %140, %cst_124 {dimension_numbers = #tpu.dot_dimension_numbers<[1], [0], [0], [1], [0, 0, 1, 1], [], []>} : vector<256x8xbf16>, vector<8x8xbf16>, vector<256x8xf32> -> vector<256x8xf32>
    %142 = arith.addf %133, %141 : vector<256x8xf32>
    %c17_125 = arith.constant 17 : index
    %c0_126 = arith.constant 0 : index
    %143 = vector.load %arg8[%c17_125, %c0_126] : memref<288x8xf32, #tpu.memory_space<vmem>>, vector<256x8xf32>
    %c0_127 = arith.constant 0 : index
    %c5_128 = arith.constant 5 : index
    %144 = vector.load %arg5[%c0_127, %c5_128] : memref<256x9xf32, #tpu.memory_space<vmem>>, vector<256x1xf32>
    %145 = vector.broadcast %144 : vector<256x1xf32> to vector<256x8xf32>
    %146 = arith.mulf %143, %145 : vector<256x8xf32>
    %147 = arith.truncf %146 : vector<256x8xf32> to vector<256x8xbf16>
    %c1_129 = arith.constant 1 : index
    %c2_130 = arith.constant 2 : index
    %c0_131 = arith.constant 0 : index
    %c0_132 = arith.constant 0 : index
    %148 = vector.load %arg3[%c1_129, %c2_130, %c0_131, %c0_132] : memref<3x3x8x8xbf16, #tpu.memory_space<vmem>>, vector<1x1x8x8xbf16>
    %149 = vector.shape_cast %148 : vector<1x1x8x8xbf16> to vector<8x8xbf16>
    %cst_133 = arith.constant dense<0.000000e+00> : vector<256x8xf32>
    %150 = tpu.matmul %147, %149, %cst_133 {dimension_numbers = #tpu.dot_dimension_numbers<[1], [0], [0], [1], [0, 0, 1, 1], [], []>} : vector<256x8xbf16>, vector<8x8xbf16>, vector<256x8xf32> -> vector<256x8xf32>
    %151 = arith.addf %142, %150 : vector<256x8xf32>
    %c23_134 = arith.constant 23 : index
    %c0_135 = arith.constant 0 : index
    %152 = vector.load %arg8[%c23_134, %c0_135] : memref<288x8xf32, #tpu.memory_space<vmem>>, vector<256x8xf32>
    %c0_136 = arith.constant 0 : index
    %c6_137 = arith.constant 6 : index
    %153 = vector.load %arg5[%c0_136, %c6_137] : memref<256x9xf32, #tpu.memory_space<vmem>>, vector<256x1xf32>
    %154 = vector.broadcast %153 : vector<256x1xf32> to vector<256x8xf32>
    %155 = arith.mulf %152, %154 : vector<256x8xf32>
    %156 = arith.truncf %155 : vector<256x8xf32> to vector<256x8xbf16>
    %c2_138 = arith.constant 2 : index
    %c0_139 = arith.constant 0 : index
    %c0_140 = arith.constant 0 : index
    %c0_141 = arith.constant 0 : index
    %157 = vector.load %arg3[%c2_138, %c0_139, %c0_140, %c0_141] : memref<3x3x8x8xbf16, #tpu.memory_space<vmem>>, vector<1x1x8x8xbf16>
    %158 = vector.shape_cast %157 : vector<1x1x8x8xbf16> to vector<8x8xbf16>
    %cst_142 = arith.constant dense<0.000000e+00> : vector<256x8xf32>
    %159 = tpu.matmul %156, %158, %cst_142 {dimension_numbers = #tpu.dot_dimension_numbers<[1], [0], [0], [1], [0, 0, 1, 1], [], []>} : vector<256x8xbf16>, vector<8x8xbf16>, vector<256x8xf32> -> vector<256x8xf32>
    %160 = arith.addf %151, %159 : vector<256x8xf32>
    %c24_143 = arith.constant 24 : index
    %c0_144 = arith.constant 0 : index
    %161 = vector.load %arg8[%c24_143, %c0_144] : memref<288x8xf32, #tpu.memory_space<vmem>>, vector<256x8xf32>
    %c0_145 = arith.constant 0 : index
    %c7_146 = arith.constant 7 : index
    %162 = vector.load %arg5[%c0_145, %c7_146] : memref<256x9xf32, #tpu.memory_space<vmem>>, vector<256x1xf32>
    %163 = vector.broadcast %162 : vector<256x1xf32> to vector<256x8xf32>
    %164 = arith.mulf %161, %163 : vector<256x8xf32>
    %165 = arith.truncf %164 : vector<256x8xf32> to vector<256x8xbf16>
    %c2_147 = arith.constant 2 : index
    %c1_148 = arith.constant 1 : index
    %c0_149 = arith.constant 0 : index
    %c0_150 = arith.constant 0 : index
    %166 = vector.load %arg3[%c2_147, %c1_148, %c0_149, %c0_150] : memref<3x3x8x8xbf16, #tpu.memory_space<vmem>>, vector<1x1x8x8xbf16>
    %167 = vector.shape_cast %166 : vector<1x1x8x8xbf16> to vector<8x8xbf16>
    %cst_151 = arith.constant dense<0.000000e+00> : vector<256x8xf32>
    %168 = tpu.matmul %165, %167, %cst_151 {dimension_numbers = #tpu.dot_dimension_numbers<[1], [0], [0], [1], [0, 0, 1, 1], [], []>} : vector<256x8xbf16>, vector<8x8xbf16>, vector<256x8xf32> -> vector<256x8xf32>
    %169 = arith.addf %160, %168 : vector<256x8xf32>
    %c25_152 = arith.constant 25 : index
    %c0_153 = arith.constant 0 : index
    %170 = vector.load %arg8[%c25_152, %c0_153] : memref<288x8xf32, #tpu.memory_space<vmem>>, vector<256x8xf32>
    %c0_154 = arith.constant 0 : index
    %c8_155 = arith.constant 8 : index
    %171 = vector.load %arg5[%c0_154, %c8_155] : memref<256x9xf32, #tpu.memory_space<vmem>>, vector<256x1xf32>
    %172 = vector.broadcast %171 : vector<256x1xf32> to vector<256x8xf32>
    %173 = arith.mulf %170, %172 : vector<256x8xf32>
    %174 = arith.truncf %173 : vector<256x8xf32> to vector<256x8xbf16>
    %c2_156 = arith.constant 2 : index
    %c2_157 = arith.constant 2 : index
    %c0_158 = arith.constant 0 : index
    %c0_159 = arith.constant 0 : index
    %175 = vector.load %arg3[%c2_156, %c2_157, %c0_158, %c0_159] : memref<3x3x8x8xbf16, #tpu.memory_space<vmem>>, vector<1x1x8x8xbf16>
    %176 = vector.shape_cast %175 : vector<1x1x8x8xbf16> to vector<8x8xbf16>
    %cst_160 = arith.constant dense<0.000000e+00> : vector<256x8xf32>
    %177 = tpu.matmul %174, %176, %cst_160 {dimension_numbers = #tpu.dot_dimension_numbers<[1], [0], [0], [1], [0, 0, 1, 1], [], []>} : vector<256x8xbf16>, vector<8x8xbf16>, vector<256x8xf32> -> vector<256x8xf32>
    %178 = arith.addf %169, %177 : vector<256x8xf32>
    %c16_161 = arith.constant 16 : index
    %c0_162 = arith.constant 0 : index
    %179 = vector.load %arg7[%c16_161, %c0_162] : memref<288x8xf32, #tpu.memory_space<vmem>>, vector<256x8xf32>
    %c2_163 = arith.constant 2 : index
    %c0_164 = arith.constant 0 : index
    %180 = vector.load %arg4[%c2_163, %c0_164] : memref<4x8xf32, #tpu.memory_space<vmem>>, vector<1x8xf32>
    %181 = vector.broadcast %180 : vector<1x8xf32> to vector<256x8xf32>
    %182 = arith.mulf %178, %181 : vector<256x8xf32>
    %c3_165 = arith.constant 3 : index
    %c0_166 = arith.constant 0 : index
    %183 = vector.load %arg4[%c3_165, %c0_166] : memref<4x8xf32, #tpu.memory_space<vmem>>, vector<1x8xf32>
    %184 = vector.broadcast %183 : vector<1x8xf32> to vector<256x8xf32>
    %185 = arith.addf %182, %184 : vector<256x8xf32>
    %186 = arith.addf %185, %179 : vector<256x8xf32>
    %cst_167 = arith.constant 0.000000e+00 : f32
    %187 = vector.broadcast %cst_167 : f32 to vector<256x8xf32>
    %188 = arith.maximumf %186, %187 : vector<256x8xf32>
    %189 = vector.shape_cast %188 : vector<256x8xf32> to vector<4x8x8x8xf32>
    %c0_168 = arith.constant 0 : index
    %c0_169 = arith.constant 0 : index
    %c0_170 = arith.constant 0 : index
    %c0_171 = arith.constant 0 : index
    %190 = vector.load %arg6[%c0_168, %c0_169, %c0_170, %c0_171] : memref<4x8x8x8xf32, #tpu.memory_space<vmem>>, vector<4x8x8x8xf32>
    tpu.vector_store %arg6[%c0_168, %c0_169, %c0_170, %c0_171], %189 {strides = array<i32>} : memref<4x8x8x8xf32, #tpu.memory_space<vmem>>, vector<4x8x8x8xf32>,
    return
  }
  func.func @transform_0(%arg0: i32) -> (i32, i32, i32, i32) {
    %c0_i32 = arith.constant 0 : i32
    %c0_i32_0 = arith.constant 0 : i32
    %c0_i32_1 = arith.constant 0 : i32
    %c0_i32_2 = arith.constant 0 : i32
    return %arg0, %c0_i32, %c0_i32_0, %c0_i32_1 : i32, i32, i32, i32
  }
  func.func @transform_1(%arg0: i32) -> (i32, i32, i32, i32) {
    %c0_i32 = arith.constant 0 : i32
    %c0_i32_0 = arith.constant 0 : i32
    %c0_i32_1 = arith.constant 0 : i32
    %c0_i32_2 = arith.constant 0 : i32
    %c0_i32_3 = arith.constant 0 : i32
    return %c0_i32, %c0_i32_0, %c0_i32_1, %c0_i32_2 : i32, i32, i32, i32
  }
  func.func @transform_2(%arg0: i32) -> (i32, i32, i32, i32) {
    %c0_i32 = arith.constant 0 : i32
    %c0_i32_0 = arith.constant 0 : i32
    %c0_i32_1 = arith.constant 0 : i32
    %c0_i32_2 = arith.constant 0 : i32
    %c0_i32_3 = arith.constant 0 : i32
    return %c0_i32, %c0_i32_0, %c0_i32_1, %c0_i32_2 : i32, i32, i32, i32
  }
  func.func @transform_3(%arg0: i32) -> (i32, i32) {
    %c0_i32 = arith.constant 0 : i32
    %c0_i32_0 = arith.constant 0 : i32
    %c0_i32_1 = arith.constant 0 : i32
    return %c0_i32, %c0_i32_0 : i32, i32
  }
  func.func @transform_4(%arg0: i32) -> (i32, i32) {
    %c0_i32 = arith.constant 0 : i32
    %c0_i32_0 = arith.constant 0 : i32
    %c0_i32_1 = arith.constant 0 : i32
    return %c0_i32, %c0_i32_0 : i32, i32
  }
  func.func @transform_5(%arg0: i32) -> (i32, i32, i32, i32) {
    %c0_i32 = arith.constant 0 : i32
    %c0_i32_0 = arith.constant 0 : i32
    %c0_i32_1 = arith.constant 0 : i32
    %c0_i32_2 = arith.constant 0 : i32
    return %arg0, %c0_i32, %c0_i32_0, %c0_i32_1 : i32, i32, i32, i32
  }
}

</mosaic_0001>

<llo_original>
// kernel: basic_block_forward.1
$region0: #{basic_block_forward.1}
  #allocation0 [shape = 'u32[]', space=smem, size = 0x4, offset = 0x4, fixed_abs, tag = 'smem constant byte address 0x4 - core index']
  #allocation1 [shape = 'u32[144,128]{1,0:T(1,128)}', space=vmem, size = 0x12000, scoped, tag = 'internal scratch']
  #allocation2 [shape = 'f32[288,8]{1,0:T(8,128)}', space=vmem, size = 0x24000, scoped, tag = 'scratch operand']
  #allocation3 [shape = 'f32[288,8]{1,0:T(8,128)}', space=vmem, size = 0x24000, scoped, tag = 'scratch operand']
  %s0 = inlined_call_operand.hbm [shape: f32[8,8,8,8], index: 0, kind: input, shape index: {}]
  %s1 = inlined_call_operand.vmem [shape: bf16[3,3,8,8], index: 1, kind: input, shape index: {}]
  %s2 = inlined_call_operand.vmem [shape: bf16[3,3,8,8], index: 2, kind: input, shape index: {}]
  %s3 = inlined_call_operand.vmem [shape: f32[4,8], index: 3, kind: input, shape index: {}]
  %s4 = inlined_call_operand.hbm [shape: f32[256,9], index: 4, kind: input, shape index: {}]
  %s5 = inlined_call_operand.hbm [shape: f32[8,8,8,8], index: 5, kind: output, shape index: {}]
  %s6 = sld [smem:[#allocation0]]
  $region65: #{basic_block_forward.1} parent=0
    _
  %s8 = ssub.s32 1, %s6
  %s9 = scalar_select 0, %s8, %s6
  $region1: #{basic_block_forward.1} parent=0
    #allocation4 [shape = 'u8[262144]{0}', space=vmem, size = 0x40000, scoped, tag = 'input window, operand 0']
    #allocation5 [shape = 's32[2]{0}', space=sflag, size = 0x8, scoped, tag = 'scoped memory for basic_block_forward.1']
    #allocation6 [shape = 's32[2]{0}', space=sflag, size = 0x8, scoped, tag = 'scoped memory for basic_block_forward.1']
    #allocation7 [shape = 'u8[131072]{0}', space=vmem, size = 0x20000, scoped, tag = 'input window, operand 4, single buffered']
    #allocation8 [shape = 's32[1]{0}', space=sflag, size = 0x4, scoped, tag = 'scoped memory for basic_block_forward.1']
    #allocation9 [shape = 'u8[262144]{0}', space=vmem, size = 0x40000, scoped, tag = 'output window, operand 0']
    %10 = vsyncpa [#allocation5], 0
    %s11 = scalar_lea.sflag [#allocation5], 1
    %12 = vsyncpa %s11, 0
    %13 = vsyncpa [#allocation8], 0
    %14 = vsyncpa [#allocation6], 0
    %s15 = scalar_lea.sflag [#allocation6], 1
    %16 = vsyncpa %s15, 0
    loop: start=0, step=1, limit=4
    $region2: #{basic_block_forward.1} parent=1 // loop_pre_header
      _
    $region3: #{basic_block_forward.1} parent=1 // loop_header
      %s18 = sphi 0, %s22
      %p19 = scmp.ge.s32.totalorder %s18, 4
      %s28 = sphi 0, %s30
      %s31 = sphi 0, %s28
      %s32 = sphi 0, %s31
      %s48 = sphi 0, %s32
      %s52 = sphi 0, %s52
      %s54 = sphi 0, %s52
      %s55 = sphi 0, %s54
      %s69 = sphi 0, %s55
      %s73 = sphi 0, %s73
      %s75 = sphi 0, %s73
      %s76 = sphi 0, %s75
      %s90 = sphi 0, %s76
      %s94 = sphi 0, %s94
      %s96 = sphi 0, %s94
      %s97 = sphi 0, %s96
      %s111 = sphi 0, %s97
      %s115 = sphi 0, %s115
      %s117 = sphi 0, %s115
      %s118 = sphi 0, %s117
      %s132 = sphi 0, %s118
      %s138 = sphi 0, %s140
      %s141 = sphi 0, %s138
      %s142 = sphi 0, %s141
      %s158 = sphi 0, %s142
    $region4: #{basic_block_forward.1} parent=1 // loop_header_branch
      %21 = sbr.rel (%p19) target = $region8
    $region5: #{basic_block_forward.1} parent=1 // loop_body
      %s23 = ssub.s32 %s18, 1
      %s24 = ssub.s32 %s18, 2
      %s25 = sadd.s32 %s18, 1
      %s26 = ssub.s32 %s18, %s25
      %p27 = scmp.eq.s32.totalorder %s26, 0
      %s29 = sadd.s32 %s28, 1
      %s30 = scalar_select %p27, %s28, %s29
      %p33 = pneg %p27
      %p34 = scmp.eq.s32.totalorder %s18, 1
      %p35 = por %p33, %p34
      %p36 = scmp.ne.s32.totalorder %s28, %s31
      %p37 = scmp.eq.s32.totalorder %s18, 0
      %p38 = por %p36, %p37
      %p39 = scmp.ne.s32.totalorder %s28, %s31
      %p40 = scmp.eq.s32.totalorder %s23, 1
      %p41 = por %p39, %p40
      %p42 = scmp.ne.s32.totalorder %s31, %s32
      %p43 = scmp.eq.s32.totalorder %s23, 0
      %p44 = por %p42, %p43
      %p45 = scmp.ne.s32.totalorder %s31, %s32
      %p46 = scmp.eq.s32.totalorder %s24, 1
      %p47 = por %p45, %p46
      %p49 = scmp.ne.s32.totalorder %s32, %s48
      %p50 = scmp.eq.s32.totalorder %s24, 0
      %p51 = por %p49, %p50
      %s53 = sadd.s32 %s52, 1
      %p56 = scmp.eq.s32.totalorder %s18, 1
      %p57 = scmp.ne.s32.totalorder %s52, %s54
      %p58 = scmp.eq.s32.totalorder %s18, 0
      %p59 = por %p57, %p58
      %p60 = scmp.ne.s32.totalorder %s52, %s54
      %p61 = scmp.eq.s32.totalorder %s23, 1
      %p62 = por %p60, %p61
      %p63 = scmp.ne.s32.totalorder %s54, %s55
      %p64 = scmp.eq.s32.totalorder %s23, 0
      %p65 = por %p63, %p64
      %p66 = scmp.ne.s32.totalorder %s54, %s55
      %p67 = scmp.eq.s32.totalorder %s24, 1
      %p68 = por %p66, %p67
      %p70 = scmp.ne.s32.totalorder %s55, %s69
      %p71 = scmp.eq.s32.totalorder %s24, 0
      %p72 = por %p70, %p71
      %s74 = sadd.s32 %s73, 1
      %p77 = scmp.eq.s32.totalorder %s18, 1
      %p78 = scmp.ne.s32.totalorder %s73, %s75
      %p79 = scmp.eq.s32.totalorder %s18, 0
      %p80 = por %p78, %p79
      %p81 = scmp.ne.s32.totalorder %s73, %s75
      %p82 = scmp.eq.s32.totalorder %s23, 1
      %p83 = por %p81, %p82
      %p84 = scmp.ne.s32.totalorder %s75, %s76
      %p85 = scmp.eq.s32.totalorder %s23, 0
      %p86 = por %p84, %p85
      %p87 = scmp.ne.s32.totalorder %s75, %s76
      %p88 = scmp.eq.s32.totalorder %s24, 1
      %p89 = por %p87, %p88
      %p91 = scmp.ne.s32.totalorder %s76, %s90
      %p92 = scmp.eq.s32.totalorder %s24, 0
      %p93 = por %p91, %p92
      %s95 = sadd.s32 %s94, 1
      %p98 = scmp.eq.s32.totalorder %s18, 1
      %p99 = scmp.ne.s32.totalorder %s94, %s96
      %p100 = scmp.eq.s32.totalorder %s18, 0
      %p101 = por %p99, %p100
      %p102 = scmp.ne.s32.totalorder %s94, %s96
      %p103 = scmp.eq.s32.totalorder %s23, 1
      %p104 = por %p102, %p103
      %p105 = scmp.ne.s32.totalorder %s96, %s97
      %p106 = scmp.eq.s32.totalorder %s23, 0
      %p107 = por %p105, %p106
      %p108 = scmp.ne.s32.totalorder %s96, %s97
      %p109 = scmp.eq.s32.totalorder %s24, 1
      %p110 = por %p108, %p109
      %p112 = scmp.ne.s32.totalorder %s97, %s111
      %p113 = scmp.eq.s32.totalorder %s24, 0
      %p114 = por %p112, %p113
      %s116 = sadd.s32 %s115, 1
      %p119 = scmp.eq.s32.totalorder %s18, 1
      %p120 = scmp.ne.s32.totalorder %s115, %s117
      %p121 = scmp.eq.s32.totalorder %s18, 0
      %p122 = por %p120, %p121
      %p123 = scmp.ne.s32.totalorder %s115, %s117
      %p124 = scmp.eq.s32.totalorder %s23, 1
      %p125 = por %p123, %p124
      %p126 = scmp.ne.s32.totalorder %s117, %s118
      %p127 = scmp.eq.s32.totalorder %s23, 0
      %p128 = por %p126, %p127
      %p129 = scmp.ne.s32.totalorder %s117, %s118
      %p130 = scmp.eq.s32.totalorder %s24, 1
      %p131 = por %p129, %p130
      %p133 = scmp.ne.s32.totalorder %s118, %s132
      %p134 = scmp.eq.s32.totalorder %s24, 0
      %p135 = por %p133, %p134
      %s136 = ssub.s32 %s18, %s25
      %p137 = scmp.eq.s32.totalorder %s136, 0
      %s139 = sadd.s32 %s138, 1
      %s140 = scalar_select %p137, %s138, %s139
      %p143 = pneg %p137
      %p144 = scmp.eq.s32.totalorder %s18, 1
      %p145 = por %p143, %p144
      %p146 = scmp.ne.s32.totalorder %s138, %s141
      %p147 = scmp.eq.s32.totalorder %s18, 0
      %p148 = por %p146, %p147
      %p149 = scmp.ne.s32.totalorder %s138, %s141
      %p150 = scmp.eq.s32.totalorder %s23, 1
      %p151 = por %p149, %p150
      %p152 = scmp.ne.s32.totalorder %s141, %s142
      %p153 = scmp.eq.s32.totalorder %s23, 0
      %p154 = por %p152, %p153
      %p155 = scmp.ne.s32.totalorder %s141, %s142
      %p156 = scmp.eq.s32.totalorder %s24, 1
      %p157 = por %p155, %p156
      %p159 = scmp.ne.s32.totalorder %s142, %s158
      %p160 = scmp.eq.s32.totalorder %s24, 0
      %p161 = por %p159, %p160
      %p162 = scmp.le.s32.totalorder 1, %s18
      %p163 = scmp.lt.s32.totalorder %s18, 3
      %p164 = pnand %p162, %p163
      %p165 = pneg %p164
      // Predicated region
      $region9: #{basic_block_forward.1} parent=5 // pred_check
        _
      $region10: #{basic_block_forward.1} parent=5 // pred_check_branch
        %167 = sbr.rel (%p164) target = $region12
      $region11: #{basic_block_forward.1} parent=5 // pred_region
        %s168 = ssub.s32 %s18, 1
        // Predicated region
        $region13: #{basic_block_forward.1} parent=11 // pred_check
          %p169 = pneg %p65
        $region14: #{basic_block_forward.1} parent=11 // pred_check_branch
          %171 = sbr.rel (%p169) target = $region16
        $region15: #{basic_block_forward.1} parent=11 // pred_region
          _
        $region16: #{basic_block_forward.1} parent=11 // pred_fallthru
          _
        // Predicated region
        $region17: #{basic_block_forward.1} parent=11 // pred_check
          %p172 = pneg %p86
        $region18: #{basic_block_forward.1} parent=11 // pred_check_branch
          %174 = sbr.rel (%p172) target = $region20
        $region19: #{basic_block_forward.1} parent=11 // pred_region
          _
        $region20: #{basic_block_forward.1} parent=11 // pred_fallthru
          _
        // Predicated region
        $region21: #{basic_block_forward.1} parent=11 // pred_check
          %p175 = pneg %p107
        $region22: #{basic_block_forward.1} parent=11 // pred_check_branch
          %177 = sbr.rel (%p175) target = $region24
        $region23: #{basic_block_forward.1} parent=11 // pred_region
          _
        $region24: #{basic_block_forward.1} parent=11 // pred_fallthru
          _
        // Predicated region
        $region25: #{basic_block_forward.1} parent=11 // pred_check
          %p178 = pneg %p128
        $region26: #{basic_block_forward.1} parent=11 // pred_check_branch
          %180 = sbr.rel (%p178) target = $region28
        $region27: #{basic_block_forward.1} parent=11 // pred_region
          %s182 = ssub.s32 4096, 4096
          %183 = vsyncadd [#allocation8], %s182
          %s184 = sshll.u32 [#allocation7], 4
          %s185 = int_to_ptr.vmem [resolvable:$true] %s184
          %190 = dma.hbm_to_vmem [thread:$0]  %s4, 4096, %s185, [#allocation8], 128, 128, 8
        $region28: #{basic_block_forward.1} parent=11 // pred_fallthru
          _
      $region12: #{basic_block_forward.1} parent=5 // pred_fallthru
        _
      %p191 = scmp.lt.s32.totalorder %s18, 2
      // Predicated region
      $region29: #{basic_block_forward.1} parent=5 // pred_check
        %p192 = pneg %p191
      $region30: #{basic_block_forward.1} parent=5 // pred_check_branch
        %194 = sbr.rel (%p192) target = $region32
      $region31: #{basic_block_forward.1} parent=5 // pred_region
        // Predicated region
        $region33: #{basic_block_forward.1} parent=31 // pred_check
          %p195 = pneg %p38
        $region34: #{basic_block_forward.1} parent=31 // pred_check_branch
          %197 = sbr.rel (%p195) target = $region36
        $region35: #{basic_block_forward.1} parent=31 // pred_region
          %s198 = sand.u32 %s28, 1
          %s199 = scalar_lea.sflag [#allocation5], %s198
          %s200 = sand.u32 %s28, 1
          %s201 = smul.addr %s200, 256
          %s202 = scalar_lea.vmem [#allocation4], %s201
          %s203 = smul.u32 4, %s18
          %s205 = ssub.s32 4096, 4096
          %206 = vsyncadd %s199, %s205
          %s207 = smul.addr %s203, 8
          %s208 = smul.addr %s207, 128
          %s209 = scalar_lea.hbm %s0, %s208
          %s210 = sshll.u32 %s202, 4
          %s211 = int_to_ptr.vmem [resolvable:$true] %s210
          %216 = dma.hbm_to_vmem [thread:$0]  %s209, 4096, %s211, %s199, 128, 128, 8
        $region36: #{basic_block_forward.1} parent=31 // pred_fallthru
          _
      $region32: #{basic_block_forward.1} parent=5 // pred_fallthru
        _
      %p217 = scmp.le.s32.totalorder 1, %s18
      %p218 = scmp.lt.s32.totalorder %s18, 3
      %p219 = pnand %p217, %p218
      %p220 = pneg %p219
      // Predicated region
      $region37: #{basic_block_forward.1} parent=5 // pred_check
        _
      $region38: #{basic_block_forward.1} parent=5 // pred_check_branch
        %222 = sbr.rel (%p219) target = $region40
      $region39: #{basic_block_forward.1} parent=5 // pred_region
        %s223 = ssub.s32 %s18, 1
        %s224 = sand.u32 %s31, 1
        %s225 = scalar_lea.sflag [#allocation5], %s224
        %s226 = sand.u32 %s31, 1
        %s227 = smul.addr %s226, 256
        %s228 = scalar_lea.vmem [#allocation4], %s227
        // Predicated region
        $region41: #{basic_block_forward.1} parent=39 // pred_check
          %p229 = pneg %p44
        $region42: #{basic_block_forward.1} parent=39 // pred_check_branch
          %231 = sbr.rel (%p229) target = $region44
        $region43: #{basic_block_forward.1} parent=39 // pred_region
          %232 = dma.done %s225, 4096
        $region44: #{basic_block_forward.1} parent=39 // pred_fallthru
          _
        // Predicated region
        $region45: #{basic_block_forward.1} parent=39 // pred_check
          %p233 = pneg %p128
        $region46: #{basic_block_forward.1} parent=39 // pred_check_branch
          %235 = sbr.rel (%p233) target = $region48
        $region47: #{basic_block_forward.1} parent=39 // pred_region
          %236 = dma.done [#allocation8], 4096
        $region48: #{basic_block_forward.1} parent=39 // pred_fallthru
          _
        %s237 = sand.u32 %s31, 1
        %s238 = scalar_lea.sflag [#allocation5], %s237
        %s239 = sand.u32 %s31, 1
        %s240 = smul.addr %s239, 256
        %s241 = scalar_lea.vmem [#allocation4], %s240
        %p242 = pneg %p44
        %p243 = pneg %p41
        %p244 = pneg %p65
        %p245 = pneg %p62
        %p246 = pneg %p86
        %p247 = pneg %p83
        %p248 = pneg %p107
        %p249 = pneg %p104
        %p250 = pneg %p128
        %p251 = pneg %p125
        %p252 = pneg %p154
        %p253 = pneg %p151
        %s254 = sand.u32 %s141, 1
        %s255 = scalar_lea.sflag [#allocation6], %s254
        %s256 = sand.u32 %s141, 1
        %s257 = smul.addr %s256, 256
        %s258 = scalar_lea.vmem [#allocation9], %s257
        %s259 = smul.u32 4, %s23
        %s260 = smul.u32 4, %s23
        %p262 = scmp.eq.s32.totalorder %s23, 0
        // Predicated region
        $region49: #{basic_block_forward.1} parent=39 // pred_check
          %p263 = pneg %p262
        $region50: #{basic_block_forward.1} parent=39 // pred_check_branch
          %265 = sbr.rel (%p263) target = $region52
        $region51: #{basic_block_forward.1} parent=39 // pred_region
          %vm266 = vcmask 64512
          %267 = vst.msk [vmem:[#allocation2] sm:$0xff] %vm266, 0.0
          %268 = vst.msk [vmem:[#allocation2 + $0x8] sm:$0xff] %vm266, 0.0
          %269 = vst.msk [vmem:[#allocation2 + $0x10] sm:$0xff] %vm266, 0.0
          %270 = vst.msk [vmem:[#allocation2 + $0x18] sm:$0xff] %vm266, 0.0
          %271 = vst.msk [vmem:[#allocation2 + $0x20] sm:$0xff] %vm266, 0.0
          %272 = vst.msk [vmem:[#allocation2 + $0x28] sm:$0xff] %vm266, 0.0
          %273 = vst.msk [vmem:[#allocation2 + $0x30] sm:$0xff] %vm266, 0.0
          %274 = vst.msk [vmem:[#allocation2 + $0x38] sm:$0xff] %vm266, 0.0
          %275 = vst.msk [vmem:[#allocation2 + $0x40] sm:$0xff] %vm266, 0.0
          %276 = vst.msk [vmem:[#allocation2 + $0x48] sm:$0xff] %vm266, 0.0
          %277 = vst.msk [vmem:[#allocation2 + $0x50] sm:$0xff] %vm266, 0.0
          %278 = vst.msk [vmem:[#allocation2 + $0x58] sm:$0xff] %vm266, 0.0
          %279 = vst.msk [vmem:[#allocation2 + $0x60] sm:$0xff] %vm266, 0.0
          %280 = vst.msk [vmem:[#allocation2 + $0x68] sm:$0xff] %vm266, 0.0
          %281 = vst.msk [vmem:[#allocation2 + $0x70] sm:$0xff] %vm266, 0.0
          %282 = vst.msk [vmem:[#allocation2 + $0x78] sm:$0xff] %vm266, 0.0
          %283 = vst.msk [vmem:[#allocation2 + $0x80] sm:$0xff] %vm266, 0.0
          %284 = vst.msk [vmem:[#allocation2 + $0x88] sm:$0xff] %vm266, 0.0
          %285 = vst.msk [vmem:[#allocation2 + $0x90] sm:$0xff] %vm266, 0.0
          %286 = vst.msk [vmem:[#allocation2 + $0x98] sm:$0xff] %vm266, 0.0
          %287 = vst.msk [vmem:[#allocation2 + $0xa0] sm:$0xff] %vm266, 0.0
          %288 = vst.msk [vmem:[#allocation2 + $0xa8] sm:$0xff] %vm266, 0.0
          %289 = vst.msk [vmem:[#allocation2 + $0xb0] sm:$0xff] %vm266, 0.0
          %290 = vst.msk [vmem:[#allocation2 + $0xb8] sm:$0xff] %vm266, 0.0
          %291 = vst.msk [vmem:[#allocation2 + $0xc0] sm:$0xff] %vm266, 0.0
          %292 = vst.msk [vmem:[#allocation2 + $0xc8] sm:$0xff] %vm266, 0.0
          %293 = vst.msk [vmem:[#allocation2 + $0xd0] sm:$0xff] %vm266, 0.0
          %294 = vst.msk [vmem:[#allocation2 + $0xd8] sm:$0xff] %vm266, 0.0
          %295 = vst.msk [vmem:[#allocation2 + $0xe0] sm:$0xff] %vm266, 0.0
          %296 = vst.msk [vmem:[#allocation2 + $0xe8] sm:$0xff] %vm266, 0.0
          %297 = vst.msk [vmem:[#allocation2 + $0xf0] sm:$0xff] %vm266, 0.0
          %298 = vst.msk [vmem:[#allocation2 + $0xf8] sm:$0xff] %vm266, 0.0
          %299 = vst.msk [vmem:[#allocation2 + $0x100] sm:$0xff] %vm266, 0.0
          %300 = vst.msk [vmem:[#allocation2 + $0x108] sm:$0xff] %vm266, 0.0
          %301 = vst.msk [vmem:[#allocation2 + $0x110] sm:$0xff] %vm266, 0.0
          %302 = vst.msk [vmem:[#allocation2 + $0x118] sm:$0xff] %vm266, 0.0
          %303 = vst.msk [vmem:[#allocation3] sm:$0xff] %vm266, 0.0
          %304 = vst.msk [vmem:[#allocation3 + $0x8] sm:$0xff] %vm266, 0.0
          %305 = vst.msk [vmem:[#allocation3 + $0x10] sm:$0xff] %vm266, 0.0
          %306 = vst.msk [vmem:[#allocation3 + $0x18] sm:$0xff] %vm266, 0.0
          %307 = vst.msk [vmem:[#allocation3 + $0x20] sm:$0xff] %vm266, 0.0
          %308 = vst.msk [vmem:[#allocation3 + $0x28] sm:$0xff] %vm266, 0.0
          %309 = vst.msk [vmem:[#allocation3 + $0x30] sm:$0xff] %vm266, 0.0
          %310 = vst.msk [vmem:[#allocation3 + $0x38] sm:$0xff] %vm266, 0.0
          %311 = vst.msk [vmem:[#allocation3 + $0x40] sm:$0xff] %vm266, 0.0
          %312 = vst.msk [vmem:[#allocation3 + $0x48] sm:$0xff] %vm266, 0.0
          %313 = vst.msk [vmem:[#allocation3 + $0x50] sm:$0xff] %vm266, 0.0
          %314 = vst.msk [vmem:[#allocation3 + $0x58] sm:$0xff] %vm266, 0.0
          %315 = vst.msk [vmem:[#allocation3 + $0x60] sm:$0xff] %vm266, 0.0
          %316 = vst.msk [vmem:[#allocation3 + $0x68] sm:$0xff] %vm266, 0.0
          %317 = vst.msk [vmem:[#allocation3 + $0x70] sm:$0xff] %vm266, 0.0
          %318 = vst.msk [vmem:[#allocation3 + $0x78] sm:$0xff] %vm266, 0.0
          %319 = vst.msk [vmem:[#allocation3 + $0x80] sm:$0xff] %vm266, 0.0
          %320 = vst.msk [vmem:[#allocation3 + $0x88] sm:$0xff] %vm266, 0.0
          %321 = vst.msk [vmem:[#allocation3 + $0x90] sm:$0xff] %vm266, 0.0
          %322 = vst.msk [vmem:[#allocation3 + $0x98] sm:$0xff] %vm266, 0.0
          %323 = vst.msk [vmem:[#allocation3 + $0xa0] sm:$0xff] %vm266, 0.0
          %324 = vst.msk [vmem:[#allocation3 + $0xa8] sm:$0xff] %vm266, 0.0
          %325 = vst.msk [vmem:[#allocation3 + $0xb0] sm:$0xff] %vm266, 0.0
          %326 = vst.msk [vmem:[#allocation3 + $0xb8] sm:$0xff] %vm266, 0.0
          %327 = vst.msk [vmem:[#allocation3 + $0xc0] sm:$0xff] %vm266, 0.0
          %328 = vst.msk [vmem:[#allocation3 + $0xc8] sm:$0xff] %vm266, 0.0
          %329 = vst.msk [vmem:[#allocation3 + $0xd0] sm:$0xff] %vm266, 0.0
          %330 = vst.msk [vmem:[#allocation3 + $0xd8] sm:$0xff] %vm266, 0.0
          %331 = vst.msk [vmem:[#allocation3 + $0xe0] sm:$0xff] %vm266, 0.0
          %332 = vst.msk [vmem:[#allocation3 + $0xe8] sm:$0xff] %vm266, 0.0
          %333 = vst.msk [vmem:[#allocation3 + $0xf0] sm:$0xff] %vm266, 0.0
          %334 = vst.msk [vmem:[#allocation3 + $0xf8] sm:$0xff] %vm266, 0.0
          %335 = vst.msk [vmem:[#allocation3 + $0x100] sm:$0xff] %vm266, 0.0
          %336 = vst.msk [vmem:[#allocation3 + $0x108] sm:$0xff] %vm266, 0.0
          %337 = vst.msk [vmem:[#allocation3 + $0x110] sm:$0xff] %vm266, 0.0
          %338 = vst.msk [vmem:[#allocation3 + $0x118] sm:$0xff] %vm266, 0.0
        $region52: #{basic_block_forward.1} parent=39 // pred_fallthru
          _
        %v339 = vld [vmem:[%s228] sm:$0xff]
        %v340 = vld [vmem:[%s228 + $0x8] sm:$0xff]
        %v341 = vld [vmem:[%s228 + $0x10] sm:$0xff]
        %v342 = vld [vmem:[%s228 + $0x18] sm:$0xff]
        %v343 = vld [vmem:[%s228 + $0x20] sm:$0xff]
        %v344 = vld [vmem:[%s228 + $0x28] sm:$0xff]
        %v345 = vld [vmem:[%s228 + $0x30] sm:$0xff]
        %v346 = vld [vmem:[%s228 + $0x38] sm:$0xff]
        %v347 = vld [vmem:[%s228 + $0x40] sm:$0xff]
        %v348 = vld [vmem:[%s228 + $0x48] sm:$0xff]
        %v349 = vld [vmem:[%s228 + $0x50] sm:$0xff]
        %v350 = vld [vmem:[%s228 + $0x58] sm:$0xff]
        %v351 = vld [vmem:[%s228 + $0x60] sm:$0xff]
        %v352 = vld [vmem:[%s228 + $0x68] sm:$0xff]
        %v353 = vld [vmem:[%s228 + $0x70] sm:$0xff]
        %v354 = vld [vmem:[%s228 + $0x78] sm:$0xff]
        %v355 = vld [vmem:[%s228 + $0x80] sm:$0xff]
        %v356 = vld [vmem:[%s228 + $0x88] sm:$0xff]
        %v357 = vld [vmem:[%s228 + $0x90] sm:$0xff]
        %v358 = vld [vmem:[%s228 + $0x98] sm:$0xff]
        %v359 = vld [vmem:[%s228 + $0xa0] sm:$0xff]
        %v360 = vld [vmem:[%s228 + $0xa8] sm:$0xff]
        %v361 = vld [vmem:[%s228 + $0xb0] sm:$0xff]
        %v362 = vld [vmem:[%s228 + $0xb8] sm:$0xff]
        %v363 = vld [vmem:[%s228 + $0xc0] sm:$0xff]
        %v364 = vld [vmem:[%s228 + $0xc8] sm:$0xff]
        %v365 = vld [vmem:[%s228 + $0xd0] sm:$0xff]
        %v366 = vld [vmem:[%s228 + $0xd8] sm:$0xff]
        %v367 = vld [vmem:[%s228 + $0xe0] sm:$0xff]
        %v368 = vld [vmem:[%s228 + $0xe8] sm:$0xff]
        %v369 = vld [vmem:[%s228 + $0xf0] sm:$0xff]
        %v370 = vld [vmem:[%s228 + $0xf8] sm:$0xff]
        %vm371 = vcmask 64512
        %372 = vst.msk [vmem:[#allocation2 + $0x10] sm:$0xff] %vm371, %v339
        %373 = vst.msk [vmem:[#allocation2 + $0x18] sm:$0xff] %vm371, %v340
        %374 = vst.msk [vmem:[#allocation2 + $0x20] sm:$0xff] %vm371, %v341
        %375 = vst.msk [vmem:[#allocation2 + $0x28] sm:$0xff] %vm371, %v342
        %376 = vst.msk [vmem:[#allocation2 + $0x30] sm:$0xff] %vm371, %v343
        %377 = vst.msk [vmem:[#allocation2 + $0x38] sm:$0xff] %vm371, %v344
        %378 = vst.msk [vmem:[#allocation2 + $0x40] sm:$0xff] %vm371, %v345
        %379 = vst.msk [vmem:[#allocation2 + $0x48] sm:$0xff] %vm371, %v346
        %380 = vst.msk [vmem:[#allocation2 + $0x50] sm:$0xff] %vm371, %v347
        %381 = vst.msk [vmem:[#allocation2 + $0x58] sm:$0xff] %vm371, %v348
        %382 = vst.msk [vmem:[#allocation2 + $0x60] sm:$0xff] %vm371, %v349
        %383 = vst.msk [vmem:[#allocation2 + $0x68] sm:$0xff] %vm371, %v350
        %384 = vst.msk [vmem:[#allocation2 + $0x70] sm:$0xff] %vm371, %v351
        %385 = vst.msk [vmem:[#allocation2 + $0x78] sm:$0xff] %vm371, %v352
        %386 = vst.msk [vmem:[#allocation2 + $0x80] sm:$0xff] %vm371, %v353
        %387 = vst.msk [vmem:[#allocation2 + $0x88] sm:$0xff] %vm371, %v354
        %388 = vst.msk [vmem:[#allocation2 + $0x90] sm:$0xff] %vm371, %v355
        %389 = vst.msk [vmem:[#allocation2 + $0x98] sm:$0xff] %vm371, %v356
        %390 = vst.msk [vmem:[#allocation2 + $0xa0] sm:$0xff] %vm371, %v357
        %391 = vst.msk [vmem:[#allocation2 + $0xa8] sm:$0xff] %vm371, %v358
        %392 = vst.msk [vmem:[#allocation2 + $0xb0] sm:$0xff] %vm371, %v359
        %393 = vst.msk [vmem:[#allocation2 + $0xb8] sm:$0xff] %vm371, %v360
        %394 = vst.msk [vmem:[#allocation2 + $0xc0] sm:$0xff] %vm371, %v361
        %395 = vst.msk [vmem:[#allocation2 + $0xc8] sm:$0xff] %vm371, %v362
        %396 = vst.msk [vmem:[#allocation2 + $0xd0] sm:$0xff] %vm371, %v363
        %397 = vst.msk [vmem:[#allocation2 + $0xd8] sm:$0xff] %vm371, %v364
        %398 = vst.msk [vmem:[#allocation2 + $0xe0] sm:$0xff] %vm371, %v365
        %399 = vst.msk [vmem:[#allocation2 + $0xe8] sm:$0xff] %vm371, %v366
        %400 = vst.msk [vmem:[#allocation2 + $0xf0] sm:$0xff] %vm371, %v367
        %401 = vst.msk [vmem:[#allocation2 + $0xf8] sm:$0xff] %vm371, %v368
        %402 = vst.msk [vmem:[#allocation2 + $0x100] sm:$0xff] %vm371, %v369
        %403 = vst.msk [vmem:[#allocation2 + $0x108] sm:$0xff] %vm371, %v370
        %v404 = vld [vmem:[#allocation2 + $0x7] sm:$0xff]
        %v405 = vld [vmem:[#allocation2 + $0xf] sm:$0xff]
        %v406 = vld [vmem:[#allocation2 + $0x17] sm:$0xff]
        %v407 = vld [vmem:[#allocation2 + $0x1f] sm:$0xff]
        %v408 = vld [vmem:[#allocation2 + $0x27] sm:$0xff]
        %v409 = vld [vmem:[#allocation2 + $0x2f] sm:$0xff]
        %v410 = vld [vmem:[#allocation2 + $0x37] sm:$0xff]
        %v411 = vld [vmem:[#allocation2 + $0x3f] sm:$0xff]
        %v412 = vld [vmem:[#allocation2 + $0x47] sm:$0xff]
        %v413 = vld [vmem:[#allocation2 + $0x4f] sm:$0xff]
        %v414 = vld [vmem:[#allocation2 + $0x57] sm:$0xff]
        %v415 = vld [vmem:[#allocation2 + $0x5f] sm:$0xff]
        %v416 = vld [vmem:[#allocation2 + $0x67] sm:$0xff]
        %v417 = vld [vmem:[#allocation2 + $0x6f] sm:$0xff]
        %v418 = vld [vmem:[#allocation2 + $0x77] sm:$0xff]
        %v419 = vld [vmem:[#allocation2 + $0x7f] sm:$0xff]
        %v420 = vld [vmem:[#allocation2 + $0x87] sm:$0xff]
        %v421 = vld [vmem:[#allocation2 + $0x8f] sm:$0xff]
        %v422 = vld [vmem:[#allocation2 + $0x97] sm:$0xff]
        %v423 = vld [vmem:[#allocation2 + $0x9f] sm:$0xff]
        %v424 = vld [vmem:[#allocation2 + $0xa7] sm:$0xff]
        %v425 = vld [vmem:[#allocation2 + $0xaf] sm:$0xff]
        %v426 = vld [vmem:[#allocation2 + $0xb7] sm:$0xff]
        %v427 = vld [vmem:[#allocation2 + $0xbf] sm:$0xff]
        %v428 = vld [vmem:[#allocation2 + $0xc7] sm:$0xff]
        %v429 = vld [vmem:[#allocation2 + $0xcf] sm:$0xff]
        %v430 = vld [vmem:[#allocation2 + $0xd7] sm:$0xff]
        %v431 = vld [vmem:[#allocation2 + $0xdf] sm:$0xff]
        %v432 = vld [vmem:[#allocation2 + $0xe7] sm:$0xff]
        %v433 = vld [vmem:[#allocation2 + $0xef] sm:$0xff]
        %v434 = vld [vmem:[#allocation2 + $0xf7] sm:$0xff]
        %v435 = vld [vmem:[#allocation2 + $0xff] sm:$0xff]
        %v436 = vld [vmem:[#allocation7] sm:$0xff]
        %v437 = vld [vmem:[#allocation7 + $0x8] sm:$0xff]
        %v438 = vld [vmem:[#allocation7 + $0x10] sm:$0xff]
        %v439 = vld [vmem:[#allocation7 + $0x18] sm:$0xff]
        %v440 = vld [vmem:[#allocation7 + $0x20] sm:$0xff]
        %v441 = vld [vmem:[#allocation7 + $0x28] sm:$0xff]
        %v442 = vld [vmem:[#allocation7 + $0x30] sm:$0xff]
        %v443 = vld [vmem:[#allocation7 + $0x38] sm:$0xff]
        %v444 = vld [vmem:[#allocation7 + $0x40] sm:$0xff]
        %v445 = vld [vmem:[#allocation7 + $0x48] sm:$0xff]
        %v446 = vld [vmem:[#allocation7 + $0x50] sm:$0xff]
        %v447 = vld [vmem:[#allocation7 + $0x58] sm:$0xff]
        %v448 = vld [vmem:[#allocation7 + $0x60] sm:$0xff]
        %v449 = vld [vmem:[#allocation7 + $0x68] sm:$0xff]
        %v450 = vld [vmem:[#allocation7 + $0x70] sm:$0xff]
        %v451 = vld [vmem:[#allocation7 + $0x78] sm:$0xff]
        %v452 = vld [vmem:[#allocation7 + $0x80] sm:$0xff]
        %v453 = vld [vmem:[#allocation7 + $0x88] sm:$0xff]
        %v454 = vld [vmem:[#allocation7 + $0x90] sm:$0xff]
        %v455 = vld [vmem:[#allocation7 + $0x98] sm:$0xff]
        %v456 = vld [vmem:[#allocation7 + $0xa0] sm:$0xff]
        %v457 = vld [vmem:[#allocation7 + $0xa8] sm:$0xff]
        %v458 = vld [vmem:[#allocation7 + $0xb0] sm:$0xff]
        %v459 = vld [vmem:[#allocation7 + $0xb8] sm:$0xff]
        %v460 = vld [vmem:[#allocation7 + $0xc0] sm:$0xff]
        %v461 = vld [vmem:[#allocation7 + $0xc8] sm:$0xff]
        %v462 = vld [vmem:[#allocation7 + $0xd0] sm:$0xff]
        %v463 = vld [vmem:[#allocation7 + $0xd8] sm:$0xff]
        %v464 = vld [vmem:[#allocation7 + $0xe0] sm:$0xff]
        %v465 = vld [vmem:[#allocation7 + $0xe8] sm:$0xff]
        %v466 = vld [vmem:[#allocation7 + $0xf0] sm:$0xff]
        %v467 = vld [vmem:[#allocation7 + $0xf8] sm:$0xff]
        %469 = vset.pattern.permute.xlu0 0
        %470 = vperm.xlu0 %469, %v436
        %v471 = vpop.permute.xlu0 %470
        %474 = vset.pattern.permute.xlu0 0
        %475 = vperm.xlu0 %474, %v437
        %v476 = vpop.permute.xlu0 %475
        %479 = vset.pattern.permute.xlu0 0
        %480 = vperm.xlu0 %479, %v438
        %v481 = vpop.permute.xlu0 %480
        %484 = vset.pattern.permute.xlu0 0
        %485 = vperm.xlu0 %484, %v439
        %v486 = vpop.permute.xlu0 %485
        %489 = vset.pattern.permute.xlu0 0
        %490 = vperm.xlu0 %489, %v440
        %v491 = vpop.permute.xlu0 %490
        %494 = vset.pattern.permute.xlu0 0
        %495 = vperm.xlu0 %494, %v441
        %v496 = vpop.permute.xlu0 %495
        %499 = vset.pattern.permute.xlu0 0
        %500 = vperm.xlu0 %499, %v442
        %v501 = vpop.permute.xlu0 %500
        %504 = vset.pattern.permute.xlu0 0
        %505 = vperm.xlu0 %504, %v443
        %v506 = vpop.permute.xlu0 %505
        %509 = vset.pattern.permute.xlu0 0
        %510 = vperm.xlu0 %509, %v444
        %v511 = vpop.permute.xlu0 %510
        %514 = vset.pattern.permute.xlu0 0
        %515 = vperm.xlu0 %514, %v445
        %v516 = vpop.permute.xlu0 %515
        %519 = vset.pattern.permute.xlu0 0
        %520 = vperm.xlu0 %519, %v446
        %v521 = vpop.permute.xlu0 %520
        %524 = vset.pattern.permute.xlu0 0
        %525 = vperm.xlu0 %524, %v447
        %v526 = vpop.permute.xlu0 %525
        %529 = vset.pattern.permute.xlu0 0
        %530 = vperm.xlu0 %529, %v448
        %v531 = vpop.permute.xlu0 %530
        %534 = vset.pattern.permute.xlu0 0
        %535 = vperm.xlu0 %534, %v449
        %v536 = vpop.permute.xlu0 %535
        %539 = vset.pattern.permute.xlu0 0
        %540 = vperm.xlu0 %539, %v450
        %v541 = vpop.permute.xlu0 %540
        %544 = vset.pattern.permute.xlu0 0
        %545 = vperm.xlu0 %544, %v451
        %v546 = vpop.permute.xlu0 %545
        %549 = vset.pattern.permute.xlu0 0
        %550 = vperm.xlu0 %549, %v452
        %v551 = vpop.permute.xlu0 %550
        %554 = vset.pattern.permute.xlu0 0
        %555 = vperm.xlu0 %554, %v453
        %v556 = vpop.permute.xlu0 %555
        %559 = vset.pattern.permute.xlu0 0
        %560 = vperm.xlu0 %559, %v454
        %v561 = vpop.permute.xlu0 %560
        %564 = vset.pattern.permute.xlu0 0
        %565 = vperm.xlu0 %564, %v455
        %v566 = vpop.permute.xlu0 %565
        %569 = vset.pattern.permute.xlu0 0
        %570 = vperm.xlu0 %569, %v456
        %v571 = vpop.permute.xlu0 %570
        %574 = vset.pattern.permute.xlu0 0
        %575 = vperm.xlu0 %574, %v457
        %v576 = vpop.permute.xlu0 %575
        %579 = vset.pattern.permute.xlu0 0
        %580 = vperm.xlu0 %579, %v458
        %v581 = vpop.permute.xlu0 %580
        %584 = vset.pattern.permute.xlu0 0
        %585 = vperm.xlu0 %584, %v459
        %v586 = vpop.permute.xlu0 %585
        %589 = vset.pattern.permute.xlu0 0
        %590 = vperm.xlu0 %589, %v460
        %v591 = vpop.permute.xlu0 %590
        %594 = vset.pattern.permute.xlu0 0
        %595 = vperm.xlu0 %594, %v461
        %v596 = vpop.permute.xlu0 %595
        %599 = vset.pattern.permute.xlu0 0
        %600 = vperm.xlu0 %599, %v462
        %v601 = vpop.permute.xlu0 %600
        %604 = vset.pattern.permute.xlu0 0
        %605 = vperm.xlu0 %604, %v463
        %v606 = vpop.permute.xlu0 %605
        %609 = vset.pattern.permute.xlu0 0
        %610 = vperm.xlu0 %609, %v464
        %v611 = vpop.permute.xlu0 %610
        %614 = vset.pattern.permute.xlu0 0
        %615 = vperm.xlu0 %614, %v465
        %v616 = vpop.permute.xlu0 %615
        %619 = vset.pattern.permute.xlu0 0
        %620 = vperm.xlu0 %619, %v466
        %v621 = vpop.permute.xlu0 %620
        %624 = vset.pattern.permute.xlu0 0
        %625 = vperm.xlu0 %624, %v467
        %v626 = vpop.permute.xlu0 %625
        %v628 = vmul.f32 %v404, %v471
        %v629 = vmul.f32 %v405, %v476
        %v630 = vmul.f32 %v406, %v481
        %v631 = vmul.f32 %v407, %v486
        %v632 = vmul.f32 %v408, %v491
        %v633 = vmul.f32 %v409, %v496
        %v634 = vmul.f32 %v410, %v501
        %v635 = vmul.f32 %v411, %v506
        %v636 = vmul.f32 %v412, %v511
        %v637 = vmul.f32 %v413, %v516
        %v638 = vmul.f32 %v414, %v521
        %v639 = vmul.f32 %v415, %v526
        %v640 = vmul.f32 %v416, %v531
        %v641 = vmul.f32 %v417, %v536
        %v642 = vmul.f32 %v418, %v541
        %v643 = vmul.f32 %v419, %v546
        %v644 = vmul.f32 %v420, %v551
        %v645 = vmul.f32 %v421, %v556
        %v646 = vmul.f32 %v422, %v561
        %v647 = vmul.f32 %v423, %v566
        %v648 = vmul.f32 %v424, %v571
        %v649 = vmul.f32 %v425, %v576
        %v650 = vmul.f32 %v426, %v581
        %v651 = vmul.f32 %v427, %v586
        %v652 = vmul.f32 %v428, %v591
        %v653 = vmul.f32 %v429, %v596
        %v654 = vmul.f32 %v430, %v601
        %v655 = vmul.f32 %v431, %v606
        %v656 = vmul.f32 %v432, %v611
        %v657 = vmul.f32 %v433, %v616
        %v658 = vmul.f32 %v434, %v621
        %v659 = vmul.f32 %v435, %v626
        %v660 = vpack.c.bf16 %v629, %v628
        %v661 = vpack.c.bf16 %v631, %v630
        %v662 = vpack.c.bf16 %v633, %v632
        %v663 = vpack.c.bf16 %v635, %v634
        %v664 = vpack.c.bf16 %v637, %v636
        %v665 = vpack.c.bf16 %v639, %v638
        %v666 = vpack.c.bf16 %v641, %v640
        %v667 = vpack.c.bf16 %v643, %v642
        %v668 = vpack.c.bf16 %v645, %v644
        %v669 = vpack.c.bf16 %v647, %v646
        %v670 = vpack.c.bf16 %v649, %v648
        %v671 = vpack.c.bf16 %v651, %v650
        %v672 = vpack.c.bf16 %v653, %v652
        %v673 = vpack.c.bf16 %v655, %v654
        %v674 = vpack.c.bf16 %v657, %v656
        %v675 = vpack.c.bf16 %v659, %v658
        %v676 = vld [vmem:[%s1] sm:$0xf]
        %v677 = vld [vmem:[#allocation2 + $0x8] sm:$0xff]
        %v678 = vld [vmem:[#allocation2 + $0x10] sm:$0xff]
        %v679 = vld [vmem:[#allocation2 + $0x18] sm:$0xff]
        %v680 = vld [vmem:[#allocation2 + $0x20] sm:$0xff]
        %v681 = vld [vmem:[#allocation2 + $0x28] sm:$0xff]
        %v682 = vld [vmem:[#allocation2 + $0x30] sm:$0xff]
        %v683 = vld [vmem:[#allocation2 + $0x38] sm:$0xff]
        %v684 = vld [vmem:[#allocation2 + $0x40] sm:$0xff]
        %v685 = vld [vmem:[#allocation2 + $0x48] sm:$0xff]
        %v686 = vld [vmem:[#allocation2 + $0x50] sm:$0xff]
        %v687 = vld [vmem:[#allocation2 + $0x58] sm:$0xff]
        %v688 = vld [vmem:[#allocation2 + $0x60] sm:$0xff]
        %v689 = vld [vmem:[#allocation2 + $0x68] sm:$0xff]
        %v690 = vld [vmem:[#allocation2 + $0x70] sm:$0xff]
        %v691 = vld [vmem:[#allocation2 + $0x78] sm:$0xff]
        %v692 = vld [vmem:[#allocation2 + $0x80] sm:$0xff]
        %v693 = vld [vmem:[#allocation2 + $0x88] sm:$0xff]
        %v694 = vld [vmem:[#allocation2 + $0x90] sm:$0xff]
        %v695 = vld [vmem:[#allocation2 + $0x98] sm:$0xff]
        %v696 = vld [vmem:[#allocation2 + $0xa0] sm:$0xff]
        %v697 = vld [vmem:[#allocation2 + $0xa8] sm:$0xff]
        %v698 = vld [vmem:[#allocation2 + $0xb0] sm:$0xff]
        %v699 = vld [vmem:[#allocation2 + $0xb8] sm:$0xff]
        %v700 = vld [vmem:[#allocation2 + $0xc0] sm:$0xff]
        %v701 = vld [vmem:[#allocation2 + $0xc8] sm:$0xff]
        %v702 = vld [vmem:[#allocation2 + $0xd0] sm:$0xff]
        %v703 = vld [vmem:[#allocation2 + $0xd8] sm:$0xff]
        %v704 = vld [vmem:[#allocation2 + $0xe0] sm:$0xff]
        %v705 = vld [vmem:[#allocation2 + $0xe8] sm:$0xff]
        %v706 = vld [vmem:[#allocation2 + $0xf0] sm:$0xff]
        %v707 = vld [vmem:[#allocation2 + $0xf8] sm:$0xff]
        %v708 = vld [vmem:[#allocation2 + $0x100] sm:$0xff]
        %709 = vset.pattern.permute.xlu0 1
        %710 = vperm.xlu0 %709, %v436
        %v711 = vpop.permute.xlu0 %710
        %713 = vset.pattern.permute.xlu0 1
        %714 = vperm.xlu0 %713, %v437
        %v715 = vpop.permute.xlu0 %714
        %717 = vset.pattern.permute.xlu0 1
        %718 = vperm.xlu0 %717, %v438
        %v719 = vpop.permute.xlu0 %718
        %721 = vset.pattern.permute.xlu0 1
        %722 = vperm.xlu0 %721, %v439
        %v723 = vpop.permute.xlu0 %722
        %725 = vset.pattern.permute.xlu0 1
        %726 = vperm.xlu0 %725, %v440
        %v727 = vpop.permute.xlu0 %726
        %729 = vset.pattern.permute.xlu0 1
        %730 = vperm.xlu0 %729, %v441
        %v731 = vpop.permute.xlu0 %730
        %733 = vset.pattern.permute.xlu0 1
        %734 = vperm.xlu0 %733, %v442
        %v735 = vpop.permute.xlu0 %734
        %737 = vset.pattern.permute.xlu0 1
        %738 = vperm.xlu0 %737, %v443
        %v739 = vpop.permute.xlu0 %738
        %741 = vset.pattern.permute.xlu0 1
        %742 = vperm.xlu0 %741, %v444
        %v743 = vpop.permute.xlu0 %742
        %745 = vset.pattern.permute.xlu0 1
        %746 = vperm.xlu0 %745, %v445
        %v747 = vpop.permute.xlu0 %746
        %749 = vset.pattern.permute.xlu0 1
        %750 = vperm.xlu0 %749, %v446
        %v751 = vpop.permute.xlu0 %750
        %753 = vset.pattern.permute.xlu0 1
        %754 = vperm.xlu0 %753, %v447
        %v755 = vpop.permute.xlu0 %754
        %757 = vset.pattern.permute.xlu0 1
        %758 = vperm.xlu0 %757, %v448
        %v759 = vpop.permute.xlu0 %758
        %761 = vset.pattern.permute.xlu0 1
        %762 = vperm.xlu0 %761, %v449
        %v763 = vpop.permute.xlu0 %762
        %765 = vset.pattern.permute.xlu0 1
        %766 = vperm.xlu0 %765, %v450
        %v767 = vpop.permute.xlu0 %766
        %769 = vset.pattern.permute.xlu0 1
        %770 = vperm.xlu0 %769, %v451
        %v771 = vpop.permute.xlu0 %770
        %773 = vset.pattern.permute.xlu0 1
        %774 = vperm.xlu0 %773, %v452
        %v775 = vpop.permute.xlu0 %774
        %777 = vset.pattern.permute.xlu0 1
        %778 = vperm.xlu0 %777, %v453
        %v779 = vpop.permute.xlu0 %778
        %781 = vset.pattern.permute.xlu0 1
        %782 = vperm.xlu0 %781, %v454
        %v783 = vpop.permute.xlu0 %782
        %785 = vset.pattern.permute.xlu0 1
        %786 = vperm.xlu0 %785, %v455
        %v787 = vpop.permute.xlu0 %786
        %789 = vset.pattern.permute.xlu0 1
        %790 = vperm.xlu0 %789, %v456
        %v791 = vpop.permute.xlu0 %790
        %793 = vset.pattern.permute.xlu0 1
        %794 = vperm.xlu0 %793, %v457
        %v795 = vpop.permute.xlu0 %794
        %797 = vset.pattern.permute.xlu0 1
        %798 = vperm.xlu0 %797, %v458
        %v799 = vpop.permute.xlu0 %798
        %801 = vset.pattern.permute.xlu0 1
        %802 = vperm.xlu0 %801, %v459
        %v803 = vpop.permute.xlu0 %802
        %805 = vset.pattern.permute.xlu0 1
        %806 = vperm.xlu0 %805, %v460
        %v807 = vpop.permute.xlu0 %806
        %809 = vset.pattern.permute.xlu0 1
        %810 = vperm.xlu0 %809, %v461
        %v811 = vpop.permute.xlu0 %810
        %813 = vset.pattern.permute.xlu0 1
        %814 = vperm.xlu0 %813, %v462
        %v815 = vpop.permute.xlu0 %814
        %817 = vset.pattern.permute.xlu0 1
        %818 = vperm.xlu0 %817, %v463
        %v819 = vpop.permute.xlu0 %818
        %821 = vset.pattern.permute.xlu0 1
        %822 = vperm.xlu0 %821, %v464
        %v823 = vpop.permute.xlu0 %822
        %825 = vset.pattern.permute.xlu0 1
        %826 = vperm.xlu0 %825, %v465
        %v827 = vpop.permute.xlu0 %826
        %829 = vset.pattern.permute.xlu0 1
        %830 = vperm.xlu0 %829, %v466
        %v831 = vpop.permute.xlu0 %830
        %833 = vset.pattern.permute.xlu0 1
        %834 = vperm.xlu0 %833, %v467
        %v835 = vpop.permute.xlu0 %834
        %v837 = vmul.f32 %v677, %v711
        %v838 = vmul.f32 %v678, %v715
        %v839 = vmul.f32 %v679, %v719
        %v840 = vmul.f32 %v680, %v723
        %v841 = vmul.f32 %v681, %v727
        %v842 = vmul.f32 %v682, %v731
        %v843 = vmul.f32 %v683, %v735
        %v844 = vmul.f32 %v684, %v739
        %v845 = vmul.f32 %v685, %v743
        %v846 = vmul.f32 %v686, %v747
        %v847 = vmul.f32 %v687, %v751
        %v848 = vmul.f32 %v688, %v755
        %v849 = vmul.f32 %v689, %v759
        %v850 = vmul.f32 %v690, %v763
        %v851 = vmul.f32 %v691, %v767
        %v852 = vmul.f32 %v692, %v771
        %v853 = vmul.f32 %v693, %v775
        %v854 = vmul.f32 %v694, %v779
        %v855 = vmul.f32 %v695, %v783
        %v856 = vmul.f32 %v696, %v787
        %v857 = vmul.f32 %v697, %v791
        %v858 = vmul.f32 %v698, %v795
        %v859 = vmul.f32 %v699, %v799
        %v860 = vmul.f32 %v700, %v803
        %v861 = vmul.f32 %v701, %v807
        %v862 = vmul.f32 %v702, %v811
        %v863 = vmul.f32 %v703, %v815
        %v864 = vmul.f32 %v704, %v819
        %v865 = vmul.f32 %v705, %v823
        %v866 = vmul.f32 %v706, %v827
        %v867 = vmul.f32 %v707, %v831
        %v868 = vmul.f32 %v708, %v835
        %v869 = vpack.c.bf16 %v838, %v837
        %v870 = vpack.c.bf16 %v840, %v839
        %v871 = vpack.c.bf16 %v842, %v841
        %v872 = vpack.c.bf16 %v844, %v843
        %v873 = vpack.c.bf16 %v846, %v845
        %v874 = vpack.c.bf16 %v848, %v847
        %v875 = vpack.c.bf16 %v850, %v849
        %v876 = vpack.c.bf16 %v852, %v851
        %v877 = vpack.c.bf16 %v854, %v853
        %v878 = vpack.c.bf16 %v856, %v855
        %v879 = vpack.c.bf16 %v858, %v857
        %v880 = vpack.c.bf16 %v860, %v859
        %v881 = vpack.c.bf16 %v862, %v861
        %v882 = vpack.c.bf16 %v864, %v863
        %v883 = vpack.c.bf16 %v866, %v865
        %v884 = vpack.c.bf16 %v868, %v867
        %s885 = scalar_lea.vmem %s1, 4
        %v886 = vld [vmem:[%s885] sm:$0xf]
        %v888 = vsel %vm371, %v869, 0
        %v891 = vsel %vm371, %v870, 0
        %v894 = vsel %vm371, %v871, 0
        %v897 = vsel %vm371, %v872, 0
        %v900 = vsel %vm371, %v873, 0
        %v903 = vsel %vm371, %v874, 0
        %v906 = vsel %vm371, %v875, 0
        %v909 = vsel %vm371, %v876, 0
        %v912 = vsel %vm371, %v877, 0
        %v915 = vsel %vm371, %v878, 0
        %v918 = vsel %vm371, %v879, 0
        %v921 = vsel %vm371, %v880, 0
        %v924 = vsel %vm371, %v881, 0
        %v927 = vsel %vm371, %v882, 0
        %v930 = vsel %vm371, %v883, 0
        %v933 = vsel %vm371, %v884, 0
        %vm935 = vcmask 1043456
        %v937 = vsel %vm935, %v886, 0
        %939 = vmatprep.subr.bf16.mxu0 0
        %940 = vmatpush1.bf16.msra.mxu0 0
        %941 = vmatprep.subr.bf16.mxu0 0
        %942 = vmatpush1.bf16.msra.mxu0 0
        %943 = vmatprep.subr.bf16.mxu0 0
        %944 = vmatpush1.bf16.msra.mxu0 0
        %945 = vmatprep.subr.bf16.mxu0 0
        %946 = vmatpush1.bf16.msra.mxu0 0
        %947 = vmatprep.subr.bf16.mxu0 0
        %948 = vmatpush1.bf16.msra.mxu0 0
        %949 = vmatprep.subr.bf16.mxu0 0
        %950 = vmatpush1.bf16.msra.mxu0 0
        %951 = vmatprep.subr.bf16.mxu0 0
        %952 = vmatpush1.bf16.msra.mxu0 0
        %953 = vmatprep.subr.bf16.mxu0 0
        %954 = vmatpush1.bf16.msra.mxu0 %v937
        %955 = vmatprep.subr.bf16.mxu0 0
        %956 = vmatpush2.bf16.msra.mxu0 0
        %957 = vmatprep.subr.bf16.mxu0 0
        %958 = vmatpush2.bf16.msra.mxu0 0
        %959 = vmatprep.subr.bf16.mxu0 0
        %960 = vmatpush2.bf16.msra.mxu0 0
        %961 = vmatprep.subr.bf16.mxu0 0
        %962 = vmatpush2.bf16.msra.mxu0 0
        %963 = vmatprep.subr.bf16.mxu0 0
        %964 = vmatpush2.bf16.msra.mxu0 0
        %965 = vmatprep.subr.bf16.mxu0 0
        %966 = vmatpush2.bf16.msra.mxu0 0
        %967 = vmatprep.subr.bf16.mxu0 0
        %968 = vmatpush2.bf16.msra.mxu0 0
        %969 = vmatprep.subr.bf16.mxu0 0
        %970 = vmatpush2.bf16.msra.mxu0 0
        %971 = vmatprep.mubr.bf16.mxu0 0
        %972 = vmatmul.mubr.bf16.gmra.mxu0 %v888
        %v973 = vpop.f32.mrf.mxu0
        %v974 = vadd.f32 0.0, %v973
        %v975 = vpop.f32.mrf.mxu0
        %v976 = vpop.f32.mrf.mxu0
        %v977 = vadd.f32 0.0, %v976
        %v978 = vpop.f32.mrf.mxu0
        %979 = vmatprep.mubr.bf16.mxu0 0
        %980 = vmatmul.mubr.bf16.gmra.mxu0 %v891
        %v981 = vpop.f32.mrf.mxu0
        %v982 = vadd.f32 0.0, %v981
        %v983 = vpop.f32.mrf.mxu0
        %v984 = vpop.f32.mrf.mxu0
        %v985 = vadd.f32 0.0, %v984
        %v986 = vpop.f32.mrf.mxu0
        %987 = vmatprep.mubr.bf16.mxu0 0
        %988 = vmatmul.mubr.bf16.gmra.mxu0 %v894
        %v989 = vpop.f32.mrf.mxu0
        %v990 = vadd.f32 0.0, %v989
        %v991 = vpop.f32.mrf.mxu0
        %v992 = vpop.f32.mrf.mxu0
        %v993 = vadd.f32 0.0, %v992
        %v994 = vpop.f32.mrf.mxu0
        %995 = vmatprep.mubr.bf16.mxu0 0
        %996 = vmatmul.mubr.bf16.gmra.mxu0 %v897
        %v997 = vpop.f32.mrf.mxu0
        %v998 = vadd.f32 0.0, %v997
        %v999 = vpop.f32.mrf.mxu0
        %v1000 = vpop.f32.mrf.mxu0
        %v1001 = vadd.f32 0.0, %v1000
        %v1002 = vpop.f32.mrf.mxu0
        %1003 = vmatprep.mubr.bf16.mxu0 0
        %1004 = vmatmul.mubr.bf16.gmra.mxu0 %v900
        %v1005 = vpop.f32.mrf.mxu0
        %v1006 = vadd.f32 0.0, %v1005
        %v1007 = vpop.f32.mrf.mxu0
        %v1008 = vpop.f32.mrf.mxu0
        %v1009 = vadd.f32 0.0, %v1008
        %v1010 = vpop.f32.mrf.mxu0
        %1011 = vmatprep.mubr.bf16.mxu0 0
        %1012 = vmatmul.mubr.bf16.gmra.mxu0 %v903
        %v1013 = vpop.f32.mrf.mxu0
        %v1014 = vadd.f32 0.0, %v1013
        %v1015 = vpop.f32.mrf.mxu0
        %v1016 = vpop.f32.mrf.mxu0
        %v1017 = vadd.f32 0.0, %v1016
        %v1018 = vpop.f32.mrf.mxu0
        %1019 = vmatprep.mubr.bf16.mxu0 0
        %1020 = vmatmul.mubr.bf16.gmra.mxu0 %v906
        %v1021 = vpop.f32.mrf.mxu0
        %v1022 = vadd.f32 0.0, %v1021
        %v1023 = vpop.f32.mrf.mxu0
        %v1024 = vpop.f32.mrf.mxu0
        %v1025 = vadd.f32 0.0, %v1024
        %v1026 = vpop.f32.mrf.mxu0
        %1027 = vmatprep.mubr.bf16.mxu0 0
        %1028 = vmatmul.mubr.bf16.gmra.mxu0 %v909
        %v1029 = vpop.f32.mrf.mxu0
        %v1030 = vadd.f32 0.0, %v1029
        %v1031 = vpop.f32.mrf.mxu0
        %v1032 = vpop.f32.mrf.mxu0
        %v1033 = vadd.f32 0.0, %v1032
        %v1034 = vpop.f32.mrf.mxu0
        %1035 = vmatprep.mubr.bf16.mxu0 0
        %1036 = vmatmul.mubr.bf16.gmra.mxu0 %v912
        %v1037 = vpop.f32.mrf.mxu0
        %v1038 = vadd.f32 0.0, %v1037
        %v1039 = vpop.f32.mrf.mxu0
        %v1040 = vpop.f32.mrf.mxu0
        %v1041 = vadd.f32 0.0, %v1040
        %v1042 = vpop.f32.mrf.mxu0
        %1043 = vmatprep.mubr.bf16.mxu0 0
        %1044 = vmatmul.mubr.bf16.gmra.mxu0 %v915
        %v1045 = vpop.f32.mrf.mxu0
        %v1046 = vadd.f32 0.0, %v1045
        %v1047 = vpop.f32.mrf.mxu0
        %v1048 = vpop.f32.mrf.mxu0
        %v1049 = vadd.f32 0.0, %v1048
        %v1050 = vpop.f32.mrf.mxu0
        %1051 = vmatprep.mubr.bf16.mxu0 0
        %1052 = vmatmul.mubr.bf16.gmra.mxu0 %v918
        %v1053 = vpop.f32.mrf.mxu0
        %v1054 = vadd.f32 0.0, %v1053
        %v1055 = vpop.f32.mrf.mxu0
        %v1056 = vpop.f32.mrf.mxu0
        %v1057 = vadd.f32 0.0, %v1056
        %v1058 = vpop.f32.mrf.mxu0
        %1059 = vmatprep.mubr.bf16.mxu0 0
        %1060 = vmatmul.mubr.bf16.gmra.mxu0 %v921
        %v1061 = vpop.f32.mrf.mxu0
        %v1062 = vadd.f32 0.0, %v1061
        %v1063 = vpop.f32.mrf.mxu0
        %v1064 = vpop.f32.mrf.mxu0
        %v1065 = vadd.f32 0.0, %v1064
        %v1066 = vpop.f32.mrf.mxu0
        %1067 = vmatprep.mubr.bf16.mxu0 0
        %1068 = vmatmul.mubr.bf16.gmra.mxu0 %v924
        %v1069 = vpop.f32.mrf.mxu0
        %v1070 = vadd.f32 0.0, %v1069
        %v1071 = vpop.f32.mrf.mxu0
        %v1072 = vpop.f32.mrf.mxu0
        %v1073 = vadd.f32 0.0, %v1072
        %v1074 = vpop.f32.mrf.mxu0
        %1075 = vmatprep.mubr.bf16.mxu0 0
        %1076 = vmatmul.mubr.bf16.gmra.mxu0 %v927
        %v1077 = vpop.f32.mrf.mxu0
        %v1078 = vadd.f32 0.0, %v1077
        %v1079 = vpop.f32.mrf.mxu0
        %v1080 = vpop.f32.mrf.mxu0
        %v1081 = vadd.f32 0.0, %v1080
        %v1082 = vpop.f32.mrf.mxu0
        %1083 = vmatprep.mubr.bf16.mxu0 0
        %1084 = vmatmul.mubr.bf16.gmra.mxu0 %v930
        %v1085 = vpop.f32.mrf.mxu0
        %v1086 = vadd.f32 0.0, %v1085
        %v1087 = vpop.f32.mrf.mxu0
        %v1088 = vpop.f32.mrf.mxu0
        %v1089 = vadd.f32 0.0, %v1088
        %v1090 = vpop.f32.mrf.mxu0
        %1091 = vmatprep.mubr.bf16.mxu0 0
        %1092 = vmatmul.mubr.bf16.gmra.mxu0 %v933
        %v1093 = vpop.f32.mrf.mxu0
        %v1094 = vadd.f32 0.0, %v1093
        %v1095 = vpop.f32.mrf.mxu0
        %v1096 = vpop.f32.mrf.mxu0
        %v1097 = vadd.f32 0.0, %v1096
        %v1098 = vpop.f32.mrf.mxu0
        %1099 = vdwg.mxu0
        %v1101 = vsel %vm371, %v660, 0
        %v1104 = vsel %vm371, %v661, 0
        %v1107 = vsel %vm371, %v662, 0
        %v1110 = vsel %vm371, %v663, 0
        %v1113 = vsel %vm371, %v664, 0
        %v1116 = vsel %vm371, %v665, 0
        %v1119 = vsel %vm371, %v666, 0
        %v1122 = vsel %vm371, %v667, 0
        %v1125 = vsel %vm371, %v668, 0
        %v1128 = vsel %vm371, %v669, 0
        %v1131 = vsel %vm371, %v670, 0
        %v1134 = vsel %vm371, %v671, 0
        %v1137 = vsel %vm371, %v672, 0
        %v1140 = vsel %vm371, %v673, 0
        %v1143 = vsel %vm371, %v674, 0
        %v1146 = vsel %vm371, %v675, 0
        %v1149 = vsel %vm935, %v676, 0
        %1151 = vmatprep.subr.bf16.mxu0 0
        %1152 = vmatpush1.bf16.msra.mxu0 0
        %1153 = vmatprep.subr.bf16.mxu0 0
        %1154 = vmatpush1.bf16.msra.mxu0 0
        %1155 = vmatprep.subr.bf16.mxu0 0
        %1156 = vmatpush1.bf16.msra.mxu0 0
        %1157 = vmatprep.subr.bf16.mxu0 0
        %1158 = vmatpush1.bf16.msra.mxu0 0
        %1159 = vmatprep.subr.bf16.mxu0 0
        %1160 = vmatpush1.bf16.msra.mxu0 0
        %1161 = vmatprep.subr.bf16.mxu0 0
        %1162 = vmatpush1.bf16.msra.mxu0 0
        %1163 = vmatprep.subr.bf16.mxu0 0
        %1164 = vmatpush1.bf16.msra.mxu0 0
        %1165 = vmatprep.subr.bf16.mxu0 0
        %1166 = vmatpush1.bf16.msra.mxu0 %v1149
        %1167 = vmatprep.subr.bf16.mxu0 0
        %1168 = vmatpush2.bf16.msra.mxu0 0
        %1169 = vmatprep.subr.bf16.mxu0 0
        %1170 = vmatpush2.bf16.msra.mxu0 0
        %1171 = vmatprep.subr.bf16.mxu0 0
        %1172 = vmatpush2.bf16.msra.mxu0 0
        %1173 = vmatprep.subr.bf16.mxu0 0
        %1174 = vmatpush2.bf16.msra.mxu0 0
        %1175 = vmatprep.subr.bf16.mxu0 0
        %1176 = vmatpush2.bf16.msra.mxu0 0
        %1177 = vmatprep.subr.bf16.mxu0 0
        %1178 = vmatpush2.bf16.msra.mxu0 0
        %1179 = vmatprep.subr.bf16.mxu0 0
        %1180 = vmatpush2.bf16.msra.mxu0 0
        %1181 = vmatprep.subr.bf16.mxu0 0
        %1182 = vmatpush2.bf16.msra.mxu0 0
        %1183 = vmatprep.mubr.bf16.mxu0 0
        %1184 = vmatmul.mubr.bf16.gmra.mxu0 %v1101
        %v1185 = vpop.f32.mrf.mxu0
        %v1186 = vadd.f32 %v974, %v1185
        %v1187 = vpop.f32.mrf.mxu0
        %v1188 = vpop.f32.mrf.mxu0
        %v1189 = vadd.f32 %v977, %v1188
        %v1190 = vpop.f32.mrf.mxu0
        %1191 = vmatprep.mubr.bf16.mxu0 0
        %1192 = vmatmul.mubr.bf16.gmra.mxu0 %v1104
        %v1193 = vpop.f32.mrf.mxu0
        %v1194 = vadd.f32 %v982, %v1193
        %v1195 = vpop.f32.mrf.mxu0
        %v1196 = vpop.f32.mrf.mxu0
        %v1197 = vadd.f32 %v985, %v1196
        %v1198 = vpop.f32.mrf.mxu0
        %1199 = vmatprep.mubr.bf16.mxu0 0
        %1200 = vmatmul.mubr.bf16.gmra.mxu0 %v1107
        %v1201 = vpop.f32.mrf.mxu0
        %v1202 = vadd.f32 %v990, %v1201
        %v1203 = vpop.f32.mrf.mxu0
        %v1204 = vpop.f32.mrf.mxu0
        %v1205 = vadd.f32 %v993, %v1204
        %v1206 = vpop.f32.mrf.mxu0
        %1207 = vmatprep.mubr.bf16.mxu0 0
        %1208 = vmatmul.mubr.bf16.gmra.mxu0 %v1110
        %v1209 = vpop.f32.mrf.mxu0
        %v1210 = vadd.f32 %v998, %v1209
        %v1211 = vpop.f32.mrf.mxu0
        %v1212 = vpop.f32.mrf.mxu0
        %v1213 = vadd.f32 %v1001, %v1212
        %v1214 = vpop.f32.mrf.mxu0
        %1215 = vmatprep.mubr.bf16.mxu0 0
        %1216 = vmatmul.mubr.bf16.gmra.mxu0 %v1113
        %v1217 = vpop.f32.mrf.mxu0
        %v1218 = vadd.f32 %v1006, %v1217
        %v1219 = vpop.f32.mrf.mxu0
        %v1220 = vpop.f32.mrf.mxu0
        %v1221 = vadd.f32 %v1009, %v1220
        %v1222 = vpop.f32.mrf.mxu0
        %1223 = vmatprep.mubr.bf16.mxu0 0
        %1224 = vmatmul.mubr.bf16.gmra.mxu0 %v1116
        %v1225 = vpop.f32.mrf.mxu0
        %v1226 = vadd.f32 %v1014, %v1225
        %v1227 = vpop.f32.mrf.mxu0
        %v1228 = vpop.f32.mrf.mxu0
        %v1229 = vadd.f32 %v1017, %v1228
        %v1230 = vpop.f32.mrf.mxu0
        %1231 = vmatprep.mubr.bf16.mxu0 0
        %1232 = vmatmul.mubr.bf16.gmra.mxu0 %v1119
        %v1233 = vpop.f32.mrf.mxu0
        %v1234 = vadd.f32 %v1022, %v1233
        %v1235 = vpop.f32.mrf.mxu0
        %v1236 = vpop.f32.mrf.mxu0
        %v1237 = vadd.f32 %v1025, %v1236
        %v1238 = vpop.f32.mrf.mxu0
        %1239 = vmatprep.mubr.bf16.mxu0 0
        %1240 = vmatmul.mubr.bf16.gmra.mxu0 %v1122
        %v1241 = vpop.f32.mrf.mxu0
        %v1242 = vadd.f32 %v1030, %v1241
        %v1243 = vpop.f32.mrf.mxu0
        %v1244 = vpop.f32.mrf.mxu0
        %v1245 = vadd.f32 %v1033, %v1244
        %v1246 = vpop.f32.mrf.mxu0
        %1247 = vmatprep.mubr.bf16.mxu0 0
        %1248 = vmatmul.mubr.bf16.gmra.mxu0 %v1125
        %v1249 = vpop.f32.mrf.mxu0
        %v1250 = vadd.f32 %v1038, %v1249
        %v1251 = vpop.f32.mrf.mxu0
        %v1252 = vpop.f32.mrf.mxu0
        %v1253 = vadd.f32 %v1041, %v1252
        %v1254 = vpop.f32.mrf.mxu0
        %1255 = vmatprep.mubr.bf16.mxu0 0
        %1256 = vmatmul.mubr.bf16.gmra.mxu0 %v1128
        %v1257 = vpop.f32.mrf.mxu0
        %v1258 = vadd.f32 %v1046, %v1257
        %v1259 = vpop.f32.mrf.mxu0
        %v1260 = vpop.f32.mrf.mxu0
        %v1261 = vadd.f32 %v1049, %v1260
        %v1262 = vpop.f32.mrf.mxu0
        %1263 = vmatprep.mubr.bf16.mxu0 0
        %1264 = vmatmul.mubr.bf16.gmra.mxu0 %v1131
        %v1265 = vpop.f32.mrf.mxu0
        %v1266 = vadd.f32 %v1054, %v1265
        %v1267 = vpop.f32.mrf.mxu0
        %v1268 = vpop.f32.mrf.mxu0
        %v1269 = vadd.f32 %v1057, %v1268
        %v1270 = vpop.f32.mrf.mxu0
        %1271 = vmatprep.mubr.bf16.mxu0 0
        %1272 = vmatmul.mubr.bf16.gmra.mxu0 %v1134
        %v1273 = vpop.f32.mrf.mxu0
        %v1274 = vadd.f32 %v1062, %v1273
        %v1275 = vpop.f32.mrf.mxu0
        %v1276 = vpop.f32.mrf.mxu0
        %v1277 = vadd.f32 %v1065, %v1276
        %v1278 = vpop.f32.mrf.mxu0
        %1279 = vmatprep.mubr.bf16.mxu0 0
        %1280 = vmatmul.mubr.bf16.gmra.mxu0 %v1137
        %v1281 = vpop.f32.mrf.mxu0
        %v1282 = vadd.f32 %v1070, %v1281
        %v1283 = vpop.f32.mrf.mxu0
        %v1284 = vpop.f32.mrf.mxu0
        %v1285 = vadd.f32 %v1073, %v1284
        %v1286 = vpop.f32.mrf.mxu0
        %1287 = vmatprep.mubr.bf16.mxu0 0
        %1288 = vmatmul.mubr.bf16.gmra.mxu0 %v1140
        %v1289 = vpop.f32.mrf.mxu0
        %v1290 = vadd.f32 %v1078, %v1289
        %v1291 = vpop.f32.mrf.mxu0
        %v1292 = vpop.f32.mrf.mxu0
        %v1293 = vadd.f32 %v1081, %v1292
        %v1294 = vpop.f32.mrf.mxu0
        %1295 = vmatprep.mubr.bf16.mxu0 0
        %1296 = vmatmul.mubr.bf16.gmra.mxu0 %v1143
        %v1297 = vpop.f32.mrf.mxu0
        %v1298 = vadd.f32 %v1086, %v1297
        %v1299 = vpop.f32.mrf.mxu0
        %v1300 = vpop.f32.mrf.mxu0
        %v1301 = vadd.f32 %v1089, %v1300
        %v1302 = vpop.f32.mrf.mxu0
        %1303 = vmatprep.mubr.bf16.mxu0 0
        %1304 = vmatmul.mubr.bf16.gmra.mxu0 %v1146
        %v1305 = vpop.f32.mrf.mxu0
        %v1306 = vadd.f32 %v1094, %v1305
        %v1307 = vpop.f32.mrf.mxu0
        %v1308 = vpop.f32.mrf.mxu0
        %v1309 = vadd.f32 %v1097, %v1308
        %v1310 = vpop.f32.mrf.mxu0
        %1311 = vdwg.mxu0
        %v1312 = vld [vmem:[#allocation2 + $0x9] sm:$0xff]
        %v1313 = vld [vmem:[#allocation2 + $0x11] sm:$0xff]
        %v1314 = vld [vmem:[#allocation2 + $0x19] sm:$0xff]
        %v1315 = vld [vmem:[#allocation2 + $0x21] sm:$0xff]
        %v1316 = vld [vmem:[#allocation2 + $0x29] sm:$0xff]
        %v1317 = vld [vmem:[#allocation2 + $0x31] sm:$0xff]
        %v1318 = vld [vmem:[#allocation2 + $0x39] sm:$0xff]
        %v1319 = vld [vmem:[#allocation2 + $0x41] sm:$0xff]
        %v1320 = vld [vmem:[#allocation2 + $0x49] sm:$0xff]
        %v1321 = vld [vmem:[#allocation2 + $0x51] sm:$0xff]
        %v1322 = vld [vmem:[#allocation2 + $0x59] sm:$0xff]
        %v1323 = vld [vmem:[#allocation2 + $0x61] sm:$0xff]
        %v1324 = vld [vmem:[#allocation2 + $0x69] sm:$0xff]
        %v1325 = vld [vmem:[#allocation2 + $0x71] sm:$0xff]
        %v1326 = vld [vmem:[#allocation2 + $0x79] sm:$0xff]
        %v1327 = vld [vmem:[#allocation2 + $0x81] sm:$0xff]
        %v1328 = vld [vmem:[#allocation2 + $0x89] sm:$0xff]
        %v1329 = vld [vmem:[#allocation2 + $0x91] sm:$0xff]
        %v1330 = vld [vmem:[#allocation2 + $0x99] sm:$0xff]
        %v1331 = vld [vmem:[#allocation2 + $0xa1] sm:$0xff]
        %v1332 = vld [vmem:[#allocation2 + $0xa9] sm:$0xff]
        %v1333 = vld [vmem:[#allocation2 + $0xb1] sm:$0xff]
        %v1334 = vld [vmem:[#allocation2 + $0xb9] sm:$0xff]
        %v1335 = vld [vmem:[#allocation2 + $0xc1] sm:$0xff]
        %v1336 = vld [vmem:[#allocation2 + $0xc9] sm:$0xff]
        %v1337 = vld [vmem:[#allocation2 + $0xd1] sm:$0xff]
        %v1338 = vld [vmem:[#allocation2 + $0xd9] sm:$0xff]
        %v1339 = vld [vmem:[#allocation2 + $0xe1] sm:$0xff]
        %v1340 = vld [vmem:[#allocation2 + $0xe9] sm:$0xff]
        %v1341 = vld [vmem:[#allocation2 + $0xf1] sm:$0xff]
        %v1342 = vld [vmem:[#allocation2 + $0xf9] sm:$0xff]
        %v1343 = vld [vmem:[#allocation2 + $0x101] sm:$0xff]
        %1344 = vset.pattern.permute.xlu0 2
        %1345 = vperm.xlu0 %1344, %v436
        %v1346 = vpop.permute.xlu0 %1345
        %1348 = vset.pattern.permute.xlu0 2
        %1349 = vperm.xlu0 %1348, %v437
        %v1350 = vpop.permute.xlu0 %1349
        %1352 = vset.pattern.permute.xlu0 2
        %1353 = vperm.xlu0 %1352, %v438
        %v1354 = vpop.permute.xlu0 %1353
        %1356 = vset.pattern.permute.xlu0 2
        %1357 = vperm.xlu0 %1356, %v439
        %v1358 = vpop.permute.xlu0 %1357
        %1360 = vset.pattern.permute.xlu0 2
        %1361 = vperm.xlu0 %1360, %v440
        %v1362 = vpop.permute.xlu0 %1361
        %1364 = vset.pattern.permute.xlu0 2
        %1365 = vperm.xlu0 %1364, %v441
        %v1366 = vpop.permute.xlu0 %1365
        %1368 = vset.pattern.permute.xlu0 2
        %1369 = vperm.xlu0 %1368, %v442
        %v1370 = vpop.permute.xlu0 %1369
        %1372 = vset.pattern.permute.xlu0 2
        %1373 = vperm.xlu0 %1372, %v443
        %v1374 = vpop.permute.xlu0 %1373
        %1376 = vset.pattern.permute.xlu0 2
        %1377 = vperm.xlu0 %1376, %v444
        %v1378 = vpop.permute.xlu0 %1377
        %1380 = vset.pattern.permute.xlu0 2
        %1381 = vperm.xlu0 %1380, %v445
        %v1382 = vpop.permute.xlu0 %1381
        %1384 = vset.pattern.permute.xlu0 2
        %1385 = vperm.xlu0 %1384, %v446
        %v1386 = vpop.permute.xlu0 %1385
        %1388 = vset.pattern.permute.xlu0 2
        %1389 = vperm.xlu0 %1388, %v447
        %v1390 = vpop.permute.xlu0 %1389
        %1392 = vset.pattern.permute.xlu0 2
        %1393 = vperm.xlu0 %1392, %v448
        %v1394 = vpop.permute.xlu0 %1393
        %1396 = vset.pattern.permute.xlu0 2
        %1397 = vperm.xlu0 %1396, %v449
        %v1398 = vpop.permute.xlu0 %1397
        %1400 = vset.pattern.permute.xlu0 2
        %1401 = vperm.xlu0 %1400, %v450
        %v1402 = vpop.permute.xlu0 %1401
        %1404 = vset.pattern.permute.xlu0 2
        %1405 = vperm.xlu0 %1404, %v451
        %v1406 = vpop.permute.xlu0 %1405
        %1408 = vset.pattern.permute.xlu0 2
        %1409 = vperm.xlu0 %1408, %v452
        %v1410 = vpop.permute.xlu0 %1409
        %1412 = vset.pattern.permute.xlu0 2
        %1413 = vperm.xlu0 %1412, %v453
        %v1414 = vpop.permute.xlu0 %1413
        %1416 = vset.pattern.permute.xlu0 2
        %1417 = vperm.xlu0 %1416, %v454
        %v1418 = vpop.permute.xlu0 %1417
        %1420 = vset.pattern.permute.xlu0 2
        %1421 = vperm.xlu0 %1420, %v455
        %v1422 = vpop.permute.xlu0 %1421
        %1424 = vset.pattern.permute.xlu0 2
        %1425 = vperm.xlu0 %1424, %v456
        %v1426 = vpop.permute.xlu0 %1425
        %1428 = vset.pattern.permute.xlu0 2
        %1429 = vperm.xlu0 %1428, %v457
        %v1430 = vpop.permute.xlu0 %1429
        %1432 = vset.pattern.permute.xlu0 2
        %1433 = vperm.xlu0 %1432, %v458
        %v1434 = vpop.permute.xlu0 %1433
        %1436 = vset.pattern.permute.xlu0 2
        %1437 = vperm.xlu0 %1436, %v459
        %v1438 = vpop.permute.xlu0 %1437
        %1440 = vset.pattern.permute.xlu0 2
        %1441 = vperm.xlu0 %1440, %v460
        %v1442 = vpop.permute.xlu0 %1441
        %1444 = vset.pattern.permute.xlu0 2
        %1445 = vperm.xlu0 %1444, %v461
        %v1446 = vpop.permute.xlu0 %1445
        %1448 = vset.pattern.permute.xlu0 2
        %1449 = vperm.xlu0 %1448, %v462
        %v1450 = vpop.permute.xlu0 %1449
        %1452 = vset.pattern.permute.xlu0 2
        %1453 = vperm.xlu0 %1452, %v463
        %v1454 = vpop.permute.xlu0 %1453
        %1456 = vset.pattern.permute.xlu0 2
        %1457 = vperm.xlu0 %1456, %v464
        %v1458 = vpop.permute.xlu0 %1457
        %1460 = vset.pattern.permute.xlu0 2
        %1461 = vperm.xlu0 %1460, %v465
        %v1462 = vpop.permute.xlu0 %1461
        %1464 = vset.pattern.permute.xlu0 2
        %1465 = vperm.xlu0 %1464, %v466
        %v1466 = vpop.permute.xlu0 %1465
        %1468 = vset.pattern.permute.xlu0 2
        %1469 = vperm.xlu0 %1468, %v467
        %v1470 = vpop.permute.xlu0 %1469
        %v1472 = vmul.f32 %v1312, %v1346
        %v1473 = vmul.f32 %v1313, %v1350
        %v1474 = vmul.f32 %v1314, %v1354
        %v1475 = vmul.f32 %v1315, %v1358
        %v1476 = vmul.f32 %v1316, %v1362
        %v1477 = vmul.f32 %v1317, %v1366
        %v1478 = vmul.f32 %v1318, %v1370
        %v1479 = vmul.f32 %v1319, %v1374
        %v1480 = vmul.f32 %v1320, %v1378
        %v1481 = vmul.f32 %v1321, %v1382
        %v1482 = vmul.f32 %v1322, %v1386
        %v1483 = vmul.f32 %v1323, %v1390
        %v1484 = vmul.f32 %v1324, %v1394
        %v1485 = vmul.f32 %v1325, %v1398
        %v1486 = vmul.f32 %v1326, %v1402
        %v1487 = vmul.f32 %v1327, %v1406
        %v1488 = vmul.f32 %v1328, %v1410
        %v1489 = vmul.f32 %v1329, %v1414
        %v1490 = vmul.f32 %v1330, %v1418
        %v1491 = vmul.f32 %v1331, %v1422
        %v1492 = vmul.f32 %v1332, %v1426
        %v1493 = vmul.f32 %v1333, %v1430
        %v1494 = vmul.f32 %v1334, %v1434
        %v1495 = vmul.f32 %v1335, %v1438
        %v1496 = vmul.f32 %v1336, %v1442
        %v1497 = vmul.f32 %v1337, %v1446
        %v1498 = vmul.f32 %v1338, %v1450
        %v1499 = vmul.f32 %v1339, %v1454
        %v1500 = vmul.f32 %v1340, %v1458
        %v1501 = vmul.f32 %v1341, %v1462
        %v1502 = vmul.f32 %v1342, %v1466
        %v1503 = vmul.f32 %v1343, %v1470
        %v1504 = vpack.c.bf16 %v1473, %v1472
        %v1505 = vpack.c.bf16 %v1475, %v1474
        %v1506 = vpack.c.bf16 %v1477, %v1476
        %v1507 = vpack.c.bf16 %v1479, %v1478
        %v1508 = vpack.c.bf16 %v1481, %v1480
        %v1509 = vpack.c.bf16 %v1483, %v1482
        %v1510 = vpack.c.bf16 %v1485, %v1484
        %v1511 = vpack.c.bf16 %v1487, %v1486
        %v1512 = vpack.c.bf16 %v1489, %v1488
        %v1513 = vpack.c.bf16 %v1491, %v1490
        %v1514 = vpack.c.bf16 %v1493, %v1492
        %v1515 = vpack.c.bf16 %v1495, %v1494
        %v1516 = vpack.c.bf16 %v1497, %v1496
        %v1517 = vpack.c.bf16 %v1499, %v1498
        %v1518 = vpack.c.bf16 %v1501, %v1500
        %v1519 = vpack.c.bf16 %v1503, %v1502
        %s1520 = scalar_lea.vmem %s1, 8
        %v1521 = vld [vmem:[%s1520] sm:$0xf]
        %v1523 = vsel %vm371, %v1504, 0
        %v1526 = vsel %vm371, %v1505, 0
        %v1529 = vsel %vm371, %v1506, 0
        %v1532 = vsel %vm371, %v1507, 0
        %v1535 = vsel %vm371, %v1508, 0
        %v1538 = vsel %vm371, %v1509, 0
        %v1541 = vsel %vm371, %v1510, 0
        %v1544 = vsel %vm371, %v1511, 0
        %v1547 = vsel %vm371, %v1512, 0
        %v1550 = vsel %vm371, %v1513, 0
        %v1553 = vsel %vm371, %v1514, 0
        %v1556 = vsel %vm371, %v1515, 0
        %v1559 = vsel %vm371, %v1516, 0
        %v1562 = vsel %vm371, %v1517, 0
        %v1565 = vsel %vm371, %v1518, 0
        %v1568 = vsel %vm371, %v1519, 0
        %v1571 = vsel %vm935, %v1521, 0
        %1573 = vmatprep.subr.bf16.mxu0 0
        %1574 = vmatpush1.bf16.msra.mxu0 0
        %1575 = vmatprep.subr.bf16.mxu0 0
        %1576 = vmatpush1.bf16.msra.mxu0 0
        %1577 = vmatprep.subr.bf16.mxu0 0
        %1578 = vmatpush1.bf16.msra.mxu0 0
        %1579 = vmatprep.subr.bf16.mxu0 0
        %1580 = vmatpush1.bf16.msra.mxu0 0
        %1581 = vmatprep.subr.bf16.mxu0 0
        %1582 = vmatpush1.bf16.msra.mxu0 0
        %1583 = vmatprep.subr.bf16.mxu0 0
        %1584 = vmatpush1.bf16.msra.mxu0 0
        %1585 = vmatprep.subr.bf16.mxu0 0
        %1586 = vmatpush1.bf16.msra.mxu0 0
        %1587 = vmatprep.subr.bf16.mxu0 0
        %1588 = vmatpush1.bf16.msra.mxu0 %v1571
        %1589 = vmatprep.subr.bf16.mxu0 0
        %1590 = vmatpush2.bf16.msra.mxu0 0
        %1591 = vmatprep.subr.bf16.mxu0 0
        %1592 = vmatpush2.bf16.msra.mxu0 0
        %1593 = vmatprep.subr.bf16.mxu0 0
        %1594 = vmatpush2.bf16.msra.mxu0 0
        %1595 = vmatprep.subr.bf16.mxu0 0
        %1596 = vmatpush2.bf16.msra.mxu0 0
        %1597 = vmatprep.subr.bf16.mxu0 0
        %1598 = vmatpush2.bf16.msra.mxu0 0
        %1599 = vmatprep.subr.bf16.mxu0 0
        %1600 = vmatpush2.bf16.msra.mxu0 0
        %1601 = vmatprep.subr.bf16.mxu0 0
        %1602 = vmatpush2.bf16.msra.mxu0 0
        %1603 = vmatprep.subr.bf16.mxu0 0
        %1604 = vmatpush2.bf16.msra.mxu0 0
        %1605 = vmatprep.mubr.bf16.mxu0 0
        %1606 = vmatmul.mubr.bf16.gmra.mxu0 %v1523
        %v1607 = vpop.f32.mrf.mxu0
        %v1608 = vadd.f32 0.0, %v1607
        %v1609 = vpop.f32.mrf.mxu0
        %v1610 = vpop.f32.mrf.mxu0
        %v1611 = vadd.f32 0.0, %v1610
        %v1612 = vpop.f32.mrf.mxu0
        %1613 = vmatprep.mubr.bf16.mxu0 0
        %1614 = vmatmul.mubr.bf16.gmra.mxu0 %v1526
        %v1615 = vpop.f32.mrf.mxu0
        %v1616 = vadd.f32 0.0, %v1615
        %v1617 = vpop.f32.mrf.mxu0
        %v1618 = vpop.f32.mrf.mxu0
        %v1619 = vadd.f32 0.0, %v1618
        %v1620 = vpop.f32.mrf.mxu0
        %1621 = vmatprep.mubr.bf16.mxu0 0
        %1622 = vmatmul.mubr.bf16.gmra.mxu0 %v1529
        %v1623 = vpop.f32.mrf.mxu0
        %v1624 = vadd.f32 0.0, %v1623
        %v1625 = vpop.f32.mrf.mxu0
        %v1626 = vpop.f32.mrf.mxu0
        %v1627 = vadd.f32 0.0, %v1626
        %v1628 = vpop.f32.mrf.mxu0
        %1629 = vmatprep.mubr.bf16.mxu0 0
        %1630 = vmatmul.mubr.bf16.gmra.mxu0 %v1532
        %v1631 = vpop.f32.mrf.mxu0
        %v1632 = vadd.f32 0.0, %v1631
        %v1633 = vpop.f32.mrf.mxu0
        %v1634 = vpop.f32.mrf.mxu0
        %v1635 = vadd.f32 0.0, %v1634
        %v1636 = vpop.f32.mrf.mxu0
        %1637 = vmatprep.mubr.bf16.mxu0 0
        %1638 = vmatmul.mubr.bf16.gmra.mxu0 %v1535
        %v1639 = vpop.f32.mrf.mxu0
        %v1640 = vadd.f32 0.0, %v1639
        %v1641 = vpop.f32.mrf.mxu0
        %v1642 = vpop.f32.mrf.mxu0
        %v1643 = vadd.f32 0.0, %v1642
        %v1644 = vpop.f32.mrf.mxu0
        %1645 = vmatprep.mubr.bf16.mxu0 0
        %1646 = vmatmul.mubr.bf16.gmra.mxu0 %v1538
        %v1647 = vpop.f32.mrf.mxu0
        %v1648 = vadd.f32 0.0, %v1647
        %v1649 = vpop.f32.mrf.mxu0
        %v1650 = vpop.f32.mrf.mxu0
        %v1651 = vadd.f32 0.0, %v1650
        %v1652 = vpop.f32.mrf.mxu0
        %1653 = vmatprep.mubr.bf16.mxu0 0
        %1654 = vmatmul.mubr.bf16.gmra.mxu0 %v1541
        %v1655 = vpop.f32.mrf.mxu0
        %v1656 = vadd.f32 0.0, %v1655
        %v1657 = vpop.f32.mrf.mxu0
        %v1658 = vpop.f32.mrf.mxu0
        %v1659 = vadd.f32 0.0, %v1658
        %v1660 = vpop.f32.mrf.mxu0
        %1661 = vmatprep.mubr.bf16.mxu0 0
        %1662 = vmatmul.mubr.bf16.gmra.mxu0 %v1544
        %v1663 = vpop.f32.mrf.mxu0
        %v1664 = vadd.f32 0.0, %v1663
        %v1665 = vpop.f32.mrf.mxu0
        %v1666 = vpop.f32.mrf.mxu0
        %v1667 = vadd.f32 0.0, %v1666
        %v1668 = vpop.f32.mrf.mxu0
        %1669 = vmatprep.mubr.bf16.mxu0 0
        %1670 = vmatmul.mubr.bf16.gmra.mxu0 %v1547
        %v1671 = vpop.f32.mrf.mxu0
        %v1672 = vadd.f32 0.0, %v1671
        %v1673 = vpop.f32.mrf.mxu0
        %v1674 = vpop.f32.mrf.mxu0
        %v1675 = vadd.f32 0.0, %v1674
        %v1676 = vpop.f32.mrf.mxu0
        %1677 = vmatprep.mubr.bf16.mxu0 0
        %1678 = vmatmul.mubr.bf16.gmra.mxu0 %v1550
        %v1679 = vpop.f32.mrf.mxu0
        %v1680 = vadd.f32 0.0, %v1679
        %v1681 = vpop.f32.mrf.mxu0
        %v1682 = vpop.f32.mrf.mxu0
        %v1683 = vadd.f32 0.0, %v1682
        %v1684 = vpop.f32.mrf.mxu0
        %1685 = vmatprep.mubr.bf16.mxu0 0
        %1686 = vmatmul.mubr.bf16.gmra.mxu0 %v1553
        %v1687 = vpop.f32.mrf.mxu0
        %v1688 = vadd.f32 0.0, %v1687
        %v1689 = vpop.f32.mrf.mxu0
        %v1690 = vpop.f32.mrf.mxu0
        %v1691 = vadd.f32 0.0, %v1690
        %v1692 = vpop.f32.mrf.mxu0
        %1693 = vmatprep.mubr.bf16.mxu0 0
        %1694 = vmatmul.mubr.bf16.gmra.mxu0 %v1556
        %v1695 = vpop.f32.mrf.mxu0
        %v1696 = vadd.f32 0.0, %v1695
        %v1697 = vpop.f32.mrf.mxu0
        %v1698 = vpop.f32.mrf.mxu0
        %v1699 = vadd.f32 0.0, %v1698
        %v1700 = vpop.f32.mrf.mxu0
        %1701 = vmatprep.mubr.bf16.mxu0 0
        %1702 = vmatmul.mubr.bf16.gmra.mxu0 %v1559
        %v1703 = vpop.f32.mrf.mxu0
        %v1704 = vadd.f32 0.0, %v1703
        %v1705 = vpop.f32.mrf.mxu0
        %v1706 = vpop.f32.mrf.mxu0
        %v1707 = vadd.f32 0.0, %v1706
        %v1708 = vpop.f32.mrf.mxu0
        %1709 = vmatprep.mubr.bf16.mxu0 0
        %1710 = vmatmul.mubr.bf16.gmra.mxu0 %v1562
        %v1711 = vpop.f32.mrf.mxu0
        %v1712 = vadd.f32 0.0, %v1711
        %v1713 = vpop.f32.mrf.mxu0
        %v1714 = vpop.f32.mrf.mxu0
        %v1715 = vadd.f32 0.0, %v1714
        %v1716 = vpop.f32.mrf.mxu0
        %1717 = vmatprep.mubr.bf16.mxu0 0
        %1718 = vmatmul.mubr.bf16.gmra.mxu0 %v1565
        %v1719 = vpop.f32.mrf.mxu0
        %v1720 = vadd.f32 0.0, %v1719
        %v1721 = vpop.f32.mrf.mxu0
        %v1722 = vpop.f32.mrf.mxu0
        %v1723 = vadd.f32 0.0, %v1722
        %v1724 = vpop.f32.mrf.mxu0
        %1725 = vmatprep.mubr.bf16.mxu0 0
        %1726 = vmatmul.mubr.bf16.gmra.mxu0 %v1568
        %v1727 = vpop.f32.mrf.mxu0
        %v1728 = vadd.f32 0.0, %v1727
        %v1729 = vpop.f32.mrf.mxu0
        %v1730 = vpop.f32.mrf.mxu0
        %v1731 = vadd.f32 0.0, %v1730
        %v1732 = vpop.f32.mrf.mxu0
        %1733 = vdwg.mxu0
        %v1734 = vadd.f32 %v1186, %v1608
        %v1735 = vadd.f32 %v1189, %v1611
        %v1736 = vadd.f32 %v1194, %v1616
        %v1737 = vadd.f32 %v1197, %v1619
        %v1738 = vadd.f32 %v1202, %v1624
        %v1739 = vadd.f32 %v1205, %v1627
        %v1740 = vadd.f32 %v1210, %v1632
        %v1741 = vadd.f32 %v1213, %v1635
        %v1742 = vadd.f32 %v1218, %v1640
        %v1743 = vadd.f32 %v1221, %v1643
        %v1744 = vadd.f32 %v1226, %v1648
        %v1745 = vadd.f32 %v1229, %v1651
        %v1746 = vadd.f32 %v1234, %v1656
        %v1747 = vadd.f32 %v1237, %v1659
        %v1748 = vadd.f32 %v1242, %v1664
        %v1749 = vadd.f32 %v1245, %v1667
        %v1750 = vadd.f32 %v1250, %v1672
        %v1751 = vadd.f32 %v1253, %v1675
        %v1752 = vadd.f32 %v1258, %v1680
        %v1753 = vadd.f32 %v1261, %v1683
        %v1754 = vadd.f32 %v1266, %v1688
        %v1755 = vadd.f32 %v1269, %v1691
        %v1756 = vadd.f32 %v1274, %v1696
        %v1757 = vadd.f32 %v1277, %v1699
        %v1758 = vadd.f32 %v1282, %v1704
        %v1759 = vadd.f32 %v1285, %v1707
        %v1760 = vadd.f32 %v1290, %v1712
        %v1761 = vadd.f32 %v1293, %v1715
        %v1762 = vadd.f32 %v1298, %v1720
        %v1763 = vadd.f32 %v1301, %v1723
        %v1764 = vadd.f32 %v1306, %v1728
        %v1765 = vadd.f32 %v1309, %v1731
        %v1766 = vld [vmem:[#allocation2 + $0xf] sm:$0xff]
        %v1767 = vld [vmem:[#allocation2 + $0x17] sm:$0xff]
        %v1768 = vld [vmem:[#allocation2 + $0x1f] sm:$0xff]
        %v1769 = vld [vmem:[#allocation2 + $0x27] sm:$0xff]
        %v1770 = vld [vmem:[#allocation2 + $0x2f] sm:$0xff]
        %v1771 = vld [vmem:[#allocation2 + $0x37] sm:$0xff]
        %v1772 = vld [vmem:[#allocation2 + $0x3f] sm:$0xff]
        %v1773 = vld [vmem:[#allocation2 + $0x47] sm:$0xff]
        %v1774 = vld [vmem:[#allocation2 + $0x4f] sm:$0xff]
        %v1775 = vld [vmem:[#allocation2 + $0x57] sm:$0xff]
        %v1776 = vld [vmem:[#allocation2 + $0x5f] sm:$0xff]
        %v1777 = vld [vmem:[#allocation2 + $0x67] sm:$0xff]
        %v1778 = vld [vmem:[#allocation2 + $0x6f] sm:$0xff]
        %v1779 = vld [vmem:[#allocation2 + $0x77] sm:$0xff]
        %v1780 = vld [vmem:[#allocation2 + $0x7f] sm:$0xff]
        %v1781 = vld [vmem:[#allocation2 + $0x87] sm:$0xff]
        %v1782 = vld [vmem:[#allocation2 + $0x8f] sm:$0xff]
        %v1783 = vld [vmem:[#allocation2 + $0x97] sm:$0xff]
        %v1784 = vld [vmem:[#allocation2 + $0x9f] sm:$0xff]
        %v1785 = vld [vmem:[#allocation2 + $0xa7] sm:$0xff]
        %v1786 = vld [vmem:[#allocation2 + $0xaf] sm:$0xff]
        %v1787 = vld [vmem:[#allocation2 + $0xb7] sm:$0xff]
        %v1788 = vld [vmem:[#allocation2 + $0xbf] sm:$0xff]
        %v1789 = vld [vmem:[#allocation2 + $0xc7] sm:$0xff]
        %v1790 = vld [vmem:[#allocation2 + $0xcf] sm:$0xff]
        %v1791 = vld [vmem:[#allocation2 + $0xd7] sm:$0xff]
        %v1792 = vld [vmem:[#allocation2 + $0xdf] sm:$0xff]
        %v1793 = vld [vmem:[#allocation2 + $0xe7] sm:$0xff]
        %v1794 = vld [vmem:[#allocation2 + $0xef] sm:$0xff]
        %v1795 = vld [vmem:[#allocation2 + $0xf7] sm:$0xff]
        %v1796 = vld [vmem:[#allocation2 + $0xff] sm:$0xff]
        %v1797 = vld [vmem:[#allocation2 + $0x107] sm:$0xff]
        %1798 = vset.pattern.permute.xlu0 3
        %1799 = vperm.xlu0 %1798, %v436
        %v1800 = vpop.permute.xlu0 %1799
        %1802 = vset.pattern.permute.xlu0 3
        %1803 = vperm.xlu0 %1802, %v437
        %v1804 = vpop.permute.xlu0 %1803
        %1806 = vset.pattern.permute.xlu0 3
        %1807 = vperm.xlu0 %1806, %v438
        %v1808 = vpop.permute.xlu0 %1807
        %1810 = vset.pattern.permute.xlu0 3
        %1811 = vperm.xlu0 %1810, %v439
        %v1812 = vpop.permute.xlu0 %1811
        %1814 = vset.pattern.permute.xlu0 3
        %1815 = vperm.xlu0 %1814, %v440
        %v1816 = vpop.permute.xlu0 %1815
        %1818 = vset.pattern.permute.xlu0 3
        %1819 = vperm.xlu0 %1818, %v441
        %v1820 = vpop.permute.xlu0 %1819
        %1822 = vset.pattern.permute.xlu0 3
        %1823 = vperm.xlu0 %1822, %v442
        %v1824 = vpop.permute.xlu0 %1823
        %1826 = vset.pattern.permute.xlu0 3
        %1827 = vperm.xlu0 %1826, %v443
        %v1828 = vpop.permute.xlu0 %1827
        %1830 = vset.pattern.permute.xlu0 3
        %1831 = vperm.xlu0 %1830, %v444
        %v1832 = vpop.permute.xlu0 %1831
        %1834 = vset.pattern.permute.xlu0 3
        %1835 = vperm.xlu0 %1834, %v445
        %v1836 = vpop.permute.xlu0 %1835
        %1838 = vset.pattern.permute.xlu0 3
        %1839 = vperm.xlu0 %1838, %v446
        %v1840 = vpop.permute.xlu0 %1839
        %1842 = vset.pattern.permute.xlu0 3
        %1843 = vperm.xlu0 %1842, %v447
        %v1844 = vpop.permute.xlu0 %1843
        %1846 = vset.pattern.permute.xlu0 3
        %1847 = vperm.xlu0 %1846, %v448
        %v1848 = vpop.permute.xlu0 %1847
        %1850 = vset.pattern.permute.xlu0 3
        %1851 = vperm.xlu0 %1850, %v449
        %v1852 = vpop.permute.xlu0 %1851
        %1854 = vset.pattern.permute.xlu0 3
        %1855 = vperm.xlu0 %1854, %v450
        %v1856 = vpop.permute.xlu0 %1855
        %1858 = vset.pattern.permute.xlu0 3
        %1859 = vperm.xlu0 %1858, %v451
        %v1860 = vpop.permute.xlu0 %1859
        %1862 = vset.pattern.permute.xlu0 3
        %1863 = vperm.xlu0 %1862, %v452
        %v1864 = vpop.permute.xlu0 %1863
        %1866 = vset.pattern.permute.xlu0 3
        %1867 = vperm.xlu0 %1866, %v453
        %v1868 = vpop.permute.xlu0 %1867
        %1870 = vset.pattern.permute.xlu0 3
        %1871 = vperm.xlu0 %1870, %v454
        %v1872 = vpop.permute.xlu0 %1871
        %1874 = vset.pattern.permute.xlu0 3
        %1875 = vperm.xlu0 %1874, %v455
        %v1876 = vpop.permute.xlu0 %1875
        %1878 = vset.pattern.permute.xlu0 3
        %1879 = vperm.xlu0 %1878, %v456
        %v1880 = vpop.permute.xlu0 %1879
        %1882 = vset.pattern.permute.xlu0 3
        %1883 = vperm.xlu0 %1882, %v457
        %v1884 = vpop.permute.xlu0 %1883
        %1886 = vset.pattern.permute.xlu0 3
        %1887 = vperm.xlu0 %1886, %v458
        %v1888 = vpop.permute.xlu0 %1887
        %1890 = vset.pattern.permute.xlu0 3
        %1891 = vperm.xlu0 %1890, %v459
        %v1892 = vpop.permute.xlu0 %1891
        %1894 = vset.pattern.permute.xlu0 3
        %1895 = vperm.xlu0 %1894, %v460
        %v1896 = vpop.permute.xlu0 %1895
        %1898 = vset.pattern.permute.xlu0 3
        %1899 = vperm.xlu0 %1898, %v461
        %v1900 = vpop.permute.xlu0 %1899
        %1902 = vset.pattern.permute.xlu0 3
        %1903 = vperm.xlu0 %1902, %v462
        %v1904 = vpop.permute.xlu0 %1903
        %1906 = vset.pattern.permute.xlu0 3
        %1907 = vperm.xlu0 %1906, %v463
        %v1908 = vpop.permute.xlu0 %1907
        %1910 = vset.pattern.permute.xlu0 3
        %1911 = vperm.xlu0 %1910, %v464
        %v1912 = vpop.permute.xlu0 %1911
        %1914 = vset.pattern.permute.xlu0 3
        %1915 = vperm.xlu0 %1914, %v465
        %v1916 = vpop.permute.xlu0 %1915
        %1918 = vset.pattern.permute.xlu0 3
        %1919 = vperm.xlu0 %1918, %v466
        %v1920 = vpop.permute.xlu0 %1919
        %1922 = vset.pattern.permute.xlu0 3
        %1923 = vperm.xlu0 %1922, %v467
        %v1924 = vpop.permute.xlu0 %1923
        %v1926 = vmul.f32 %v1766, %v1800
        %v1927 = vmul.f32 %v1767, %v1804
        %v1928 = vmul.f32 %v1768, %v1808
        %v1929 = vmul.f32 %v1769, %v1812
        %v1930 = vmul.f32 %v1770, %v1816
        %v1931 = vmul.f32 %v1771, %v1820
        %v1932 = vmul.f32 %v1772, %v1824
        %v1933 = vmul.f32 %v1773, %v1828
        %v1934 = vmul.f32 %v1774, %v1832
        %v1935 = vmul.f32 %v1775, %v1836
        %v1936 = vmul.f32 %v1776, %v1840
        %v1937 = vmul.f32 %v1777, %v1844
        %v1938 = vmul.f32 %v1778, %v1848
        %v1939 = vmul.f32 %v1779, %v1852
        %v1940 = vmul.f32 %v1780, %v1856
        %v1941 = vmul.f32 %v1781, %v1860
        %v1942 = vmul.f32 %v1782, %v1864
        %v1943 = vmul.f32 %v1783, %v1868
        %v1944 = vmul.f32 %v1784, %v1872
        %v1945 = vmul.f32 %v1785, %v1876
        %v1946 = vmul.f32 %v1786, %v1880
        %v1947 = vmul.f32 %v1787, %v1884
        %v1948 = vmul.f32 %v1788, %v1888
        %v1949 = vmul.f32 %v1789, %v1892
        %v1950 = vmul.f32 %v1790, %v1896
        %v1951 = vmul.f32 %v1791, %v1900
        %v1952 = vmul.f32 %v1792, %v1904
        %v1953 = vmul.f32 %v1793, %v1908
        %v1954 = vmul.f32 %v1794, %v1912
        %v1955 = vmul.f32 %v1795, %v1916
        %v1956 = vmul.f32 %v1796, %v1920
        %v1957 = vmul.f32 %v1797, %v1924
        %v1958 = vpack.c.bf16 %v1927, %v1926
        %v1959 = vpack.c.bf16 %v1929, %v1928
        %v1960 = vpack.c.bf16 %v1931, %v1930
        %v1961 = vpack.c.bf16 %v1933, %v1932
        %v1962 = vpack.c.bf16 %v1935, %v1934
        %v1963 = vpack.c.bf16 %v1937, %v1936
        %v1964 = vpack.c.bf16 %v1939, %v1938
        %v1965 = vpack.c.bf16 %v1941, %v1940
        %v1966 = vpack.c.bf16 %v1943, %v1942
        %v1967 = vpack.c.bf16 %v1945, %v1944
        %v1968 = vpack.c.bf16 %v1947, %v1946
        %v1969 = vpack.c.bf16 %v1949, %v1948
        %v1970 = vpack.c.bf16 %v1951, %v1950
        %v1971 = vpack.c.bf16 %v1953, %v1952
        %v1972 = vpack.c.bf16 %v1955, %v1954
        %v1973 = vpack.c.bf16 %v1957, %v1956
        %s1974 = scalar_lea.vmem %s1, 12
        %v1975 = vld [vmem:[%s1974] sm:$0xf]
        %v1977 = vsel %vm371, %v1958, 0
        %v1980 = vsel %vm371, %v1959, 0
        %v1983 = vsel %vm371, %v1960, 0
        %v1986 = vsel %vm371, %v1961, 0
        %v1989 = vsel %vm371, %v1962, 0
        %v1992 = vsel %vm371, %v1963, 0
        %v1995 = vsel %vm371, %v1964, 0
        %v1998 = vsel %vm371, %v1965, 0
        %v2001 = vsel %vm371, %v1966, 0
        %v2004 = vsel %vm371, %v1967, 0
        %v2007 = vsel %vm371, %v1968, 0
        %v2010 = vsel %vm371, %v1969, 0
        %v2013 = vsel %vm371, %v1970, 0
        %v2016 = vsel %vm371, %v1971, 0
        %v2019 = vsel %vm371, %v1972, 0
        %v2022 = vsel %vm371, %v1973, 0
        %v2025 = vsel %vm935, %v1975, 0
        %2027 = vmatprep.subr.bf16.mxu0 0
        %2028 = vmatpush1.bf16.msra.mxu0 0
        %2029 = vmatprep.subr.bf16.mxu0 0
        %2030 = vmatpush1.bf16.msra.mxu0 0
        %2031 = vmatprep.subr.bf16.mxu0 0
        %2032 = vmatpush1.bf16.msra.mxu0 0
        %2033 = vmatprep.subr.bf16.mxu0 0
        %2034 = vmatpush1.bf16.msra.mxu0 0
        %2035 = vmatprep.subr.bf16.mxu0 0
        %2036 = vmatpush1.bf16.msra.mxu0 0
        %2037 = vmatprep.subr.bf16.mxu0 0
        %2038 = vmatpush1.bf16.msra.mxu0 0
        %2039 = vmatprep.subr.bf16.mxu0 0
        %2040 = vmatpush1.bf16.msra.mxu0 0
        %2041 = vmatprep.subr.bf16.mxu0 0
        %2042 = vmatpush1.bf16.msra.mxu0 %v2025
        %2043 = vmatprep.subr.bf16.mxu0 0
        %2044 = vmatpush2.bf16.msra.mxu0 0
        %2045 = vmatprep.subr.bf16.mxu0 0
        %2046 = vmatpush2.bf16.msra.mxu0 0
        %2047 = vmatprep.subr.bf16.mxu0 0
        %2048 = vmatpush2.bf16.msra.mxu0 0
        %2049 = vmatprep.subr.bf16.mxu0 0
        %2050 = vmatpush2.bf16.msra.mxu0 0
        %2051 = vmatprep.subr.bf16.mxu0 0
        %2052 = vmatpush2.bf16.msra.mxu0 0
        %2053 = vmatprep.subr.bf16.mxu0 0
        %2054 = vmatpush2.bf16.msra.mxu0 0
        %2055 = vmatprep.subr.bf16.mxu0 0
        %2056 = vmatpush2.bf16.msra.mxu0 0
        %2057 = vmatprep.subr.bf16.mxu0 0
        %2058 = vmatpush2.bf16.msra.mxu0 0
        %2059 = vmatprep.mubr.bf16.mxu0 0
        %2060 = vmatmul.mubr.bf16.gmra.mxu0 %v1977
        %v2061 = vpop.f32.mrf.mxu0
        %v2062 = vadd.f32 0.0, %v2061
        %v2063 = vpop.f32.mrf.mxu0
        %v2064 = vpop.f32.mrf.mxu0
        %v2065 = vadd.f32 0.0, %v2064
        %v2066 = vpop.f32.mrf.mxu0
        %2067 = vmatprep.mubr.bf16.mxu0 0
        %2068 = vmatmul.mubr.bf16.gmra.mxu0 %v1980
        %v2069 = vpop.f32.mrf.mxu0
        %v2070 = vadd.f32 0.0, %v2069
        %v2071 = vpop.f32.mrf.mxu0
        %v2072 = vpop.f32.mrf.mxu0
        %v2073 = vadd.f32 0.0, %v2072
        %v2074 = vpop.f32.mrf.mxu0
        %2075 = vmatprep.mubr.bf16.mxu0 0
        %2076 = vmatmul.mubr.bf16.gmra.mxu0 %v1983
        %v2077 = vpop.f32.mrf.mxu0
        %v2078 = vadd.f32 0.0, %v2077
        %v2079 = vpop.f32.mrf.mxu0
        %v2080 = vpop.f32.mrf.mxu0
        %v2081 = vadd.f32 0.0, %v2080
        %v2082 = vpop.f32.mrf.mxu0
        %2083 = vmatprep.mubr.bf16.mxu0 0
        %2084 = vmatmul.mubr.bf16.gmra.mxu0 %v1986
        %v2085 = vpop.f32.mrf.mxu0
        %v2086 = vadd.f32 0.0, %v2085
        %v2087 = vpop.f32.mrf.mxu0
        %v2088 = vpop.f32.mrf.mxu0
        %v2089 = vadd.f32 0.0, %v2088
        %v2090 = vpop.f32.mrf.mxu0
        %2091 = vmatprep.mubr.bf16.mxu0 0
        %2092 = vmatmul.mubr.bf16.gmra.mxu0 %v1989
        %v2093 = vpop.f32.mrf.mxu0
        %v2094 = vadd.f32 0.0, %v2093
        %v2095 = vpop.f32.mrf.mxu0
        %v2096 = vpop.f32.mrf.mxu0
        %v2097 = vadd.f32 0.0, %v2096
        %v2098 = vpop.f32.mrf.mxu0
        %2099 = vmatprep.mubr.bf16.mxu0 0
        %2100 = vmatmul.mubr.bf16.gmra.mxu0 %v1992
        %v2101 = vpop.f32.mrf.mxu0
        %v2102 = vadd.f32 0.0, %v2101
        %v2103 = vpop.f32.mrf.mxu0
        %v2104 = vpop.f32.mrf.mxu0
        %v2105 = vadd.f32 0.0, %v2104
        %v2106 = vpop.f32.mrf.mxu0
        %2107 = vmatprep.mubr.bf16.mxu0 0
        %2108 = vmatmul.mubr.bf16.gmra.mxu0 %v1995
        %v2109 = vpop.f32.mrf.mxu0
        %v2110 = vadd.f32 0.0, %v2109
        %v2111 = vpop.f32.mrf.mxu0
        %v2112 = vpop.f32.mrf.mxu0
        %v2113 = vadd.f32 0.0, %v2112
        %v2114 = vpop.f32.mrf.mxu0
        %2115 = vmatprep.mubr.bf16.mxu0 0
        %2116 = vmatmul.mubr.bf16.gmra.mxu0 %v1998
        %v2117 = vpop.f32.mrf.mxu0
        %v2118 = vadd.f32 0.0, %v2117
        %v2119 = vpop.f32.mrf.mxu0
        %v2120 = vpop.f32.mrf.mxu0
        %v2121 = vadd.f32 0.0, %v2120
        %v2122 = vpop.f32.mrf.mxu0
        %2123 = vmatprep.mubr.bf16.mxu0 0
        %2124 = vmatmul.mubr.bf16.gmra.mxu0 %v2001
        %v2125 = vpop.f32.mrf.mxu0
        %v2126 = vadd.f32 0.0, %v2125
        %v2127 = vpop.f32.mrf.mxu0
        %v2128 = vpop.f32.mrf.mxu0
        %v2129 = vadd.f32 0.0, %v2128
        %v2130 = vpop.f32.mrf.mxu0
        %2131 = vmatprep.mubr.bf16.mxu0 0
        %2132 = vmatmul.mubr.bf16.gmra.mxu0 %v2004
        %v2133 = vpop.f32.mrf.mxu0
        %v2134 = vadd.f32 0.0, %v2133
        %v2135 = vpop.f32.mrf.mxu0
        %v2136 = vpop.f32.mrf.mxu0
        %v2137 = vadd.f32 0.0, %v2136
        %v2138 = vpop.f32.mrf.mxu0
        %2139 = vmatprep.mubr.bf16.mxu0 0
        %2140 = vmatmul.mubr.bf16.gmra.mxu0 %v2007
        %v2141 = vpop.f32.mrf.mxu0
        %v2142 = vadd.f32 0.0, %v2141
        %v2143 = vpop.f32.mrf.mxu0
        %v2144 = vpop.f32.mrf.mxu0
        %v2145 = vadd.f32 0.0, %v2144
        %v2146 = vpop.f32.mrf.mxu0
        %2147 = vmatprep.mubr.bf16.mxu0 0
        %2148 = vmatmul.mubr.bf16.gmra.mxu0 %v2010
        %v2149 = vpop.f32.mrf.mxu0
        %v2150 = vadd.f32 0.0, %v2149
        %v2151 = vpop.f32.mrf.mxu0
        %v2152 = vpop.f32.mrf.mxu0
        %v2153 = vadd.f32 0.0, %v2152
        %v2154 = vpop.f32.mrf.mxu0
        %2155 = vmatprep.mubr.bf16.mxu0 0
        %2156 = vmatmul.mubr.bf16.gmra.mxu0 %v2013
        %v2157 = vpop.f32.mrf.mxu0
        %v2158 = vadd.f32 0.0, %v2157
        %v2159 = vpop.f32.mrf.mxu0
        %v2160 = vpop.f32.mrf.mxu0
        %v2161 = vadd.f32 0.0, %v2160
        %v2162 = vpop.f32.mrf.mxu0
        %2163 = vmatprep.mubr.bf16.mxu0 0
        %2164 = vmatmul.mubr.bf16.gmra.mxu0 %v2016
        %v2165 = vpop.f32.mrf.mxu0
        %v2166 = vadd.f32 0.0, %v2165
        %v2167 = vpop.f32.mrf.mxu0
        %v2168 = vpop.f32.mrf.mxu0
        %v2169 = vadd.f32 0.0, %v2168
        %v2170 = vpop.f32.mrf.mxu0
        %2171 = vmatprep.mubr.bf16.mxu0 0
        %2172 = vmatmul.mubr.bf16.gmra.mxu0 %v2019
        %v2173 = vpop.f32.mrf.mxu0
        %v2174 = vadd.f32 0.0, %v2173
        %v2175 = vpop.f32.mrf.mxu0
        %v2176 = vpop.f32.mrf.mxu0
        %v2177 = vadd.f32 0.0, %v2176
        %v2178 = vpop.f32.mrf.mxu0
        %2179 = vmatprep.mubr.bf16.mxu0 0
        %2180 = vmatmul.mubr.bf16.gmra.mxu0 %v2022
        %v2181 = vpop.f32.mrf.mxu0
        %v2182 = vadd.f32 0.0, %v2181
        %v2183 = vpop.f32.mrf.mxu0
        %v2184 = vpop.f32.mrf.mxu0
        %v2185 = vadd.f32 0.0, %v2184
        %v2186 = vpop.f32.mrf.mxu0
        %2187 = vdwg.mxu0
        %v2188 = vadd.f32 %v1734, %v2062
        %v2189 = vadd.f32 %v1735, %v2065
        %v2190 = vadd.f32 %v1736, %v2070
        %v2191 = vadd.f32 %v1737, %v2073
        %v2192 = vadd.f32 %v1738, %v2078
        %v2193 = vadd.f32 %v1739, %v2081
        %v2194 = vadd.f32 %v1740, %v2086
        %v2195 = vadd.f32 %v1741, %v2089
        %v2196 = vadd.f32 %v1742, %v2094
        %v2197 = vadd.f32 %v1743, %v2097
        %v2198 = vadd.f32 %v1744, %v2102
        %v2199 = vadd.f32 %v1745, %v2105
        %v2200 = vadd.f32 %v1746, %v2110
        %v2201 = vadd.f32 %v1747, %v2113
        %v2202 = vadd.f32 %v1748, %v2118
        %v2203 = vadd.f32 %v1749, %v2121
        %v2204 = vadd.f32 %v1750, %v2126
        %v2205 = vadd.f32 %v1751, %v2129
        %v2206 = vadd.f32 %v1752, %v2134
        %v2207 = vadd.f32 %v1753, %v2137
        %v2208 = vadd.f32 %v1754, %v2142
        %v2209 = vadd.f32 %v1755, %v2145
        %v2210 = vadd.f32 %v1756, %v2150
        %v2211 = vadd.f32 %v1757, %v2153
        %v2212 = vadd.f32 %v1758, %v2158
        %v2213 = vadd.f32 %v1759, %v2161
        %v2214 = vadd.f32 %v1760, %v2166
        %v2215 = vadd.f32 %v1761, %v2169
        %v2216 = vadd.f32 %v1762, %v2174
        %v2217 = vadd.f32 %v1763, %v2177
        %v2218 = vadd.f32 %v1764, %v2182
        %v2219 = vadd.f32 %v1765, %v2185
        %v2220 = vld [vmem:[#allocation2 + $0x10] sm:$0xff]
        %v2221 = vld [vmem:[#allocation2 + $0x18] sm:$0xff]
        %v2222 = vld [vmem:[#allocation2 + $0x20] sm:$0xff]
        %v2223 = vld [vmem:[#allocation2 + $0x28] sm:$0xff]
        %v2224 = vld [vmem:[#allocation2 + $0x30] sm:$0xff]
        %v2225 = vld [vmem:[#allocation2 + $0x38] sm:$0xff]
        %v2226 = vld [vmem:[#allocation2 + $0x40] sm:$0xff]
        %v2227 = vld [vmem:[#allocation2 + $0x48] sm:$0xff]
        %v2228 = vld [vmem:[#allocation2 + $0x50] sm:$0xff]
        %v2229 = vld [vmem:[#allocation2 + $0x58] sm:$0xff]
        %v2230 = vld [vmem:[#allocation2 + $0x60] sm:$0xff]
        %v2231 = vld [vmem:[#allocation2 + $0x68] sm:$0xff]
        %v2232 = vld [vmem:[#allocation2 + $0x70] sm:$0xff]
        %v2233 = vld [vmem:[#allocation2 + $0x78] sm:$0xff]
        %v2234 = vld [vmem:[#allocation2 + $0x80] sm:$0xff]
        %v2235 = vld [vmem:[#allocation2 + $0x88] sm:$0xff]
        %v2236 = vld [vmem:[#allocation2 + $0x90] sm:$0xff]
        %v2237 = vld [vmem:[#allocation2 + $0x98] sm:$0xff]
        %v2238 = vld [vmem:[#allocation2 + $0xa0] sm:$0xff]
        %v2239 = vld [vmem:[#allocation2 + $0xa8] sm:$0xff]
        %v2240 = vld [vmem:[#allocation2 + $0xb0] sm:$0xff]
        %v2241 = vld [vmem:[#allocation2 + $0xb8] sm:$0xff]
        %v2242 = vld [vmem:[#allocation2 + $0xc0] sm:$0xff]
        %v2243 = vld [vmem:[#allocation2 + $0xc8] sm:$0xff]
        %v2244 = vld [vmem:[#allocation2 + $0xd0] sm:$0xff]
        %v2245 = vld [vmem:[#allocation2 + $0xd8] sm:$0xff]
        %v2246 = vld [vmem:[#allocation2 + $0xe0] sm:$0xff]
        %v2247 = vld [vmem:[#allocation2 + $0xe8] sm:$0xff]
        %v2248 = vld [vmem:[#allocation2 + $0xf0] sm:$0xff]
        %v2249 = vld [vmem:[#allocation2 + $0xf8] sm:$0xff]
        %v2250 = vld [vmem:[#allocation2 + $0x100] sm:$0xff]
        %v2251 = vld [vmem:[#allocation2 + $0x108] sm:$0xff]
        %2252 = vset.pattern.permute.xlu0 4
        %2253 = vperm.xlu0 %2252, %v436
        %v2254 = vpop.permute.xlu0 %2253
        %2256 = vset.pattern.permute.xlu0 4
        %2257 = vperm.xlu0 %2256, %v437
        %v2258 = vpop.permute.xlu0 %2257
        %2260 = vset.pattern.permute.xlu0 4
        %2261 = vperm.xlu0 %2260, %v438
        %v2262 = vpop.permute.xlu0 %2261
        %2264 = vset.pattern.permute.xlu0 4
        %2265 = vperm.xlu0 %2264, %v439
        %v2266 = vpop.permute.xlu0 %2265
        %2268 = vset.pattern.permute.xlu0 4
        %2269 = vperm.xlu0 %2268, %v440
        %v2270 = vpop.permute.xlu0 %2269
        %2272 = vset.pattern.permute.xlu0 4
        %2273 = vperm.xlu0 %2272, %v441
        %v2274 = vpop.permute.xlu0 %2273
        %2276 = vset.pattern.permute.xlu0 4
        %2277 = vperm.xlu0 %2276, %v442
        %v2278 = vpop.permute.xlu0 %2277
        %2280 = vset.pattern.permute.xlu0 4
        %2281 = vperm.xlu0 %2280, %v443
        %v2282 = vpop.permute.xlu0 %2281
        %2284 = vset.pattern.permute.xlu0 4
        %2285 = vperm.xlu0 %2284, %v444
        %v2286 = vpop.permute.xlu0 %2285
        %2288 = vset.pattern.permute.xlu0 4
        %2289 = vperm.xlu0 %2288, %v445
        %v2290 = vpop.permute.xlu0 %2289
        %2292 = vset.pattern.permute.xlu0 4
        %2293 = vperm.xlu0 %2292, %v446
        %v2294 = vpop.permute.xlu0 %2293
        %2296 = vset.pattern.permute.xlu0 4
        %2297 = vperm.xlu0 %2296, %v447
        %v2298 = vpop.permute.xlu0 %2297
        %2300 = vset.pattern.permute.xlu0 4
        %2301 = vperm.xlu0 %2300, %v448
        %v2302 = vpop.permute.xlu0 %2301
        %2304 = vset.pattern.permute.xlu0 4
        %2305 = vperm.xlu0 %2304, %v449
        %v2306 = vpop.permute.xlu0 %2305
        %2308 = vset.pattern.permute.xlu0 4
        %2309 = vperm.xlu0 %2308, %v450
        %v2310 = vpop.permute.xlu0 %2309
        %2312 = vset.pattern.permute.xlu0 4
        %2313 = vperm.xlu0 %2312, %v451
        %v2314 = vpop.permute.xlu0 %2313
        %2316 = vset.pattern.permute.xlu0 4
        %2317 = vperm.xlu0 %2316, %v452
        %v2318 = vpop.permute.xlu0 %2317
        %2320 = vset.pattern.permute.xlu0 4
        %2321 = vperm.xlu0 %2320, %v453
        %v2322 = vpop.permute.xlu0 %2321
        %2324 = vset.pattern.permute.xlu0 4
        %2325 = vperm.xlu0 %2324, %v454
        %v2326 = vpop.permute.xlu0 %2325
        %2328 = vset.pattern.permute.xlu0 4
        %2329 = vperm.xlu0 %2328, %v455
        %v2330 = vpop.permute.xlu0 %2329
        %2332 = vset.pattern.permute.xlu0 4
        %2333 = vperm.xlu0 %2332, %v456
        %v2334 = vpop.permute.xlu0 %2333
        %2336 = vset.pattern.permute.xlu0 4
        %2337 = vperm.xlu0 %2336, %v457
        %v2338 = vpop.permute.xlu0 %2337
        %2340 = vset.pattern.permute.xlu0 4
        %2341 = vperm.xlu0 %2340, %v458
        %v2342 = vpop.permute.xlu0 %2341
        %2344 = vset.pattern.permute.xlu0 4
        %2345 = vperm.xlu0 %2344, %v459
        %v2346 = vpop.permute.xlu0 %2345
        %2348 = vset.pattern.permute.xlu0 4
        %2349 = vperm.xlu0 %2348, %v460
        %v2350 = vpop.permute.xlu0 %2349
        %2352 = vset.pattern.permute.xlu0 4
        %2353 = vperm.xlu0 %2352, %v461
        %v2354 = vpop.permute.xlu0 %2353
        %2356 = vset.pattern.permute.xlu0 4
        %2357 = vperm.xlu0 %2356, %v462
        %v2358 = vpop.permute.xlu0 %2357
        %2360 = vset.pattern.permute.xlu0 4
        %2361 = vperm.xlu0 %2360, %v463
        %v2362 = vpop.permute.xlu0 %2361
        %2364 = vset.pattern.permute.xlu0 4
        %2365 = vperm.xlu0 %2364, %v464
        %v2366 = vpop.permute.xlu0 %2365
        %2368 = vset.pattern.permute.xlu0 4
        %2369 = vperm.xlu0 %2368, %v465
        %v2370 = vpop.permute.xlu0 %2369
        %2372 = vset.pattern.permute.xlu0 4
        %2373 = vperm.xlu0 %2372, %v466
        %v2374 = vpop.permute.xlu0 %2373
        %2376 = vset.pattern.permute.xlu0 4
        %2377 = vperm.xlu0 %2376, %v467
        %v2378 = vpop.permute.xlu0 %2377
        %v2380 = vmul.f32 %v2220, %v2254
        %v2381 = vmul.f32 %v2221, %v2258
        %v2382 = vmul.f32 %v2222, %v2262
        %v2383 = vmul.f32 %v2223, %v2266
        %v2384 = vmul.f32 %v2224, %v2270
        %v2385 = vmul.f32 %v2225, %v2274
        %v2386 = vmul.f32 %v2226, %v2278
        %v2387 = vmul.f32 %v2227, %v2282
        %v2388 = vmul.f32 %v2228, %v2286
        %v2389 = vmul.f32 %v2229, %v2290
        %v2390 = vmul.f32 %v2230, %v2294
        %v2391 = vmul.f32 %v2231, %v2298
        %v2392 = vmul.f32 %v2232, %v2302
        %v2393 = vmul.f32 %v2233, %v2306
        %v2394 = vmul.f32 %v2234, %v2310
        %v2395 = vmul.f32 %v2235, %v2314
        %v2396 = vmul.f32 %v2236, %v2318
        %v2397 = vmul.f32 %v2237, %v2322
        %v2398 = vmul.f32 %v2238, %v2326
        %v2399 = vmul.f32 %v2239, %v2330
        %v2400 = vmul.f32 %v2240, %v2334
        %v2401 = vmul.f32 %v2241, %v2338
        %v2402 = vmul.f32 %v2242, %v2342
        %v2403 = vmul.f32 %v2243, %v2346
        %v2404 = vmul.f32 %v2244, %v2350
        %v2405 = vmul.f32 %v2245, %v2354
        %v2406 = vmul.f32 %v2246, %v2358
        %v2407 = vmul.f32 %v2247, %v2362
        %v2408 = vmul.f32 %v2248, %v2366
        %v2409 = vmul.f32 %v2249, %v2370
        %v2410 = vmul.f32 %v2250, %v2374
        %v2411 = vmul.f32 %v2251, %v2378
        %v2412 = vpack.c.bf16 %v2381, %v2380
        %v2413 = vpack.c.bf16 %v2383, %v2382
        %v2414 = vpack.c.bf16 %v2385, %v2384
        %v2415 = vpack.c.bf16 %v2387, %v2386
        %v2416 = vpack.c.bf16 %v2389, %v2388
        %v2417 = vpack.c.bf16 %v2391, %v2390
        %v2418 = vpack.c.bf16 %v2393, %v2392
        %v2419 = vpack.c.bf16 %v2395, %v2394
        %v2420 = vpack.c.bf16 %v2397, %v2396
        %v2421 = vpack.c.bf16 %v2399, %v2398
        %v2422 = vpack.c.bf16 %v2401, %v2400
        %v2423 = vpack.c.bf16 %v2403, %v2402
        %v2424 = vpack.c.bf16 %v2405, %v2404
        %v2425 = vpack.c.bf16 %v2407, %v2406
        %v2426 = vpack.c.bf16 %v2409, %v2408
        %v2427 = vpack.c.bf16 %v2411, %v2410
        %s2428 = scalar_lea.vmem %s1, 16
        %v2429 = vld [vmem:[%s2428] sm:$0xf]
        %v2431 = vsel %vm371, %v2412, 0
        %v2434 = vsel %vm371, %v2413, 0
        %v2437 = vsel %vm371, %v2414, 0
        %v2440 = vsel %vm371, %v2415, 0
        %v2443 = vsel %vm371, %v2416, 0
        %v2446 = vsel %vm371, %v2417, 0
        %v2449 = vsel %vm371, %v2418, 0
        %v2452 = vsel %vm371, %v2419, 0
        %v2455 = vsel %vm371, %v2420, 0
        %v2458 = vsel %vm371, %v2421, 0
        %v2461 = vsel %vm371, %v2422, 0
        %v2464 = vsel %vm371, %v2423, 0
        %v2467 = vsel %vm371, %v2424, 0
        %v2470 = vsel %vm371, %v2425, 0
        %v2473 = vsel %vm371, %v2426, 0
        %v2476 = vsel %vm371, %v2427, 0
        %v2479 = vsel %vm935, %v2429, 0
        %2481 = vmatprep.subr.bf16.mxu0 0
        %2482 = vmatpush1.bf16.msra.mxu0 0
        %2483 = vmatprep.subr.bf16.mxu0 0
        %2484 = vmatpush1.bf16.msra.mxu0 0
        %2485 = vmatprep.subr.bf16.mxu0 0
        %2486 = vmatpush1.bf16.msra.mxu0 0
        %2487 = vmatprep.subr.bf16.mxu0 0
        %2488 = vmatpush1.bf16.msra.mxu0 0
        %2489 = vmatprep.subr.bf16.mxu0 0
        %2490 = vmatpush1.bf16.msra.mxu0 0
        %2491 = vmatprep.subr.bf16.mxu0 0
        %2492 = vmatpush1.bf16.msra.mxu0 0
        %2493 = vmatprep.subr.bf16.mxu0 0
        %2494 = vmatpush1.bf16.msra.mxu0 0
        %2495 = vmatprep.subr.bf16.mxu0 0
        %2496 = vmatpush1.bf16.msra.mxu0 %v2479
        %2497 = vmatprep.subr.bf16.mxu0 0
        %2498 = vmatpush2.bf16.msra.mxu0 0
        %2499 = vmatprep.subr.bf16.mxu0 0
        %2500 = vmatpush2.bf16.msra.mxu0 0
        %2501 = vmatprep.subr.bf16.mxu0 0
        %2502 = vmatpush2.bf16.msra.mxu0 0
        %2503 = vmatprep.subr.bf16.mxu0 0
        %2504 = vmatpush2.bf16.msra.mxu0 0
        %2505 = vmatprep.subr.bf16.mxu0 0
        %2506 = vmatpush2.bf16.msra.mxu0 0
        %2507 = vmatprep.subr.bf16.mxu0 0
        %2508 = vmatpush2.bf16.msra.mxu0 0
        %2509 = vmatprep.subr.bf16.mxu0 0
        %2510 = vmatpush2.bf16.msra.mxu0 0
        %2511 = vmatprep.subr.bf16.mxu0 0
        %2512 = vmatpush2.bf16.msra.mxu0 0
        %2513 = vmatprep.mubr.bf16.mxu0 0
        %2514 = vmatmul.mubr.bf16.gmra.mxu0 %v2431
        %v2515 = vpop.f32.mrf.mxu0
        %v2516 = vadd.f32 0.0, %v2515
        %v2517 = vpop.f32.mrf.mxu0
        %v2518 = vpop.f32.mrf.mxu0
        %v2519 = vadd.f32 0.0, %v2518
        %v2520 = vpop.f32.mrf.mxu0
        %2521 = vmatprep.mubr.bf16.mxu0 0
        %2522 = vmatmul.mubr.bf16.gmra.mxu0 %v2434
        %v2523 = vpop.f32.mrf.mxu0
        %v2524 = vadd.f32 0.0, %v2523
        %v2525 = vpop.f32.mrf.mxu0
        %v2526 = vpop.f32.mrf.mxu0
        %v2527 = vadd.f32 0.0, %v2526
        %v2528 = vpop.f32.mrf.mxu0
        %2529 = vmatprep.mubr.bf16.mxu0 0
        %2530 = vmatmul.mubr.bf16.gmra.mxu0 %v2437
        %v2531 = vpop.f32.mrf.mxu0
        %v2532 = vadd.f32 0.0, %v2531
        %v2533 = vpop.f32.mrf.mxu0
        %v2534 = vpop.f32.mrf.mxu0
        %v2535 = vadd.f32 0.0, %v2534
        %v2536 = vpop.f32.mrf.mxu0
        %2537 = vmatprep.mubr.bf16.mxu0 0
        %2538 = vmatmul.mubr.bf16.gmra.mxu0 %v2440
        %v2539 = vpop.f32.mrf.mxu0
        %v2540 = vadd.f32 0.0, %v2539
        %v2541 = vpop.f32.mrf.mxu0
        %v2542 = vpop.f32.mrf.mxu0
        %v2543 = vadd.f32 0.0, %v2542
        %v2544 = vpop.f32.mrf.mxu0
        %2545 = vmatprep.mubr.bf16.mxu0 0
        %2546 = vmatmul.mubr.bf16.gmra.mxu0 %v2443
        %v2547 = vpop.f32.mrf.mxu0
        %v2548 = vadd.f32 0.0, %v2547
        %v2549 = vpop.f32.mrf.mxu0
        %v2550 = vpop.f32.mrf.mxu0
        %v2551 = vadd.f32 0.0, %v2550
        %v2552 = vpop.f32.mrf.mxu0
        %2553 = vmatprep.mubr.bf16.mxu0 0
        %2554 = vmatmul.mubr.bf16.gmra.mxu0 %v2446
        %v2555 = vpop.f32.mrf.mxu0
        %v2556 = vadd.f32 0.0, %v2555
        %v2557 = vpop.f32.mrf.mxu0
        %v2558 = vpop.f32.mrf.mxu0
        %v2559 = vadd.f32 0.0, %v2558
        %v2560 = vpop.f32.mrf.mxu0
        %2561 = vmatprep.mubr.bf16.mxu0 0
        %2562 = vmatmul.mubr.bf16.gmra.mxu0 %v2449
        %v2563 = vpop.f32.mrf.mxu0
        %v2564 = vadd.f32 0.0, %v2563
        %v2565 = vpop.f32.mrf.mxu0
        %v2566 = vpop.f32.mrf.mxu0
        %v2567 = vadd.f32 0.0, %v2566
        %v2568 = vpop.f32.mrf.mxu0
        %2569 = vmatprep.mubr.bf16.mxu0 0
        %2570 = vmatmul.mubr.bf16.gmra.mxu0 %v2452
        %v2571 = vpop.f32.mrf.mxu0
        %v2572 = vadd.f32 0.0, %v2571
        %v2573 = vpop.f32.mrf.mxu0
        %v2574 = vpop.f32.mrf.mxu0
        %v2575 = vadd.f32 0.0, %v2574
        %v2576 = vpop.f32.mrf.mxu0
        %2577 = vmatprep.mubr.bf16.mxu0 0
        %2578 = vmatmul.mubr.bf16.gmra.mxu0 %v2455
        %v2579 = vpop.f32.mrf.mxu0
        %v2580 = vadd.f32 0.0, %v2579
        %v2581 = vpop.f32.mrf.mxu0
        %v2582 = vpop.f32.mrf.mxu0
        %v2583 = vadd.f32 0.0, %v2582
        %v2584 = vpop.f32.mrf.mxu0
        %2585 = vmatprep.mubr.bf16.mxu0 0
        %2586 = vmatmul.mubr.bf16.gmra.mxu0 %v2458
        %v2587 = vpop.f32.mrf.mxu0
        %v2588 = vadd.f32 0.0, %v2587
        %v2589 = vpop.f32.mrf.mxu0
        %v2590 = vpop.f32.mrf.mxu0
        %v2591 = vadd.f32 0.0, %v2590
        %v2592 = vpop.f32.mrf.mxu0
        %2593 = vmatprep.mubr.bf16.mxu0 0
        %2594 = vmatmul.mubr.bf16.gmra.mxu0 %v2461
        %v2595 = vpop.f32.mrf.mxu0
        %v2596 = vadd.f32 0.0, %v2595
        %v2597 = vpop.f32.mrf.mxu0
        %v2598 = vpop.f32.mrf.mxu0
        %v2599 = vadd.f32 0.0, %v2598
        %v2600 = vpop.f32.mrf.mxu0
        %2601 = vmatprep.mubr.bf16.mxu0 0
        %2602 = vmatmul.mubr.bf16.gmra.mxu0 %v2464
        %v2603 = vpop.f32.mrf.mxu0
        %v2604 = vadd.f32 0.0, %v2603
        %v2605 = vpop.f32.mrf.mxu0
        %v2606 = vpop.f32.mrf.mxu0
        %v2607 = vadd.f32 0.0, %v2606
        %v2608 = vpop.f32.mrf.mxu0
        %2609 = vmatprep.mubr.bf16.mxu0 0
        %2610 = vmatmul.mubr.bf16.gmra.mxu0 %v2467
        %v2611 = vpop.f32.mrf.mxu0
        %v2612 = vadd.f32 0.0, %v2611
        %v2613 = vpop.f32.mrf.mxu0
        %v2614 = vpop.f32.mrf.mxu0
        %v2615 = vadd.f32 0.0, %v2614
        %v2616 = vpop.f32.mrf.mxu0
        %2617 = vmatprep.mubr.bf16.mxu0 0
        %2618 = vmatmul.mubr.bf16.gmra.mxu0 %v2470
        %v2619 = vpop.f32.mrf.mxu0
        %v2620 = vadd.f32 0.0, %v2619
        %v2621 = vpop.f32.mrf.mxu0
        %v2622 = vpop.f32.mrf.mxu0
        %v2623 = vadd.f32 0.0, %v2622
        %v2624 = vpop.f32.mrf.mxu0
        %2625 = vmatprep.mubr.bf16.mxu0 0
        %2626 = vmatmul.mubr.bf16.gmra.mxu0 %v2473
        %v2627 = vpop.f32.mrf.mxu0
        %v2628 = vadd.f32 0.0, %v2627
        %v2629 = vpop.f32.mrf.mxu0
        %v2630 = vpop.f32.mrf.mxu0
        %v2631 = vadd.f32 0.0, %v2630
        %v2632 = vpop.f32.mrf.mxu0
        %2633 = vmatprep.mubr.bf16.mxu0 0
        %2634 = vmatmul.mubr.bf16.gmra.mxu0 %v2476
        %v2635 = vpop.f32.mrf.mxu0
        %v2636 = vadd.f32 0.0, %v2635
        %v2637 = vpop.f32.mrf.mxu0
        %v2638 = vpop.f32.mrf.mxu0
        %v2639 = vadd.f32 0.0, %v2638
        %v2640 = vpop.f32.mrf.mxu0
        %2641 = vdwg.mxu0
        %v2642 = vadd.f32 %v2188, %v2516
        %v2643 = vadd.f32 %v2189, %v2519
        %v2644 = vadd.f32 %v2190, %v2524
        %v2645 = vadd.f32 %v2191, %v2527
        %v2646 = vadd.f32 %v2192, %v2532
        %v2647 = vadd.f32 %v2193, %v2535
        %v2648 = vadd.f32 %v2194, %v2540
        %v2649 = vadd.f32 %v2195, %v2543
        %v2650 = vadd.f32 %v2196, %v2548
        %v2651 = vadd.f32 %v2197, %v2551
        %v2652 = vadd.f32 %v2198, %v2556
        %v2653 = vadd.f32 %v2199, %v2559
        %v2654 = vadd.f32 %v2200, %v2564
        %v2655 = vadd.f32 %v2201, %v2567
        %v2656 = vadd.f32 %v2202, %v2572
        %v2657 = vadd.f32 %v2203, %v2575
        %v2658 = vadd.f32 %v2204, %v2580
        %v2659 = vadd.f32 %v2205, %v2583
        %v2660 = vadd.f32 %v2206, %v2588
        %v2661 = vadd.f32 %v2207, %v2591
        %v2662 = vadd.f32 %v2208, %v2596
        %v2663 = vadd.f32 %v2209, %v2599
        %v2664 = vadd.f32 %v2210, %v2604
        %v2665 = vadd.f32 %v2211, %v2607
        %v2666 = vadd.f32 %v2212, %v2612
        %v2667 = vadd.f32 %v2213, %v2615
        %v2668 = vadd.f32 %v2214, %v2620
        %v2669 = vadd.f32 %v2215, %v2623
        %v2670 = vadd.f32 %v2216, %v2628
        %v2671 = vadd.f32 %v2217, %v2631
        %v2672 = vadd.f32 %v2218, %v2636
        %v2673 = vadd.f32 %v2219, %v2639
        %v2674 = vld [vmem:[#allocation2 + $0x11] sm:$0xff]
        %v2675 = vld [vmem:[#allocation2 + $0x19] sm:$0xff]
        %v2676 = vld [vmem:[#allocation2 + $0x21] sm:$0xff]
        %v2677 = vld [vmem:[#allocation2 + $0x29] sm:$0xff]
        %v2678 = vld [vmem:[#allocation2 + $0x31] sm:$0xff]
        %v2679 = vld [vmem:[#allocation2 + $0x39] sm:$0xff]
        %v2680 = vld [vmem:[#allocation2 + $0x41] sm:$0xff]
        %v2681 = vld [vmem:[#allocation2 + $0x49] sm:$0xff]
        %v2682 = vld [vmem:[#allocation2 + $0x51] sm:$0xff]
        %v2683 = vld [vmem:[#allocation2 + $0x59] sm:$0xff]
        %v2684 = vld [vmem:[#allocation2 + $0x61] sm:$0xff]
        %v2685 = vld [vmem:[#allocation2 + $0x69] sm:$0xff]
        %v2686 = vld [vmem:[#allocation2 + $0x71] sm:$0xff]
        %v2687 = vld [vmem:[#allocation2 + $0x79] sm:$0xff]
        %v2688 = vld [vmem:[#allocation2 + $0x81] sm:$0xff]
        %v2689 = vld [vmem:[#allocation2 + $0x89] sm:$0xff]
        %v2690 = vld [vmem:[#allocation2 + $0x91] sm:$0xff]
        %v2691 = vld [vmem:[#allocation2 + $0x99] sm:$0xff]
        %v2692 = vld [vmem:[#allocation2 + $0xa1] sm:$0xff]
        %v2693 = vld [vmem:[#allocation2 + $0xa9] sm:$0xff]
        %v2694 = vld [vmem:[#allocation2 + $0xb1] sm:$0xff]
        %v2695 = vld [vmem:[#allocation2 + $0xb9] sm:$0xff]
        %v2696 = vld [vmem:[#allocation2 + $0xc1] sm:$0xff]
        %v2697 = vld [vmem:[#allocation2 + $0xc9] sm:$0xff]
        %v2698 = vld [vmem:[#allocation2 + $0xd1] sm:$0xff]
        %v2699 = vld [vmem:[#allocation2 + $0xd9] sm:$0xff]
        %v2700 = vld [vmem:[#allocation2 + $0xe1] sm:$0xff]
        %v2701 = vld [vmem:[#allocation2 + $0xe9] sm:$0xff]
        %v2702 = vld [vmem:[#allocation2 + $0xf1] sm:$0xff]
        %v2703 = vld [vmem:[#allocation2 + $0xf9] sm:$0xff]
        %v2704 = vld [vmem:[#allocation2 + $0x101] sm:$0xff]
        %v2705 = vld [vmem:[#allocation2 + $0x109] sm:$0xff]
        %2706 = vset.pattern.permute.xlu0 5
        %2707 = vperm.xlu0 %2706, %v436
        %v2708 = vpop.permute.xlu0 %2707
        %2710 = vset.pattern.permute.xlu0 5
        %2711 = vperm.xlu0 %2710, %v437
        %v2712 = vpop.permute.xlu0 %2711
        %2714 = vset.pattern.permute.xlu0 5
        %2715 = vperm.xlu0 %2714, %v438
        %v2716 = vpop.permute.xlu0 %2715
        %2718 = vset.pattern.permute.xlu0 5
        %2719 = vperm.xlu0 %2718, %v439
        %v2720 = vpop.permute.xlu0 %2719
        %2722 = vset.pattern.permute.xlu0 5
        %2723 = vperm.xlu0 %2722, %v440
        %v2724 = vpop.permute.xlu0 %2723
        %2726 = vset.pattern.permute.xlu0 5
        %2727 = vperm.xlu0 %2726, %v441
        %v2728 = vpop.permute.xlu0 %2727
        %2730 = vset.pattern.permute.xlu0 5
        %2731 = vperm.xlu0 %2730, %v442
        %v2732 = vpop.permute.xlu0 %2731
        %2734 = vset.pattern.permute.xlu0 5
        %2735 = vperm.xlu0 %2734, %v443
        %v2736 = vpop.permute.xlu0 %2735
        %2738 = vset.pattern.permute.xlu0 5
        %2739 = vperm.xlu0 %2738, %v444
        %v2740 = vpop.permute.xlu0 %2739
        %2742 = vset.pattern.permute.xlu0 5
        %2743 = vperm.xlu0 %2742, %v445
        %v2744 = vpop.permute.xlu0 %2743
        %2746 = vset.pattern.permute.xlu0 5
        %2747 = vperm.xlu0 %2746, %v446
        %v2748 = vpop.permute.xlu0 %2747
        %2750 = vset.pattern.permute.xlu0 5
        %2751 = vperm.xlu0 %2750, %v447
        %v2752 = vpop.permute.xlu0 %2751
        %2754 = vset.pattern.permute.xlu0 5
        %2755 = vperm.xlu0 %2754, %v448
        %v2756 = vpop.permute.xlu0 %2755
        %2758 = vset.pattern.permute.xlu0 5
        %2759 = vperm.xlu0 %2758, %v449
        %v2760 = vpop.permute.xlu0 %2759
        %2762 = vset.pattern.permute.xlu0 5
        %2763 = vperm.xlu0 %2762, %v450
        %v2764 = vpop.permute.xlu0 %2763
        %2766 = vset.pattern.permute.xlu0 5
        %2767 = vperm.xlu0 %2766, %v451
        %v2768 = vpop.permute.xlu0 %2767
        %2770 = vset.pattern.permute.xlu0 5
        %2771 = vperm.xlu0 %2770, %v452
        %v2772 = vpop.permute.xlu0 %2771
        %2774 = vset.pattern.permute.xlu0 5
        %2775 = vperm.xlu0 %2774, %v453
        %v2776 = vpop.permute.xlu0 %2775
        %2778 = vset.pattern.permute.xlu0 5
        %2779 = vperm.xlu0 %2778, %v454
        %v2780 = vpop.permute.xlu0 %2779
        %2782 = vset.pattern.permute.xlu0 5
        %2783 = vperm.xlu0 %2782, %v455
        %v2784 = vpop.permute.xlu0 %2783
        %2786 = vset.pattern.permute.xlu0 5
        %2787 = vperm.xlu0 %2786, %v456
        %v2788 = vpop.permute.xlu0 %2787
        %2790 = vset.pattern.permute.xlu0 5
        %2791 = vperm.xlu0 %2790, %v457
        %v2792 = vpop.permute.xlu0 %2791
        %2794 = vset.pattern.permute.xlu0 5
        %2795 = vperm.xlu0 %2794, %v458
        %v2796 = vpop.permute.xlu0 %2795
        %2798 = vset.pattern.permute.xlu0 5
        %2799 = vperm.xlu0 %2798, %v459
        %v2800 = vpop.permute.xlu0 %2799
        %2802 = vset.pattern.permute.xlu0 5
        %2803 = vperm.xlu0 %2802, %v460
        %v2804 = vpop.permute.xlu0 %2803
        %2806 = vset.pattern.permute.xlu0 5
        %2807 = vperm.xlu0 %2806, %v461
        %v2808 = vpop.permute.xlu0 %2807
        %2810 = vset.pattern.permute.xlu0 5
        %2811 = vperm.xlu0 %2810, %v462
        %v2812 = vpop.permute.xlu0 %2811
        %2814 = vset.pattern.permute.xlu0 5
        %2815 = vperm.xlu0 %2814, %v463
        %v2816 = vpop.permute.xlu0 %2815
        %2818 = vset.pattern.permute.xlu0 5
        %2819 = vperm.xlu0 %2818, %v464
        %v2820 = vpop.permute.xlu0 %2819
        %2822 = vset.pattern.permute.xlu0 5
        %2823 = vperm.xlu0 %2822, %v465
        %v2824 = vpop.permute.xlu0 %2823
        %2826 = vset.pattern.permute.xlu0 5
        %2827 = vperm.xlu0 %2826, %v466
        %v2828 = vpop.permute.xlu0 %2827
        %2830 = vset.pattern.permute.xlu0 5
        %2831 = vperm.xlu0 %2830, %v467
        %v2832 = vpop.permute.xlu0 %2831
        %v2834 = vmul.f32 %v2674, %v2708
        %v2835 = vmul.f32 %v2675, %v2712
        %v2836 = vmul.f32 %v2676, %v2716
        %v2837 = vmul.f32 %v2677, %v2720
        %v2838 = vmul.f32 %v2678, %v2724
        %v2839 = vmul.f32 %v2679, %v2728
        %v2840 = vmul.f32 %v2680, %v2732
        %v2841 = vmul.f32 %v2681, %v2736
        %v2842 = vmul.f32 %v2682, %v2740
        %v2843 = vmul.f32 %v2683, %v2744
        %v2844 = vmul.f32 %v2684, %v2748
        %v2845 = vmul.f32 %v2685, %v2752
        %v2846 = vmul.f32 %v2686, %v2756
        %v2847 = vmul.f32 %v2687, %v2760
        %v2848 = vmul.f32 %v2688, %v2764
        %v2849 = vmul.f32 %v2689, %v2768
        %v2850 = vmul.f32 %v2690, %v2772
        %v2851 = vmul.f32 %v2691, %v2776
        %v2852 = vmul.f32 %v2692, %v2780
        %v2853 = vmul.f32 %v2693, %v2784
        %v2854 = vmul.f32 %v2694, %v2788
        %v2855 = vmul.f32 %v2695, %v2792
        %v2856 = vmul.f32 %v2696, %v2796
        %v2857 = vmul.f32 %v2697, %v2800
        %v2858 = vmul.f32 %v2698, %v2804
        %v2859 = vmul.f32 %v2699, %v2808
        %v2860 = vmul.f32 %v2700, %v2812
        %v2861 = vmul.f32 %v2701, %v2816
        %v2862 = vmul.f32 %v2702, %v2820
        %v2863 = vmul.f32 %v2703, %v2824
        %v2864 = vmul.f32 %v2704, %v2828
        %v2865 = vmul.f32 %v2705, %v2832
        %v2866 = vpack.c.bf16 %v2835, %v2834
        %v2867 = vpack.c.bf16 %v2837, %v2836
        %v2868 = vpack.c.bf16 %v2839, %v2838
        %v2869 = vpack.c.bf16 %v2841, %v2840
        %v2870 = vpack.c.bf16 %v2843, %v2842
        %v2871 = vpack.c.bf16 %v2845, %v2844
        %v2872 = vpack.c.bf16 %v2847, %v2846
        %v2873 = vpack.c.bf16 %v2849, %v2848
        %v2874 = vpack.c.bf16 %v2851, %v2850
        %v2875 = vpack.c.bf16 %v2853, %v2852
        %v2876 = vpack.c.bf16 %v2855, %v2854
        %v2877 = vpack.c.bf16 %v2857, %v2856
        %v2878 = vpack.c.bf16 %v2859, %v2858
        %v2879 = vpack.c.bf16 %v2861, %v2860
        %v2880 = vpack.c.bf16 %v2863, %v2862
        %v2881 = vpack.c.bf16 %v2865, %v2864
        %s2882 = scalar_lea.vmem %s1, 20
        %v2883 = vld [vmem:[%s2882] sm:$0xf]
        %v2885 = vsel %vm371, %v2866, 0
        %v2888 = vsel %vm371, %v2867, 0
        %v2891 = vsel %vm371, %v2868, 0
        %v2894 = vsel %vm371, %v2869, 0
        %v2897 = vsel %vm371, %v2870, 0
        %v2900 = vsel %vm371, %v2871, 0
        %v2903 = vsel %vm371, %v2872, 0
        %v2906 = vsel %vm371, %v2873, 0
        %v2909 = vsel %vm371, %v2874, 0
        %v2912 = vsel %vm371, %v2875, 0
        %v2915 = vsel %vm371, %v2876, 0
        %v2918 = vsel %vm371, %v2877, 0
        %v2921 = vsel %vm371, %v2878, 0
        %v2924 = vsel %vm371, %v2879, 0
        %v2927 = vsel %vm371, %v2880, 0
        %v2930 = vsel %vm371, %v2881, 0
        %v2933 = vsel %vm935, %v2883, 0
        %2935 = vmatprep.subr.bf16.mxu0 0
        %2936 = vmatpush1.bf16.msra.mxu0 0
        %2937 = vmatprep.subr.bf16.mxu0 0
        %2938 = vmatpush1.bf16.msra.mxu0 0
        %2939 = vmatprep.subr.bf16.mxu0 0
        %2940 = vmatpush1.bf16.msra.mxu0 0
        %2941 = vmatprep.subr.bf16.mxu0 0
        %2942 = vmatpush1.bf16.msra.mxu0 0
        %2943 = vmatprep.subr.bf16.mxu0 0
        %2944 = vmatpush1.bf16.msra.mxu0 0
        %2945 = vmatprep.subr.bf16.mxu0 0
        %2946 = vmatpush1.bf16.msra.mxu0 0
        %2947 = vmatprep.subr.bf16.mxu0 0
        %2948 = vmatpush1.bf16.msra.mxu0 0
        %2949 = vmatprep.subr.bf16.mxu0 0
        %2950 = vmatpush1.bf16.msra.mxu0 %v2933
        %2951 = vmatprep.subr.bf16.mxu0 0
        %2952 = vmatpush2.bf16.msra.mxu0 0
        %2953 = vmatprep.subr.bf16.mxu0 0
        %2954 = vmatpush2.bf16.msra.mxu0 0
        %2955 = vmatprep.subr.bf16.mxu0 0
        %2956 = vmatpush2.bf16.msra.mxu0 0
        %2957 = vmatprep.subr.bf16.mxu0 0
        %2958 = vmatpush2.bf16.msra.mxu0 0
        %2959 = vmatprep.subr.bf16.mxu0 0
        %2960 = vmatpush2.bf16.msra.mxu0 0
        %2961 = vmatprep.subr.bf16.mxu0 0
        %2962 = vmatpush2.bf16.msra.mxu0 0
        %2963 = vmatprep.subr.bf16.mxu0 0
        %2964 = vmatpush2.bf16.msra.mxu0 0
        %2965 = vmatprep.subr.bf16.mxu0 0
        %2966 = vmatpush2.bf16.msra.mxu0 0
        %2967 = vmatprep.mubr.bf16.mxu0 0
        %2968 = vmatmul.mubr.bf16.gmra.mxu0 %v2885
        %v2969 = vpop.f32.mrf.mxu0
        %v2970 = vadd.f32 0.0, %v2969
        %v2971 = vpop.f32.mrf.mxu0
        %v2972 = vpop.f32.mrf.mxu0
        %v2973 = vadd.f32 0.0, %v2972
        %v2974 = vpop.f32.mrf.mxu0
        %2975 = vmatprep.mubr.bf16.mxu0 0
        %2976 = vmatmul.mubr.bf16.gmra.mxu0 %v2888
        %v2977 = vpop.f32.mrf.mxu0
        %v2978 = vadd.f32 0.0, %v2977
        %v2979 = vpop.f32.mrf.mxu0
        %v2980 = vpop.f32.mrf.mxu0
        %v2981 = vadd.f32 0.0, %v2980
        %v2982 = vpop.f32.mrf.mxu0
        %2983 = vmatprep.mubr.bf16.mxu0 0
        %2984 = vmatmul.mubr.bf16.gmra.mxu0 %v2891
        %v2985 = vpop.f32.mrf.mxu0
        %v2986 = vadd.f32 0.0, %v2985
        %v2987 = vpop.f32.mrf.mxu0
        %v2988 = vpop.f32.mrf.mxu0
        %v2989 = vadd.f32 0.0, %v2988
        %v2990 = vpop.f32.mrf.mxu0
        %2991 = vmatprep.mubr.bf16.mxu0 0
        %2992 = vmatmul.mubr.bf16.gmra.mxu0 %v2894
        %v2993 = vpop.f32.mrf.mxu0
        %v2994 = vadd.f32 0.0, %v2993
        %v2995 = vpop.f32.mrf.mxu0
        %v2996 = vpop.f32.mrf.mxu0
        %v2997 = vadd.f32 0.0, %v2996
        %v2998 = vpop.f32.mrf.mxu0
        %2999 = vmatprep.mubr.bf16.mxu0 0
        %3000 = vmatmul.mubr.bf16.gmra.mxu0 %v2897
        %v3001 = vpop.f32.mrf.mxu0
        %v3002 = vadd.f32 0.0, %v3001
        %v3003 = vpop.f32.mrf.mxu0
        %v3004 = vpop.f32.mrf.mxu0
        %v3005 = vadd.f32 0.0, %v3004
        %v3006 = vpop.f32.mrf.mxu0
        %3007 = vmatprep.mubr.bf16.mxu0 0
        %3008 = vmatmul.mubr.bf16.gmra.mxu0 %v2900
        %v3009 = vpop.f32.mrf.mxu0
        %v3010 = vadd.f32 0.0, %v3009
        %v3011 = vpop.f32.mrf.mxu0
        %v3012 = vpop.f32.mrf.mxu0
        %v3013 = vadd.f32 0.0, %v3012
        %v3014 = vpop.f32.mrf.mxu0
        %3015 = vmatprep.mubr.bf16.mxu0 0
        %3016 = vmatmul.mubr.bf16.gmra.mxu0 %v2903
        %v3017 = vpop.f32.mrf.mxu0
        %v3018 = vadd.f32 0.0, %v3017
        %v3019 = vpop.f32.mrf.mxu0
        %v3020 = vpop.f32.mrf.mxu0
        %v3021 = vadd.f32 0.0, %v3020
        %v3022 = vpop.f32.mrf.mxu0
        %3023 = vmatprep.mubr.bf16.mxu0 0
        %3024 = vmatmul.mubr.bf16.gmra.mxu0 %v2906
        %v3025 = vpop.f32.mrf.mxu0
        %v3026 = vadd.f32 0.0, %v3025
        %v3027 = vpop.f32.mrf.mxu0
        %v3028 = vpop.f32.mrf.mxu0
        %v3029 = vadd.f32 0.0, %v3028
        %v3030 = vpop.f32.mrf.mxu0
        %3031 = vmatprep.mubr.bf16.mxu0 0
        %3032 = vmatmul.mubr.bf16.gmra.mxu0 %v2909
        %v3033 = vpop.f32.mrf.mxu0
        %v3034 = vadd.f32 0.0, %v3033
        %v3035 = vpop.f32.mrf.mxu0
        %v3036 = vpop.f32.mrf.mxu0
        %v3037 = vadd.f32 0.0, %v3036
        %v3038 = vpop.f32.mrf.mxu0
        %3039 = vmatprep.mubr.bf16.mxu0 0
        %3040 = vmatmul.mubr.bf16.gmra.mxu0 %v2912
        %v3041 = vpop.f32.mrf.mxu0
        %v3042 = vadd.f32 0.0, %v3041
        %v3043 = vpop.f32.mrf.mxu0
        %v3044 = vpop.f32.mrf.mxu0
        %v3045 = vadd.f32 0.0, %v3044
        %v3046 = vpop.f32.mrf.mxu0
        %3047 = vmatprep.mubr.bf16.mxu0 0
        %3048 = vmatmul.mubr.bf16.gmra.mxu0 %v2915
        %v3049 = vpop.f32.mrf.mxu0
        %v3050 = vadd.f32 0.0, %v3049
        %v3051 = vpop.f32.mrf.mxu0
        %v3052 = vpop.f32.mrf.mxu0
        %v3053 = vadd.f32 0.0, %v3052
        %v3054 = vpop.f32.mrf.mxu0
        %3055 = vmatprep.mubr.bf16.mxu0 0
        %3056 = vmatmul.mubr.bf16.gmra.mxu0 %v2918
        %v3057 = vpop.f32.mrf.mxu0
        %v3058 = vadd.f32 0.0, %v3057
        %v3059 = vpop.f32.mrf.mxu0
        %v3060 = vpop.f32.mrf.mxu0
        %v3061 = vadd.f32 0.0, %v3060
        %v3062 = vpop.f32.mrf.mxu0
        %3063 = vmatprep.mubr.bf16.mxu0 0
        %3064 = vmatmul.mubr.bf16.gmra.mxu0 %v2921
        %v3065 = vpop.f32.mrf.mxu0
        %v3066 = vadd.f32 0.0, %v3065
        %v3067 = vpop.f32.mrf.mxu0
        %v3068 = vpop.f32.mrf.mxu0
        %v3069 = vadd.f32 0.0, %v3068
        %v3070 = vpop.f32.mrf.mxu0
        %3071 = vmatprep.mubr.bf16.mxu0 0
        %3072 = vmatmul.mubr.bf16.gmra.mxu0 %v2924
        %v3073 = vpop.f32.mrf.mxu0
        %v3074 = vadd.f32 0.0, %v3073
        %v3075 = vpop.f32.mrf.mxu0
        %v3076 = vpop.f32.mrf.mxu0
        %v3077 = vadd.f32 0.0, %v3076
        %v3078 = vpop.f32.mrf.mxu0
        %3079 = vmatprep.mubr.bf16.mxu0 0
        %3080 = vmatmul.mubr.bf16.gmra.mxu0 %v2927
        %v3081 = vpop.f32.mrf.mxu0
        %v3082 = vadd.f32 0.0, %v3081
        %v3083 = vpop.f32.mrf.mxu0
        %v3084 = vpop.f32.mrf.mxu0
        %v3085 = vadd.f32 0.0, %v3084
        %v3086 = vpop.f32.mrf.mxu0
        %3087 = vmatprep.mubr.bf16.mxu0 0
        %3088 = vmatmul.mubr.bf16.gmra.mxu0 %v2930
        %v3089 = vpop.f32.mrf.mxu0
        %v3090 = vadd.f32 0.0, %v3089
        %v3091 = vpop.f32.mrf.mxu0
        %v3092 = vpop.f32.mrf.mxu0
        %v3093 = vadd.f32 0.0, %v3092
        %v3094 = vpop.f32.mrf.mxu0
        %3095 = vdwg.mxu0
        %v3096 = vadd.f32 %v2642, %v2970
        %v3097 = vadd.f32 %v2643, %v2973
        %v3098 = vadd.f32 %v2644, %v2978
        %v3099 = vadd.f32 %v2645, %v2981
        %v3100 = vadd.f32 %v2646, %v2986
        %v3101 = vadd.f32 %v2647, %v2989
        %v3102 = vadd.f32 %v2648, %v2994
        %v3103 = vadd.f32 %v2649, %v2997
        %v3104 = vadd.f32 %v2650, %v3002
        %v3105 = vadd.f32 %v2651, %v3005
        %v3106 = vadd.f32 %v2652, %v3010
        %v3107 = vadd.f32 %v2653, %v3013
        %v3108 = vadd.f32 %v2654, %v3018
        %v3109 = vadd.f32 %v2655, %v3021
        %v3110 = vadd.f32 %v2656, %v3026
        %v3111 = vadd.f32 %v2657, %v3029
        %v3112 = vadd.f32 %v2658, %v3034
        %v3113 = vadd.f32 %v2659, %v3037
        %v3114 = vadd.f32 %v2660, %v3042
        %v3115 = vadd.f32 %v2661, %v3045
        %v3116 = vadd.f32 %v2662, %v3050
        %v3117 = vadd.f32 %v2663, %v3053
        %v3118 = vadd.f32 %v2664, %v3058
        %v3119 = vadd.f32 %v2665, %v3061
        %v3120 = vadd.f32 %v2666, %v3066
        %v3121 = vadd.f32 %v2667, %v3069
        %v3122 = vadd.f32 %v2668, %v3074
        %v3123 = vadd.f32 %v2669, %v3077
        %v3124 = vadd.f32 %v2670, %v3082
        %v3125 = vadd.f32 %v2671, %v3085
        %v3126 = vadd.f32 %v2672, %v3090
        %v3127 = vadd.f32 %v2673, %v3093
        %v3128 = vld [vmem:[#allocation2 + $0x17] sm:$0xff]
        %v3129 = vld [vmem:[#allocation2 + $0x1f] sm:$0xff]
        %v3130 = vld [vmem:[#allocation2 + $0x27] sm:$0xff]
        %v3131 = vld [vmem:[#allocation2 + $0x2f] sm:$0xff]
        %v3132 = vld [vmem:[#allocation2 + $0x37] sm:$0xff]
        %v3133 = vld [vmem:[#allocation2 + $0x3f] sm:$0xff]
        %v3134 = vld [vmem:[#allocation2 + $0x47] sm:$0xff]
        %v3135 = vld [vmem:[#allocation2 + $0x4f] sm:$0xff]
        %v3136 = vld [vmem:[#allocation2 + $0x57] sm:$0xff]
        %v3137 = vld [vmem:[#allocation2 + $0x5f] sm:$0xff]
        %v3138 = vld [vmem:[#allocation2 + $0x67] sm:$0xff]
        %v3139 = vld [vmem:[#allocation2 + $0x6f] sm:$0xff]
        %v3140 = vld [vmem:[#allocation2 + $0x77] sm:$0xff]
        %v3141 = vld [vmem:[#allocation2 + $0x7f] sm:$0xff]
        %v3142 = vld [vmem:[#allocation2 + $0x87] sm:$0xff]
        %v3143 = vld [vmem:[#allocation2 + $0x8f] sm:$0xff]
        %v3144 = vld [vmem:[#allocation2 + $0x97] sm:$0xff]
        %v3145 = vld [vmem:[#allocation2 + $0x9f] sm:$0xff]
        %v3146 = vld [vmem:[#allocation2 + $0xa7] sm:$0xff]
        %v3147 = vld [vmem:[#allocation2 + $0xaf] sm:$0xff]
        %v3148 = vld [vmem:[#allocation2 + $0xb7] sm:$0xff]
        %v3149 = vld [vmem:[#allocation2 + $0xbf] sm:$0xff]
        %v3150 = vld [vmem:[#allocation2 + $0xc7] sm:$0xff]
        %v3151 = vld [vmem:[#allocation2 + $0xcf] sm:$0xff]
        %v3152 = vld [vmem:[#allocation2 + $0xd7] sm:$0xff]
        %v3153 = vld [vmem:[#allocation2 + $0xdf] sm:$0xff]
        %v3154 = vld [vmem:[#allocation2 + $0xe7] sm:$0xff]
        %v3155 = vld [vmem:[#allocation2 + $0xef] sm:$0xff]
        %v3156 = vld [vmem:[#allocation2 + $0xf7] sm:$0xff]
        %v3157 = vld [vmem:[#allocation2 + $0xff] sm:$0xff]
        %v3158 = vld [vmem:[#allocation2 + $0x107] sm:$0xff]
        %v3159 = vld [vmem:[#allocation2 + $0x10f] sm:$0xff]
        %3160 = vset.pattern.permute.xlu0 6
        %3161 = vperm.xlu0 %3160, %v436
        %v3162 = vpop.permute.xlu0 %3161
        %3164 = vset.pattern.permute.xlu0 6
        %3165 = vperm.xlu0 %3164, %v437
        %v3166 = vpop.permute.xlu0 %3165
        %3168 = vset.pattern.permute.xlu0 6
        %3169 = vperm.xlu0 %3168, %v438
        %v3170 = vpop.permute.xlu0 %3169
        %3172 = vset.pattern.permute.xlu0 6
        %3173 = vperm.xlu0 %3172, %v439
        %v3174 = vpop.permute.xlu0 %3173
        %3176 = vset.pattern.permute.xlu0 6
        %3177 = vperm.xlu0 %3176, %v440
        %v3178 = vpop.permute.xlu0 %3177
        %3180 = vset.pattern.permute.xlu0 6
        %3181 = vperm.xlu0 %3180, %v441
        %v3182 = vpop.permute.xlu0 %3181
        %3184 = vset.pattern.permute.xlu0 6
        %3185 = vperm.xlu0 %3184, %v442
        %v3186 = vpop.permute.xlu0 %3185
        %3188 = vset.pattern.permute.xlu0 6
        %3189 = vperm.xlu0 %3188, %v443
        %v3190 = vpop.permute.xlu0 %3189
        %3192 = vset.pattern.permute.xlu0 6
        %3193 = vperm.xlu0 %3192, %v444
        %v3194 = vpop.permute.xlu0 %3193
        %3196 = vset.pattern.permute.xlu0 6
        %3197 = vperm.xlu0 %3196, %v445
        %v3198 = vpop.permute.xlu0 %3197
        %3200 = vset.pattern.permute.xlu0 6
        %3201 = vperm.xlu0 %3200, %v446
        %v3202 = vpop.permute.xlu0 %3201
        %3204 = vset.pattern.permute.xlu0 6
        %3205 = vperm.xlu0 %3204, %v447
        %v3206 = vpop.permute.xlu0 %3205
        %3208 = vset.pattern.permute.xlu0 6
        %3209 = vperm.xlu0 %3208, %v448
        %v3210 = vpop.permute.xlu0 %3209
        %3212 = vset.pattern.permute.xlu0 6
        %3213 = vperm.xlu0 %3212, %v449
        %v3214 = vpop.permute.xlu0 %3213
        %3216 = vset.pattern.permute.xlu0 6
        %3217 = vperm.xlu0 %3216, %v450
        %v3218 = vpop.permute.xlu0 %3217
        %3220 = vset.pattern.permute.xlu0 6
        %3221 = vperm.xlu0 %3220, %v451
        %v3222 = vpop.permute.xlu0 %3221
        %3224 = vset.pattern.permute.xlu0 6
        %3225 = vperm.xlu0 %3224, %v452
        %v3226 = vpop.permute.xlu0 %3225
        %3228 = vset.pattern.permute.xlu0 6
        %3229 = vperm.xlu0 %3228, %v453
        %v3230 = vpop.permute.xlu0 %3229
        %3232 = vset.pattern.permute.xlu0 6
        %3233 = vperm.xlu0 %3232, %v454
        %v3234 = vpop.permute.xlu0 %3233
        %3236 = vset.pattern.permute.xlu0 6
        %3237 = vperm.xlu0 %3236, %v455
        %v3238 = vpop.permute.xlu0 %3237
        %3240 = vset.pattern.permute.xlu0 6
        %3241 = vperm.xlu0 %3240, %v456
        %v3242 = vpop.permute.xlu0 %3241
        %3244 = vset.pattern.permute.xlu0 6
        %3245 = vperm.xlu0 %3244, %v457
        %v3246 = vpop.permute.xlu0 %3245
        %3248 = vset.pattern.permute.xlu0 6
        %3249 = vperm.xlu0 %3248, %v458
        %v3250 = vpop.permute.xlu0 %3249
        %3252 = vset.pattern.permute.xlu0 6
        %3253 = vperm.xlu0 %3252, %v459
        %v3254 = vpop.permute.xlu0 %3253
        %3256 = vset.pattern.permute.xlu0 6
        %3257 = vperm.xlu0 %3256, %v460
        %v3258 = vpop.permute.xlu0 %3257
        %3260 = vset.pattern.permute.xlu0 6
        %3261 = vperm.xlu0 %3260, %v461
        %v3262 = vpop.permute.xlu0 %3261
        %3264 = vset.pattern.permute.xlu0 6
        %3265 = vperm.xlu0 %3264, %v462
        %v3266 = vpop.permute.xlu0 %3265
        %3268 = vset.pattern.permute.xlu0 6
        %3269 = vperm.xlu0 %3268, %v463
        %v3270 = vpop.permute.xlu0 %3269
        %3272 = vset.pattern.permute.xlu0 6
        %3273 = vperm.xlu0 %3272, %v464
        %v3274 = vpop.permute.xlu0 %3273
        %3276 = vset.pattern.permute.xlu0 6
        %3277 = vperm.xlu0 %3276, %v465
        %v3278 = vpop.permute.xlu0 %3277
        %3280 = vset.pattern.permute.xlu0 6
        %3281 = vperm.xlu0 %3280, %v466
        %v3282 = vpop.permute.xlu0 %3281
        %3284 = vset.pattern.permute.xlu0 6
        %3285 = vperm.xlu0 %3284, %v467
        %v3286 = vpop.permute.xlu0 %3285
        %v3288 = vmul.f32 %v3128, %v3162
        %v3289 = vmul.f32 %v3129, %v3166
        %v3290 = vmul.f32 %v3130, %v3170
        %v3291 = vmul.f32 %v3131, %v3174
        %v3292 = vmul.f32 %v3132, %v3178
        %v3293 = vmul.f32 %v3133, %v3182
        %v3294 = vmul.f32 %v3134, %v3186
        %v3295 = vmul.f32 %v3135, %v3190
        %v3296 = vmul.f32 %v3136, %v3194
        %v3297 = vmul.f32 %v3137, %v3198
        %v3298 = vmul.f32 %v3138, %v3202
        %v3299 = vmul.f32 %v3139, %v3206
        %v3300 = vmul.f32 %v3140, %v3210
        %v3301 = vmul.f32 %v3141, %v3214
        %v3302 = vmul.f32 %v3142, %v3218
        %v3303 = vmul.f32 %v3143, %v3222
        %v3304 = vmul.f32 %v3144, %v3226
        %v3305 = vmul.f32 %v3145, %v3230
        %v3306 = vmul.f32 %v3146, %v3234
        %v3307 = vmul.f32 %v3147, %v3238
        %v3308 = vmul.f32 %v3148, %v3242
        %v3309 = vmul.f32 %v3149, %v3246
        %v3310 = vmul.f32 %v3150, %v3250
        %v3311 = vmul.f32 %v3151, %v3254
        %v3312 = vmul.f32 %v3152, %v3258
        %v3313 = vmul.f32 %v3153, %v3262
        %v3314 = vmul.f32 %v3154, %v3266
        %v3315 = vmul.f32 %v3155, %v3270
        %v3316 = vmul.f32 %v3156, %v3274
        %v3317 = vmul.f32 %v3157, %v3278
        %v3318 = vmul.f32 %v3158, %v3282
        %v3319 = vmul.f32 %v3159, %v3286
        %v3320 = vpack.c.bf16 %v3289, %v3288
        %v3321 = vpack.c.bf16 %v3291, %v3290
        %v3322 = vpack.c.bf16 %v3293, %v3292
        %v3323 = vpack.c.bf16 %v3295, %v3294
        %v3324 = vpack.c.bf16 %v3297, %v3296
        %v3325 = vpack.c.bf16 %v3299, %v3298
        %v3326 = vpack.c.bf16 %v3301, %v3300
        %v3327 = vpack.c.bf16 %v3303, %v3302
        %v3328 = vpack.c.bf16 %v3305, %v3304
        %v3329 = vpack.c.bf16 %v3307, %v3306
        %v3330 = vpack.c.bf16 %v3309, %v3308
        %v3331 = vpack.c.bf16 %v3311, %v3310
        %v3332 = vpack.c.bf16 %v3313, %v3312
        %v3333 = vpack.c.bf16 %v3315, %v3314
        %v3334 = vpack.c.bf16 %v3317, %v3316
        %v3335 = vpack.c.bf16 %v3319, %v3318
        %s3336 = scalar_lea.vmem %s1, 24
        %v3337 = vld [vmem:[%s3336] sm:$0xf]
        %v3339 = vsel %vm371, %v3320, 0
        %v3342 = vsel %vm371, %v3321, 0
        %v3345 = vsel %vm371, %v3322, 0
        %v3348 = vsel %vm371, %v3323, 0
        %v3351 = vsel %vm371, %v3324, 0
        %v3354 = vsel %vm371, %v3325, 0
        %v3357 = vsel %vm371, %v3326, 0
        %v3360 = vsel %vm371, %v3327, 0
        %v3363 = vsel %vm371, %v3328, 0
        %v3366 = vsel %vm371, %v3329, 0
        %v3369 = vsel %vm371, %v3330, 0
        %v3372 = vsel %vm371, %v3331, 0
        %v3375 = vsel %vm371, %v3332, 0
        %v3378 = vsel %vm371, %v3333, 0
        %v3381 = vsel %vm371, %v3334, 0
        %v3384 = vsel %vm371, %v3335, 0
        %v3387 = vsel %vm935, %v3337, 0
        %3389 = vmatprep.subr.bf16.mxu0 0
        %3390 = vmatpush1.bf16.msra.mxu0 0
        %3391 = vmatprep.subr.bf16.mxu0 0
        %3392 = vmatpush1.bf16.msra.mxu0 0
        %3393 = vmatprep.subr.bf16.mxu0 0
        %3394 = vmatpush1.bf16.msra.mxu0 0
        %3395 = vmatprep.subr.bf16.mxu0 0
        %3396 = vmatpush1.bf16.msra.mxu0 0
        %3397 = vmatprep.subr.bf16.mxu0 0
        %3398 = vmatpush1.bf16.msra.mxu0 0
        %3399 = vmatprep.subr.bf16.mxu0 0
        %3400 = vmatpush1.bf16.msra.mxu0 0
        %3401 = vmatprep.subr.bf16.mxu0 0
        %3402 = vmatpush1.bf16.msra.mxu0 0
        %3403 = vmatprep.subr.bf16.mxu0 0
        %3404 = vmatpush1.bf16.msra.mxu0 %v3387
        %3405 = vmatprep.subr.bf16.mxu0 0
        %3406 = vmatpush2.bf16.msra.mxu0 0
        %3407 = vmatprep.subr.bf16.mxu0 0
        %3408 = vmatpush2.bf16.msra.mxu0 0
        %3409 = vmatprep.subr.bf16.mxu0 0
        %3410 = vmatpush2.bf16.msra.mxu0 0
        %3411 = vmatprep.subr.bf16.mxu0 0
        %3412 = vmatpush2.bf16.msra.mxu0 0
        %3413 = vmatprep.subr.bf16.mxu0 0
        %3414 = vmatpush2.bf16.msra.mxu0 0
        %3415 = vmatprep.subr.bf16.mxu0 0
        %3416 = vmatpush2.bf16.msra.mxu0 0
        %3417 = vmatprep.subr.bf16.mxu0 0
        %3418 = vmatpush2.bf16.msra.mxu0 0
        %3419 = vmatprep.subr.bf16.mxu0 0
        %3420 = vmatpush2.bf16.msra.mxu0 0
        %3421 = vmatprep.mubr.bf16.mxu0 0
        %3422 = vmatmul.mubr.bf16.gmra.mxu0 %v3339
        %v3423 = vpop.f32.mrf.mxu0
        %v3424 = vadd.f32 0.0, %v3423
        %v3425 = vpop.f32.mrf.mxu0
        %v3426 = vpop.f32.mrf.mxu0
        %v3427 = vadd.f32 0.0, %v3426
        %v3428 = vpop.f32.mrf.mxu0
        %3429 = vmatprep.mubr.bf16.mxu0 0
        %3430 = vmatmul.mubr.bf16.gmra.mxu0 %v3342
        %v3431 = vpop.f32.mrf.mxu0
        %v3432 = vadd.f32 0.0, %v3431
        %v3433 = vpop.f32.mrf.mxu0
        %v3434 = vpop.f32.mrf.mxu0
        %v3435 = vadd.f32 0.0, %v3434
        %v3436 = vpop.f32.mrf.mxu0
        %3437 = vmatprep.mubr.bf16.mxu0 0
        %3438 = vmatmul.mubr.bf16.gmra.mxu0 %v3345
        %v3439 = vpop.f32.mrf.mxu0
        %v3440 = vadd.f32 0.0, %v3439
        %v3441 = vpop.f32.mrf.mxu0
        %v3442 = vpop.f32.mrf.mxu0
        %v3443 = vadd.f32 0.0, %v3442
        %v3444 = vpop.f32.mrf.mxu0
        %3445 = vmatprep.mubr.bf16.mxu0 0
        %3446 = vmatmul.mubr.bf16.gmra.mxu0 %v3348
        %v3447 = vpop.f32.mrf.mxu0
        %v3448 = vadd.f32 0.0, %v3447
        %v3449 = vpop.f32.mrf.mxu0
        %v3450 = vpop.f32.mrf.mxu0
        %v3451 = vadd.f32 0.0, %v3450
        %v3452 = vpop.f32.mrf.mxu0
        %3453 = vmatprep.mubr.bf16.mxu0 0
        %3454 = vmatmul.mubr.bf16.gmra.mxu0 %v3351
        %v3455 = vpop.f32.mrf.mxu0
        %v3456 = vadd.f32 0.0, %v3455
        %v3457 = vpop.f32.mrf.mxu0
        %v3458 = vpop.f32.mrf.mxu0
        %v3459 = vadd.f32 0.0, %v3458
        %v3460 = vpop.f32.mrf.mxu0
        %3461 = vmatprep.mubr.bf16.mxu0 0
        %3462 = vmatmul.mubr.bf16.gmra.mxu0 %v3354
        %v3463 = vpop.f32.mrf.mxu0
        %v3464 = vadd.f32 0.0, %v3463
        %v3465 = vpop.f32.mrf.mxu0
        %v3466 = vpop.f32.mrf.mxu0
        %v3467 = vadd.f32 0.0, %v3466
        %v3468 = vpop.f32.mrf.mxu0
        %3469 = vmatprep.mubr.bf16.mxu0 0
        %3470 = vmatmul.mubr.bf16.gmra.mxu0 %v3357
        %v3471 = vpop.f32.mrf.mxu0
        %v3472 = vadd.f32 0.0, %v3471
        %v3473 = vpop.f32.mrf.mxu0
        %v3474 = vpop.f32.mrf.mxu0
        %v3475 = vadd.f32 0.0, %v3474
        %v3476 = vpop.f32.mrf.mxu0
        %3477 = vmatprep.mubr.bf16.mxu0 0
        %3478 = vmatmul.mubr.bf16.gmra.mxu0 %v3360
        %v3479 = vpop.f32.mrf.mxu0
        %v3480 = vadd.f32 0.0, %v3479
        %v3481 = vpop.f32.mrf.mxu0
        %v3482 = vpop.f32.mrf.mxu0
        %v3483 = vadd.f32 0.0, %v3482
        %v3484 = vpop.f32.mrf.mxu0
        %3485 = vmatprep.mubr.bf16.mxu0 0
        %3486 = vmatmul.mubr.bf16.gmra.mxu0 %v3363
        %v3487 = vpop.f32.mrf.mxu0
        %v3488 = vadd.f32 0.0, %v3487
        %v3489 = vpop.f32.mrf.mxu0
        %v3490 = vpop.f32.mrf.mxu0
        %v3491 = vadd.f32 0.0, %v3490
        %v3492 = vpop.f32.mrf.mxu0
        %3493 = vmatprep.mubr.bf16.mxu0 0
        %3494 = vmatmul.mubr.bf16.gmra.mxu0 %v3366
        %v3495 = vpop.f32.mrf.mxu0
        %v3496 = vadd.f32 0.0, %v3495
        %v3497 = vpop.f32.mrf.mxu0
        %v3498 = vpop.f32.mrf.mxu0
        %v3499 = vadd.f32 0.0, %v3498
        %v3500 = vpop.f32.mrf.mxu0
        %3501 = vmatprep.mubr.bf16.mxu0 0
        %3502 = vmatmul.mubr.bf16.gmra.mxu0 %v3369
        %v3503 = vpop.f32.mrf.mxu0
        %v3504 = vadd.f32 0.0, %v3503
        %v3505 = vpop.f32.mrf.mxu0
        %v3506 = vpop.f32.mrf.mxu0
        %v3507 = vadd.f32 0.0, %v3506
        %v3508 = vpop.f32.mrf.mxu0
        %3509 = vmatprep.mubr.bf16.mxu0 0
        %3510 = vmatmul.mubr.bf16.gmra.mxu0 %v3372
        %v3511 = vpop.f32.mrf.mxu0
        %v3512 = vadd.f32 0.0, %v3511
        %v3513 = vpop.f32.mrf.mxu0
        %v3514 = vpop.f32.mrf.mxu0
        %v3515 = vadd.f32 0.0, %v3514
        %v3516 = vpop.f32.mrf.mxu0
        %3517 = vmatprep.mubr.bf16.mxu0 0
        %3518 = vmatmul.mubr.bf16.gmra.mxu0 %v3375
        %v3519 = vpop.f32.mrf.mxu0
        %v3520 = vadd.f32 0.0, %v3519
        %v3521 = vpop.f32.mrf.mxu0
        %v3522 = vpop.f32.mrf.mxu0
        %v3523 = vadd.f32 0.0, %v3522
        %v3524 = vpop.f32.mrf.mxu0
        %3525 = vmatprep.mubr.bf16.mxu0 0
        %3526 = vmatmul.mubr.bf16.gmra.mxu0 %v3378
        %v3527 = vpop.f32.mrf.mxu0
        %v3528 = vadd.f32 0.0, %v3527
        %v3529 = vpop.f32.mrf.mxu0
        %v3530 = vpop.f32.mrf.mxu0
        %v3531 = vadd.f32 0.0, %v3530
        %v3532 = vpop.f32.mrf.mxu0
        %3533 = vmatprep.mubr.bf16.mxu0 0
        %3534 = vmatmul.mubr.bf16.gmra.mxu0 %v3381
        %v3535 = vpop.f32.mrf.mxu0
        %v3536 = vadd.f32 0.0, %v3535
        %v3537 = vpop.f32.mrf.mxu0
        %v3538 = vpop.f32.mrf.mxu0
        %v3539 = vadd.f32 0.0, %v3538
        %v3540 = vpop.f32.mrf.mxu0
        %3541 = vmatprep.mubr.bf16.mxu0 0
        %3542 = vmatmul.mubr.bf16.gmra.mxu0 %v3384
        %v3543 = vpop.f32.mrf.mxu0
        %v3544 = vadd.f32 0.0, %v3543
        %v3545 = vpop.f32.mrf.mxu0
        %v3546 = vpop.f32.mrf.mxu0
        %v3547 = vadd.f32 0.0, %v3546
        %v3548 = vpop.f32.mrf.mxu0
        %3549 = vdwg.mxu0
        %v3550 = vadd.f32 %v3096, %v3424
        %v3551 = vadd.f32 %v3097, %v3427
        %v3552 = vadd.f32 %v3098, %v3432
        %v3553 = vadd.f32 %v3099, %v3435
        %v3554 = vadd.f32 %v3100, %v3440
        %v3555 = vadd.f32 %v3101, %v3443
        %v3556 = vadd.f32 %v3102, %v3448
        %v3557 = vadd.f32 %v3103, %v3451
        %v3558 = vadd.f32 %v3104, %v3456
        %v3559 = vadd.f32 %v3105, %v3459
        %v3560 = vadd.f32 %v3106, %v3464
        %v3561 = vadd.f32 %v3107, %v3467
        %v3562 = vadd.f32 %v3108, %v3472
        %v3563 = vadd.f32 %v3109, %v3475
        %v3564 = vadd.f32 %v3110, %v3480
        %v3565 = vadd.f32 %v3111, %v3483
        %v3566 = vadd.f32 %v3112, %v3488
        %v3567 = vadd.f32 %v3113, %v3491
        %v3568 = vadd.f32 %v3114, %v3496
        %v3569 = vadd.f32 %v3115, %v3499
        %v3570 = vadd.f32 %v3116, %v3504
        %v3571 = vadd.f32 %v3117, %v3507
        %v3572 = vadd.f32 %v3118, %v3512
        %v3573 = vadd.f32 %v3119, %v3515
        %v3574 = vadd.f32 %v3120, %v3520
        %v3575 = vadd.f32 %v3121, %v3523
        %v3576 = vadd.f32 %v3122, %v3528
        %v3577 = vadd.f32 %v3123, %v3531
        %v3578 = vadd.f32 %v3124, %v3536
        %v3579 = vadd.f32 %v3125, %v3539
        %v3580 = vadd.f32 %v3126, %v3544
        %v3581 = vadd.f32 %v3127, %v3547
        %v3582 = vld [vmem:[#allocation2 + $0x18] sm:$0xff]
        %v3583 = vld [vmem:[#allocation2 + $0x20] sm:$0xff]
        %v3584 = vld [vmem:[#allocation2 + $0x28] sm:$0xff]
        %v3585 = vld [vmem:[#allocation2 + $0x30] sm:$0xff]
        %v3586 = vld [vmem:[#allocation2 + $0x38] sm:$0xff]
        %v3587 = vld [vmem:[#allocation2 + $0x40] sm:$0xff]
        %v3588 = vld [vmem:[#allocation2 + $0x48] sm:$0xff]
        %v3589 = vld [vmem:[#allocation2 + $0x50] sm:$0xff]
        %v3590 = vld [vmem:[#allocation2 + $0x58] sm:$0xff]
        %v3591 = vld [vmem:[#allocation2 + $0x60] sm:$0xff]
        %v3592 = vld [vmem:[#allocation2 + $0x68] sm:$0xff]
        %v3593 = vld [vmem:[#allocation2 + $0x70] sm:$0xff]
        %v3594 = vld [vmem:[#allocation2 + $0x78] sm:$0xff]
        %v3595 = vld [vmem:[#allocation2 + $0x80] sm:$0xff]
        %v3596 = vld [vmem:[#allocation2 + $0x88] sm:$0xff]
        %v3597 = vld [vmem:[#allocation2 + $0x90] sm:$0xff]
        %v3598 = vld [vmem:[#allocation2 + $0x98] sm:$0xff]
        %v3599 = vld [vmem:[#allocation2 + $0xa0] sm:$0xff]
        %v3600 = vld [vmem:[#allocation2 + $0xa8] sm:$0xff]
        %v3601 = vld [vmem:[#allocation2 + $0xb0] sm:$0xff]
        %v3602 = vld [vmem:[#allocation2 + $0xb8] sm:$0xff]
        %v3603 = vld [vmem:[#allocation2 + $0xc0] sm:$0xff]
        %v3604 = vld [vmem:[#allocation2 + $0xc8] sm:$0xff]
        %v3605 = vld [vmem:[#allocation2 + $0xd0] sm:$0xff]
        %v3606 = vld [vmem:[#allocation2 + $0xd8] sm:$0xff]
        %v3607 = vld [vmem:[#allocation2 + $0xe0] sm:$0xff]
        %v3608 = vld [vmem:[#allocation2 + $0xe8] sm:$0xff]
        %v3609 = vld [vmem:[#allocation2 + $0xf0] sm:$0xff]
        %v3610 = vld [vmem:[#allocation2 + $0xf8] sm:$0xff]
        %v3611 = vld [vmem:[#allocation2 + $0x100] sm:$0xff]
        %v3612 = vld [vmem:[#allocation2 + $0x108] sm:$0xff]
        %v3613 = vld [vmem:[#allocation2 + $0x110] sm:$0xff]
        %3614 = vset.pattern.permute.xlu0 7
        %3615 = vperm.xlu0 %3614, %v436
        %v3616 = vpop.permute.xlu0 %3615
        %3618 = vset.pattern.permute.xlu0 7
        %3619 = vperm.xlu0 %3618, %v437
        %v3620 = vpop.permute.xlu0 %3619
        %3622 = vset.pattern.permute.xlu0 7
        %3623 = vperm.xlu0 %3622, %v438
        %v3624 = vpop.permute.xlu0 %3623
        %3626 = vset.pattern.permute.xlu0 7
        %3627 = vperm.xlu0 %3626, %v439
        %v3628 = vpop.permute.xlu0 %3627
        %3630 = vset.pattern.permute.xlu0 7
        %3631 = vperm.xlu0 %3630, %v440
        %v3632 = vpop.permute.xlu0 %3631
        %3634 = vset.pattern.permute.xlu0 7
        %3635 = vperm.xlu0 %3634, %v441
        %v3636 = vpop.permute.xlu0 %3635
        %3638 = vset.pattern.permute.xlu0 7
        %3639 = vperm.xlu0 %3638, %v442
        %v3640 = vpop.permute.xlu0 %3639
        %3642 = vset.pattern.permute.xlu0 7
        %3643 = vperm.xlu0 %3642, %v443
        %v3644 = vpop.permute.xlu0 %3643
        %3646 = vset.pattern.permute.xlu0 7
        %3647 = vperm.xlu0 %3646, %v444
        %v3648 = vpop.permute.xlu0 %3647
        %3650 = vset.pattern.permute.xlu0 7
        %3651 = vperm.xlu0 %3650, %v445
        %v3652 = vpop.permute.xlu0 %3651
        %3654 = vset.pattern.permute.xlu0 7
        %3655 = vperm.xlu0 %3654, %v446
        %v3656 = vpop.permute.xlu0 %3655
        %3658 = vset.pattern.permute.xlu0 7
        %3659 = vperm.xlu0 %3658, %v447
        %v3660 = vpop.permute.xlu0 %3659
        %3662 = vset.pattern.permute.xlu0 7
        %3663 = vperm.xlu0 %3662, %v448
        %v3664 = vpop.permute.xlu0 %3663
        %3666 = vset.pattern.permute.xlu0 7
        %3667 = vperm.xlu0 %3666, %v449
        %v3668 = vpop.permute.xlu0 %3667
        %3670 = vset.pattern.permute.xlu0 7
        %3671 = vperm.xlu0 %3670, %v450
        %v3672 = vpop.permute.xlu0 %3671
        %3674 = vset.pattern.permute.xlu0 7
        %3675 = vperm.xlu0 %3674, %v451
        %v3676 = vpop.permute.xlu0 %3675
        %3678 = vset.pattern.permute.xlu0 7
        %3679 = vperm.xlu0 %3678, %v452
        %v3680 = vpop.permute.xlu0 %3679
        %3682 = vset.pattern.permute.xlu0 7
        %3683 = vperm.xlu0 %3682, %v453
        %v3684 = vpop.permute.xlu0 %3683
        %3686 = vset.pattern.permute.xlu0 7
        %3687 = vperm.xlu0 %3686, %v454
        %v3688 = vpop.permute.xlu0 %3687
        %3690 = vset.pattern.permute.xlu0 7
        %3691 = vperm.xlu0 %3690, %v455
        %v3692 = vpop.permute.xlu0 %3691
        %3694 = vset.pattern.permute.xlu0 7
        %3695 = vperm.xlu0 %3694, %v456
        %v3696 = vpop.permute.xlu0 %3695
        %3698 = vset.pattern.permute.xlu0 7
        %3699 = vperm.xlu0 %3698, %v457
        %v3700 = vpop.permute.xlu0 %3699
        %3702 = vset.pattern.permute.xlu0 7
        %3703 = vperm.xlu0 %3702, %v458
        %v3704 = vpop.permute.xlu0 %3703
        %3706 = vset.pattern.permute.xlu0 7
        %3707 = vperm.xlu0 %3706, %v459
        %v3708 = vpop.permute.xlu0 %3707
        %3710 = vset.pattern.permute.xlu0 7
        %3711 = vperm.xlu0 %3710, %v460
        %v3712 = vpop.permute.xlu0 %3711
        %3714 = vset.pattern.permute.xlu0 7
        %3715 = vperm.xlu0 %3714, %v461
        %v3716 = vpop.permute.xlu0 %3715
        %3718 = vset.pattern.permute.xlu0 7
        %3719 = vperm.xlu0 %3718, %v462
        %v3720 = vpop.permute.xlu0 %3719
        %3722 = vset.pattern.permute.xlu0 7
        %3723 = vperm.xlu0 %3722, %v463
        %v3724 = vpop.permute.xlu0 %3723
        %3726 = vset.pattern.permute.xlu0 7
        %3727 = vperm.xlu0 %3726, %v464
        %v3728 = vpop.permute.xlu0 %3727
        %3730 = vset.pattern.permute.xlu0 7
        %3731 = vperm.xlu0 %3730, %v465
        %v3732 = vpop.permute.xlu0 %3731
        %3734 = vset.pattern.permute.xlu0 7
        %3735 = vperm.xlu0 %3734, %v466
        %v3736 = vpop.permute.xlu0 %3735
        %3738 = vset.pattern.permute.xlu0 7
        %3739 = vperm.xlu0 %3738, %v467
        %v3740 = vpop.permute.xlu0 %3739
        %v3742 = vmul.f32 %v3582, %v3616
        %v3743 = vmul.f32 %v3583, %v3620
        %v3744 = vmul.f32 %v3584, %v3624
        %v3745 = vmul.f32 %v3585, %v3628
        %v3746 = vmul.f32 %v3586, %v3632
        %v3747 = vmul.f32 %v3587, %v3636
        %v3748 = vmul.f32 %v3588, %v3640
        %v3749 = vmul.f32 %v3589, %v3644
        %v3750 = vmul.f32 %v3590, %v3648
        %v3751 = vmul.f32 %v3591, %v3652
        %v3752 = vmul.f32 %v3592, %v3656
        %v3753 = vmul.f32 %v3593, %v3660
        %v3754 = vmul.f32 %v3594, %v3664
        %v3755 = vmul.f32 %v3595, %v3668
        %v3756 = vmul.f32 %v3596, %v3672
        %v3757 = vmul.f32 %v3597, %v3676
        %v3758 = vmul.f32 %v3598, %v3680
        %v3759 = vmul.f32 %v3599, %v3684
        %v3760 = vmul.f32 %v3600, %v3688
        %v3761 = vmul.f32 %v3601, %v3692
        %v3762 = vmul.f32 %v3602, %v3696
        %v3763 = vmul.f32 %v3603, %v3700
        %v3764 = vmul.f32 %v3604, %v3704
        %v3765 = vmul.f32 %v3605, %v3708
        %v3766 = vmul.f32 %v3606, %v3712
        %v3767 = vmul.f32 %v3607, %v3716
        %v3768 = vmul.f32 %v3608, %v3720
        %v3769 = vmul.f32 %v3609, %v3724
        %v3770 = vmul.f32 %v3610, %v3728
        %v3771 = vmul.f32 %v3611, %v3732
        %v3772 = vmul.f32 %v3612, %v3736
        %v3773 = vmul.f32 %v3613, %v3740
        %v3774 = vpack.c.bf16 %v3743, %v3742
        %v3775 = vpack.c.bf16 %v3745, %v3744
        %v3776 = vpack.c.bf16 %v3747, %v3746
        %v3777 = vpack.c.bf16 %v3749, %v3748
        %v3778 = vpack.c.bf16 %v3751, %v3750
        %v3779 = vpack.c.bf16 %v3753, %v3752
        %v3780 = vpack.c.bf16 %v3755, %v3754
        %v3781 = vpack.c.bf16 %v3757, %v3756
        %v3782 = vpack.c.bf16 %v3759, %v3758
        %v3783 = vpack.c.bf16 %v3761, %v3760
        %v3784 = vpack.c.bf16 %v3763, %v3762
        %v3785 = vpack.c.bf16 %v3765, %v3764
        %v3786 = vpack.c.bf16 %v3767, %v3766
        %v3787 = vpack.c.bf16 %v3769, %v3768
        %v3788 = vpack.c.bf16 %v3771, %v3770
        %v3789 = vpack.c.bf16 %v3773, %v3772
        %s3790 = scalar_lea.vmem %s1, 28
        %v3791 = vld [vmem:[%s3790] sm:$0xf]
        %v3793 = vsel %vm371, %v3774, 0
        %v3796 = vsel %vm371, %v3775, 0
        %v3799 = vsel %vm371, %v3776, 0
        %v3802 = vsel %vm371, %v3777, 0
        %v3805 = vsel %vm371, %v3778, 0
        %v3808 = vsel %vm371, %v3779, 0
        %v3811 = vsel %vm371, %v3780, 0
        %v3814 = vsel %vm371, %v3781, 0
        %v3817 = vsel %vm371, %v3782, 0
        %v3820 = vsel %vm371, %v3783, 0
        %v3823 = vsel %vm371, %v3784, 0
        %v3826 = vsel %vm371, %v3785, 0
        %v3829 = vsel %vm371, %v3786, 0
        %v3832 = vsel %vm371, %v3787, 0
        %v3835 = vsel %vm371, %v3788, 0
        %v3838 = vsel %vm371, %v3789, 0
        %v3841 = vsel %vm935, %v3791, 0
        %3843 = vmatprep.subr.bf16.mxu0 0
        %3844 = vmatpush1.bf16.msra.mxu0 0
        %3845 = vmatprep.subr.bf16.mxu0 0
        %3846 = vmatpush1.bf16.msra.mxu0 0
        %3847 = vmatprep.subr.bf16.mxu0 0
        %3848 = vmatpush1.bf16.msra.mxu0 0
        %3849 = vmatprep.subr.bf16.mxu0 0
        %3850 = vmatpush1.bf16.msra.mxu0 0
        %3851 = vmatprep.subr.bf16.mxu0 0
        %3852 = vmatpush1.bf16.msra.mxu0 0
        %3853 = vmatprep.subr.bf16.mxu0 0
        %3854 = vmatpush1.bf16.msra.mxu0 0
        %3855 = vmatprep.subr.bf16.mxu0 0
        %3856 = vmatpush1.bf16.msra.mxu0 0
        %3857 = vmatprep.subr.bf16.mxu0 0
        %3858 = vmatpush1.bf16.msra.mxu0 %v3841
        %3859 = vmatprep.subr.bf16.mxu0 0
        %3860 = vmatpush2.bf16.msra.mxu0 0
        %3861 = vmatprep.subr.bf16.mxu0 0
        %3862 = vmatpush2.bf16.msra.mxu0 0
        %3863 = vmatprep.subr.bf16.mxu0 0
        %3864 = vmatpush2.bf16.msra.mxu0 0
        %3865 = vmatprep.subr.bf16.mxu0 0
        %3866 = vmatpush2.bf16.msra.mxu0 0
        %3867 = vmatprep.subr.bf16.mxu0 0
        %3868 = vmatpush2.bf16.msra.mxu0 0
        %3869 = vmatprep.subr.bf16.mxu0 0
        %3870 = vmatpush2.bf16.msra.mxu0 0
        %3871 = vmatprep.subr.bf16.mxu0 0
        %3872 = vmatpush2.bf16.msra.mxu0 0
        %3873 = vmatprep.subr.bf16.mxu0 0
        %3874 = vmatpush2.bf16.msra.mxu0 0
        %3875 = vmatprep.mubr.bf16.mxu0 0
        %3876 = vmatmul.mubr.bf16.gmra.mxu0 %v3793
        %v3877 = vpop.f32.mrf.mxu0
        %v3878 = vadd.f32 0.0, %v3877
        %v3879 = vpop.f32.mrf.mxu0
        %v3880 = vpop.f32.mrf.mxu0
        %v3881 = vadd.f32 0.0, %v3880
        %v3882 = vpop.f32.mrf.mxu0
        %3883 = vmatprep.mubr.bf16.mxu0 0
        %3884 = vmatmul.mubr.bf16.gmra.mxu0 %v3796
        %v3885 = vpop.f32.mrf.mxu0
        %v3886 = vadd.f32 0.0, %v3885
        %v3887 = vpop.f32.mrf.mxu0
        %v3888 = vpop.f32.mrf.mxu0
        %v3889 = vadd.f32 0.0, %v3888
        %v3890 = vpop.f32.mrf.mxu0
        %3891 = vmatprep.mubr.bf16.mxu0 0
        %3892 = vmatmul.mubr.bf16.gmra.mxu0 %v3799
        %v3893 = vpop.f32.mrf.mxu0
        %v3894 = vadd.f32 0.0, %v3893
        %v3895 = vpop.f32.mrf.mxu0
        %v3896 = vpop.f32.mrf.mxu0
        %v3897 = vadd.f32 0.0, %v3896
        %v3898 = vpop.f32.mrf.mxu0
        %3899 = vmatprep.mubr.bf16.mxu0 0
        %3900 = vmatmul.mubr.bf16.gmra.mxu0 %v3802
        %v3901 = vpop.f32.mrf.mxu0
        %v3902 = vadd.f32 0.0, %v3901
        %v3903 = vpop.f32.mrf.mxu0
        %v3904 = vpop.f32.mrf.mxu0
        %v3905 = vadd.f32 0.0, %v3904
        %v3906 = vpop.f32.mrf.mxu0
        %3907 = vmatprep.mubr.bf16.mxu0 0
        %3908 = vmatmul.mubr.bf16.gmra.mxu0 %v3805
        %v3909 = vpop.f32.mrf.mxu0
        %v3910 = vadd.f32 0.0, %v3909
        %v3911 = vpop.f32.mrf.mxu0
        %v3912 = vpop.f32.mrf.mxu0
        %v3913 = vadd.f32 0.0, %v3912
        %v3914 = vpop.f32.mrf.mxu0
        %3915 = vmatprep.mubr.bf16.mxu0 0
        %3916 = vmatmul.mubr.bf16.gmra.mxu0 %v3808
        %v3917 = vpop.f32.mrf.mxu0
        %v3918 = vadd.f32 0.0, %v3917
        %v3919 = vpop.f32.mrf.mxu0
        %v3920 = vpop.f32.mrf.mxu0
        %v3921 = vadd.f32 0.0, %v3920
        %v3922 = vpop.f32.mrf.mxu0
        %3923 = vmatprep.mubr.bf16.mxu0 0
        %3924 = vmatmul.mubr.bf16.gmra.mxu0 %v3811
        %v3925 = vpop.f32.mrf.mxu0
        %v3926 = vadd.f32 0.0, %v3925
        %v3927 = vpop.f32.mrf.mxu0
        %v3928 = vpop.f32.mrf.mxu0
        %v3929 = vadd.f32 0.0, %v3928
        %v3930 = vpop.f32.mrf.mxu0
        %3931 = vmatprep.mubr.bf16.mxu0 0
        %3932 = vmatmul.mubr.bf16.gmra.mxu0 %v3814
        %v3933 = vpop.f32.mrf.mxu0
        %v3934 = vadd.f32 0.0, %v3933
        %v3935 = vpop.f32.mrf.mxu0
        %v3936 = vpop.f32.mrf.mxu0
        %v3937 = vadd.f32 0.0, %v3936
        %v3938 = vpop.f32.mrf.mxu0
        %3939 = vmatprep.mubr.bf16.mxu0 0
        %3940 = vmatmul.mubr.bf16.gmra.mxu0 %v3817
        %v3941 = vpop.f32.mrf.mxu0
        %v3942 = vadd.f32 0.0, %v3941
        %v3943 = vpop.f32.mrf.mxu0
        %v3944 = vpop.f32.mrf.mxu0
        %v3945 = vadd.f32 0.0, %v3944
        %v3946 = vpop.f32.mrf.mxu0
        %3947 = vmatprep.mubr.bf16.mxu0 0
        %3948 = vmatmul.mubr.bf16.gmra.mxu0 %v3820
        %v3949 = vpop.f32.mrf.mxu0
        %v3950 = vadd.f32 0.0, %v3949
        %v3951 = vpop.f32.mrf.mxu0
        %v3952 = vpop.f32.mrf.mxu0
        %v3953 = vadd.f32 0.0, %v3952
        %v3954 = vpop.f32.mrf.mxu0
        %3955 = vmatprep.mubr.bf16.mxu0 0
        %3956 = vmatmul.mubr.bf16.gmra.mxu0 %v3823
        %v3957 = vpop.f32.mrf.mxu0
        %v3958 = vadd.f32 0.0, %v3957
        %v3959 = vpop.f32.mrf.mxu0
        %v3960 = vpop.f32.mrf.mxu0
        %v3961 = vadd.f32 0.0, %v3960
        %v3962 = vpop.f32.mrf.mxu0
        %3963 = vmatprep.mubr.bf16.mxu0 0
        %3964 = vmatmul.mubr.bf16.gmra.mxu0 %v3826
        %v3965 = vpop.f32.mrf.mxu0
        %v3966 = vadd.f32 0.0, %v3965
        %v3967 = vpop.f32.mrf.mxu0
        %v3968 = vpop.f32.mrf.mxu0
        %v3969 = vadd.f32 0.0, %v3968
        %v3970 = vpop.f32.mrf.mxu0
        %3971 = vmatprep.mubr.bf16.mxu0 0
        %3972 = vmatmul.mubr.bf16.gmra.mxu0 %v3829
        %v3973 = vpop.f32.mrf.mxu0
        %v3974 = vadd.f32 0.0, %v3973
        %v3975 = vpop.f32.mrf.mxu0
        %v3976 = vpop.f32.mrf.mxu0
        %v3977 = vadd.f32 0.0, %v3976
        %v3978 = vpop.f32.mrf.mxu0
        %3979 = vmatprep.mubr.bf16.mxu0 0
        %3980 = vmatmul.mubr.bf16.gmra.mxu0 %v3832
        %v3981 = vpop.f32.mrf.mxu0
        %v3982 = vadd.f32 0.0, %v3981
        %v3983 = vpop.f32.mrf.mxu0
        %v3984 = vpop.f32.mrf.mxu0
        %v3985 = vadd.f32 0.0, %v3984
        %v3986 = vpop.f32.mrf.mxu0
        %3987 = vmatprep.mubr.bf16.mxu0 0
        %3988 = vmatmul.mubr.bf16.gmra.mxu0 %v3835
        %v3989 = vpop.f32.mrf.mxu0
        %v3990 = vadd.f32 0.0, %v3989
        %v3991 = vpop.f32.mrf.mxu0
        %v3992 = vpop.f32.mrf.mxu0
        %v3993 = vadd.f32 0.0, %v3992
        %v3994 = vpop.f32.mrf.mxu0
        %3995 = vmatprep.mubr.bf16.mxu0 0
        %3996 = vmatmul.mubr.bf16.gmra.mxu0 %v3838
        %v3997 = vpop.f32.mrf.mxu0
        %v3998 = vadd.f32 0.0, %v3997
        %v3999 = vpop.f32.mrf.mxu0
        %v4000 = vpop.f32.mrf.mxu0
        %v4001 = vadd.f32 0.0, %v4000
        %v4002 = vpop.f32.mrf.mxu0
        %4003 = vdwg.mxu0
        %v4004 = vadd.f32 %v3550, %v3878
        %v4005 = vadd.f32 %v3551, %v3881
        %v4006 = vadd.f32 %v3552, %v3886
        %v4007 = vadd.f32 %v3553, %v3889
        %v4008 = vadd.f32 %v3554, %v3894
        %v4009 = vadd.f32 %v3555, %v3897
        %v4010 = vadd.f32 %v3556, %v3902
        %v4011 = vadd.f32 %v3557, %v3905
        %v4012 = vadd.f32 %v3558, %v3910
        %v4013 = vadd.f32 %v3559, %v3913
        %v4014 = vadd.f32 %v3560, %v3918
        %v4015 = vadd.f32 %v3561, %v3921
        %v4016 = vadd.f32 %v3562, %v3926
        %v4017 = vadd.f32 %v3563, %v3929
        %v4018 = vadd.f32 %v3564, %v3934
        %v4019 = vadd.f32 %v3565, %v3937
        %v4020 = vadd.f32 %v3566, %v3942
        %v4021 = vadd.f32 %v3567, %v3945
        %v4022 = vadd.f32 %v3568, %v3950
        %v4023 = vadd.f32 %v3569, %v3953
        %v4024 = vadd.f32 %v3570, %v3958
        %v4025 = vadd.f32 %v3571, %v3961
        %v4026 = vadd.f32 %v3572, %v3966
        %v4027 = vadd.f32 %v3573, %v3969
        %v4028 = vadd.f32 %v3574, %v3974
        %v4029 = vadd.f32 %v3575, %v3977
        %v4030 = vadd.f32 %v3576, %v3982
        %v4031 = vadd.f32 %v3577, %v3985
        %v4032 = vadd.f32 %v3578, %v3990
        %v4033 = vadd.f32 %v3579, %v3993
        %v4034 = vadd.f32 %v3580, %v3998
        %v4035 = vadd.f32 %v3581, %v4001
        %v4036 = vld [vmem:[#allocation2 + $0x19] sm:$0xff]
        %v4037 = vld [vmem:[#allocation2 + $0x21] sm:$0xff]
        %v4038 = vld [vmem:[#allocation2 + $0x29] sm:$0xff]
        %v4039 = vld [vmem:[#allocation2 + $0x31] sm:$0xff]
        %v4040 = vld [vmem:[#allocation2 + $0x39] sm:$0xff]
        %v4041 = vld [vmem:[#allocation2 + $0x41] sm:$0xff]
        %v4042 = vld [vmem:[#allocation2 + $0x49] sm:$0xff]
        %v4043 = vld [vmem:[#allocation2 + $0x51] sm:$0xff]
        %v4044 = vld [vmem:[#allocation2 + $0x59] sm:$0xff]
        %v4045 = vld [vmem:[#allocation2 + $0x61] sm:$0xff]
        %v4046 = vld [vmem:[#allocation2 + $0x69] sm:$0xff]
        %v4047 = vld [vmem:[#allocation2 + $0x71] sm:$0xff]
        %v4048 = vld [vmem:[#allocation2 + $0x79] sm:$0xff]
        %v4049 = vld [vmem:[#allocation2 + $0x81] sm:$0xff]
        %v4050 = vld [vmem:[#allocation2 + $0x89] sm:$0xff]
        %v4051 = vld [vmem:[#allocation2 + $0x91] sm:$0xff]
        %v4052 = vld [vmem:[#allocation2 + $0x99] sm:$0xff]
        %v4053 = vld [vmem:[#allocation2 + $0xa1] sm:$0xff]
        %v4054 = vld [vmem:[#allocation2 + $0xa9] sm:$0xff]
        %v4055 = vld [vmem:[#allocation2 + $0xb1] sm:$0xff]
        %v4056 = vld [vmem:[#allocation2 + $0xb9] sm:$0xff]
        %v4057 = vld [vmem:[#allocation2 + $0xc1] sm:$0xff]
        %v4058 = vld [vmem:[#allocation2 + $0xc9] sm:$0xff]
        %v4059 = vld [vmem:[#allocation2 + $0xd1] sm:$0xff]
        %v4060 = vld [vmem:[#allocation2 + $0xd9] sm:$0xff]
        %v4061 = vld [vmem:[#allocation2 + $0xe1] sm:$0xff]
        %v4062 = vld [vmem:[#allocation2 + $0xe9] sm:$0xff]
        %v4063 = vld [vmem:[#allocation2 + $0xf1] sm:$0xff]
        %v4064 = vld [vmem:[#allocation2 + $0xf9] sm:$0xff]
        %v4065 = vld [vmem:[#allocation2 + $0x101] sm:$0xff]
        %v4066 = vld [vmem:[#allocation2 + $0x109] sm:$0xff]
        %v4067 = vld [vmem:[#allocation2 + $0x111] sm:$0xff]
        %4068 = vset.pattern.permute.xlu0 8
        %4069 = vperm.xlu0 %4068, %v436
        %v4070 = vpop.permute.xlu0 %4069
        %4072 = vset.pattern.permute.xlu0 8
        %4073 = vperm.xlu0 %4072, %v437
        %v4074 = vpop.permute.xlu0 %4073
        %4076 = vset.pattern.permute.xlu0 8
        %4077 = vperm.xlu0 %4076, %v438
        %v4078 = vpop.permute.xlu0 %4077
        %4080 = vset.pattern.permute.xlu0 8
        %4081 = vperm.xlu0 %4080, %v439
        %v4082 = vpop.permute.xlu0 %4081
        %4084 = vset.pattern.permute.xlu0 8
        %4085 = vperm.xlu0 %4084, %v440
        %v4086 = vpop.permute.xlu0 %4085
        %4088 = vset.pattern.permute.xlu0 8
        %4089 = vperm.xlu0 %4088, %v441
        %v4090 = vpop.permute.xlu0 %4089
        %4092 = vset.pattern.permute.xlu0 8
        %4093 = vperm.xlu0 %4092, %v442
        %v4094 = vpop.permute.xlu0 %4093
        %4096 = vset.pattern.permute.xlu0 8
        %4097 = vperm.xlu0 %4096, %v443
        %v4098 = vpop.permute.xlu0 %4097
        %4100 = vset.pattern.permute.xlu0 8
        %4101 = vperm.xlu0 %4100, %v444
        %v4102 = vpop.permute.xlu0 %4101
        %4104 = vset.pattern.permute.xlu0 8
        %4105 = vperm.xlu0 %4104, %v445
        %v4106 = vpop.permute.xlu0 %4105
        %4108 = vset.pattern.permute.xlu0 8
        %4109 = vperm.xlu0 %4108, %v446
        %v4110 = vpop.permute.xlu0 %4109
        %4112 = vset.pattern.permute.xlu0 8
        %4113 = vperm.xlu0 %4112, %v447
        %v4114 = vpop.permute.xlu0 %4113
        %4116 = vset.pattern.permute.xlu0 8
        %4117 = vperm.xlu0 %4116, %v448
        %v4118 = vpop.permute.xlu0 %4117
        %4120 = vset.pattern.permute.xlu0 8
        %4121 = vperm.xlu0 %4120, %v449
        %v4122 = vpop.permute.xlu0 %4121
        %4124 = vset.pattern.permute.xlu0 8
        %4125 = vperm.xlu0 %4124, %v450
        %v4126 = vpop.permute.xlu0 %4125
        %4128 = vset.pattern.permute.xlu0 8
        %4129 = vperm.xlu0 %4128, %v451
        %v4130 = vpop.permute.xlu0 %4129
        %4132 = vset.pattern.permute.xlu0 8
        %4133 = vperm.xlu0 %4132, %v452
        %v4134 = vpop.permute.xlu0 %4133
        %4136 = vset.pattern.permute.xlu0 8
        %4137 = vperm.xlu0 %4136, %v453
        %v4138 = vpop.permute.xlu0 %4137
        %4140 = vset.pattern.permute.xlu0 8
        %4141 = vperm.xlu0 %4140, %v454
        %v4142 = vpop.permute.xlu0 %4141
        %4144 = vset.pattern.permute.xlu0 8
        %4145 = vperm.xlu0 %4144, %v455
        %v4146 = vpop.permute.xlu0 %4145
        %4148 = vset.pattern.permute.xlu0 8
        %4149 = vperm.xlu0 %4148, %v456
        %v4150 = vpop.permute.xlu0 %4149
        %4152 = vset.pattern.permute.xlu0 8
        %4153 = vperm.xlu0 %4152, %v457
        %v4154 = vpop.permute.xlu0 %4153
        %4156 = vset.pattern.permute.xlu0 8
        %4157 = vperm.xlu0 %4156, %v458
        %v4158 = vpop.permute.xlu0 %4157
        %4160 = vset.pattern.permute.xlu0 8
        %4161 = vperm.xlu0 %4160, %v459
        %v4162 = vpop.permute.xlu0 %4161
        %4164 = vset.pattern.permute.xlu0 8
        %4165 = vperm.xlu0 %4164, %v460
        %v4166 = vpop.permute.xlu0 %4165
        %4168 = vset.pattern.permute.xlu0 8
        %4169 = vperm.xlu0 %4168, %v461
        %v4170 = vpop.permute.xlu0 %4169
        %4172 = vset.pattern.permute.xlu0 8
        %4173 = vperm.xlu0 %4172, %v462
        %v4174 = vpop.permute.xlu0 %4173
        %4176 = vset.pattern.permute.xlu0 8
        %4177 = vperm.xlu0 %4176, %v463
        %v4178 = vpop.permute.xlu0 %4177
        %4180 = vset.pattern.permute.xlu0 8
        %4181 = vperm.xlu0 %4180, %v464
        %v4182 = vpop.permute.xlu0 %4181
        %4184 = vset.pattern.permute.xlu0 8
        %4185 = vperm.xlu0 %4184, %v465
        %v4186 = vpop.permute.xlu0 %4185
        %4188 = vset.pattern.permute.xlu0 8
        %4189 = vperm.xlu0 %4188, %v466
        %v4190 = vpop.permute.xlu0 %4189
        %4192 = vset.pattern.permute.xlu0 8
        %4193 = vperm.xlu0 %4192, %v467
        %v4194 = vpop.permute.xlu0 %4193
        %v4196 = vmul.f32 %v4036, %v4070
        %v4197 = vmul.f32 %v4037, %v4074
        %v4198 = vmul.f32 %v4038, %v4078
        %v4199 = vmul.f32 %v4039, %v4082
        %v4200 = vmul.f32 %v4040, %v4086
        %v4201 = vmul.f32 %v4041, %v4090
        %v4202 = vmul.f32 %v4042, %v4094
        %v4203 = vmul.f32 %v4043, %v4098
        %v4204 = vmul.f32 %v4044, %v4102
        %v4205 = vmul.f32 %v4045, %v4106
        %v4206 = vmul.f32 %v4046, %v4110
        %v4207 = vmul.f32 %v4047, %v4114
        %v4208 = vmul.f32 %v4048, %v4118
        %v4209 = vmul.f32 %v4049, %v4122
        %v4210 = vmul.f32 %v4050, %v4126
        %v4211 = vmul.f32 %v4051, %v4130
        %v4212 = vmul.f32 %v4052, %v4134
        %v4213 = vmul.f32 %v4053, %v4138
        %v4214 = vmul.f32 %v4054, %v4142
        %v4215 = vmul.f32 %v4055, %v4146
        %v4216 = vmul.f32 %v4056, %v4150
        %v4217 = vmul.f32 %v4057, %v4154
        %v4218 = vmul.f32 %v4058, %v4158
        %v4219 = vmul.f32 %v4059, %v4162
        %v4220 = vmul.f32 %v4060, %v4166
        %v4221 = vmul.f32 %v4061, %v4170
        %v4222 = vmul.f32 %v4062, %v4174
        %v4223 = vmul.f32 %v4063, %v4178
        %v4224 = vmul.f32 %v4064, %v4182
        %v4225 = vmul.f32 %v4065, %v4186
        %v4226 = vmul.f32 %v4066, %v4190
        %v4227 = vmul.f32 %v4067, %v4194
        %v4228 = vpack.c.bf16 %v4197, %v4196
        %v4229 = vpack.c.bf16 %v4199, %v4198
        %v4230 = vpack.c.bf16 %v4201, %v4200
        %v4231 = vpack.c.bf16 %v4203, %v4202
        %v4232 = vpack.c.bf16 %v4205, %v4204
        %v4233 = vpack.c.bf16 %v4207, %v4206
        %v4234 = vpack.c.bf16 %v4209, %v4208
        %v4235 = vpack.c.bf16 %v4211, %v4210
        %v4236 = vpack.c.bf16 %v4213, %v4212
        %v4237 = vpack.c.bf16 %v4215, %v4214
        %v4238 = vpack.c.bf16 %v4217, %v4216
        %v4239 = vpack.c.bf16 %v4219, %v4218
        %v4240 = vpack.c.bf16 %v4221, %v4220
        %v4241 = vpack.c.bf16 %v4223, %v4222
        %v4242 = vpack.c.bf16 %v4225, %v4224
        %v4243 = vpack.c.bf16 %v4227, %v4226
        %s4244 = scalar_lea.vmem %s1, 32
        %v4245 = vld [vmem:[%s4244] sm:$0xf]
        %v4247 = vsel %vm371, %v4228, 0
        %v4250 = vsel %vm371, %v4229, 0
        %v4253 = vsel %vm371, %v4230, 0
        %v4256 = vsel %vm371, %v4231, 0
        %v4259 = vsel %vm371, %v4232, 0
        %v4262 = vsel %vm371, %v4233, 0
        %v4265 = vsel %vm371, %v4234, 0
        %v4268 = vsel %vm371, %v4235, 0
        %v4271 = vsel %vm371, %v4236, 0
        %v4274 = vsel %vm371, %v4237, 0
        %v4277 = vsel %vm371, %v4238, 0
        %v4280 = vsel %vm371, %v4239, 0
        %v4283 = vsel %vm371, %v4240, 0
        %v4286 = vsel %vm371, %v4241, 0
        %v4289 = vsel %vm371, %v4242, 0
        %v4292 = vsel %vm371, %v4243, 0
        %v4295 = vsel %vm935, %v4245, 0
        %4297 = vmatprep.subr.bf16.mxu0 0
        %4298 = vmatpush1.bf16.msra.mxu0 0
        %4299 = vmatprep.subr.bf16.mxu0 0
        %4300 = vmatpush1.bf16.msra.mxu0 0
        %4301 = vmatprep.subr.bf16.mxu0 0
        %4302 = vmatpush1.bf16.msra.mxu0 0
        %4303 = vmatprep.subr.bf16.mxu0 0
        %4304 = vmatpush1.bf16.msra.mxu0 0
        %4305 = vmatprep.subr.bf16.mxu0 0
        %4306 = vmatpush1.bf16.msra.mxu0 0
        %4307 = vmatprep.subr.bf16.mxu0 0
        %4308 = vmatpush1.bf16.msra.mxu0 0
        %4309 = vmatprep.subr.bf16.mxu0 0
        %4310 = vmatpush1.bf16.msra.mxu0 0
        %4311 = vmatprep.subr.bf16.mxu0 0
        %4312 = vmatpush1.bf16.msra.mxu0 %v4295
        %4313 = vmatprep.subr.bf16.mxu0 0
        %4314 = vmatpush2.bf16.msra.mxu0 0
        %4315 = vmatprep.subr.bf16.mxu0 0
        %4316 = vmatpush2.bf16.msra.mxu0 0
        %4317 = vmatprep.subr.bf16.mxu0 0
        %4318 = vmatpush2.bf16.msra.mxu0 0
        %4319 = vmatprep.subr.bf16.mxu0 0
        %4320 = vmatpush2.bf16.msra.mxu0 0
        %4321 = vmatprep.subr.bf16.mxu0 0
        %4322 = vmatpush2.bf16.msra.mxu0 0
        %4323 = vmatprep.subr.bf16.mxu0 0
        %4324 = vmatpush2.bf16.msra.mxu0 0
        %4325 = vmatprep.subr.bf16.mxu0 0
        %4326 = vmatpush2.bf16.msra.mxu0 0
        %4327 = vmatprep.subr.bf16.mxu0 0
        %4328 = vmatpush2.bf16.msra.mxu0 0
        %4329 = vmatprep.mubr.bf16.mxu0 0
        %4330 = vmatmul.mubr.bf16.gmra.mxu0 %v4247
        %v4331 = vpop.f32.mrf.mxu0
        %v4332 = vadd.f32 0.0, %v4331
        %v4333 = vpop.f32.mrf.mxu0
        %v4334 = vpop.f32.mrf.mxu0
        %v4335 = vadd.f32 0.0, %v4334
        %v4336 = vpop.f32.mrf.mxu0
        %4337 = vmatprep.mubr.bf16.mxu0 0
        %4338 = vmatmul.mubr.bf16.gmra.mxu0 %v4250
        %v4339 = vpop.f32.mrf.mxu0
        %v4340 = vadd.f32 0.0, %v4339
        %v4341 = vpop.f32.mrf.mxu0
        %v4342 = vpop.f32.mrf.mxu0
        %v4343 = vadd.f32 0.0, %v4342
        %v4344 = vpop.f32.mrf.mxu0
        %4345 = vmatprep.mubr.bf16.mxu0 0
        %4346 = vmatmul.mubr.bf16.gmra.mxu0 %v4253
        %v4347 = vpop.f32.mrf.mxu0
        %v4348 = vadd.f32 0.0, %v4347
        %v4349 = vpop.f32.mrf.mxu0
        %v4350 = vpop.f32.mrf.mxu0
        %v4351 = vadd.f32 0.0, %v4350
        %v4352 = vpop.f32.mrf.mxu0
        %4353 = vmatprep.mubr.bf16.mxu0 0
        %4354 = vmatmul.mubr.bf16.gmra.mxu0 %v4256
        %v4355 = vpop.f32.mrf.mxu0
        %v4356 = vadd.f32 0.0, %v4355
        %v4357 = vpop.f32.mrf.mxu0
        %v4358 = vpop.f32.mrf.mxu0
        %v4359 = vadd.f32 0.0, %v4358
        %v4360 = vpop.f32.mrf.mxu0
        %4361 = vmatprep.mubr.bf16.mxu0 0
        %4362 = vmatmul.mubr.bf16.gmra.mxu0 %v4259
        %v4363 = vpop.f32.mrf.mxu0
        %v4364 = vadd.f32 0.0, %v4363
        %v4365 = vpop.f32.mrf.mxu0
        %v4366 = vpop.f32.mrf.mxu0
        %v4367 = vadd.f32 0.0, %v4366
        %v4368 = vpop.f32.mrf.mxu0
        %4369 = vmatprep.mubr.bf16.mxu0 0
        %4370 = vmatmul.mubr.bf16.gmra.mxu0 %v4262
        %v4371 = vpop.f32.mrf.mxu0
        %v4372 = vadd.f32 0.0, %v4371
        %v4373 = vpop.f32.mrf.mxu0
        %v4374 = vpop.f32.mrf.mxu0
        %v4375 = vadd.f32 0.0, %v4374
        %v4376 = vpop.f32.mrf.mxu0
        %4377 = vmatprep.mubr.bf16.mxu0 0
        %4378 = vmatmul.mubr.bf16.gmra.mxu0 %v4265
        %v4379 = vpop.f32.mrf.mxu0
        %v4380 = vadd.f32 0.0, %v4379
        %v4381 = vpop.f32.mrf.mxu0
        %v4382 = vpop.f32.mrf.mxu0
        %v4383 = vadd.f32 0.0, %v4382
        %v4384 = vpop.f32.mrf.mxu0
        %4385 = vmatprep.mubr.bf16.mxu0 0
        %4386 = vmatmul.mubr.bf16.gmra.mxu0 %v4268
        %v4387 = vpop.f32.mrf.mxu0
        %v4388 = vadd.f32 0.0, %v4387
        %v4389 = vpop.f32.mrf.mxu0
        %v4390 = vpop.f32.mrf.mxu0
        %v4391 = vadd.f32 0.0, %v4390
        %v4392 = vpop.f32.mrf.mxu0
        %4393 = vmatprep.mubr.bf16.mxu0 0
        %4394 = vmatmul.mubr.bf16.gmra.mxu0 %v4271
        %v4395 = vpop.f32.mrf.mxu0
        %v4396 = vadd.f32 0.0, %v4395
        %v4397 = vpop.f32.mrf.mxu0
        %v4398 = vpop.f32.mrf.mxu0
        %v4399 = vadd.f32 0.0, %v4398
        %v4400 = vpop.f32.mrf.mxu0
        %4401 = vmatprep.mubr.bf16.mxu0 0
        %4402 = vmatmul.mubr.bf16.gmra.mxu0 %v4274
        %v4403 = vpop.f32.mrf.mxu0
        %v4404 = vadd.f32 0.0, %v4403
        %v4405 = vpop.f32.mrf.mxu0
        %v4406 = vpop.f32.mrf.mxu0
        %v4407 = vadd.f32 0.0, %v4406
        %v4408 = vpop.f32.mrf.mxu0
        %4409 = vmatprep.mubr.bf16.mxu0 0
        %4410 = vmatmul.mubr.bf16.gmra.mxu0 %v4277
        %v4411 = vpop.f32.mrf.mxu0
        %v4412 = vadd.f32 0.0, %v4411
        %v4413 = vpop.f32.mrf.mxu0
        %v4414 = vpop.f32.mrf.mxu0
        %v4415 = vadd.f32 0.0, %v4414
        %v4416 = vpop.f32.mrf.mxu0
        %4417 = vmatprep.mubr.bf16.mxu0 0
        %4418 = vmatmul.mubr.bf16.gmra.mxu0 %v4280
        %v4419 = vpop.f32.mrf.mxu0
        %v4420 = vadd.f32 0.0, %v4419
        %v4421 = vpop.f32.mrf.mxu0
        %v4422 = vpop.f32.mrf.mxu0
        %v4423 = vadd.f32 0.0, %v4422
        %v4424 = vpop.f32.mrf.mxu0
        %4425 = vmatprep.mubr.bf16.mxu0 0
        %4426 = vmatmul.mubr.bf16.gmra.mxu0 %v4283
        %v4427 = vpop.f32.mrf.mxu0
        %v4428 = vadd.f32 0.0, %v4427
        %v4429 = vpop.f32.mrf.mxu0
        %v4430 = vpop.f32.mrf.mxu0
        %v4431 = vadd.f32 0.0, %v4430
        %v4432 = vpop.f32.mrf.mxu0
        %4433 = vmatprep.mubr.bf16.mxu0 0
        %4434 = vmatmul.mubr.bf16.gmra.mxu0 %v4286
        %v4435 = vpop.f32.mrf.mxu0
        %v4436 = vadd.f32 0.0, %v4435
        %v4437 = vpop.f32.mrf.mxu0
        %v4438 = vpop.f32.mrf.mxu0
        %v4439 = vadd.f32 0.0, %v4438
        %v4440 = vpop.f32.mrf.mxu0
        %4441 = vmatprep.mubr.bf16.mxu0 0
        %4442 = vmatmul.mubr.bf16.gmra.mxu0 %v4289
        %v4443 = vpop.f32.mrf.mxu0
        %v4444 = vadd.f32 0.0, %v4443
        %v4445 = vpop.f32.mrf.mxu0
        %v4446 = vpop.f32.mrf.mxu0
        %v4447 = vadd.f32 0.0, %v4446
        %v4448 = vpop.f32.mrf.mxu0
        %4449 = vmatprep.mubr.bf16.mxu0 0
        %4450 = vmatmul.mubr.bf16.gmra.mxu0 %v4292
        %v4451 = vpop.f32.mrf.mxu0
        %v4452 = vadd.f32 0.0, %v4451
        %v4453 = vpop.f32.mrf.mxu0
        %v4454 = vpop.f32.mrf.mxu0
        %v4455 = vadd.f32 0.0, %v4454
        %v4456 = vpop.f32.mrf.mxu0
        %4457 = vdwg.mxu0
        %v4458 = vadd.f32 %v4004, %v4332
        %v4459 = vadd.f32 %v4005, %v4335
        %v4460 = vadd.f32 %v4006, %v4340
        %v4461 = vadd.f32 %v4007, %v4343
        %v4462 = vadd.f32 %v4008, %v4348
        %v4463 = vadd.f32 %v4009, %v4351
        %v4464 = vadd.f32 %v4010, %v4356
        %v4465 = vadd.f32 %v4011, %v4359
        %v4466 = vadd.f32 %v4012, %v4364
        %v4467 = vadd.f32 %v4013, %v4367
        %v4468 = vadd.f32 %v4014, %v4372
        %v4469 = vadd.f32 %v4015, %v4375
        %v4470 = vadd.f32 %v4016, %v4380
        %v4471 = vadd.f32 %v4017, %v4383
        %v4472 = vadd.f32 %v4018, %v4388
        %v4473 = vadd.f32 %v4019, %v4391
        %v4474 = vadd.f32 %v4020, %v4396
        %v4475 = vadd.f32 %v4021, %v4399
        %v4476 = vadd.f32 %v4022, %v4404
        %v4477 = vadd.f32 %v4023, %v4407
        %v4478 = vadd.f32 %v4024, %v4412
        %v4479 = vadd.f32 %v4025, %v4415
        %v4480 = vadd.f32 %v4026, %v4420
        %v4481 = vadd.f32 %v4027, %v4423
        %v4482 = vadd.f32 %v4028, %v4428
        %v4483 = vadd.f32 %v4029, %v4431
        %v4484 = vadd.f32 %v4030, %v4436
        %v4485 = vadd.f32 %v4031, %v4439
        %v4486 = vadd.f32 %v4032, %v4444
        %v4487 = vadd.f32 %v4033, %v4447
        %v4488 = vadd.f32 %v4034, %v4452
        %v4489 = vadd.f32 %v4035, %v4455
        %v4490 = vld [vmem:[%s3] sm:$0x1]
        %v4491 = vlaneseq
        %v4492 = vshrl.u32 %v4491, 7
        %v4493 = vsub.s32 0, %v4492
        %v4494 = vrot.slane %v4490, %v4493
        %v4495 = vmul.f32 %v4458, %v4494
        %v4496 = vmul.f32 %v4459, %v4494
        %v4497 = vmul.f32 %v4460, %v4494
        %v4498 = vmul.f32 %v4461, %v4494
        %v4499 = vmul.f32 %v4462, %v4494
        %v4500 = vmul.f32 %v4463, %v4494
        %v4501 = vmul.f32 %v4464, %v4494
        %v4502 = vmul.f32 %v4465, %v4494
        %v4503 = vmul.f32 %v4466, %v4494
        %v4504 = vmul.f32 %v4467, %v4494
        %v4505 = vmul.f32 %v4468, %v4494
        %v4506 = vmul.f32 %v4469, %v4494
        %v4507 = vmul.f32 %v4470, %v4494
        %v4508 = vmul.f32 %v4471, %v4494
        %v4509 = vmul.f32 %v4472, %v4494
        %v4510 = vmul.f32 %v4473, %v4494
        %v4511 = vmul.f32 %v4474, %v4494
        %v4512 = vmul.f32 %v4475, %v4494
        %v4513 = vmul.f32 %v4476, %v4494
        %v4514 = vmul.f32 %v4477, %v4494
        %v4515 = vmul.f32 %v4478, %v4494
        %v4516 = vmul.f32 %v4479, %v4494
        %v4517 = vmul.f32 %v4480, %v4494
        %v4518 = vmul.f32 %v4481, %v4494
        %v4519 = vmul.f32 %v4482, %v4494
        %v4520 = vmul.f32 %v4483, %v4494
        %v4521 = vmul.f32 %v4484, %v4494
        %v4522 = vmul.f32 %v4485, %v4494
        %v4523 = vmul.f32 %v4486, %v4494
        %v4524 = vmul.f32 %v4487, %v4494
        %v4525 = vmul.f32 %v4488, %v4494
        %v4526 = vmul.f32 %v4489, %v4494
        %v4527 = vld [vmem:[%s3 + $0x1] sm:$0x1]
        %v4528 = vlaneseq
        %v4529 = vshrl.u32 %v4528, 7
        %v4530 = vsub.s32 0, %v4529
        %v4531 = vrot.slane %v4527, %v4530
        %v4532 = vadd.f32 %v4495, %v4531
        %v4533 = vadd.f32 %v4496, %v4531
        %v4534 = vadd.f32 %v4497, %v4531
        %v4535 = vadd.f32 %v4498, %v4531
        %v4536 = vadd.f32 %v4499, %v4531
        %v4537 = vadd.f32 %v4500, %v4531
        %v4538 = vadd.f32 %v4501, %v4531
        %v4539 = vadd.f32 %v4502, %v4531
        %v4540 = vadd.f32 %v4503, %v4531
        %v4541 = vadd.f32 %v4504, %v4531
        %v4542 = vadd.f32 %v4505, %v4531
        %v4543 = vadd.f32 %v4506, %v4531
        %v4544 = vadd.f32 %v4507, %v4531
        %v4545 = vadd.f32 %v4508, %v4531
        %v4546 = vadd.f32 %v4509, %v4531
        %v4547 = vadd.f32 %v4510, %v4531
        %v4548 = vadd.f32 %v4511, %v4531
        %v4549 = vadd.f32 %v4512, %v4531
        %v4550 = vadd.f32 %v4513, %v4531
        %v4551 = vadd.f32 %v4514, %v4531
        %v4552 = vadd.f32 %v4515, %v4531
        %v4553 = vadd.f32 %v4516, %v4531
        %v4554 = vadd.f32 %v4517, %v4531
        %v4555 = vadd.f32 %v4518, %v4531
        %v4556 = vadd.f32 %v4519, %v4531
        %v4557 = vadd.f32 %v4520, %v4531
        %v4558 = vadd.f32 %v4521, %v4531
        %v4559 = vadd.f32 %v4522, %v4531
        %v4560 = vadd.f32 %v4523, %v4531
        %v4561 = vadd.f32 %v4524, %v4531
        %v4562 = vadd.f32 %v4525, %v4531
        %v4563 = vadd.f32 %v4526, %v4531
        %v4564 = vmax.f32 %v4532, 0.0
        %v4565 = vmax.f32 %v4533, 0.0
        %v4566 = vmax.f32 %v4534, 0.0
        %v4567 = vmax.f32 %v4535, 0.0
        %v4568 = vmax.f32 %v4536, 0.0
        %v4569 = vmax.f32 %v4537, 0.0
        %v4570 = vmax.f32 %v4538, 0.0
        %v4571 = vmax.f32 %v4539, 0.0
        %v4572 = vmax.f32 %v4540, 0.0
        %v4573 = vmax.f32 %v4541, 0.0
        %v4574 = vmax.f32 %v4542, 0.0
        %v4575 = vmax.f32 %v4543, 0.0
        %v4576 = vmax.f32 %v4544, 0.0
        %v4577 = vmax.f32 %v4545, 0.0
        %v4578 = vmax.f32 %v4546, 0.0
        %v4579 = vmax.f32 %v4547, 0.0
        %v4580 = vmax.f32 %v4548, 0.0
        %v4581 = vmax.f32 %v4549, 0.0
        %v4582 = vmax.f32 %v4550, 0.0
        %v4583 = vmax.f32 %v4551, 0.0
        %v4584 = vmax.f32 %v4552, 0.0
        %v4585 = vmax.f32 %v4553, 0.0
        %v4586 = vmax.f32 %v4554, 0.0
        %v4587 = vmax.f32 %v4555, 0.0
        %v4588 = vmax.f32 %v4556, 0.0
        %v4589 = vmax.f32 %v4557, 0.0
        %v4590 = vmax.f32 %v4558, 0.0
        %v4591 = vmax.f32 %v4559, 0.0
        %v4592 = vmax.f32 %v4560, 0.0
        %v4593 = vmax.f32 %v4561, 0.0
        %v4594 = vmax.f32 %v4562, 0.0
        %v4595 = vmax.f32 %v4563, 0.0
        %4596 = vst.msk [vmem:[#allocation3 + $0x10] sm:$0xff] %vm371, %v4564
        %4597 = vst.msk [vmem:[#allocation3 + $0x18] sm:$0xff] %vm371, %v4565
        %4598 = vst.msk [vmem:[#allocation3 + $0x20] sm:$0xff] %vm371, %v4566
        %4599 = vst.msk [vmem:[#allocation3 + $0x28] sm:$0xff] %vm371, %v4567
        %4600 = vst.msk [vmem:[#allocation3 + $0x30] sm:$0xff] %vm371, %v4568
        %4601 = vst.msk [vmem:[#allocation3 + $0x38] sm:$0xff] %vm371, %v4569
        %4602 = vst.msk [vmem:[#allocation3 + $0x40] sm:$0xff] %vm371, %v4570
        %4603 = vst.msk [vmem:[#allocation3 + $0x48] sm:$0xff] %vm371, %v4571
        %4604 = vst.msk [vmem:[#allocation3 + $0x50] sm:$0xff] %vm371, %v4572
        %4605 = vst.msk [vmem:[#allocation3 + $0x58] sm:$0xff] %vm371, %v4573
        %4606 = vst.msk [vmem:[#allocation3 + $0x60] sm:$0xff] %vm371, %v4574
        %4607 = vst.msk [vmem:[#allocation3 + $0x68] sm:$0xff] %vm371, %v4575
        %4608 = vst.msk [vmem:[#allocation3 + $0x70] sm:$0xff] %vm371, %v4576
        %4609 = vst.msk [vmem:[#allocation3 + $0x78] sm:$0xff] %vm371, %v4577
        %4610 = vst.msk [vmem:[#allocation3 + $0x80] sm:$0xff] %vm371, %v4578
        %4611 = vst.msk [vmem:[#allocation3 + $0x88] sm:$0xff] %vm371, %v4579
        %4612 = vst.msk [vmem:[#allocation3 + $0x90] sm:$0xff] %vm371, %v4580
        %4613 = vst.msk [vmem:[#allocation3 + $0x98] sm:$0xff] %vm371, %v4581
        %4614 = vst.msk [vmem:[#allocation3 + $0xa0] sm:$0xff] %vm371, %v4582
        %4615 = vst.msk [vmem:[#allocation3 + $0xa8] sm:$0xff] %vm371, %v4583
        %4616 = vst.msk [vmem:[#allocation3 + $0xb0] sm:$0xff] %vm371, %v4584
        %4617 = vst.msk [vmem:[#allocation3 + $0xb8] sm:$0xff] %vm371, %v4585
        %4618 = vst.msk [vmem:[#allocation3 + $0xc0] sm:$0xff] %vm371, %v4586
        %4619 = vst.msk [vmem:[#allocation3 + $0xc8] sm:$0xff] %vm371, %v4587
        %4620 = vst.msk [vmem:[#allocation3 + $0xd0] sm:$0xff] %vm371, %v4588
        %4621 = vst.msk [vmem:[#allocation3 + $0xd8] sm:$0xff] %vm371, %v4589
        %4622 = vst.msk [vmem:[#allocation3 + $0xe0] sm:$0xff] %vm371, %v4590
        %4623 = vst.msk [vmem:[#allocation3 + $0xe8] sm:$0xff] %vm371, %v4591
        %4624 = vst.msk [vmem:[#allocation3 + $0xf0] sm:$0xff] %vm371, %v4592
        %4625 = vst.msk [vmem:[#allocation3 + $0xf8] sm:$0xff] %vm371, %v4593
        %4626 = vst.msk [vmem:[#allocation3 + $0x100] sm:$0xff] %vm371, %v4594
        %4627 = vst.msk [vmem:[#allocation3 + $0x108] sm:$0xff] %vm371, %v4595
        %v4628 = vld [vmem:[#allocation3 + $0x7] sm:$0xff]
        %v4629 = vld [vmem:[#allocation3 + $0xf] sm:$0xff]
        %v4630 = vld [vmem:[#allocation3 + $0x17] sm:$0xff]
        %v4631 = vld [vmem:[#allocation3 + $0x1f] sm:$0xff]
        %v4632 = vld [vmem:[#allocation3 + $0x27] sm:$0xff]
        %v4633 = vld [vmem:[#allocation3 + $0x2f] sm:$0xff]
        %v4634 = vld [vmem:[#allocation3 + $0x37] sm:$0xff]
        %v4635 = vld [vmem:[#allocation3 + $0x3f] sm:$0xff]
        %v4636 = vld [vmem:[#allocation3 + $0x47] sm:$0xff]
        %v4637 = vld [vmem:[#allocation3 + $0x4f] sm:$0xff]
        %v4638 = vld [vmem:[#allocation3 + $0x57] sm:$0xff]
        %v4639 = vld [vmem:[#allocation3 + $0x5f] sm:$0xff]
        %v4640 = vld [vmem:[#allocation3 + $0x67] sm:$0xff]
        %v4641 = vld [vmem:[#allocation3 + $0x6f] sm:$0xff]
        %v4642 = vld [vmem:[#allocation3 + $0x77] sm:$0xff]
        %v4643 = vld [vmem:[#allocation3 + $0x7f] sm:$0xff]
        %v4644 = vld [vmem:[#allocation3 + $0x87] sm:$0xff]
        %v4645 = vld [vmem:[#allocation3 + $0x8f] sm:$0xff]
        %v4646 = vld [vmem:[#allocation3 + $0x97] sm:$0xff]
        %v4647 = vld [vmem:[#allocation3 + $0x9f] sm:$0xff]
        %v4648 = vld [vmem:[#allocation3 + $0xa7] sm:$0xff]
        %v4649 = vld [vmem:[#allocation3 + $0xaf] sm:$0xff]
        %v4650 = vld [vmem:[#allocation3 + $0xb7] sm:$0xff]
        %v4651 = vld [vmem:[#allocation3 + $0xbf] sm:$0xff]
        %v4652 = vld [vmem:[#allocation3 + $0xc7] sm:$0xff]
        %v4653 = vld [vmem:[#allocation3 + $0xcf] sm:$0xff]
        %v4654 = vld [vmem:[#allocation3 + $0xd7] sm:$0xff]
        %v4655 = vld [vmem:[#allocation3 + $0xdf] sm:$0xff]
        %v4656 = vld [vmem:[#allocation3 + $0xe7] sm:$0xff]
        %v4657 = vld [vmem:[#allocation3 + $0xef] sm:$0xff]
        %v4658 = vld [vmem:[#allocation3 + $0xf7] sm:$0xff]
        %v4659 = vld [vmem:[#allocation3 + $0xff] sm:$0xff]
        %v4660 = vld [vmem:[#allocation7] sm:$0xff]
        %v4661 = vld [vmem:[#allocation7 + $0x8] sm:$0xff]
        %v4662 = vld [vmem:[#allocation7 + $0x10] sm:$0xff]
        %v4663 = vld [vmem:[#allocation7 + $0x18] sm:$0xff]
        %v4664 = vld [vmem:[#allocation7 + $0x20] sm:$0xff]
        %v4665 = vld [vmem:[#allocation7 + $0x28] sm:$0xff]
        %v4666 = vld [vmem:[#allocation7 + $0x30] sm:$0xff]
        %v4667 = vld [vmem:[#allocation7 + $0x38] sm:$0xff]
        %v4668 = vld [vmem:[#allocation7 + $0x40] sm:$0xff]
        %v4669 = vld [vmem:[#allocation7 + $0x48] sm:$0xff]
        %v4670 = vld [vmem:[#allocation7 + $0x50] sm:$0xff]
        %v4671 = vld [vmem:[#allocation7 + $0x58] sm:$0xff]
        %v4672 = vld [vmem:[#allocation7 + $0x60] sm:$0xff]
        %v4673 = vld [vmem:[#allocation7 + $0x68] sm:$0xff]
        %v4674 = vld [vmem:[#allocation7 + $0x70] sm:$0xff]
        %v4675 = vld [vmem:[#allocation7 + $0x78] sm:$0xff]
        %v4676 = vld [vmem:[#allocation7 + $0x80] sm:$0xff]
        %v4677 = vld [vmem:[#allocation7 + $0x88] sm:$0xff]
        %v4678 = vld [vmem:[#allocation7 + $0x90] sm:$0xff]
        %v4679 = vld [vmem:[#allocation7 + $0x98] sm:$0xff]
        %v4680 = vld [vmem:[#allocation7 + $0xa0] sm:$0xff]
        %v4681 = vld [vmem:[#allocation7 + $0xa8] sm:$0xff]
        %v4682 = vld [vmem:[#allocation7 + $0xb0] sm:$0xff]
        %v4683 = vld [vmem:[#allocation7 + $0xb8] sm:$0xff]
        %v4684 = vld [vmem:[#allocation7 + $0xc0] sm:$0xff]
        %v4685 = vld [vmem:[#allocation7 + $0xc8] sm:$0xff]
        %v4686 = vld [vmem:[#allocation7 + $0xd0] sm:$0xff]
        %v4687 = vld [vmem:[#allocation7 + $0xd8] sm:$0xff]
        %v4688 = vld [vmem:[#allocation7 + $0xe0] sm:$0xff]
        %v4689 = vld [vmem:[#allocation7 + $0xe8] sm:$0xff]
        %v4690 = vld [vmem:[#allocation7 + $0xf0] sm:$0xff]
        %v4691 = vld [vmem:[#allocation7 + $0xf8] sm:$0xff]
        %4693 = vset.pattern.permute.xlu0 0
        %4694 = vperm.xlu0 %4693, %v4660
        %v4695 = vpop.permute.xlu0 %4694
        %4698 = vset.pattern.permute.xlu0 0
        %4699 = vperm.xlu0 %4698, %v4661
        %v4700 = vpop.permute.xlu0 %4699
        %4703 = vset.pattern.permute.xlu0 0
        %4704 = vperm.xlu0 %4703, %v4662
        %v4705 = vpop.permute.xlu0 %4704
        %4708 = vset.pattern.permute.xlu0 0
        %4709 = vperm.xlu0 %4708, %v4663
        %v4710 = vpop.permute.xlu0 %4709
        %4713 = vset.pattern.permute.xlu0 0
        %4714 = vperm.xlu0 %4713, %v4664
        %v4715 = vpop.permute.xlu0 %4714
        %4718 = vset.pattern.permute.xlu0 0
        %4719 = vperm.xlu0 %4718, %v4665
        %v4720 = vpop.permute.xlu0 %4719
        %4723 = vset.pattern.permute.xlu0 0
        %4724 = vperm.xlu0 %4723, %v4666
        %v4725 = vpop.permute.xlu0 %4724
        %4728 = vset.pattern.permute.xlu0 0
        %4729 = vperm.xlu0 %4728, %v4667
        %v4730 = vpop.permute.xlu0 %4729
        %4733 = vset.pattern.permute.xlu0 0
        %4734 = vperm.xlu0 %4733, %v4668
        %v4735 = vpop.permute.xlu0 %4734
        %4738 = vset.pattern.permute.xlu0 0
        %4739 = vperm.xlu0 %4738, %v4669
        %v4740 = vpop.permute.xlu0 %4739
        %4743 = vset.pattern.permute.xlu0 0
        %4744 = vperm.xlu0 %4743, %v4670
        %v4745 = vpop.permute.xlu0 %4744
        %4748 = vset.pattern.permute.xlu0 0
        %4749 = vperm.xlu0 %4748, %v4671
        %v4750 = vpop.permute.xlu0 %4749
        %4753 = vset.pattern.permute.xlu0 0
        %4754 = vperm.xlu0 %4753, %v4672
        %v4755 = vpop.permute.xlu0 %4754
        %4758 = vset.pattern.permute.xlu0 0
        %4759 = vperm.xlu0 %4758, %v4673
        %v4760 = vpop.permute.xlu0 %4759
        %4763 = vset.pattern.permute.xlu0 0
        %4764 = vperm.xlu0 %4763, %v4674
        %v4765 = vpop.permute.xlu0 %4764
        %4768 = vset.pattern.permute.xlu0 0
        %4769 = vperm.xlu0 %4768, %v4675
        %v4770 = vpop.permute.xlu0 %4769
        %4773 = vset.pattern.permute.xlu0 0
        %4774 = vperm.xlu0 %4773, %v4676
        %v4775 = vpop.permute.xlu0 %4774
        %4778 = vset.pattern.permute.xlu0 0
        %4779 = vperm.xlu0 %4778, %v4677
        %v4780 = vpop.permute.xlu0 %4779
        %4783 = vset.pattern.permute.xlu0 0
        %4784 = vperm.xlu0 %4783, %v4678
        %v4785 = vpop.permute.xlu0 %4784
        %4788 = vset.pattern.permute.xlu0 0
        %4789 = vperm.xlu0 %4788, %v4679
        %v4790 = vpop.permute.xlu0 %4789
        %4793 = vset.pattern.permute.xlu0 0
        %4794 = vperm.xlu0 %4793, %v4680
        %v4795 = vpop.permute.xlu0 %4794
        %4798 = vset.pattern.permute.xlu0 0
        %4799 = vperm.xlu0 %4798, %v4681
        %v4800 = vpop.permute.xlu0 %4799
        %4803 = vset.pattern.permute.xlu0 0
        %4804 = vperm.xlu0 %4803, %v4682
        %v4805 = vpop.permute.xlu0 %4804
        %4808 = vset.pattern.permute.xlu0 0
        %4809 = vperm.xlu0 %4808, %v4683
        %v4810 = vpop.permute.xlu0 %4809
        %4813 = vset.pattern.permute.xlu0 0
        %4814 = vperm.xlu0 %4813, %v4684
        %v4815 = vpop.permute.xlu0 %4814
        %4818 = vset.pattern.permute.xlu0 0
        %4819 = vperm.xlu0 %4818, %v4685
        %v4820 = vpop.permute.xlu0 %4819
        %4823 = vset.pattern.permute.xlu0 0
        %4824 = vperm.xlu0 %4823, %v4686
        %v4825 = vpop.permute.xlu0 %4824
        %4828 = vset.pattern.permute.xlu0 0
        %4829 = vperm.xlu0 %4828, %v4687
        %v4830 = vpop.permute.xlu0 %4829
        %4833 = vset.pattern.permute.xlu0 0
        %4834 = vperm.xlu0 %4833, %v4688
        %v4835 = vpop.permute.xlu0 %4834
        %4838 = vset.pattern.permute.xlu0 0
        %4839 = vperm.xlu0 %4838, %v4689
        %v4840 = vpop.permute.xlu0 %4839
        %4843 = vset.pattern.permute.xlu0 0
        %4844 = vperm.xlu0 %4843, %v4690
        %v4845 = vpop.permute.xlu0 %4844
        %4848 = vset.pattern.permute.xlu0 0
        %4849 = vperm.xlu0 %4848, %v4691
        %v4850 = vpop.permute.xlu0 %4849
        %v4852 = vmul.f32 %v4628, %v4695
        %v4853 = vmul.f32 %v4629, %v4700
        %v4854 = vmul.f32 %v4630, %v4705
        %v4855 = vmul.f32 %v4631, %v4710
        %v4856 = vmul.f32 %v4632, %v4715
        %v4857 = vmul.f32 %v4633, %v4720
        %v4858 = vmul.f32 %v4634, %v4725
        %v4859 = vmul.f32 %v4635, %v4730
        %v4860 = vmul.f32 %v4636, %v4735
        %v4861 = vmul.f32 %v4637, %v4740
        %v4862 = vmul.f32 %v4638, %v4745
        %v4863 = vmul.f32 %v4639, %v4750
        %v4864 = vmul.f32 %v4640, %v4755
        %v4865 = vmul.f32 %v4641, %v4760
        %v4866 = vmul.f32 %v4642, %v4765
        %v4867 = vmul.f32 %v4643, %v4770
        %v4868 = vmul.f32 %v4644, %v4775
        %v4869 = vmul.f32 %v4645, %v4780
        %v4870 = vmul.f32 %v4646, %v4785
        %v4871 = vmul.f32 %v4647, %v4790
        %v4872 = vmul.f32 %v4648, %v4795
        %v4873 = vmul.f32 %v4649, %v4800
        %v4874 = vmul.f32 %v4650, %v4805
        %v4875 = vmul.f32 %v4651, %v4810
        %v4876 = vmul.f32 %v4652, %v4815
        %v4877 = vmul.f32 %v4653, %v4820
        %v4878 = vmul.f32 %v4654, %v4825
        %v4879 = vmul.f32 %v4655, %v4830
        %v4880 = vmul.f32 %v4656, %v4835
        %v4881 = vmul.f32 %v4657, %v4840
        %v4882 = vmul.f32 %v4658, %v4845
        %v4883 = vmul.f32 %v4659, %v4850
        %v4884 = vpack.c.bf16 %v4853, %v4852
        %v4885 = vpack.c.bf16 %v4855, %v4854
        %v4886 = vpack.c.bf16 %v4857, %v4856
        %v4887 = vpack.c.bf16 %v4859, %v4858
        %v4888 = vpack.c.bf16 %v4861, %v4860
        %v4889 = vpack.c.bf16 %v4863, %v4862
        %v4890 = vpack.c.bf16 %v4865, %v4864
        %v4891 = vpack.c.bf16 %v4867, %v4866
        %v4892 = vpack.c.bf16 %v4869, %v4868
        %v4893 = vpack.c.bf16 %v4871, %v4870
        %v4894 = vpack.c.bf16 %v4873, %v4872
        %v4895 = vpack.c.bf16 %v4875, %v4874
        %v4896 = vpack.c.bf16 %v4877, %v4876
        %v4897 = vpack.c.bf16 %v4879, %v4878
        %v4898 = vpack.c.bf16 %v4881, %v4880
        %v4899 = vpack.c.bf16 %v4883, %v4882
        %v4900 = vld [vmem:[%s2] sm:$0xf]
        %v4901 = vld [vmem:[#allocation3 + $0x8] sm:$0xff]
        %v4902 = vld [vmem:[#allocation3 + $0x10] sm:$0xff]
        %v4903 = vld [vmem:[#allocation3 + $0x18] sm:$0xff]
        %v4904 = vld [vmem:[#allocation3 + $0x20] sm:$0xff]
        %v4905 = vld [vmem:[#allocation3 + $0x28] sm:$0xff]
        %v4906 = vld [vmem:[#allocation3 + $0x30] sm:$0xff]
        %v4907 = vld [vmem:[#allocation3 + $0x38] sm:$0xff]
        %v4908 = vld [vmem:[#allocation3 + $0x40] sm:$0xff]
        %v4909 = vld [vmem:[#allocation3 + $0x48] sm:$0xff]
        %v4910 = vld [vmem:[#allocation3 + $0x50] sm:$0xff]
        %v4911 = vld [vmem:[#allocation3 + $0x58] sm:$0xff]
        %v4912 = vld [vmem:[#allocation3 + $0x60] sm:$0xff]
        %v4913 = vld [vmem:[#allocation3 + $0x68] sm:$0xff]
        %v4914 = vld [vmem:[#allocation3 + $0x70] sm:$0xff]
        %v4915 = vld [vmem:[#allocation3 + $0x78] sm:$0xff]
        %v4916 = vld [vmem:[#allocation3 + $0x80] sm:$0xff]
        %v4917 = vld [vmem:[#allocation3 + $0x88] sm:$0xff]
        %v4918 = vld [vmem:[#allocation3 + $0x90] sm:$0xff]
        %v4919 = vld [vmem:[#allocation3 + $0x98] sm:$0xff]
        %v4920 = vld [vmem:[#allocation3 + $0xa0] sm:$0xff]
        %v4921 = vld [vmem:[#allocation3 + $0xa8] sm:$0xff]
        %v4922 = vld [vmem:[#allocation3 + $0xb0] sm:$0xff]
        %v4923 = vld [vmem:[#allocation3 + $0xb8] sm:$0xff]
        %v4924 = vld [vmem:[#allocation3 + $0xc0] sm:$0xff]
        %v4925 = vld [vmem:[#allocation3 + $0xc8] sm:$0xff]
        %v4926 = vld [vmem:[#allocation3 + $0xd0] sm:$0xff]
        %v4927 = vld [vmem:[#allocation3 + $0xd8] sm:$0xff]
        %v4928 = vld [vmem:[#allocation3 + $0xe0] sm:$0xff]
        %v4929 = vld [vmem:[#allocation3 + $0xe8] sm:$0xff]
        %v4930 = vld [vmem:[#allocation3 + $0xf0] sm:$0xff]
        %v4931 = vld [vmem:[#allocation3 + $0xf8] sm:$0xff]
        %v4932 = vld [vmem:[#allocation3 + $0x100] sm:$0xff]
        %4933 = vset.pattern.permute.xlu0 1
        %4934 = vperm.xlu0 %4933, %v4660
        %v4935 = vpop.permute.xlu0 %4934
        %4937 = vset.pattern.permute.xlu0 1
        %4938 = vperm.xlu0 %4937, %v4661
        %v4939 = vpop.permute.xlu0 %4938
        %4941 = vset.pattern.permute.xlu0 1
        %4942 = vperm.xlu0 %4941, %v4662
        %v4943 = vpop.permute.xlu0 %4942
        %4945 = vset.pattern.permute.xlu0 1
        %4946 = vperm.xlu0 %4945, %v4663
        %v4947 = vpop.permute.xlu0 %4946
        %4949 = vset.pattern.permute.xlu0 1
        %4950 = vperm.xlu0 %4949, %v4664
        %v4951 = vpop.permute.xlu0 %4950
        %4953 = vset.pattern.permute.xlu0 1
        %4954 = vperm.xlu0 %4953, %v4665
        %v4955 = vpop.permute.xlu0 %4954
        %4957 = vset.pattern.permute.xlu0 1
        %4958 = vperm.xlu0 %4957, %v4666
        %v4959 = vpop.permute.xlu0 %4958
        %4961 = vset.pattern.permute.xlu0 1
        %4962 = vperm.xlu0 %4961, %v4667
        %v4963 = vpop.permute.xlu0 %4962
        %4965 = vset.pattern.permute.xlu0 1
        %4966 = vperm.xlu0 %4965, %v4668
        %v4967 = vpop.permute.xlu0 %4966
        %4969 = vset.pattern.permute.xlu0 1
        %4970 = vperm.xlu0 %4969, %v4669
        %v4971 = vpop.permute.xlu0 %4970
        %4973 = vset.pattern.permute.xlu0 1
        %4974 = vperm.xlu0 %4973, %v4670
        %v4975 = vpop.permute.xlu0 %4974
        %4977 = vset.pattern.permute.xlu0 1
        %4978 = vperm.xlu0 %4977, %v4671
        %v4979 = vpop.permute.xlu0 %4978
        %4981 = vset.pattern.permute.xlu0 1
        %4982 = vperm.xlu0 %4981, %v4672
        %v4983 = vpop.permute.xlu0 %4982
        %4985 = vset.pattern.permute.xlu0 1
        %4986 = vperm.xlu0 %4985, %v4673
        %v4987 = vpop.permute.xlu0 %4986
        %4989 = vset.pattern.permute.xlu0 1
        %4990 = vperm.xlu0 %4989, %v4674
        %v4991 = vpop.permute.xlu0 %4990
        %4993 = vset.pattern.permute.xlu0 1
        %4994 = vperm.xlu0 %4993, %v4675
        %v4995 = vpop.permute.xlu0 %4994
        %4997 = vset.pattern.permute.xlu0 1
        %4998 = vperm.xlu0 %4997, %v4676
        %v4999 = vpop.permute.xlu0 %4998
        %5001 = vset.pattern.permute.xlu0 1
        %5002 = vperm.xlu0 %5001, %v4677
        %v5003 = vpop.permute.xlu0 %5002
        %5005 = vset.pattern.permute.xlu0 1
        %5006 = vperm.xlu0 %5005, %v4678
        %v5007 = vpop.permute.xlu0 %5006
        %5009 = vset.pattern.permute.xlu0 1
        %5010 = vperm.xlu0 %5009, %v4679
        %v5011 = vpop.permute.xlu0 %5010
        %5013 = vset.pattern.permute.xlu0 1
        %5014 = vperm.xlu0 %5013, %v4680
        %v5015 = vpop.permute.xlu0 %5014
        %5017 = vset.pattern.permute.xlu0 1
        %5018 = vperm.xlu0 %5017, %v4681
        %v5019 = vpop.permute.xlu0 %5018
        %5021 = vset.pattern.permute.xlu0 1
        %5022 = vperm.xlu0 %5021, %v4682
        %v5023 = vpop.permute.xlu0 %5022
        %5025 = vset.pattern.permute.xlu0 1
        %5026 = vperm.xlu0 %5025, %v4683
        %v5027 = vpop.permute.xlu0 %5026
        %5029 = vset.pattern.permute.xlu0 1
        %5030 = vperm.xlu0 %5029, %v4684
        %v5031 = vpop.permute.xlu0 %5030
        %5033 = vset.pattern.permute.xlu0 1
        %5034 = vperm.xlu0 %5033, %v4685
        %v5035 = vpop.permute.xlu0 %5034
        %5037 = vset.pattern.permute.xlu0 1
        %5038 = vperm.xlu0 %5037, %v4686
        %v5039 = vpop.permute.xlu0 %5038
        %5041 = vset.pattern.permute.xlu0 1
        %5042 = vperm.xlu0 %5041, %v4687
        %v5043 = vpop.permute.xlu0 %5042
        %5045 = vset.pattern.permute.xlu0 1
        %5046 = vperm.xlu0 %5045, %v4688
        %v5047 = vpop.permute.xlu0 %5046
        %5049 = vset.pattern.permute.xlu0 1
        %5050 = vperm.xlu0 %5049, %v4689
        %v5051 = vpop.permute.xlu0 %5050
        %5053 = vset.pattern.permute.xlu0 1
        %5054 = vperm.xlu0 %5053, %v4690
        %v5055 = vpop.permute.xlu0 %5054
        %5057 = vset.pattern.permute.xlu0 1
        %5058 = vperm.xlu0 %5057, %v4691
        %v5059 = vpop.permute.xlu0 %5058
        %v5061 = vmul.f32 %v4901, %v4935
        %v5062 = vmul.f32 %v4902, %v4939
        %v5063 = vmul.f32 %v4903, %v4943
        %v5064 = vmul.f32 %v4904, %v4947
        %v5065 = vmul.f32 %v4905, %v4951
        %v5066 = vmul.f32 %v4906, %v4955
        %v5067 = vmul.f32 %v4907, %v4959
        %v5068 = vmul.f32 %v4908, %v4963
        %v5069 = vmul.f32 %v4909, %v4967
        %v5070 = vmul.f32 %v4910, %v4971
        %v5071 = vmul.f32 %v4911, %v4975
        %v5072 = vmul.f32 %v4912, %v4979
        %v5073 = vmul.f32 %v4913, %v4983
        %v5074 = vmul.f32 %v4914, %v4987
        %v5075 = vmul.f32 %v4915, %v4991
        %v5076 = vmul.f32 %v4916, %v4995
        %v5077 = vmul.f32 %v4917, %v4999
        %v5078 = vmul.f32 %v4918, %v5003
        %v5079 = vmul.f32 %v4919, %v5007
        %v5080 = vmul.f32 %v4920, %v5011
        %v5081 = vmul.f32 %v4921, %v5015
        %v5082 = vmul.f32 %v4922, %v5019
        %v5083 = vmul.f32 %v4923, %v5023
        %v5084 = vmul.f32 %v4924, %v5027
        %v5085 = vmul.f32 %v4925, %v5031
        %v5086 = vmul.f32 %v4926, %v5035
        %v5087 = vmul.f32 %v4927, %v5039
        %v5088 = vmul.f32 %v4928, %v5043
        %v5089 = vmul.f32 %v4929, %v5047
        %v5090 = vmul.f32 %v4930, %v5051
        %v5091 = vmul.f32 %v4931, %v5055
        %v5092 = vmul.f32 %v4932, %v5059
        %v5093 = vpack.c.bf16 %v5062, %v5061
        %v5094 = vpack.c.bf16 %v5064, %v5063
        %v5095 = vpack.c.bf16 %v5066, %v5065
        %v5096 = vpack.c.bf16 %v5068, %v5067
        %v5097 = vpack.c.bf16 %v5070, %v5069
        %v5098 = vpack.c.bf16 %v5072, %v5071
        %v5099 = vpack.c.bf16 %v5074, %v5073
        %v5100 = vpack.c.bf16 %v5076, %v5075
        %v5101 = vpack.c.bf16 %v5078, %v5077
        %v5102 = vpack.c.bf16 %v5080, %v5079
        %v5103 = vpack.c.bf16 %v5082, %v5081
        %v5104 = vpack.c.bf16 %v5084, %v5083
        %v5105 = vpack.c.bf16 %v5086, %v5085
        %v5106 = vpack.c.bf16 %v5088, %v5087
        %v5107 = vpack.c.bf16 %v5090, %v5089
        %v5108 = vpack.c.bf16 %v5092, %v5091
        %s5109 = scalar_lea.vmem %s2, 4
        %v5110 = vld [vmem:[%s5109] sm:$0xf]
        %v5112 = vsel %vm371, %v5093, 0
        %v5115 = vsel %vm371, %v5094, 0
        %v5118 = vsel %vm371, %v5095, 0
        %v5121 = vsel %vm371, %v5096, 0
        %v5124 = vsel %vm371, %v5097, 0
        %v5127 = vsel %vm371, %v5098, 0
        %v5130 = vsel %vm371, %v5099, 0
        %v5133 = vsel %vm371, %v5100, 0
        %v5136 = vsel %vm371, %v5101, 0
        %v5139 = vsel %vm371, %v5102, 0
        %v5142 = vsel %vm371, %v5103, 0
        %v5145 = vsel %vm371, %v5104, 0
        %v5148 = vsel %vm371, %v5105, 0
        %v5151 = vsel %vm371, %v5106, 0
        %v5154 = vsel %vm371, %v5107, 0
        %v5157 = vsel %vm371, %v5108, 0
        %v5160 = vsel %vm935, %v5110, 0
        %5162 = vmatprep.subr.bf16.mxu0 0
        %5163 = vmatpush1.bf16.msra.mxu0 0
        %5164 = vmatprep.subr.bf16.mxu0 0
        %5165 = vmatpush1.bf16.msra.mxu0 0
        %5166 = vmatprep.subr.bf16.mxu0 0
        %5167 = vmatpush1.bf16.msra.mxu0 0
        %5168 = vmatprep.subr.bf16.mxu0 0
        %5169 = vmatpush1.bf16.msra.mxu0 0
        %5170 = vmatprep.subr.bf16.mxu0 0
        %5171 = vmatpush1.bf16.msra.mxu0 0
        %5172 = vmatprep.subr.bf16.mxu0 0
        %5173 = vmatpush1.bf16.msra.mxu0 0
        %5174 = vmatprep.subr.bf16.mxu0 0
        %5175 = vmatpush1.bf16.msra.mxu0 0
        %5176 = vmatprep.subr.bf16.mxu0 0
        %5177 = vmatpush1.bf16.msra.mxu0 %v5160
        %5178 = vmatprep.subr.bf16.mxu0 0
        %5179 = vmatpush2.bf16.msra.mxu0 0
        %5180 = vmatprep.subr.bf16.mxu0 0
        %5181 = vmatpush2.bf16.msra.mxu0 0
        %5182 = vmatprep.subr.bf16.mxu0 0
        %5183 = vmatpush2.bf16.msra.mxu0 0
        %5184 = vmatprep.subr.bf16.mxu0 0
        %5185 = vmatpush2.bf16.msra.mxu0 0
        %5186 = vmatprep.subr.bf16.mxu0 0
        %5187 = vmatpush2.bf16.msra.mxu0 0
        %5188 = vmatprep.subr.bf16.mxu0 0
        %5189 = vmatpush2.bf16.msra.mxu0 0
        %5190 = vmatprep.subr.bf16.mxu0 0
        %5191 = vmatpush2.bf16.msra.mxu0 0
        %5192 = vmatprep.subr.bf16.mxu0 0
        %5193 = vmatpush2.bf16.msra.mxu0 0
        %5194 = vmatprep.mubr.bf16.mxu0 0
        %5195 = vmatmul.mubr.bf16.gmra.mxu0 %v5112
        %v5196 = vpop.f32.mrf.mxu0
        %v5197 = vadd.f32 0.0, %v5196
        %v5198 = vpop.f32.mrf.mxu0
        %v5199 = vpop.f32.mrf.mxu0
        %v5200 = vadd.f32 0.0, %v5199
        %v5201 = vpop.f32.mrf.mxu0
        %5202 = vmatprep.mubr.bf16.mxu0 0
        %5203 = vmatmul.mubr.bf16.gmra.mxu0 %v5115
        %v5204 = vpop.f32.mrf.mxu0
        %v5205 = vadd.f32 0.0, %v5204
        %v5206 = vpop.f32.mrf.mxu0
        %v5207 = vpop.f32.mrf.mxu0
        %v5208 = vadd.f32 0.0, %v5207
        %v5209 = vpop.f32.mrf.mxu0
        %5210 = vmatprep.mubr.bf16.mxu0 0
        %5211 = vmatmul.mubr.bf16.gmra.mxu0 %v5118
        %v5212 = vpop.f32.mrf.mxu0
        %v5213 = vadd.f32 0.0, %v5212
        %v5214 = vpop.f32.mrf.mxu0
        %v5215 = vpop.f32.mrf.mxu0
        %v5216 = vadd.f32 0.0, %v5215
        %v5217 = vpop.f32.mrf.mxu0
        %5218 = vmatprep.mubr.bf16.mxu0 0
        %5219 = vmatmul.mubr.bf16.gmra.mxu0 %v5121
        %v5220 = vpop.f32.mrf.mxu0
        %v5221 = vadd.f32 0.0, %v5220
        %v5222 = vpop.f32.mrf.mxu0
        %v5223 = vpop.f32.mrf.mxu0
        %v5224 = vadd.f32 0.0, %v5223
        %v5225 = vpop.f32.mrf.mxu0
        %5226 = vmatprep.mubr.bf16.mxu0 0
        %5227 = vmatmul.mubr.bf16.gmra.mxu0 %v5124
        %v5228 = vpop.f32.mrf.mxu0
        %v5229 = vadd.f32 0.0, %v5228
        %v5230 = vpop.f32.mrf.mxu0
        %v5231 = vpop.f32.mrf.mxu0
        %v5232 = vadd.f32 0.0, %v5231
        %v5233 = vpop.f32.mrf.mxu0
        %5234 = vmatprep.mubr.bf16.mxu0 0
        %5235 = vmatmul.mubr.bf16.gmra.mxu0 %v5127
        %v5236 = vpop.f32.mrf.mxu0
        %v5237 = vadd.f32 0.0, %v5236
        %v5238 = vpop.f32.mrf.mxu0
        %v5239 = vpop.f32.mrf.mxu0
        %v5240 = vadd.f32 0.0, %v5239
        %v5241 = vpop.f32.mrf.mxu0
        %5242 = vmatprep.mubr.bf16.mxu0 0
        %5243 = vmatmul.mubr.bf16.gmra.mxu0 %v5130
        %v5244 = vpop.f32.mrf.mxu0
        %v5245 = vadd.f32 0.0, %v5244
        %v5246 = vpop.f32.mrf.mxu0
        %v5247 = vpop.f32.mrf.mxu0
        %v5248 = vadd.f32 0.0, %v5247
        %v5249 = vpop.f32.mrf.mxu0
        %5250 = vmatprep.mubr.bf16.mxu0 0
        %5251 = vmatmul.mubr.bf16.gmra.mxu0 %v5133
        %v5252 = vpop.f32.mrf.mxu0
        %v5253 = vadd.f32 0.0, %v5252
        %v5254 = vpop.f32.mrf.mxu0
        %v5255 = vpop.f32.mrf.mxu0
        %v5256 = vadd.f32 0.0, %v5255
        %v5257 = vpop.f32.mrf.mxu0
        %5258 = vmatprep.mubr.bf16.mxu0 0
        %5259 = vmatmul.mubr.bf16.gmra.mxu0 %v5136
        %v5260 = vpop.f32.mrf.mxu0
        %v5261 = vadd.f32 0.0, %v5260
        %v5262 = vpop.f32.mrf.mxu0
        %v5263 = vpop.f32.mrf.mxu0
        %v5264 = vadd.f32 0.0, %v5263
        %v5265 = vpop.f32.mrf.mxu0
        %5266 = vmatprep.mubr.bf16.mxu0 0
        %5267 = vmatmul.mubr.bf16.gmra.mxu0 %v5139
        %v5268 = vpop.f32.mrf.mxu0
        %v5269 = vadd.f32 0.0, %v5268
        %v5270 = vpop.f32.mrf.mxu0
        %v5271 = vpop.f32.mrf.mxu0
        %v5272 = vadd.f32 0.0, %v5271
        %v5273 = vpop.f32.mrf.mxu0
        %5274 = vmatprep.mubr.bf16.mxu0 0
        %5275 = vmatmul.mubr.bf16.gmra.mxu0 %v5142
        %v5276 = vpop.f32.mrf.mxu0
        %v5277 = vadd.f32 0.0, %v5276
        %v5278 = vpop.f32.mrf.mxu0
        %v5279 = vpop.f32.mrf.mxu0
        %v5280 = vadd.f32 0.0, %v5279
        %v5281 = vpop.f32.mrf.mxu0
        %5282 = vmatprep.mubr.bf16.mxu0 0
        %5283 = vmatmul.mubr.bf16.gmra.mxu0 %v5145
        %v5284 = vpop.f32.mrf.mxu0
        %v5285 = vadd.f32 0.0, %v5284
        %v5286 = vpop.f32.mrf.mxu0
        %v5287 = vpop.f32.mrf.mxu0
        %v5288 = vadd.f32 0.0, %v5287
        %v5289 = vpop.f32.mrf.mxu0
        %5290 = vmatprep.mubr.bf16.mxu0 0
        %5291 = vmatmul.mubr.bf16.gmra.mxu0 %v5148
        %v5292 = vpop.f32.mrf.mxu0
        %v5293 = vadd.f32 0.0, %v5292
        %v5294 = vpop.f32.mrf.mxu0
        %v5295 = vpop.f32.mrf.mxu0
        %v5296 = vadd.f32 0.0, %v5295
        %v5297 = vpop.f32.mrf.mxu0
        %5298 = vmatprep.mubr.bf16.mxu0 0
        %5299 = vmatmul.mubr.bf16.gmra.mxu0 %v5151
        %v5300 = vpop.f32.mrf.mxu0
        %v5301 = vadd.f32 0.0, %v5300
        %v5302 = vpop.f32.mrf.mxu0
        %v5303 = vpop.f32.mrf.mxu0
        %v5304 = vadd.f32 0.0, %v5303
        %v5305 = vpop.f32.mrf.mxu0
        %5306 = vmatprep.mubr.bf16.mxu0 0
        %5307 = vmatmul.mubr.bf16.gmra.mxu0 %v5154
        %v5308 = vpop.f32.mrf.mxu0
        %v5309 = vadd.f32 0.0, %v5308
        %v5310 = vpop.f32.mrf.mxu0
        %v5311 = vpop.f32.mrf.mxu0
        %v5312 = vadd.f32 0.0, %v5311
        %v5313 = vpop.f32.mrf.mxu0
        %5314 = vmatprep.mubr.bf16.mxu0 0
        %5315 = vmatmul.mubr.bf16.gmra.mxu0 %v5157
        %v5316 = vpop.f32.mrf.mxu0
        %v5317 = vadd.f32 0.0, %v5316
        %v5318 = vpop.f32.mrf.mxu0
        %v5319 = vpop.f32.mrf.mxu0
        %v5320 = vadd.f32 0.0, %v5319
        %v5321 = vpop.f32.mrf.mxu0
        %5322 = vdwg.mxu0
        %v5324 = vsel %vm371, %v4884, 0
        %v5327 = vsel %vm371, %v4885, 0
        %v5330 = vsel %vm371, %v4886, 0
        %v5333 = vsel %vm371, %v4887, 0
        %v5336 = vsel %vm371, %v4888, 0
        %v5339 = vsel %vm371, %v4889, 0
        %v5342 = vsel %vm371, %v4890, 0
        %v5345 = vsel %vm371, %v4891, 0
        %v5348 = vsel %vm371, %v4892, 0
        %v5351 = vsel %vm371, %v4893, 0
        %v5354 = vsel %vm371, %v4894, 0
        %v5357 = vsel %vm371, %v4895, 0
        %v5360 = vsel %vm371, %v4896, 0
        %v5363 = vsel %vm371, %v4897, 0
        %v5366 = vsel %vm371, %v4898, 0
        %v5369 = vsel %vm371, %v4899, 0
        %v5372 = vsel %vm935, %v4900, 0
        %5374 = vmatprep.subr.bf16.mxu0 0
        %5375 = vmatpush1.bf16.msra.mxu0 0
        %5376 = vmatprep.subr.bf16.mxu0 0
        %5377 = vmatpush1.bf16.msra.mxu0 0
        %5378 = vmatprep.subr.bf16.mxu0 0
        %5379 = vmatpush1.bf16.msra.mxu0 0
        %5380 = vmatprep.subr.bf16.mxu0 0
        %5381 = vmatpush1.bf16.msra.mxu0 0
        %5382 = vmatprep.subr.bf16.mxu0 0
        %5383 = vmatpush1.bf16.msra.mxu0 0
        %5384 = vmatprep.subr.bf16.mxu0 0
        %5385 = vmatpush1.bf16.msra.mxu0 0
        %5386 = vmatprep.subr.bf16.mxu0 0
        %5387 = vmatpush1.bf16.msra.mxu0 0
        %5388 = vmatprep.subr.bf16.mxu0 0
        %5389 = vmatpush1.bf16.msra.mxu0 %v5372
        %5390 = vmatprep.subr.bf16.mxu0 0
        %5391 = vmatpush2.bf16.msra.mxu0 0
        %5392 = vmatprep.subr.bf16.mxu0 0
        %5393 = vmatpush2.bf16.msra.mxu0 0
        %5394 = vmatprep.subr.bf16.mxu0 0
        %5395 = vmatpush2.bf16.msra.mxu0 0
        %5396 = vmatprep.subr.bf16.mxu0 0
        %5397 = vmatpush2.bf16.msra.mxu0 0
        %5398 = vmatprep.subr.bf16.mxu0 0
        %5399 = vmatpush2.bf16.msra.mxu0 0
        %5400 = vmatprep.subr.bf16.mxu0 0
        %5401 = vmatpush2.bf16.msra.mxu0 0
        %5402 = vmatprep.subr.bf16.mxu0 0
        %5403 = vmatpush2.bf16.msra.mxu0 0
        %5404 = vmatprep.subr.bf16.mxu0 0
        %5405 = vmatpush2.bf16.msra.mxu0 0
        %5406 = vmatprep.mubr.bf16.mxu0 0
        %5407 = vmatmul.mubr.bf16.gmra.mxu0 %v5324
        %v5408 = vpop.f32.mrf.mxu0
        %v5409 = vadd.f32 %v5197, %v5408
        %v5410 = vpop.f32.mrf.mxu0
        %v5411 = vpop.f32.mrf.mxu0
        %v5412 = vadd.f32 %v5200, %v5411
        %v5413 = vpop.f32.mrf.mxu0
        %5414 = vmatprep.mubr.bf16.mxu0 0
        %5415 = vmatmul.mubr.bf16.gmra.mxu0 %v5327
        %v5416 = vpop.f32.mrf.mxu0
        %v5417 = vadd.f32 %v5205, %v5416
        %v5418 = vpop.f32.mrf.mxu0
        %v5419 = vpop.f32.mrf.mxu0
        %v5420 = vadd.f32 %v5208, %v5419
        %v5421 = vpop.f32.mrf.mxu0
        %5422 = vmatprep.mubr.bf16.mxu0 0
        %5423 = vmatmul.mubr.bf16.gmra.mxu0 %v5330
        %v5424 = vpop.f32.mrf.mxu0
        %v5425 = vadd.f32 %v5213, %v5424
        %v5426 = vpop.f32.mrf.mxu0
        %v5427 = vpop.f32.mrf.mxu0
        %v5428 = vadd.f32 %v5216, %v5427
        %v5429 = vpop.f32.mrf.mxu0
        %5430 = vmatprep.mubr.bf16.mxu0 0
        %5431 = vmatmul.mubr.bf16.gmra.mxu0 %v5333
        %v5432 = vpop.f32.mrf.mxu0
        %v5433 = vadd.f32 %v5221, %v5432
        %v5434 = vpop.f32.mrf.mxu0
        %v5435 = vpop.f32.mrf.mxu0
        %v5436 = vadd.f32 %v5224, %v5435
        %v5437 = vpop.f32.mrf.mxu0
        %5438 = vmatprep.mubr.bf16.mxu0 0
        %5439 = vmatmul.mubr.bf16.gmra.mxu0 %v5336
        %v5440 = vpop.f32.mrf.mxu0
        %v5441 = vadd.f32 %v5229, %v5440
        %v5442 = vpop.f32.mrf.mxu0
        %v5443 = vpop.f32.mrf.mxu0
        %v5444 = vadd.f32 %v5232, %v5443
        %v5445 = vpop.f32.mrf.mxu0
        %5446 = vmatprep.mubr.bf16.mxu0 0
        %5447 = vmatmul.mubr.bf16.gmra.mxu0 %v5339
        %v5448 = vpop.f32.mrf.mxu0
        %v5449 = vadd.f32 %v5237, %v5448
        %v5450 = vpop.f32.mrf.mxu0
        %v5451 = vpop.f32.mrf.mxu0
        %v5452 = vadd.f32 %v5240, %v5451
        %v5453 = vpop.f32.mrf.mxu0
        %5454 = vmatprep.mubr.bf16.mxu0 0
        %5455 = vmatmul.mubr.bf16.gmra.mxu0 %v5342
        %v5456 = vpop.f32.mrf.mxu0
        %v5457 = vadd.f32 %v5245, %v5456
        %v5458 = vpop.f32.mrf.mxu0
        %v5459 = vpop.f32.mrf.mxu0
        %v5460 = vadd.f32 %v5248, %v5459
        %v5461 = vpop.f32.mrf.mxu0
        %5462 = vmatprep.mubr.bf16.mxu0 0
        %5463 = vmatmul.mubr.bf16.gmra.mxu0 %v5345
        %v5464 = vpop.f32.mrf.mxu0
        %v5465 = vadd.f32 %v5253, %v5464
        %v5466 = vpop.f32.mrf.mxu0
        %v5467 = vpop.f32.mrf.mxu0
        %v5468 = vadd.f32 %v5256, %v5467
        %v5469 = vpop.f32.mrf.mxu0
        %5470 = vmatprep.mubr.bf16.mxu0 0
        %5471 = vmatmul.mubr.bf16.gmra.mxu0 %v5348
        %v5472 = vpop.f32.mrf.mxu0
        %v5473 = vadd.f32 %v5261, %v5472
        %v5474 = vpop.f32.mrf.mxu0
        %v5475 = vpop.f32.mrf.mxu0
        %v5476 = vadd.f32 %v5264, %v5475
        %v5477 = vpop.f32.mrf.mxu0
        %5478 = vmatprep.mubr.bf16.mxu0 0
        %5479 = vmatmul.mubr.bf16.gmra.mxu0 %v5351
        %v5480 = vpop.f32.mrf.mxu0
        %v5481 = vadd.f32 %v5269, %v5480
        %v5482 = vpop.f32.mrf.mxu0
        %v5483 = vpop.f32.mrf.mxu0
        %v5484 = vadd.f32 %v5272, %v5483
        %v5485 = vpop.f32.mrf.mxu0
        %5486 = vmatprep.mubr.bf16.mxu0 0
        %5487 = vmatmul.mubr.bf16.gmra.mxu0 %v5354
        %v5488 = vpop.f32.mrf.mxu0
        %v5489 = vadd.f32 %v5277, %v5488
        %v5490 = vpop.f32.mrf.mxu0
        %v5491 = vpop.f32.mrf.mxu0
        %v5492 = vadd.f32 %v5280, %v5491
        %v5493 = vpop.f32.mrf.mxu0
        %5494 = vmatprep.mubr.bf16.mxu0 0
        %5495 = vmatmul.mubr.bf16.gmra.mxu0 %v5357
        %v5496 = vpop.f32.mrf.mxu0
        %v5497 = vadd.f32 %v5285, %v5496
        %v5498 = vpop.f32.mrf.mxu0
        %v5499 = vpop.f32.mrf.mxu0
        %v5500 = vadd.f32 %v5288, %v5499
        %v5501 = vpop.f32.mrf.mxu0
        %5502 = vmatprep.mubr.bf16.mxu0 0
        %5503 = vmatmul.mubr.bf16.gmra.mxu0 %v5360
        %v5504 = vpop.f32.mrf.mxu0
        %v5505 = vadd.f32 %v5293, %v5504
        %v5506 = vpop.f32.mrf.mxu0
        %v5507 = vpop.f32.mrf.mxu0
        %v5508 = vadd.f32 %v5296, %v5507
        %v5509 = vpop.f32.mrf.mxu0
        %5510 = vmatprep.mubr.bf16.mxu0 0
        %5511 = vmatmul.mubr.bf16.gmra.mxu0 %v5363
        %v5512 = vpop.f32.mrf.mxu0
        %v5513 = vadd.f32 %v5301, %v5512
        %v5514 = vpop.f32.mrf.mxu0
        %v5515 = vpop.f32.mrf.mxu0
        %v5516 = vadd.f32 %v5304, %v5515
        %v5517 = vpop.f32.mrf.mxu0
        %5518 = vmatprep.mubr.bf16.mxu0 0
        %5519 = vmatmul.mubr.bf16.gmra.mxu0 %v5366
        %v5520 = vpop.f32.mrf.mxu0
        %v5521 = vadd.f32 %v5309, %v5520
        %v5522 = vpop.f32.mrf.mxu0
        %v5523 = vpop.f32.mrf.mxu0
        %v5524 = vadd.f32 %v5312, %v5523
        %v5525 = vpop.f32.mrf.mxu0
        %5526 = vmatprep.mubr.bf16.mxu0 0
        %5527 = vmatmul.mubr.bf16.gmra.mxu0 %v5369
        %v5528 = vpop.f32.mrf.mxu0
        %v5529 = vadd.f32 %v5317, %v5528
        %v5530 = vpop.f32.mrf.mxu0
        %v5531 = vpop.f32.mrf.mxu0
        %v5532 = vadd.f32 %v5320, %v5531
        %v5533 = vpop.f32.mrf.mxu0
        %5534 = vdwg.mxu0
        %v5535 = vld [vmem:[#allocation3 + $0x9] sm:$0xff]
        %v5536 = vld [vmem:[#allocation3 + $0x11] sm:$0xff]
        %v5537 = vld [vmem:[#allocation3 + $0x19] sm:$0xff]
        %v5538 = vld [vmem:[#allocation3 + $0x21] sm:$0xff]
        %v5539 = vld [vmem:[#allocation3 + $0x29] sm:$0xff]
        %v5540 = vld [vmem:[#allocation3 + $0x31] sm:$0xff]
        %v5541 = vld [vmem:[#allocation3 + $0x39] sm:$0xff]
        %v5542 = vld [vmem:[#allocation3 + $0x41] sm:$0xff]
        %v5543 = vld [vmem:[#allocation3 + $0x49] sm:$0xff]
        %v5544 = vld [vmem:[#allocation3 + $0x51] sm:$0xff]
        %v5545 = vld [vmem:[#allocation3 + $0x59] sm:$0xff]
        %v5546 = vld [vmem:[#allocation3 + $0x61] sm:$0xff]
        %v5547 = vld [vmem:[#allocation3 + $0x69] sm:$0xff]
        %v5548 = vld [vmem:[#allocation3 + $0x71] sm:$0xff]
        %v5549 = vld [vmem:[#allocation3 + $0x79] sm:$0xff]
        %v5550 = vld [vmem:[#allocation3 + $0x81] sm:$0xff]
        %v5551 = vld [vmem:[#allocation3 + $0x89] sm:$0xff]
        %v5552 = vld [vmem:[#allocation3 + $0x91] sm:$0xff]
        %v5553 = vld [vmem:[#allocation3 + $0x99] sm:$0xff]
        %v5554 = vld [vmem:[#allocation3 + $0xa1] sm:$0xff]
        %v5555 = vld [vmem:[#allocation3 + $0xa9] sm:$0xff]
        %v5556 = vld [vmem:[#allocation3 + $0xb1] sm:$0xff]
        %v5557 = vld [vmem:[#allocation3 + $0xb9] sm:$0xff]
        %v5558 = vld [vmem:[#allocation3 + $0xc1] sm:$0xff]
        %v5559 = vld [vmem:[#allocation3 + $0xc9] sm:$0xff]
        %v5560 = vld [vmem:[#allocation3 + $0xd1] sm:$0xff]
        %v5561 = vld [vmem:[#allocation3 + $0xd9] sm:$0xff]
        %v5562 = vld [vmem:[#allocation3 + $0xe1] sm:$0xff]
        %v5563 = vld [vmem:[#allocation3 + $0xe9] sm:$0xff]
        %v5564 = vld [vmem:[#allocation3 + $0xf1] sm:$0xff]
        %v5565 = vld [vmem:[#allocation3 + $0xf9] sm:$0xff]
        %v5566 = vld [vmem:[#allocation3 + $0x101] sm:$0xff]
        %5567 = vset.pattern.permute.xlu0 2
        %5568 = vperm.xlu0 %5567, %v4660
        %v5569 = vpop.permute.xlu0 %5568
        %5571 = vset.pattern.permute.xlu0 2
        %5572 = vperm.xlu0 %5571, %v4661
        %v5573 = vpop.permute.xlu0 %5572
        %5575 = vset.pattern.permute.xlu0 2
        %5576 = vperm.xlu0 %5575, %v4662
        %v5577 = vpop.permute.xlu0 %5576
        %5579 = vset.pattern.permute.xlu0 2
        %5580 = vperm.xlu0 %5579, %v4663
        %v5581 = vpop.permute.xlu0 %5580
        %5583 = vset.pattern.permute.xlu0 2
        %5584 = vperm.xlu0 %5583, %v4664
        %v5585 = vpop.permute.xlu0 %5584
        %5587 = vset.pattern.permute.xlu0 2
        %5588 = vperm.xlu0 %5587, %v4665
        %v5589 = vpop.permute.xlu0 %5588
        %5591 = vset.pattern.permute.xlu0 2
        %5592 = vperm.xlu0 %5591, %v4666
        %v5593 = vpop.permute.xlu0 %5592
        %5595 = vset.pattern.permute.xlu0 2
        %5596 = vperm.xlu0 %5595, %v4667
        %v5597 = vpop.permute.xlu0 %5596
        %5599 = vset.pattern.permute.xlu0 2
        %5600 = vperm.xlu0 %5599, %v4668
        %v5601 = vpop.permute.xlu0 %5600
        %5603 = vset.pattern.permute.xlu0 2
        %5604 = vperm.xlu0 %5603, %v4669
        %v5605 = vpop.permute.xlu0 %5604
        %5607 = vset.pattern.permute.xlu0 2
        %5608 = vperm.xlu0 %5607, %v4670
        %v5609 = vpop.permute.xlu0 %5608
        %5611 = vset.pattern.permute.xlu0 2
        %5612 = vperm.xlu0 %5611, %v4671
        %v5613 = vpop.permute.xlu0 %5612
        %5615 = vset.pattern.permute.xlu0 2
        %5616 = vperm.xlu0 %5615, %v4672
        %v5617 = vpop.permute.xlu0 %5616
        %5619 = vset.pattern.permute.xlu0 2
        %5620 = vperm.xlu0 %5619, %v4673
        %v5621 = vpop.permute.xlu0 %5620
        %5623 = vset.pattern.permute.xlu0 2
        %5624 = vperm.xlu0 %5623, %v4674
        %v5625 = vpop.permute.xlu0 %5624
        %5627 = vset.pattern.permute.xlu0 2
        %5628 = vperm.xlu0 %5627, %v4675
        %v5629 = vpop.permute.xlu0 %5628
        %5631 = vset.pattern.permute.xlu0 2
        %5632 = vperm.xlu0 %5631, %v4676
        %v5633 = vpop.permute.xlu0 %5632
        %5635 = vset.pattern.permute.xlu0 2
        %5636 = vperm.xlu0 %5635, %v4677
        %v5637 = vpop.permute.xlu0 %5636
        %5639 = vset.pattern.permute.xlu0 2
        %5640 = vperm.xlu0 %5639, %v4678
        %v5641 = vpop.permute.xlu0 %5640
        %5643 = vset.pattern.permute.xlu0 2
        %5644 = vperm.xlu0 %5643, %v4679
        %v5645 = vpop.permute.xlu0 %5644
        %5647 = vset.pattern.permute.xlu0 2
        %5648 = vperm.xlu0 %5647, %v4680
        %v5649 = vpop.permute.xlu0 %5648
        %5651 = vset.pattern.permute.xlu0 2
        %5652 = vperm.xlu0 %5651, %v4681
        %v5653 = vpop.permute.xlu0 %5652
        %5655 = vset.pattern.permute.xlu0 2
        %5656 = vperm.xlu0 %5655, %v4682
        %v5657 = vpop.permute.xlu0 %5656
        %5659 = vset.pattern.permute.xlu0 2
        %5660 = vperm.xlu0 %5659, %v4683
        %v5661 = vpop.permute.xlu0 %5660
        %5663 = vset.pattern.permute.xlu0 2
        %5664 = vperm.xlu0 %5663, %v4684
        %v5665 = vpop.permute.xlu0 %5664
        %5667 = vset.pattern.permute.xlu0 2
        %5668 = vperm.xlu0 %5667, %v4685
        %v5669 = vpop.permute.xlu0 %5668
        %5671 = vset.pattern.permute.xlu0 2
        %5672 = vperm.xlu0 %5671, %v4686
        %v5673 = vpop.permute.xlu0 %5672
        %5675 = vset.pattern.permute.xlu0 2
        %5676 = vperm.xlu0 %5675, %v4687
        %v5677 = vpop.permute.xlu0 %5676
        %5679 = vset.pattern.permute.xlu0 2
        %5680 = vperm.xlu0 %5679, %v4688
        %v5681 = vpop.permute.xlu0 %5680
        %5683 = vset.pattern.permute.xlu0 2
        %5684 = vperm.xlu0 %5683, %v4689
        %v5685 = vpop.permute.xlu0 %5684
        %5687 = vset.pattern.permute.xlu0 2
        %5688 = vperm.xlu0 %5687, %v4690
        %v5689 = vpop.permute.xlu0 %5688
        %5691 = vset.pattern.permute.xlu0 2
        %5692 = vperm.xlu0 %5691, %v4691
        %v5693 = vpop.permute.xlu0 %5692
        %v5695 = vmul.f32 %v5535, %v5569
        %v5696 = vmul.f32 %v5536, %v5573
        %v5697 = vmul.f32 %v5537, %v5577
        %v5698 = vmul.f32 %v5538, %v5581
        %v5699 = vmul.f32 %v5539, %v5585
        %v5700 = vmul.f32 %v5540, %v5589
        %v5701 = vmul.f32 %v5541, %v5593
        %v5702 = vmul.f32 %v5542, %v5597
        %v5703 = vmul.f32 %v5543, %v5601
        %v5704 = vmul.f32 %v5544, %v5605
        %v5705 = vmul.f32 %v5545, %v5609
        %v5706 = vmul.f32 %v5546, %v5613
        %v5707 = vmul.f32 %v5547, %v5617
        %v5708 = vmul.f32 %v5548, %v5621
        %v5709 = vmul.f32 %v5549, %v5625
        %v5710 = vmul.f32 %v5550, %v5629
        %v5711 = vmul.f32 %v5551, %v5633
        %v5712 = vmul.f32 %v5552, %v5637
        %v5713 = vmul.f32 %v5553, %v5641
        %v5714 = vmul.f32 %v5554, %v5645
        %v5715 = vmul.f32 %v5555, %v5649
        %v5716 = vmul.f32 %v5556, %v5653
        %v5717 = vmul.f32 %v5557, %v5657
        %v5718 = vmul.f32 %v5558, %v5661
        %v5719 = vmul.f32 %v5559, %v5665
        %v5720 = vmul.f32 %v5560, %v5669
        %v5721 = vmul.f32 %v5561, %v5673
        %v5722 = vmul.f32 %v5562, %v5677
        %v5723 = vmul.f32 %v5563, %v5681
        %v5724 = vmul.f32 %v5564, %v5685
        %v5725 = vmul.f32 %v5565, %v5689
        %v5726 = vmul.f32 %v5566, %v5693
        %v5727 = vpack.c.bf16 %v5696, %v5695
        %v5728 = vpack.c.bf16 %v5698, %v5697
        %v5729 = vpack.c.bf16 %v5700, %v5699
        %v5730 = vpack.c.bf16 %v5702, %v5701
        %v5731 = vpack.c.bf16 %v5704, %v5703
        %v5732 = vpack.c.bf16 %v5706, %v5705
        %v5733 = vpack.c.bf16 %v5708, %v5707
        %v5734 = vpack.c.bf16 %v5710, %v5709
        %v5735 = vpack.c.bf16 %v5712, %v5711
        %v5736 = vpack.c.bf16 %v5714, %v5713
        %v5737 = vpack.c.bf16 %v5716, %v5715
        %v5738 = vpack.c.bf16 %v5718, %v5717
        %v5739 = vpack.c.bf16 %v5720, %v5719
        %v5740 = vpack.c.bf16 %v5722, %v5721
        %v5741 = vpack.c.bf16 %v5724, %v5723
        %v5742 = vpack.c.bf16 %v5726, %v5725
        %s5743 = scalar_lea.vmem %s2, 8
        %v5744 = vld [vmem:[%s5743] sm:$0xf]
        %v5746 = vsel %vm371, %v5727, 0
        %v5749 = vsel %vm371, %v5728, 0
        %v5752 = vsel %vm371, %v5729, 0
        %v5755 = vsel %vm371, %v5730, 0
        %v5758 = vsel %vm371, %v5731, 0
        %v5761 = vsel %vm371, %v5732, 0
        %v5764 = vsel %vm371, %v5733, 0
        %v5767 = vsel %vm371, %v5734, 0
        %v5770 = vsel %vm371, %v5735, 0
        %v5773 = vsel %vm371, %v5736, 0
        %v5776 = vsel %vm371, %v5737, 0
        %v5779 = vsel %vm371, %v5738, 0
        %v5782 = vsel %vm371, %v5739, 0
        %v5785 = vsel %vm371, %v5740, 0
        %v5788 = vsel %vm371, %v5741, 0
        %v5791 = vsel %vm371, %v5742, 0
        %v5794 = vsel %vm935, %v5744, 0
        %5796 = vmatprep.subr.bf16.mxu0 0
        %5797 = vmatpush1.bf16.msra.mxu0 0
        %5798 = vmatprep.subr.bf16.mxu0 0
        %5799 = vmatpush1.bf16.msra.mxu0 0
        %5800 = vmatprep.subr.bf16.mxu0 0
        %5801 = vmatpush1.bf16.msra.mxu0 0
        %5802 = vmatprep.subr.bf16.mxu0 0
        %5803 = vmatpush1.bf16.msra.mxu0 0
        %5804 = vmatprep.subr.bf16.mxu0 0
        %5805 = vmatpush1.bf16.msra.mxu0 0
        %5806 = vmatprep.subr.bf16.mxu0 0
        %5807 = vmatpush1.bf16.msra.mxu0 0
        %5808 = vmatprep.subr.bf16.mxu0 0
        %5809 = vmatpush1.bf16.msra.mxu0 0
        %5810 = vmatprep.subr.bf16.mxu0 0
        %5811 = vmatpush1.bf16.msra.mxu0 %v5794
        %5812 = vmatprep.subr.bf16.mxu0 0
        %5813 = vmatpush2.bf16.msra.mxu0 0
        %5814 = vmatprep.subr.bf16.mxu0 0
        %5815 = vmatpush2.bf16.msra.mxu0 0
        %5816 = vmatprep.subr.bf16.mxu0 0
        %5817 = vmatpush2.bf16.msra.mxu0 0
        %5818 = vmatprep.subr.bf16.mxu0 0
        %5819 = vmatpush2.bf16.msra.mxu0 0
        %5820 = vmatprep.subr.bf16.mxu0 0
        %5821 = vmatpush2.bf16.msra.mxu0 0
        %5822 = vmatprep.subr.bf16.mxu0 0
        %5823 = vmatpush2.bf16.msra.mxu0 0
        %5824 = vmatprep.subr.bf16.mxu0 0
        %5825 = vmatpush2.bf16.msra.mxu0 0
        %5826 = vmatprep.subr.bf16.mxu0 0
        %5827 = vmatpush2.bf16.msra.mxu0 0
        %5828 = vmatprep.mubr.bf16.mxu0 0
        %5829 = vmatmul.mubr.bf16.gmra.mxu0 %v5746
        %v5830 = vpop.f32.mrf.mxu0
        %v5831 = vadd.f32 0.0, %v5830
        %v5832 = vpop.f32.mrf.mxu0
        %v5833 = vpop.f32.mrf.mxu0
        %v5834 = vadd.f32 0.0, %v5833
        %v5835 = vpop.f32.mrf.mxu0
        %5836 = vmatprep.mubr.bf16.mxu0 0
        %5837 = vmatmul.mubr.bf16.gmra.mxu0 %v5749
        %v5838 = vpop.f32.mrf.mxu0
        %v5839 = vadd.f32 0.0, %v5838
        %v5840 = vpop.f32.mrf.mxu0
        %v5841 = vpop.f32.mrf.mxu0
        %v5842 = vadd.f32 0.0, %v5841
        %v5843 = vpop.f32.mrf.mxu0
        %5844 = vmatprep.mubr.bf16.mxu0 0
        %5845 = vmatmul.mubr.bf16.gmra.mxu0 %v5752
        %v5846 = vpop.f32.mrf.mxu0
        %v5847 = vadd.f32 0.0, %v5846
        %v5848 = vpop.f32.mrf.mxu0
        %v5849 = vpop.f32.mrf.mxu0
        %v5850 = vadd.f32 0.0, %v5849
        %v5851 = vpop.f32.mrf.mxu0
        %5852 = vmatprep.mubr.bf16.mxu0 0
        %5853 = vmatmul.mubr.bf16.gmra.mxu0 %v5755
        %v5854 = vpop.f32.mrf.mxu0
        %v5855 = vadd.f32 0.0, %v5854
        %v5856 = vpop.f32.mrf.mxu0
        %v5857 = vpop.f32.mrf.mxu0
        %v5858 = vadd.f32 0.0, %v5857
        %v5859 = vpop.f32.mrf.mxu0
        %5860 = vmatprep.mubr.bf16.mxu0 0
        %5861 = vmatmul.mubr.bf16.gmra.mxu0 %v5758
        %v5862 = vpop.f32.mrf.mxu0
        %v5863 = vadd.f32 0.0, %v5862
        %v5864 = vpop.f32.mrf.mxu0
        %v5865 = vpop.f32.mrf.mxu0
        %v5866 = vadd.f32 0.0, %v5865
        %v5867 = vpop.f32.mrf.mxu0
        %5868 = vmatprep.mubr.bf16.mxu0 0
        %5869 = vmatmul.mubr.bf16.gmra.mxu0 %v5761
        %v5870 = vpop.f32.mrf.mxu0
        %v5871 = vadd.f32 0.0, %v5870
        %v5872 = vpop.f32.mrf.mxu0
        %v5873 = vpop.f32.mrf.mxu0
        %v5874 = vadd.f32 0.0, %v5873
        %v5875 = vpop.f32.mrf.mxu0
        %5876 = vmatprep.mubr.bf16.mxu0 0
        %5877 = vmatmul.mubr.bf16.gmra.mxu0 %v5764
        %v5878 = vpop.f32.mrf.mxu0
        %v5879 = vadd.f32 0.0, %v5878
        %v5880 = vpop.f32.mrf.mxu0
        %v5881 = vpop.f32.mrf.mxu0
        %v5882 = vadd.f32 0.0, %v5881
        %v5883 = vpop.f32.mrf.mxu0
        %5884 = vmatprep.mubr.bf16.mxu0 0
        %5885 = vmatmul.mubr.bf16.gmra.mxu0 %v5767
        %v5886 = vpop.f32.mrf.mxu0
        %v5887 = vadd.f32 0.0, %v5886
        %v5888 = vpop.f32.mrf.mxu0
        %v5889 = vpop.f32.mrf.mxu0
        %v5890 = vadd.f32 0.0, %v5889
        %v5891 = vpop.f32.mrf.mxu0
        %5892 = vmatprep.mubr.bf16.mxu0 0
        %5893 = vmatmul.mubr.bf16.gmra.mxu0 %v5770
        %v5894 = vpop.f32.mrf.mxu0
        %v5895 = vadd.f32 0.0, %v5894
        %v5896 = vpop.f32.mrf.mxu0
        %v5897 = vpop.f32.mrf.mxu0
        %v5898 = vadd.f32 0.0, %v5897
        %v5899 = vpop.f32.mrf.mxu0
        %5900 = vmatprep.mubr.bf16.mxu0 0
        %5901 = vmatmul.mubr.bf16.gmra.mxu0 %v5773
        %v5902 = vpop.f32.mrf.mxu0
        %v5903 = vadd.f32 0.0, %v5902
        %v5904 = vpop.f32.mrf.mxu0
        %v5905 = vpop.f32.mrf.mxu0
        %v5906 = vadd.f32 0.0, %v5905
        %v5907 = vpop.f32.mrf.mxu0
        %5908 = vmatprep.mubr.bf16.mxu0 0
        %5909 = vmatmul.mubr.bf16.gmra.mxu0 %v5776
        %v5910 = vpop.f32.mrf.mxu0
        %v5911 = vadd.f32 0.0, %v5910
        %v5912 = vpop.f32.mrf.mxu0
        %v5913 = vpop.f32.mrf.mxu0
        %v5914 = vadd.f32 0.0, %v5913
        %v5915 = vpop.f32.mrf.mxu0
        %5916 = vmatprep.mubr.bf16.mxu0 0
        %5917 = vmatmul.mubr.bf16.gmra.mxu0 %v5779
        %v5918 = vpop.f32.mrf.mxu0
        %v5919 = vadd.f32 0.0, %v5918
        %v5920 = vpop.f32.mrf.mxu0
        %v5921 = vpop.f32.mrf.mxu0
        %v5922 = vadd.f32 0.0, %v5921
        %v5923 = vpop.f32.mrf.mxu0
        %5924 = vmatprep.mubr.bf16.mxu0 0
        %5925 = vmatmul.mubr.bf16.gmra.mxu0 %v5782
        %v5926 = vpop.f32.mrf.mxu0
        %v5927 = vadd.f32 0.0, %v5926
        %v5928 = vpop.f32.mrf.mxu0
        %v5929 = vpop.f32.mrf.mxu0
        %v5930 = vadd.f32 0.0, %v5929
        %v5931 = vpop.f32.mrf.mxu0
        %5932 = vmatprep.mubr.bf16.mxu0 0
        %5933 = vmatmul.mubr.bf16.gmra.mxu0 %v5785
        %v5934 = vpop.f32.mrf.mxu0
        %v5935 = vadd.f32 0.0, %v5934
        %v5936 = vpop.f32.mrf.mxu0
        %v5937 = vpop.f32.mrf.mxu0
        %v5938 = vadd.f32 0.0, %v5937
        %v5939 = vpop.f32.mrf.mxu0
        %5940 = vmatprep.mubr.bf16.mxu0 0
        %5941 = vmatmul.mubr.bf16.gmra.mxu0 %v5788
        %v5942 = vpop.f32.mrf.mxu0
        %v5943 = vadd.f32 0.0, %v5942
        %v5944 = vpop.f32.mrf.mxu0
        %v5945 = vpop.f32.mrf.mxu0
        %v5946 = vadd.f32 0.0, %v5945
        %v5947 = vpop.f32.mrf.mxu0
        %5948 = vmatprep.mubr.bf16.mxu0 0
        %5949 = vmatmul.mubr.bf16.gmra.mxu0 %v5791
        %v5950 = vpop.f32.mrf.mxu0
        %v5951 = vadd.f32 0.0, %v5950
        %v5952 = vpop.f32.mrf.mxu0
        %v5953 = vpop.f32.mrf.mxu0
        %v5954 = vadd.f32 0.0, %v5953
        %v5955 = vpop.f32.mrf.mxu0
        %5956 = vdwg.mxu0
        %v5957 = vadd.f32 %v5409, %v5831
        %v5958 = vadd.f32 %v5412, %v5834
        %v5959 = vadd.f32 %v5417, %v5839
        %v5960 = vadd.f32 %v5420, %v5842
        %v5961 = vadd.f32 %v5425, %v5847
        %v5962 = vadd.f32 %v5428, %v5850
        %v5963 = vadd.f32 %v5433, %v5855
        %v5964 = vadd.f32 %v5436, %v5858
        %v5965 = vadd.f32 %v5441, %v5863
        %v5966 = vadd.f32 %v5444, %v5866
        %v5967 = vadd.f32 %v5449, %v5871
        %v5968 = vadd.f32 %v5452, %v5874
        %v5969 = vadd.f32 %v5457, %v5879
        %v5970 = vadd.f32 %v5460, %v5882
        %v5971 = vadd.f32 %v5465, %v5887
        %v5972 = vadd.f32 %v5468, %v5890
        %v5973 = vadd.f32 %v5473, %v5895
        %v5974 = vadd.f32 %v5476, %v5898
        %v5975 = vadd.f32 %v5481, %v5903
        %v5976 = vadd.f32 %v5484, %v5906
        %v5977 = vadd.f32 %v5489, %v5911
        %v5978 = vadd.f32 %v5492, %v5914
        %v5979 = vadd.f32 %v5497, %v5919
        %v5980 = vadd.f32 %v5500, %v5922
        %v5981 = vadd.f32 %v5505, %v5927
        %v5982 = vadd.f32 %v5508, %v5930
        %v5983 = vadd.f32 %v5513, %v5935
        %v5984 = vadd.f32 %v5516, %v5938
        %v5985 = vadd.f32 %v5521, %v5943
        %v5986 = vadd.f32 %v5524, %v5946
        %v5987 = vadd.f32 %v5529, %v5951
        %v5988 = vadd.f32 %v5532, %v5954
        %v5989 = vld [vmem:[#allocation3 + $0xf] sm:$0xff]
        %v5990 = vld [vmem:[#allocation3 + $0x17] sm:$0xff]
        %v5991 = vld [vmem:[#allocation3 + $0x1f] sm:$0xff]
        %v5992 = vld [vmem:[#allocation3 + $0x27] sm:$0xff]
        %v5993 = vld [vmem:[#allocation3 + $0x2f] sm:$0xff]
        %v5994 = vld [vmem:[#allocation3 + $0x37] sm:$0xff]
        %v5995 = vld [vmem:[#allocation3 + $0x3f] sm:$0xff]
        %v5996 = vld [vmem:[#allocation3 + $0x47] sm:$0xff]
        %v5997 = vld [vmem:[#allocation3 + $0x4f] sm:$0xff]
        %v5998 = vld [vmem:[#allocation3 + $0x57] sm:$0xff]
        %v5999 = vld [vmem:[#allocation3 + $0x5f] sm:$0xff]
        %v6000 = vld [vmem:[#allocation3 + $0x67] sm:$0xff]
        %v6001 = vld [vmem:[#allocation3 + $0x6f] sm:$0xff]
        %v6002 = vld [vmem:[#allocation3 + $0x77] sm:$0xff]
        %v6003 = vld [vmem:[#allocation3 + $0x7f] sm:$0xff]
        %v6004 = vld [vmem:[#allocation3 + $0x87] sm:$0xff]
        %v6005 = vld [vmem:[#allocation3 + $0x8f] sm:$0xff]
        %v6006 = vld [vmem:[#allocation3 + $0x97] sm:$0xff]
        %v6007 = vld [vmem:[#allocation3 + $0x9f] sm:$0xff]
        %v6008 = vld [vmem:[#allocation3 + $0xa7] sm:$0xff]
        %v6009 = vld [vmem:[#allocation3 + $0xaf] sm:$0xff]
        %v6010 = vld [vmem:[#allocation3 + $0xb7] sm:$0xff]
        %v6011 = vld [vmem:[#allocation3 + $0xbf] sm:$0xff]
        %v6012 = vld [vmem:[#allocation3 + $0xc7] sm:$0xff]
        %v6013 = vld [vmem:[#allocation3 + $0xcf] sm:$0xff]
        %v6014 = vld [vmem:[#allocation3 + $0xd7] sm:$0xff]
        %v6015 = vld [vmem:[#allocation3 + $0xdf] sm:$0xff]
        %v6016 = vld [vmem:[#allocation3 + $0xe7] sm:$0xff]
        %v6017 = vld [vmem:[#allocation3 + $0xef] sm:$0xff]
        %v6018 = vld [vmem:[#allocation3 + $0xf7] sm:$0xff]
        %v6019 = vld [vmem:[#allocation3 + $0xff] sm:$0xff]
        %v6020 = vld [vmem:[#allocation3 + $0x107] sm:$0xff]
        %6021 = vset.pattern.permute.xlu0 3
        %6022 = vperm.xlu0 %6021, %v4660
        %v6023 = vpop.permute.xlu0 %6022
        %6025 = vset.pattern.permute.xlu0 3
        %6026 = vperm.xlu0 %6025, %v4661
        %v6027 = vpop.permute.xlu0 %6026
        %6029 = vset.pattern.permute.xlu0 3
        %6030 = vperm.xlu0 %6029, %v4662
        %v6031 = vpop.permute.xlu0 %6030
        %6033 = vset.pattern.permute.xlu0 3
        %6034 = vperm.xlu0 %6033, %v4663
        %v6035 = vpop.permute.xlu0 %6034
        %6037 = vset.pattern.permute.xlu0 3
        %6038 = vperm.xlu0 %6037, %v4664
        %v6039 = vpop.permute.xlu0 %6038
        %6041 = vset.pattern.permute.xlu0 3
        %6042 = vperm.xlu0 %6041, %v4665
        %v6043 = vpop.permute.xlu0 %6042
        %6045 = vset.pattern.permute.xlu0 3
        %6046 = vperm.xlu0 %6045, %v4666
        %v6047 = vpop.permute.xlu0 %6046
        %6049 = vset.pattern.permute.xlu0 3
        %6050 = vperm.xlu0 %6049, %v4667
        %v6051 = vpop.permute.xlu0 %6050
        %6053 = vset.pattern.permute.xlu0 3
        %6054 = vperm.xlu0 %6053, %v4668
        %v6055 = vpop.permute.xlu0 %6054
        %6057 = vset.pattern.permute.xlu0 3
        %6058 = vperm.xlu0 %6057, %v4669
        %v6059 = vpop.permute.xlu0 %6058
        %6061 = vset.pattern.permute.xlu0 3
        %6062 = vperm.xlu0 %6061, %v4670
        %v6063 = vpop.permute.xlu0 %6062
        %6065 = vset.pattern.permute.xlu0 3
        %6066 = vperm.xlu0 %6065, %v4671
        %v6067 = vpop.permute.xlu0 %6066
        %6069 = vset.pattern.permute.xlu0 3
        %6070 = vperm.xlu0 %6069, %v4672
        %v6071 = vpop.permute.xlu0 %6070
        %6073 = vset.pattern.permute.xlu0 3
        %6074 = vperm.xlu0 %6073, %v4673
        %v6075 = vpop.permute.xlu0 %6074
        %6077 = vset.pattern.permute.xlu0 3
        %6078 = vperm.xlu0 %6077, %v4674
        %v6079 = vpop.permute.xlu0 %6078
        %6081 = vset.pattern.permute.xlu0 3
        %6082 = vperm.xlu0 %6081, %v4675
        %v6083 = vpop.permute.xlu0 %6082
        %6085 = vset.pattern.permute.xlu0 3
        %6086 = vperm.xlu0 %6085, %v4676
        %v6087 = vpop.permute.xlu0 %6086
        %6089 = vset.pattern.permute.xlu0 3
        %6090 = vperm.xlu0 %6089, %v4677
        %v6091 = vpop.permute.xlu0 %6090
        %6093 = vset.pattern.permute.xlu0 3
        %6094 = vperm.xlu0 %6093, %v4678
        %v6095 = vpop.permute.xlu0 %6094
        %6097 = vset.pattern.permute.xlu0 3
        %6098 = vperm.xlu0 %6097, %v4679
        %v6099 = vpop.permute.xlu0 %6098
        %6101 = vset.pattern.permute.xlu0 3
        %6102 = vperm.xlu0 %6101, %v4680
        %v6103 = vpop.permute.xlu0 %6102
        %6105 = vset.pattern.permute.xlu0 3
        %6106 = vperm.xlu0 %6105, %v4681
        %v6107 = vpop.permute.xlu0 %6106
        %6109 = vset.pattern.permute.xlu0 3
        %6110 = vperm.xlu0 %6109, %v4682
        %v6111 = vpop.permute.xlu0 %6110
        %6113 = vset.pattern.permute.xlu0 3
        %6114 = vperm.xlu0 %6113, %v4683
        %v6115 = vpop.permute.xlu0 %6114
        %6117 = vset.pattern.permute.xlu0 3
        %6118 = vperm.xlu0 %6117, %v4684
        %v6119 = vpop.permute.xlu0 %6118
        %6121 = vset.pattern.permute.xlu0 3
        %6122 = vperm.xlu0 %6121, %v4685
        %v6123 = vpop.permute.xlu0 %6122
        %6125 = vset.pattern.permute.xlu0 3
        %6126 = vperm.xlu0 %6125, %v4686
        %v6127 = vpop.permute.xlu0 %6126
        %6129 = vset.pattern.permute.xlu0 3
        %6130 = vperm.xlu0 %6129, %v4687
        %v6131 = vpop.permute.xlu0 %6130
        %6133 = vset.pattern.permute.xlu0 3
        %6134 = vperm.xlu0 %6133, %v4688
        %v6135 = vpop.permute.xlu0 %6134
        %6137 = vset.pattern.permute.xlu0 3
        %6138 = vperm.xlu0 %6137, %v4689
        %v6139 = vpop.permute.xlu0 %6138
        %6141 = vset.pattern.permute.xlu0 3
        %6142 = vperm.xlu0 %6141, %v4690
        %v6143 = vpop.permute.xlu0 %6142
        %6145 = vset.pattern.permute.xlu0 3
        %6146 = vperm.xlu0 %6145, %v4691
        %v6147 = vpop.permute.xlu0 %6146
        %v6149 = vmul.f32 %v5989, %v6023
        %v6150 = vmul.f32 %v5990, %v6027
        %v6151 = vmul.f32 %v5991, %v6031
        %v6152 = vmul.f32 %v5992, %v6035
        %v6153 = vmul.f32 %v5993, %v6039
        %v6154 = vmul.f32 %v5994, %v6043
        %v6155 = vmul.f32 %v5995, %v6047
        %v6156 = vmul.f32 %v5996, %v6051
        %v6157 = vmul.f32 %v5997, %v6055
        %v6158 = vmul.f32 %v5998, %v6059
        %v6159 = vmul.f32 %v5999, %v6063
        %v6160 = vmul.f32 %v6000, %v6067
        %v6161 = vmul.f32 %v6001, %v6071
        %v6162 = vmul.f32 %v6002, %v6075
        %v6163 = vmul.f32 %v6003, %v6079
        %v6164 = vmul.f32 %v6004, %v6083
        %v6165 = vmul.f32 %v6005, %v6087
        %v6166 = vmul.f32 %v6006, %v6091
        %v6167 = vmul.f32 %v6007, %v6095
        %v6168 = vmul.f32 %v6008, %v6099
        %v6169 = vmul.f32 %v6009, %v6103
        %v6170 = vmul.f32 %v6010, %v6107
        %v6171 = vmul.f32 %v6011, %v6111
        %v6172 = vmul.f32 %v6012, %v6115
        %v6173 = vmul.f32 %v6013, %v6119
        %v6174 = vmul.f32 %v6014, %v6123
        %v6175 = vmul.f32 %v6015, %v6127
        %v6176 = vmul.f32 %v6016, %v6131
        %v6177 = vmul.f32 %v6017, %v6135
        %v6178 = vmul.f32 %v6018, %v6139
        %v6179 = vmul.f32 %v6019, %v6143
        %v6180 = vmul.f32 %v6020, %v6147
        %v6181 = vpack.c.bf16 %v6150, %v6149
        %v6182 = vpack.c.bf16 %v6152, %v6151
        %v6183 = vpack.c.bf16 %v6154, %v6153
        %v6184 = vpack.c.bf16 %v6156, %v6155
        %v6185 = vpack.c.bf16 %v6158, %v6157
        %v6186 = vpack.c.bf16 %v6160, %v6159
        %v6187 = vpack.c.bf16 %v6162, %v6161
        %v6188 = vpack.c.bf16 %v6164, %v6163
        %v6189 = vpack.c.bf16 %v6166, %v6165
        %v6190 = vpack.c.bf16 %v6168, %v6167
        %v6191 = vpack.c.bf16 %v6170, %v6169
        %v6192 = vpack.c.bf16 %v6172, %v6171
        %v6193 = vpack.c.bf16 %v6174, %v6173
        %v6194 = vpack.c.bf16 %v6176, %v6175
        %v6195 = vpack.c.bf16 %v6178, %v6177
        %v6196 = vpack.c.bf16 %v6180, %v6179
        %s6197 = scalar_lea.vmem %s2, 12
        %v6198 = vld [vmem:[%s6197] sm:$0xf]
        %v6200 = vsel %vm371, %v6181, 0
        %v6203 = vsel %vm371, %v6182, 0
        %v6206 = vsel %vm371, %v6183, 0
        %v6209 = vsel %vm371, %v6184, 0
        %v6212 = vsel %vm371, %v6185, 0
        %v6215 = vsel %vm371, %v6186, 0
        %v6218 = vsel %vm371, %v6187, 0
        %v6221 = vsel %vm371, %v6188, 0
        %v6224 = vsel %vm371, %v6189, 0
        %v6227 = vsel %vm371, %v6190, 0
        %v6230 = vsel %vm371, %v6191, 0
        %v6233 = vsel %vm371, %v6192, 0
        %v6236 = vsel %vm371, %v6193, 0
        %v6239 = vsel %vm371, %v6194, 0
        %v6242 = vsel %vm371, %v6195, 0
        %v6245 = vsel %vm371, %v6196, 0
        %v6248 = vsel %vm935, %v6198, 0
        %6250 = vmatprep.subr.bf16.mxu0 0
        %6251 = vmatpush1.bf16.msra.mxu0 0
        %6252 = vmatprep.subr.bf16.mxu0 0
        %6253 = vmatpush1.bf16.msra.mxu0 0
        %6254 = vmatprep.subr.bf16.mxu0 0
        %6255 = vmatpush1.bf16.msra.mxu0 0
        %6256 = vmatprep.subr.bf16.mxu0 0
        %6257 = vmatpush1.bf16.msra.mxu0 0
        %6258 = vmatprep.subr.bf16.mxu0 0
        %6259 = vmatpush1.bf16.msra.mxu0 0
        %6260 = vmatprep.subr.bf16.mxu0 0
        %6261 = vmatpush1.bf16.msra.mxu0 0
        %6262 = vmatprep.subr.bf16.mxu0 0
        %6263 = vmatpush1.bf16.msra.mxu0 0
        %6264 = vmatprep.subr.bf16.mxu0 0
        %6265 = vmatpush1.bf16.msra.mxu0 %v6248
        %6266 = vmatprep.subr.bf16.mxu0 0
        %6267 = vmatpush2.bf16.msra.mxu0 0
        %6268 = vmatprep.subr.bf16.mxu0 0
        %6269 = vmatpush2.bf16.msra.mxu0 0
        %6270 = vmatprep.subr.bf16.mxu0 0
        %6271 = vmatpush2.bf16.msra.mxu0 0
        %6272 = vmatprep.subr.bf16.mxu0 0
        %6273 = vmatpush2.bf16.msra.mxu0 0
        %6274 = vmatprep.subr.bf16.mxu0 0
        %6275 = vmatpush2.bf16.msra.mxu0 0
        %6276 = vmatprep.subr.bf16.mxu0 0
        %6277 = vmatpush2.bf16.msra.mxu0 0
        %6278 = vmatprep.subr.bf16.mxu0 0
        %6279 = vmatpush2.bf16.msra.mxu0 0
        %6280 = vmatprep.subr.bf16.mxu0 0
        %6281 = vmatpush2.bf16.msra.mxu0 0
        %6282 = vmatprep.mubr.bf16.mxu0 0
        %6283 = vmatmul.mubr.bf16.gmra.mxu0 %v6200
        %v6284 = vpop.f32.mrf.mxu0
        %v6285 = vadd.f32 0.0, %v6284
        %v6286 = vpop.f32.mrf.mxu0
        %v6287 = vpop.f32.mrf.mxu0
        %v6288 = vadd.f32 0.0, %v6287
        %v6289 = vpop.f32.mrf.mxu0
        %6290 = vmatprep.mubr.bf16.mxu0 0
        %6291 = vmatmul.mubr.bf16.gmra.mxu0 %v6203
        %v6292 = vpop.f32.mrf.mxu0
        %v6293 = vadd.f32 0.0, %v6292
        %v6294 = vpop.f32.mrf.mxu0
        %v6295 = vpop.f32.mrf.mxu0
        %v6296 = vadd.f32 0.0, %v6295
        %v6297 = vpop.f32.mrf.mxu0
        %6298 = vmatprep.mubr.bf16.mxu0 0
        %6299 = vmatmul.mubr.bf16.gmra.mxu0 %v6206
        %v6300 = vpop.f32.mrf.mxu0
        %v6301 = vadd.f32 0.0, %v6300
        %v6302 = vpop.f32.mrf.mxu0
        %v6303 = vpop.f32.mrf.mxu0
        %v6304 = vadd.f32 0.0, %v6303
        %v6305 = vpop.f32.mrf.mxu0
        %6306 = vmatprep.mubr.bf16.mxu0 0
        %6307 = vmatmul.mubr.bf16.gmra.mxu0 %v6209
        %v6308 = vpop.f32.mrf.mxu0
        %v6309 = vadd.f32 0.0, %v6308
        %v6310 = vpop.f32.mrf.mxu0
        %v6311 = vpop.f32.mrf.mxu0
        %v6312 = vadd.f32 0.0, %v6311
        %v6313 = vpop.f32.mrf.mxu0
        %6314 = vmatprep.mubr.bf16.mxu0 0
        %6315 = vmatmul.mubr.bf16.gmra.mxu0 %v6212
        %v6316 = vpop.f32.mrf.mxu0
        %v6317 = vadd.f32 0.0, %v6316
        %v6318 = vpop.f32.mrf.mxu0
        %v6319 = vpop.f32.mrf.mxu0
        %v6320 = vadd.f32 0.0, %v6319
        %v6321 = vpop.f32.mrf.mxu0
        %6322 = vmatprep.mubr.bf16.mxu0 0
        %6323 = vmatmul.mubr.bf16.gmra.mxu0 %v6215
        %v6324 = vpop.f32.mrf.mxu0
        %v6325 = vadd.f32 0.0, %v6324
        %v6326 = vpop.f32.mrf.mxu0
        %v6327 = vpop.f32.mrf.mxu0
        %v6328 = vadd.f32 0.0, %v6327
        %v6329 = vpop.f32.mrf.mxu0
        %6330 = vmatprep.mubr.bf16.mxu0 0
        %6331 = vmatmul.mubr.bf16.gmra.mxu0 %v6218
        %v6332 = vpop.f32.mrf.mxu0
        %v6333 = vadd.f32 0.0, %v6332
        %v6334 = vpop.f32.mrf.mxu0
        %v6335 = vpop.f32.mrf.mxu0
        %v6336 = vadd.f32 0.0, %v6335
        %v6337 = vpop.f32.mrf.mxu0
        %6338 = vmatprep.mubr.bf16.mxu0 0
        %6339 = vmatmul.mubr.bf16.gmra.mxu0 %v6221
        %v6340 = vpop.f32.mrf.mxu0
        %v6341 = vadd.f32 0.0, %v6340
        %v6342 = vpop.f32.mrf.mxu0
        %v6343 = vpop.f32.mrf.mxu0
        %v6344 = vadd.f32 0.0, %v6343
        %v6345 = vpop.f32.mrf.mxu0
        %6346 = vmatprep.mubr.bf16.mxu0 0
        %6347 = vmatmul.mubr.bf16.gmra.mxu0 %v6224
        %v6348 = vpop.f32.mrf.mxu0
        %v6349 = vadd.f32 0.0, %v6348
        %v6350 = vpop.f32.mrf.mxu0
        %v6351 = vpop.f32.mrf.mxu0
        %v6352 = vadd.f32 0.0, %v6351
        %v6353 = vpop.f32.mrf.mxu0
        %6354 = vmatprep.mubr.bf16.mxu0 0
        %6355 = vmatmul.mubr.bf16.gmra.mxu0 %v6227
        %v6356 = vpop.f32.mrf.mxu0
        %v6357 = vadd.f32 0.0, %v6356
        %v6358 = vpop.f32.mrf.mxu0
        %v6359 = vpop.f32.mrf.mxu0
        %v6360 = vadd.f32 0.0, %v6359
        %v6361 = vpop.f32.mrf.mxu0
        %6362 = vmatprep.mubr.bf16.mxu0 0
        %6363 = vmatmul.mubr.bf16.gmra.mxu0 %v6230
        %v6364 = vpop.f32.mrf.mxu0
        %v6365 = vadd.f32 0.0, %v6364
        %v6366 = vpop.f32.mrf.mxu0
        %v6367 = vpop.f32.mrf.mxu0
        %v6368 = vadd.f32 0.0, %v6367
        %v6369 = vpop.f32.mrf.mxu0
        %6370 = vmatprep.mubr.bf16.mxu0 0
        %6371 = vmatmul.mubr.bf16.gmra.mxu0 %v6233
        %v6372 = vpop.f32.mrf.mxu0
        %v6373 = vadd.f32 0.0, %v6372
        %v6374 = vpop.f32.mrf.mxu0
        %v6375 = vpop.f32.mrf.mxu0
        %v6376 = vadd.f32 0.0, %v6375
        %v6377 = vpop.f32.mrf.mxu0
        %6378 = vmatprep.mubr.bf16.mxu0 0
        %6379 = vmatmul.mubr.bf16.gmra.mxu0 %v6236
        %v6380 = vpop.f32.mrf.mxu0
        %v6381 = vadd.f32 0.0, %v6380
        %v6382 = vpop.f32.mrf.mxu0
        %v6383 = vpop.f32.mrf.mxu0
        %v6384 = vadd.f32 0.0, %v6383
        %v6385 = vpop.f32.mrf.mxu0
        %6386 = vmatprep.mubr.bf16.mxu0 0
        %6387 = vmatmul.mubr.bf16.gmra.mxu0 %v6239
        %v6388 = vpop.f32.mrf.mxu0
        %v6389 = vadd.f32 0.0, %v6388
        %v6390 = vpop.f32.mrf.mxu0
        %v6391 = vpop.f32.mrf.mxu0
        %v6392 = vadd.f32 0.0, %v6391
        %v6393 = vpop.f32.mrf.mxu0
        %6394 = vmatprep.mubr.bf16.mxu0 0
        %6395 = vmatmul.mubr.bf16.gmra.mxu0 %v6242
        %v6396 = vpop.f32.mrf.mxu0
        %v6397 = vadd.f32 0.0, %v6396
        %v6398 = vpop.f32.mrf.mxu0
        %v6399 = vpop.f32.mrf.mxu0
        %v6400 = vadd.f32 0.0, %v6399
        %v6401 = vpop.f32.mrf.mxu0
        %6402 = vmatprep.mubr.bf16.mxu0 0
        %6403 = vmatmul.mubr.bf16.gmra.mxu0 %v6245
        %v6404 = vpop.f32.mrf.mxu0
        %v6405 = vadd.f32 0.0, %v6404
        %v6406 = vpop.f32.mrf.mxu0
        %v6407 = vpop.f32.mrf.mxu0
        %v6408 = vadd.f32 0.0, %v6407
        %v6409 = vpop.f32.mrf.mxu0
        %6410 = vdwg.mxu0
        %v6411 = vadd.f32 %v5957, %v6285
        %v6412 = vadd.f32 %v5958, %v6288
        %v6413 = vadd.f32 %v5959, %v6293
        %v6414 = vadd.f32 %v5960, %v6296
        %v6415 = vadd.f32 %v5961, %v6301
        %v6416 = vadd.f32 %v5962, %v6304
        %v6417 = vadd.f32 %v5963, %v6309
        %v6418 = vadd.f32 %v5964, %v6312
        %v6419 = vadd.f32 %v5965, %v6317
        %v6420 = vadd.f32 %v5966, %v6320
        %v6421 = vadd.f32 %v5967, %v6325
        %v6422 = vadd.f32 %v5968, %v6328
        %v6423 = vadd.f32 %v5969, %v6333
        %v6424 = vadd.f32 %v5970, %v6336
        %v6425 = vadd.f32 %v5971, %v6341
        %v6426 = vadd.f32 %v5972, %v6344
        %v6427 = vadd.f32 %v5973, %v6349
        %v6428 = vadd.f32 %v5974, %v6352
        %v6429 = vadd.f32 %v5975, %v6357
        %v6430 = vadd.f32 %v5976, %v6360
        %v6431 = vadd.f32 %v5977, %v6365
        %v6432 = vadd.f32 %v5978, %v6368
        %v6433 = vadd.f32 %v5979, %v6373
        %v6434 = vadd.f32 %v5980, %v6376
        %v6435 = vadd.f32 %v5981, %v6381
        %v6436 = vadd.f32 %v5982, %v6384
        %v6437 = vadd.f32 %v5983, %v6389
        %v6438 = vadd.f32 %v5984, %v6392
        %v6439 = vadd.f32 %v5985, %v6397
        %v6440 = vadd.f32 %v5986, %v6400
        %v6441 = vadd.f32 %v5987, %v6405
        %v6442 = vadd.f32 %v5988, %v6408
        %v6443 = vld [vmem:[#allocation3 + $0x10] sm:$0xff]
        %v6444 = vld [vmem:[#allocation3 + $0x18] sm:$0xff]
        %v6445 = vld [vmem:[#allocation3 + $0x20] sm:$0xff]
        %v6446 = vld [vmem:[#allocation3 + $0x28] sm:$0xff]
        %v6447 = vld [vmem:[#allocation3 + $0x30] sm:$0xff]
        %v6448 = vld [vmem:[#allocation3 + $0x38] sm:$0xff]
        %v6449 = vld [vmem:[#allocation3 + $0x40] sm:$0xff]
        %v6450 = vld [vmem:[#allocation3 + $0x48] sm:$0xff]
        %v6451 = vld [vmem:[#allocation3 + $0x50] sm:$0xff]
        %v6452 = vld [vmem:[#allocation3 + $0x58] sm:$0xff]
        %v6453 = vld [vmem:[#allocation3 + $0x60] sm:$0xff]
        %v6454 = vld [vmem:[#allocation3 + $0x68] sm:$0xff]
        %v6455 = vld [vmem:[#allocation3 + $0x70] sm:$0xff]
        %v6456 = vld [vmem:[#allocation3 + $0x78] sm:$0xff]
        %v6457 = vld [vmem:[#allocation3 + $0x80] sm:$0xff]
        %v6458 = vld [vmem:[#allocation3 + $0x88] sm:$0xff]
        %v6459 = vld [vmem:[#allocation3 + $0x90] sm:$0xff]
        %v6460 = vld [vmem:[#allocation3 + $0x98] sm:$0xff]
        %v6461 = vld [vmem:[#allocation3 + $0xa0] sm:$0xff]
        %v6462 = vld [vmem:[#allocation3 + $0xa8] sm:$0xff]
        %v6463 = vld [vmem:[#allocation3 + $0xb0] sm:$0xff]
        %v6464 = vld [vmem:[#allocation3 + $0xb8] sm:$0xff]
        %v6465 = vld [vmem:[#allocation3 + $0xc0] sm:$0xff]
        %v6466 = vld [vmem:[#allocation3 + $0xc8] sm:$0xff]
        %v6467 = vld [vmem:[#allocation3 + $0xd0] sm:$0xff]
        %v6468 = vld [vmem:[#allocation3 + $0xd8] sm:$0xff]
        %v6469 = vld [vmem:[#allocation3 + $0xe0] sm:$0xff]
        %v6470 = vld [vmem:[#allocation3 + $0xe8] sm:$0xff]
        %v6471 = vld [vmem:[#allocation3 + $0xf0] sm:$0xff]
        %v6472 = vld [vmem:[#allocation3 + $0xf8] sm:$0xff]
        %v6473 = vld [vmem:[#allocation3 + $0x100] sm:$0xff]
        %v6474 = vld [vmem:[#allocation3 + $0x108] sm:$0xff]
        %6475 = vset.pattern.permute.xlu0 4
        %6476 = vperm.xlu0 %6475, %v4660
        %v6477 = vpop.permute.xlu0 %6476
        %6479 = vset.pattern.permute.xlu0 4
        %6480 = vperm.xlu0 %6479, %v4661
        %v6481 = vpop.permute.xlu0 %6480
        %6483 = vset.pattern.permute.xlu0 4
        %6484 = vperm.xlu0 %6483, %v4662
        %v6485 = vpop.permute.xlu0 %6484
        %6487 = vset.pattern.permute.xlu0 4
        %6488 = vperm.xlu0 %6487, %v4663
        %v6489 = vpop.permute.xlu0 %6488
        %6491 = vset.pattern.permute.xlu0 4
        %6492 = vperm.xlu0 %6491, %v4664
        %v6493 = vpop.permute.xlu0 %6492
        %6495 = vset.pattern.permute.xlu0 4
        %6496 = vperm.xlu0 %6495, %v4665
        %v6497 = vpop.permute.xlu0 %6496
        %6499 = vset.pattern.permute.xlu0 4
        %6500 = vperm.xlu0 %6499, %v4666
        %v6501 = vpop.permute.xlu0 %6500
        %6503 = vset.pattern.permute.xlu0 4
        %6504 = vperm.xlu0 %6503, %v4667
        %v6505 = vpop.permute.xlu0 %6504
        %6507 = vset.pattern.permute.xlu0 4
        %6508 = vperm.xlu0 %6507, %v4668
        %v6509 = vpop.permute.xlu0 %6508
        %6511 = vset.pattern.permute.xlu0 4
        %6512 = vperm.xlu0 %6511, %v4669
        %v6513 = vpop.permute.xlu0 %6512
        %6515 = vset.pattern.permute.xlu0 4
        %6516 = vperm.xlu0 %6515, %v4670
        %v6517 = vpop.permute.xlu0 %6516
        %6519 = vset.pattern.permute.xlu0 4
        %6520 = vperm.xlu0 %6519, %v4671
        %v6521 = vpop.permute.xlu0 %6520
        %6523 = vset.pattern.permute.xlu0 4
        %6524 = vperm.xlu0 %6523, %v4672
        %v6525 = vpop.permute.xlu0 %6524
        %6527 = vset.pattern.permute.xlu0 4
        %6528 = vperm.xlu0 %6527, %v4673
        %v6529 = vpop.permute.xlu0 %6528
        %6531 = vset.pattern.permute.xlu0 4
        %6532 = vperm.xlu0 %6531, %v4674
        %v6533 = vpop.permute.xlu0 %6532
        %6535 = vset.pattern.permute.xlu0 4
        %6536 = vperm.xlu0 %6535, %v4675
        %v6537 = vpop.permute.xlu0 %6536
        %6539 = vset.pattern.permute.xlu0 4
        %6540 = vperm.xlu0 %6539, %v4676
        %v6541 = vpop.permute.xlu0 %6540
        %6543 = vset.pattern.permute.xlu0 4
        %6544 = vperm.xlu0 %6543, %v4677
        %v6545 = vpop.permute.xlu0 %6544
        %6547 = vset.pattern.permute.xlu0 4
        %6548 = vperm.xlu0 %6547, %v4678
        %v6549 = vpop.permute.xlu0 %6548
        %6551 = vset.pattern.permute.xlu0 4
        %6552 = vperm.xlu0 %6551, %v4679
        %v6553 = vpop.permute.xlu0 %6552
        %6555 = vset.pattern.permute.xlu0 4
        %6556 = vperm.xlu0 %6555, %v4680
        %v6557 = vpop.permute.xlu0 %6556
        %6559 = vset.pattern.permute.xlu0 4
        %6560 = vperm.xlu0 %6559, %v4681
        %v6561 = vpop.permute.xlu0 %6560
        %6563 = vset.pattern.permute.xlu0 4
        %6564 = vperm.xlu0 %6563, %v4682
        %v6565 = vpop.permute.xlu0 %6564
        %6567 = vset.pattern.permute.xlu0 4
        %6568 = vperm.xlu0 %6567, %v4683
        %v6569 = vpop.permute.xlu0 %6568
        %6571 = vset.pattern.permute.xlu0 4
        %6572 = vperm.xlu0 %6571, %v4684
        %v6573 = vpop.permute.xlu0 %6572
        %6575 = vset.pattern.permute.xlu0 4
        %6576 = vperm.xlu0 %6575, %v4685
        %v6577 = vpop.permute.xlu0 %6576
        %6579 = vset.pattern.permute.xlu0 4
        %6580 = vperm.xlu0 %6579, %v4686
        %v6581 = vpop.permute.xlu0 %6580
        %6583 = vset.pattern.permute.xlu0 4
        %6584 = vperm.xlu0 %6583, %v4687
        %v6585 = vpop.permute.xlu0 %6584
        %6587 = vset.pattern.permute.xlu0 4
        %6588 = vperm.xlu0 %6587, %v4688
        %v6589 = vpop.permute.xlu0 %6588
        %6591 = vset.pattern.permute.xlu0 4
        %6592 = vperm.xlu0 %6591, %v4689
        %v6593 = vpop.permute.xlu0 %6592
        %6595 = vset.pattern.permute.xlu0 4
        %6596 = vperm.xlu0 %6595, %v4690
        %v6597 = vpop.permute.xlu0 %6596
        %6599 = vset.pattern.permute.xlu0 4
        %6600 = vperm.xlu0 %6599, %v4691
        %v6601 = vpop.permute.xlu0 %6600
        %v6603 = vmul.f32 %v6443, %v6477
        %v6604 = vmul.f32 %v6444, %v6481
        %v6605 = vmul.f32 %v6445, %v6485
        %v6606 = vmul.f32 %v6446, %v6489
        %v6607 = vmul.f32 %v6447, %v6493
        %v6608 = vmul.f32 %v6448, %v6497
        %v6609 = vmul.f32 %v6449, %v6501
        %v6610 = vmul.f32 %v6450, %v6505
        %v6611 = vmul.f32 %v6451, %v6509
        %v6612 = vmul.f32 %v6452, %v6513
        %v6613 = vmul.f32 %v6453, %v6517
        %v6614 = vmul.f32 %v6454, %v6521
        %v6615 = vmul.f32 %v6455, %v6525
        %v6616 = vmul.f32 %v6456, %v6529
        %v6617 = vmul.f32 %v6457, %v6533
        %v6618 = vmul.f32 %v6458, %v6537
        %v6619 = vmul.f32 %v6459, %v6541
        %v6620 = vmul.f32 %v6460, %v6545
        %v6621 = vmul.f32 %v6461, %v6549
        %v6622 = vmul.f32 %v6462, %v6553
        %v6623 = vmul.f32 %v6463, %v6557
        %v6624 = vmul.f32 %v6464, %v6561
        %v6625 = vmul.f32 %v6465, %v6565
        %v6626 = vmul.f32 %v6466, %v6569
        %v6627 = vmul.f32 %v6467, %v6573
        %v6628 = vmul.f32 %v6468, %v6577
        %v6629 = vmul.f32 %v6469, %v6581
        %v6630 = vmul.f32 %v6470, %v6585
        %v6631 = vmul.f32 %v6471, %v6589
        %v6632 = vmul.f32 %v6472, %v6593
        %v6633 = vmul.f32 %v6473, %v6597
        %v6634 = vmul.f32 %v6474, %v6601
        %v6635 = vpack.c.bf16 %v6604, %v6603
        %v6636 = vpack.c.bf16 %v6606, %v6605
        %v6637 = vpack.c.bf16 %v6608, %v6607
        %v6638 = vpack.c.bf16 %v6610, %v6609
        %v6639 = vpack.c.bf16 %v6612, %v6611
        %v6640 = vpack.c.bf16 %v6614, %v6613
        %v6641 = vpack.c.bf16 %v6616, %v6615
        %v6642 = vpack.c.bf16 %v6618, %v6617
        %v6643 = vpack.c.bf16 %v6620, %v6619
        %v6644 = vpack.c.bf16 %v6622, %v6621
        %v6645 = vpack.c.bf16 %v6624, %v6623
        %v6646 = vpack.c.bf16 %v6626, %v6625
        %v6647 = vpack.c.bf16 %v6628, %v6627
        %v6648 = vpack.c.bf16 %v6630, %v6629
        %v6649 = vpack.c.bf16 %v6632, %v6631
        %v6650 = vpack.c.bf16 %v6634, %v6633
        %s6651 = scalar_lea.vmem %s2, 16
        %v6652 = vld [vmem:[%s6651] sm:$0xf]
        %v6654 = vsel %vm371, %v6635, 0
        %v6657 = vsel %vm371, %v6636, 0
        %v6660 = vsel %vm371, %v6637, 0
        %v6663 = vsel %vm371, %v6638, 0
        %v6666 = vsel %vm371, %v6639, 0
        %v6669 = vsel %vm371, %v6640, 0
        %v6672 = vsel %vm371, %v6641, 0
        %v6675 = vsel %vm371, %v6642, 0
        %v6678 = vsel %vm371, %v6643, 0
        %v6681 = vsel %vm371, %v6644, 0
        %v6684 = vsel %vm371, %v6645, 0
        %v6687 = vsel %vm371, %v6646, 0
        %v6690 = vsel %vm371, %v6647, 0
        %v6693 = vsel %vm371, %v6648, 0
        %v6696 = vsel %vm371, %v6649, 0
        %v6699 = vsel %vm371, %v6650, 0
        %v6702 = vsel %vm935, %v6652, 0
        %6704 = vmatprep.subr.bf16.mxu0 0
        %6705 = vmatpush1.bf16.msra.mxu0 0
        %6706 = vmatprep.subr.bf16.mxu0 0
        %6707 = vmatpush1.bf16.msra.mxu0 0
        %6708 = vmatprep.subr.bf16.mxu0 0
        %6709 = vmatpush1.bf16.msra.mxu0 0
        %6710 = vmatprep.subr.bf16.mxu0 0
        %6711 = vmatpush1.bf16.msra.mxu0 0
        %6712 = vmatprep.subr.bf16.mxu0 0
        %6713 = vmatpush1.bf16.msra.mxu0 0
        %6714 = vmatprep.subr.bf16.mxu0 0
        %6715 = vmatpush1.bf16.msra.mxu0 0
        %6716 = vmatprep.subr.bf16.mxu0 0
        %6717 = vmatpush1.bf16.msra.mxu0 0
        %6718 = vmatprep.subr.bf16.mxu0 0
        %6719 = vmatpush1.bf16.msra.mxu0 %v6702
        %6720 = vmatprep.subr.bf16.mxu0 0
        %6721 = vmatpush2.bf16.msra.mxu0 0
        %6722 = vmatprep.subr.bf16.mxu0 0
        %6723 = vmatpush2.bf16.msra.mxu0 0
        %6724 = vmatprep.subr.bf16.mxu0 0
        %6725 = vmatpush2.bf16.msra.mxu0 0
        %6726 = vmatprep.subr.bf16.mxu0 0
        %6727 = vmatpush2.bf16.msra.mxu0 0
        %6728 = vmatprep.subr.bf16.mxu0 0
        %6729 = vmatpush2.bf16.msra.mxu0 0
        %6730 = vmatprep.subr.bf16.mxu0 0
        %6731 = vmatpush2.bf16.msra.mxu0 0
        %6732 = vmatprep.subr.bf16.mxu0 0
        %6733 = vmatpush2.bf16.msra.mxu0 0
        %6734 = vmatprep.subr.bf16.mxu0 0
        %6735 = vmatpush2.bf16.msra.mxu0 0
        %6736 = vmatprep.mubr.bf16.mxu0 0
        %6737 = vmatmul.mubr.bf16.gmra.mxu0 %v6654
        %v6738 = vpop.f32.mrf.mxu0
        %v6739 = vadd.f32 0.0, %v6738
        %v6740 = vpop.f32.mrf.mxu0
        %v6741 = vpop.f32.mrf.mxu0
        %v6742 = vadd.f32 0.0, %v6741
        %v6743 = vpop.f32.mrf.mxu0
        %6744 = vmatprep.mubr.bf16.mxu0 0
        %6745 = vmatmul.mubr.bf16.gmra.mxu0 %v6657
        %v6746 = vpop.f32.mrf.mxu0
        %v6747 = vadd.f32 0.0, %v6746
        %v6748 = vpop.f32.mrf.mxu0
        %v6749 = vpop.f32.mrf.mxu0
        %v6750 = vadd.f32 0.0, %v6749
        %v6751 = vpop.f32.mrf.mxu0
        %6752 = vmatprep.mubr.bf16.mxu0 0
        %6753 = vmatmul.mubr.bf16.gmra.mxu0 %v6660
        %v6754 = vpop.f32.mrf.mxu0
        %v6755 = vadd.f32 0.0, %v6754
        %v6756 = vpop.f32.mrf.mxu0
        %v6757 = vpop.f32.mrf.mxu0
        %v6758 = vadd.f32 0.0, %v6757
        %v6759 = vpop.f32.mrf.mxu0
        %6760 = vmatprep.mubr.bf16.mxu0 0
        %6761 = vmatmul.mubr.bf16.gmra.mxu0 %v6663
        %v6762 = vpop.f32.mrf.mxu0
        %v6763 = vadd.f32 0.0, %v6762
        %v6764 = vpop.f32.mrf.mxu0
        %v6765 = vpop.f32.mrf.mxu0
        %v6766 = vadd.f32 0.0, %v6765
        %v6767 = vpop.f32.mrf.mxu0
        %6768 = vmatprep.mubr.bf16.mxu0 0
        %6769 = vmatmul.mubr.bf16.gmra.mxu0 %v6666
        %v6770 = vpop.f32.mrf.mxu0
        %v6771 = vadd.f32 0.0, %v6770
        %v6772 = vpop.f32.mrf.mxu0
        %v6773 = vpop.f32.mrf.mxu0
        %v6774 = vadd.f32 0.0, %v6773
        %v6775 = vpop.f32.mrf.mxu0
        %6776 = vmatprep.mubr.bf16.mxu0 0
        %6777 = vmatmul.mubr.bf16.gmra.mxu0 %v6669
        %v6778 = vpop.f32.mrf.mxu0
        %v6779 = vadd.f32 0.0, %v6778
        %v6780 = vpop.f32.mrf.mxu0
        %v6781 = vpop.f32.mrf.mxu0
        %v6782 = vadd.f32 0.0, %v6781
        %v6783 = vpop.f32.mrf.mxu0
        %6784 = vmatprep.mubr.bf16.mxu0 0
        %6785 = vmatmul.mubr.bf16.gmra.mxu0 %v6672
        %v6786 = vpop.f32.mrf.mxu0
        %v6787 = vadd.f32 0.0, %v6786
        %v6788 = vpop.f32.mrf.mxu0
        %v6789 = vpop.f32.mrf.mxu0
        %v6790 = vadd.f32 0.0, %v6789
        %v6791 = vpop.f32.mrf.mxu0
        %6792 = vmatprep.mubr.bf16.mxu0 0
        %6793 = vmatmul.mubr.bf16.gmra.mxu0 %v6675
        %v6794 = vpop.f32.mrf.mxu0
        %v6795 = vadd.f32 0.0, %v6794
        %v6796 = vpop.f32.mrf.mxu0
        %v6797 = vpop.f32.mrf.mxu0
        %v6798 = vadd.f32 0.0, %v6797
        %v6799 = vpop.f32.mrf.mxu0
        %6800 = vmatprep.mubr.bf16.mxu0 0
        %6801 = vmatmul.mubr.bf16.gmra.mxu0 %v6678
        %v6802 = vpop.f32.mrf.mxu0
        %v6803 = vadd.f32 0.0, %v6802
        %v6804 = vpop.f32.mrf.mxu0
        %v6805 = vpop.f32.mrf.mxu0
        %v6806 = vadd.f32 0.0, %v6805
        %v6807 = vpop.f32.mrf.mxu0
        %6808 = vmatprep.mubr.bf16.mxu0 0
        %6809 = vmatmul.mubr.bf16.gmra.mxu0 %v6681
        %v6810 = vpop.f32.mrf.mxu0
        %v6811 = vadd.f32 0.0, %v6810
        %v6812 = vpop.f32.mrf.mxu0
        %v6813 = vpop.f32.mrf.mxu0
        %v6814 = vadd.f32 0.0, %v6813
        %v6815 = vpop.f32.mrf.mxu0
        %6816 = vmatprep.mubr.bf16.mxu0 0
        %6817 = vmatmul.mubr.bf16.gmra.mxu0 %v6684
        %v6818 = vpop.f32.mrf.mxu0
        %v6819 = vadd.f32 0.0, %v6818
        %v6820 = vpop.f32.mrf.mxu0
        %v6821 = vpop.f32.mrf.mxu0
        %v6822 = vadd.f32 0.0, %v6821
        %v6823 = vpop.f32.mrf.mxu0
        %6824 = vmatprep.mubr.bf16.mxu0 0
        %6825 = vmatmul.mubr.bf16.gmra.mxu0 %v6687
        %v6826 = vpop.f32.mrf.mxu0
        %v6827 = vadd.f32 0.0, %v6826
        %v6828 = vpop.f32.mrf.mxu0
        %v6829 = vpop.f32.mrf.mxu0
        %v6830 = vadd.f32 0.0, %v6829
        %v6831 = vpop.f32.mrf.mxu0
        %6832 = vmatprep.mubr.bf16.mxu0 0
        %6833 = vmatmul.mubr.bf16.gmra.mxu0 %v6690
        %v6834 = vpop.f32.mrf.mxu0
        %v6835 = vadd.f32 0.0, %v6834
        %v6836 = vpop.f32.mrf.mxu0
        %v6837 = vpop.f32.mrf.mxu0
        %v6838 = vadd.f32 0.0, %v6837
        %v6839 = vpop.f32.mrf.mxu0
        %6840 = vmatprep.mubr.bf16.mxu0 0
        %6841 = vmatmul.mubr.bf16.gmra.mxu0 %v6693
        %v6842 = vpop.f32.mrf.mxu0
        %v6843 = vadd.f32 0.0, %v6842
        %v6844 = vpop.f32.mrf.mxu0
        %v6845 = vpop.f32.mrf.mxu0
        %v6846 = vadd.f32 0.0, %v6845
        %v6847 = vpop.f32.mrf.mxu0
        %6848 = vmatprep.mubr.bf16.mxu0 0
        %6849 = vmatmul.mubr.bf16.gmra.mxu0 %v6696
        %v6850 = vpop.f32.mrf.mxu0
        %v6851 = vadd.f32 0.0, %v6850
        %v6852 = vpop.f32.mrf.mxu0
        %v6853 = vpop.f32.mrf.mxu0
        %v6854 = vadd.f32 0.0, %v6853
        %v6855 = vpop.f32.mrf.mxu0
        %6856 = vmatprep.mubr.bf16.mxu0 0
        %6857 = vmatmul.mubr.bf16.gmra.mxu0 %v6699
        %v6858 = vpop.f32.mrf.mxu0
        %v6859 = vadd.f32 0.0, %v6858
        %v6860 = vpop.f32.mrf.mxu0
        %v6861 = vpop.f32.mrf.mxu0
        %v6862 = vadd.f32 0.0, %v6861
        %v6863 = vpop.f32.mrf.mxu0
        %6864 = vdwg.mxu0
        %v6865 = vadd.f32 %v6411, %v6739
        %v6866 = vadd.f32 %v6412, %v6742
        %v6867 = vadd.f32 %v6413, %v6747
        %v6868 = vadd.f32 %v6414, %v6750
        %v6869 = vadd.f32 %v6415, %v6755
        %v6870 = vadd.f32 %v6416, %v6758
        %v6871 = vadd.f32 %v6417, %v6763
        %v6872 = vadd.f32 %v6418, %v6766
        %v6873 = vadd.f32 %v6419, %v6771
        %v6874 = vadd.f32 %v6420, %v6774
        %v6875 = vadd.f32 %v6421, %v6779
        %v6876 = vadd.f32 %v6422, %v6782
        %v6877 = vadd.f32 %v6423, %v6787
        %v6878 = vadd.f32 %v6424, %v6790
        %v6879 = vadd.f32 %v6425, %v6795
        %v6880 = vadd.f32 %v6426, %v6798
        %v6881 = vadd.f32 %v6427, %v6803
        %v6882 = vadd.f32 %v6428, %v6806
        %v6883 = vadd.f32 %v6429, %v6811
        %v6884 = vadd.f32 %v6430, %v6814
        %v6885 = vadd.f32 %v6431, %v6819
        %v6886 = vadd.f32 %v6432, %v6822
        %v6887 = vadd.f32 %v6433, %v6827
        %v6888 = vadd.f32 %v6434, %v6830
        %v6889 = vadd.f32 %v6435, %v6835
        %v6890 = vadd.f32 %v6436, %v6838
        %v6891 = vadd.f32 %v6437, %v6843
        %v6892 = vadd.f32 %v6438, %v6846
        %v6893 = vadd.f32 %v6439, %v6851
        %v6894 = vadd.f32 %v6440, %v6854
        %v6895 = vadd.f32 %v6441, %v6859
        %v6896 = vadd.f32 %v6442, %v6862
        %v6897 = vld [vmem:[#allocation3 + $0x11] sm:$0xff]
        %v6898 = vld [vmem:[#allocation3 + $0x19] sm:$0xff]
        %v6899 = vld [vmem:[#allocation3 + $0x21] sm:$0xff]
        %v6900 = vld [vmem:[#allocation3 + $0x29] sm:$0xff]
        %v6901 = vld [vmem:[#allocation3 + $0x31] sm:$0xff]
        %v6902 = vld [vmem:[#allocation3 + $0x39] sm:$0xff]
        %v6903 = vld [vmem:[#allocation3 + $0x41] sm:$0xff]
        %v6904 = vld [vmem:[#allocation3 + $0x49] sm:$0xff]
        %v6905 = vld [vmem:[#allocation3 + $0x51] sm:$0xff]
        %v6906 = vld [vmem:[#allocation3 + $0x59] sm:$0xff]
        %v6907 = vld [vmem:[#allocation3 + $0x61] sm:$0xff]
        %v6908 = vld [vmem:[#allocation3 + $0x69] sm:$0xff]
        %v6909 = vld [vmem:[#allocation3 + $0x71] sm:$0xff]
        %v6910 = vld [vmem:[#allocation3 + $0x79] sm:$0xff]
        %v6911 = vld [vmem:[#allocation3 + $0x81] sm:$0xff]
        %v6912 = vld [vmem:[#allocation3 + $0x89] sm:$0xff]
        %v6913 = vld [vmem:[#allocation3 + $0x91] sm:$0xff]
        %v6914 = vld [vmem:[#allocation3 + $0x99] sm:$0xff]
        %v6915 = vld [vmem:[#allocation3 + $0xa1] sm:$0xff]
        %v6916 = vld [vmem:[#allocation3 + $0xa9] sm:$0xff]
        %v6917 = vld [vmem:[#allocation3 + $0xb1] sm:$0xff]
        %v6918 = vld [vmem:[#allocation3 + $0xb9] sm:$0xff]
        %v6919 = vld [vmem:[#allocation3 + $0xc1] sm:$0xff]
        %v6920 = vld [vmem:[#allocation3 + $0xc9] sm:$0xff]
        %v6921 = vld [vmem:[#allocation3 + $0xd1] sm:$0xff]
        %v6922 = vld [vmem:[#allocation3 + $0xd9] sm:$0xff]
        %v6923 = vld [vmem:[#allocation3 + $0xe1] sm:$0xff]
        %v6924 = vld [vmem:[#allocation3 + $0xe9] sm:$0xff]
        %v6925 = vld [vmem:[#allocation3 + $0xf1] sm:$0xff]
        %v6926 = vld [vmem:[#allocation3 + $0xf9] sm:$0xff]
        %v6927 = vld [vmem:[#allocation3 + $0x101] sm:$0xff]
        %v6928 = vld [vmem:[#allocation3 + $0x109] sm:$0xff]
        %6929 = vset.pattern.permute.xlu0 5
        %6930 = vperm.xlu0 %6929, %v4660
        %v6931 = vpop.permute.xlu0 %6930
        %6933 = vset.pattern.permute.xlu0 5
        %6934 = vperm.xlu0 %6933, %v4661
        %v6935 = vpop.permute.xlu0 %6934
        %6937 = vset.pattern.permute.xlu0 5
        %6938 = vperm.xlu0 %6937, %v4662
        %v6939 = vpop.permute.xlu0 %6938
        %6941 = vset.pattern.permute.xlu0 5
        %6942 = vperm.xlu0 %6941, %v4663
        %v6943 = vpop.permute.xlu0 %6942
        %6945 = vset.pattern.permute.xlu0 5
        %6946 = vperm.xlu0 %6945, %v4664
        %v6947 = vpop.permute.xlu0 %6946
        %6949 = vset.pattern.permute.xlu0 5
        %6950 = vperm.xlu0 %6949, %v4665
        %v6951 = vpop.permute.xlu0 %6950
        %6953 = vset.pattern.permute.xlu0 5
        %6954 = vperm.xlu0 %6953, %v4666
        %v6955 = vpop.permute.xlu0 %6954
        %6957 = vset.pattern.permute.xlu0 5
        %6958 = vperm.xlu0 %6957, %v4667
        %v6959 = vpop.permute.xlu0 %6958
        %6961 = vset.pattern.permute.xlu0 5
        %6962 = vperm.xlu0 %6961, %v4668
        %v6963 = vpop.permute.xlu0 %6962
        %6965 = vset.pattern.permute.xlu0 5
        %6966 = vperm.xlu0 %6965, %v4669
        %v6967 = vpop.permute.xlu0 %6966
        %6969 = vset.pattern.permute.xlu0 5
        %6970 = vperm.xlu0 %6969, %v4670
        %v6971 = vpop.permute.xlu0 %6970
        %6973 = vset.pattern.permute.xlu0 5
        %6974 = vperm.xlu0 %6973, %v4671
        %v6975 = vpop.permute.xlu0 %6974
        %6977 = vset.pattern.permute.xlu0 5
        %6978 = vperm.xlu0 %6977, %v4672
        %v6979 = vpop.permute.xlu0 %6978
        %6981 = vset.pattern.permute.xlu0 5
        %6982 = vperm.xlu0 %6981, %v4673
        %v6983 = vpop.permute.xlu0 %6982
        %6985 = vset.pattern.permute.xlu0 5
        %6986 = vperm.xlu0 %6985, %v4674
        %v6987 = vpop.permute.xlu0 %6986
        %6989 = vset.pattern.permute.xlu0 5
        %6990 = vperm.xlu0 %6989, %v4675
        %v6991 = vpop.permute.xlu0 %6990
        %6993 = vset.pattern.permute.xlu0 5
        %6994 = vperm.xlu0 %6993, %v4676
        %v6995 = vpop.permute.xlu0 %6994
        %6997 = vset.pattern.permute.xlu0 5
        %6998 = vperm.xlu0 %6997, %v4677
        %v6999 = vpop.permute.xlu0 %6998
        %7001 = vset.pattern.permute.xlu0 5
        %7002 = vperm.xlu0 %7001, %v4678
        %v7003 = vpop.permute.xlu0 %7002
        %7005 = vset.pattern.permute.xlu0 5
        %7006 = vperm.xlu0 %7005, %v4679
        %v7007 = vpop.permute.xlu0 %7006
        %7009 = vset.pattern.permute.xlu0 5
        %7010 = vperm.xlu0 %7009, %v4680
        %v7011 = vpop.permute.xlu0 %7010
        %7013 = vset.pattern.permute.xlu0 5
        %7014 = vperm.xlu0 %7013, %v4681
        %v7015 = vpop.permute.xlu0 %7014
        %7017 = vset.pattern.permute.xlu0 5
        %7018 = vperm.xlu0 %7017, %v4682
        %v7019 = vpop.permute.xlu0 %7018
        %7021 = vset.pattern.permute.xlu0 5
        %7022 = vperm.xlu0 %7021, %v4683
        %v7023 = vpop.permute.xlu0 %7022
        %7025 = vset.pattern.permute.xlu0 5
        %7026 = vperm.xlu0 %7025, %v4684
        %v7027 = vpop.permute.xlu0 %7026
        %7029 = vset.pattern.permute.xlu0 5
        %7030 = vperm.xlu0 %7029, %v4685
        %v7031 = vpop.permute.xlu0 %7030
        %7033 = vset.pattern.permute.xlu0 5
        %7034 = vperm.xlu0 %7033, %v4686
        %v7035 = vpop.permute.xlu0 %7034
        %7037 = vset.pattern.permute.xlu0 5
        %7038 = vperm.xlu0 %7037, %v4687
        %v7039 = vpop.permute.xlu0 %7038
        %7041 = vset.pattern.permute.xlu0 5
        %7042 = vperm.xlu0 %7041, %v4688
        %v7043 = vpop.permute.xlu0 %7042
        %7045 = vset.pattern.permute.xlu0 5
        %7046 = vperm.xlu0 %7045, %v4689
        %v7047 = vpop.permute.xlu0 %7046
        %7049 = vset.pattern.permute.xlu0 5
        %7050 = vperm.xlu0 %7049, %v4690
        %v7051 = vpop.permute.xlu0 %7050
        %7053 = vset.pattern.permute.xlu0 5
        %7054 = vperm.xlu0 %7053, %v4691
        %v7055 = vpop.permute.xlu0 %7054
        %v7057 = vmul.f32 %v6897, %v6931
        %v7058 = vmul.f32 %v6898, %v6935
        %v7059 = vmul.f32 %v6899, %v6939
        %v7060 = vmul.f32 %v6900, %v6943
        %v7061 = vmul.f32 %v6901, %v6947
        %v7062 = vmul.f32 %v6902, %v6951
        %v7063 = vmul.f32 %v6903, %v6955
        %v7064 = vmul.f32 %v6904, %v6959
        %v7065 = vmul.f32 %v6905, %v6963
        %v7066 = vmul.f32 %v6906, %v6967
        %v7067 = vmul.f32 %v6907, %v6971
        %v7068 = vmul.f32 %v6908, %v6975
        %v7069 = vmul.f32 %v6909, %v6979
        %v7070 = vmul.f32 %v6910, %v6983
        %v7071 = vmul.f32 %v6911, %v6987
        %v7072 = vmul.f32 %v6912, %v6991
        %v7073 = vmul.f32 %v6913, %v6995
        %v7074 = vmul.f32 %v6914, %v6999
        %v7075 = vmul.f32 %v6915, %v7003
        %v7076 = vmul.f32 %v6916, %v7007
        %v7077 = vmul.f32 %v6917, %v7011
        %v7078 = vmul.f32 %v6918, %v7015
        %v7079 = vmul.f32 %v6919, %v7019
        %v7080 = vmul.f32 %v6920, %v7023
        %v7081 = vmul.f32 %v6921, %v7027
        %v7082 = vmul.f32 %v6922, %v7031
        %v7083 = vmul.f32 %v6923, %v7035
        %v7084 = vmul.f32 %v6924, %v7039
        %v7085 = vmul.f32 %v6925, %v7043
        %v7086 = vmul.f32 %v6926, %v7047
        %v7087 = vmul.f32 %v6927, %v7051
        %v7088 = vmul.f32 %v6928, %v7055
        %v7089 = vpack.c.bf16 %v7058, %v7057
        %v7090 = vpack.c.bf16 %v7060, %v7059
        %v7091 = vpack.c.bf16 %v7062, %v7061
        %v7092 = vpack.c.bf16 %v7064, %v7063
        %v7093 = vpack.c.bf16 %v7066, %v7065
        %v7094 = vpack.c.bf16 %v7068, %v7067
        %v7095 = vpack.c.bf16 %v7070, %v7069
        %v7096 = vpack.c.bf16 %v7072, %v7071
        %v7097 = vpack.c.bf16 %v7074, %v7073
        %v7098 = vpack.c.bf16 %v7076, %v7075
        %v7099 = vpack.c.bf16 %v7078, %v7077
        %v7100 = vpack.c.bf16 %v7080, %v7079
        %v7101 = vpack.c.bf16 %v7082, %v7081
        %v7102 = vpack.c.bf16 %v7084, %v7083
        %v7103 = vpack.c.bf16 %v7086, %v7085
        %v7104 = vpack.c.bf16 %v7088, %v7087
        %s7105 = scalar_lea.vmem %s2, 20
        %v7106 = vld [vmem:[%s7105] sm:$0xf]
        %v7108 = vsel %vm371, %v7089, 0
        %v7111 = vsel %vm371, %v7090, 0
        %v7114 = vsel %vm371, %v7091, 0
        %v7117 = vsel %vm371, %v7092, 0
        %v7120 = vsel %vm371, %v7093, 0
        %v7123 = vsel %vm371, %v7094, 0
        %v7126 = vsel %vm371, %v7095, 0
        %v7129 = vsel %vm371, %v7096, 0
        %v7132 = vsel %vm371, %v7097, 0
        %v7135 = vsel %vm371, %v7098, 0
        %v7138 = vsel %vm371, %v7099, 0
        %v7141 = vsel %vm371, %v7100, 0
        %v7144 = vsel %vm371, %v7101, 0
        %v7147 = vsel %vm371, %v7102, 0
        %v7150 = vsel %vm371, %v7103, 0
        %v7153 = vsel %vm371, %v7104, 0
        %v7156 = vsel %vm935, %v7106, 0
        %7158 = vmatprep.subr.bf16.mxu0 0
        %7159 = vmatpush1.bf16.msra.mxu0 0
        %7160 = vmatprep.subr.bf16.mxu0 0
        %7161 = vmatpush1.bf16.msra.mxu0 0
        %7162 = vmatprep.subr.bf16.mxu0 0
        %7163 = vmatpush1.bf16.msra.mxu0 0
        %7164 = vmatprep.subr.bf16.mxu0 0
        %7165 = vmatpush1.bf16.msra.mxu0 0
        %7166 = vmatprep.subr.bf16.mxu0 0
        %7167 = vmatpush1.bf16.msra.mxu0 0
        %7168 = vmatprep.subr.bf16.mxu0 0
        %7169 = vmatpush1.bf16.msra.mxu0 0
        %7170 = vmatprep.subr.bf16.mxu0 0
        %7171 = vmatpush1.bf16.msra.mxu0 0
        %7172 = vmatprep.subr.bf16.mxu0 0
        %7173 = vmatpush1.bf16.msra.mxu0 %v7156
        %7174 = vmatprep.subr.bf16.mxu0 0
        %7175 = vmatpush2.bf16.msra.mxu0 0
        %7176 = vmatprep.subr.bf16.mxu0 0
        %7177 = vmatpush2.bf16.msra.mxu0 0
        %7178 = vmatprep.subr.bf16.mxu0 0
        %7179 = vmatpush2.bf16.msra.mxu0 0
        %7180 = vmatprep.subr.bf16.mxu0 0
        %7181 = vmatpush2.bf16.msra.mxu0 0
        %7182 = vmatprep.subr.bf16.mxu0 0
        %7183 = vmatpush2.bf16.msra.mxu0 0
        %7184 = vmatprep.subr.bf16.mxu0 0
        %7185 = vmatpush2.bf16.msra.mxu0 0
        %7186 = vmatprep.subr.bf16.mxu0 0
        %7187 = vmatpush2.bf16.msra.mxu0 0
        %7188 = vmatprep.subr.bf16.mxu0 0
        %7189 = vmatpush2.bf16.msra.mxu0 0
        %7190 = vmatprep.mubr.bf16.mxu0 0
        %7191 = vmatmul.mubr.bf16.gmra.mxu0 %v7108
        %v7192 = vpop.f32.mrf.mxu0
        %v7193 = vadd.f32 0.0, %v7192
        %v7194 = vpop.f32.mrf.mxu0
        %v7195 = vpop.f32.mrf.mxu0
        %v7196 = vadd.f32 0.0, %v7195
        %v7197 = vpop.f32.mrf.mxu0
        %7198 = vmatprep.mubr.bf16.mxu0 0
        %7199 = vmatmul.mubr.bf16.gmra.mxu0 %v7111
        %v7200 = vpop.f32.mrf.mxu0
        %v7201 = vadd.f32 0.0, %v7200
        %v7202 = vpop.f32.mrf.mxu0
        %v7203 = vpop.f32.mrf.mxu0
        %v7204 = vadd.f32 0.0, %v7203
        %v7205 = vpop.f32.mrf.mxu0
        %7206 = vmatprep.mubr.bf16.mxu0 0
        %7207 = vmatmul.mubr.bf16.gmra.mxu0 %v7114
        %v7208 = vpop.f32.mrf.mxu0
        %v7209 = vadd.f32 0.0, %v7208
        %v7210 = vpop.f32.mrf.mxu0
        %v7211 = vpop.f32.mrf.mxu0
        %v7212 = vadd.f32 0.0, %v7211
        %v7213 = vpop.f32.mrf.mxu0
        %7214 = vmatprep.mubr.bf16.mxu0 0
        %7215 = vmatmul.mubr.bf16.gmra.mxu0 %v7117
        %v7216 = vpop.f32.mrf.mxu0
        %v7217 = vadd.f32 0.0, %v7216
        %v7218 = vpop.f32.mrf.mxu0
        %v7219 = vpop.f32.mrf.mxu0
        %v7220 = vadd.f32 0.0, %v7219
        %v7221 = vpop.f32.mrf.mxu0
        %7222 = vmatprep.mubr.bf16.mxu0 0
        %7223 = vmatmul.mubr.bf16.gmra.mxu0 %v7120
        %v7224 = vpop.f32.mrf.mxu0
        %v7225 = vadd.f32 0.0, %v7224
        %v7226 = vpop.f32.mrf.mxu0
        %v7227 = vpop.f32.mrf.mxu0
        %v7228 = vadd.f32 0.0, %v7227
        %v7229 = vpop.f32.mrf.mxu0
        %7230 = vmatprep.mubr.bf16.mxu0 0
        %7231 = vmatmul.mubr.bf16.gmra.mxu0 %v7123
        %v7232 = vpop.f32.mrf.mxu0
        %v7233 = vadd.f32 0.0, %v7232
        %v7234 = vpop.f32.mrf.mxu0
        %v7235 = vpop.f32.mrf.mxu0
        %v7236 = vadd.f32 0.0, %v7235
        %v7237 = vpop.f32.mrf.mxu0
        %7238 = vmatprep.mubr.bf16.mxu0 0
        %7239 = vmatmul.mubr.bf16.gmra.mxu0 %v7126
        %v7240 = vpop.f32.mrf.mxu0
        %v7241 = vadd.f32 0.0, %v7240
        %v7242 = vpop.f32.mrf.mxu0
        %v7243 = vpop.f32.mrf.mxu0
        %v7244 = vadd.f32 0.0, %v7243
        %v7245 = vpop.f32.mrf.mxu0
        %7246 = vmatprep.mubr.bf16.mxu0 0
        %7247 = vmatmul.mubr.bf16.gmra.mxu0 %v7129
        %v7248 = vpop.f32.mrf.mxu0
        %v7249 = vadd.f32 0.0, %v7248
        %v7250 = vpop.f32.mrf.mxu0
        %v7251 = vpop.f32.mrf.mxu0
        %v7252 = vadd.f32 0.0, %v7251
        %v7253 = vpop.f32.mrf.mxu0
        %7254 = vmatprep.mubr.bf16.mxu0 0
        %7255 = vmatmul.mubr.bf16.gmra.mxu0 %v7132
        %v7256 = vpop.f32.mrf.mxu0
        %v7257 = vadd.f32 0.0, %v7256
        %v7258 = vpop.f32.mrf.mxu0
        %v7259 = vpop.f32.mrf.mxu0
        %v7260 = vadd.f32 0.0, %v7259
        %v7261 = vpop.f32.mrf.mxu0
        %7262 = vmatprep.mubr.bf16.mxu0 0
        %7263 = vmatmul.mubr.bf16.gmra.mxu0 %v7135
        %v7264 = vpop.f32.mrf.mxu0
        %v7265 = vadd.f32 0.0, %v7264
        %v7266 = vpop.f32.mrf.mxu0
        %v7267 = vpop.f32.mrf.mxu0
        %v7268 = vadd.f32 0.0, %v7267
        %v7269 = vpop.f32.mrf.mxu0
        %7270 = vmatprep.mubr.bf16.mxu0 0
        %7271 = vmatmul.mubr.bf16.gmra.mxu0 %v7138
        %v7272 = vpop.f32.mrf.mxu0
        %v7273 = vadd.f32 0.0, %v7272
        %v7274 = vpop.f32.mrf.mxu0
        %v7275 = vpop.f32.mrf.mxu0
        %v7276 = vadd.f32 0.0, %v7275
        %v7277 = vpop.f32.mrf.mxu0
        %7278 = vmatprep.mubr.bf16.mxu0 0
        %7279 = vmatmul.mubr.bf16.gmra.mxu0 %v7141
        %v7280 = vpop.f32.mrf.mxu0
        %v7281 = vadd.f32 0.0, %v7280
        %v7282 = vpop.f32.mrf.mxu0
        %v7283 = vpop.f32.mrf.mxu0
        %v7284 = vadd.f32 0.0, %v7283
        %v7285 = vpop.f32.mrf.mxu0
        %7286 = vmatprep.mubr.bf16.mxu0 0
        %7287 = vmatmul.mubr.bf16.gmra.mxu0 %v7144
        %v7288 = vpop.f32.mrf.mxu0
        %v7289 = vadd.f32 0.0, %v7288
        %v7290 = vpop.f32.mrf.mxu0
        %v7291 = vpop.f32.mrf.mxu0
        %v7292 = vadd.f32 0.0, %v7291
        %v7293 = vpop.f32.mrf.mxu0
        %7294 = vmatprep.mubr.bf16.mxu0 0
        %7295 = vmatmul.mubr.bf16.gmra.mxu0 %v7147
        %v7296 = vpop.f32.mrf.mxu0
        %v7297 = vadd.f32 0.0, %v7296
        %v7298 = vpop.f32.mrf.mxu0
        %v7299 = vpop.f32.mrf.mxu0
        %v7300 = vadd.f32 0.0, %v7299
        %v7301 = vpop.f32.mrf.mxu0
        %7302 = vmatprep.mubr.bf16.mxu0 0
        %7303 = vmatmul.mubr.bf16.gmra.mxu0 %v7150
        %v7304 = vpop.f32.mrf.mxu0
        %v7305 = vadd.f32 0.0, %v7304
        %v7306 = vpop.f32.mrf.mxu0
        %v7307 = vpop.f32.mrf.mxu0
        %v7308 = vadd.f32 0.0, %v7307
        %v7309 = vpop.f32.mrf.mxu0
        %7310 = vmatprep.mubr.bf16.mxu0 0
        %7311 = vmatmul.mubr.bf16.gmra.mxu0 %v7153
        %v7312 = vpop.f32.mrf.mxu0
        %v7313 = vadd.f32 0.0, %v7312
        %v7314 = vpop.f32.mrf.mxu0
        %v7315 = vpop.f32.mrf.mxu0
        %v7316 = vadd.f32 0.0, %v7315
        %v7317 = vpop.f32.mrf.mxu0
        %7318 = vdwg.mxu0
        %v7319 = vadd.f32 %v6865, %v7193
        %v7320 = vadd.f32 %v6866, %v7196
        %v7321 = vadd.f32 %v6867, %v7201
        %v7322 = vadd.f32 %v6868, %v7204
        %v7323 = vadd.f32 %v6869, %v7209
        %v7324 = vadd.f32 %v6870, %v7212
        %v7325 = vadd.f32 %v6871, %v7217
        %v7326 = vadd.f32 %v6872, %v7220
        %v7327 = vadd.f32 %v6873, %v7225
        %v7328 = vadd.f32 %v6874, %v7228
        %v7329 = vadd.f32 %v6875, %v7233
        %v7330 = vadd.f32 %v6876, %v7236
        %v7331 = vadd.f32 %v6877, %v7241
        %v7332 = vadd.f32 %v6878, %v7244
        %v7333 = vadd.f32 %v6879, %v7249
        %v7334 = vadd.f32 %v6880, %v7252
        %v7335 = vadd.f32 %v6881, %v7257
        %v7336 = vadd.f32 %v6882, %v7260
        %v7337 = vadd.f32 %v6883, %v7265
        %v7338 = vadd.f32 %v6884, %v7268
        %v7339 = vadd.f32 %v6885, %v7273
        %v7340 = vadd.f32 %v6886, %v7276
        %v7341 = vadd.f32 %v6887, %v7281
        %v7342 = vadd.f32 %v6888, %v7284
        %v7343 = vadd.f32 %v6889, %v7289
        %v7344 = vadd.f32 %v6890, %v7292
        %v7345 = vadd.f32 %v6891, %v7297
        %v7346 = vadd.f32 %v6892, %v7300
        %v7347 = vadd.f32 %v6893, %v7305
        %v7348 = vadd.f32 %v6894, %v7308
        %v7349 = vadd.f32 %v6895, %v7313
        %v7350 = vadd.f32 %v6896, %v7316
        %v7351 = vld [vmem:[#allocation3 + $0x17] sm:$0xff]
        %v7352 = vld [vmem:[#allocation3 + $0x1f] sm:$0xff]
        %v7353 = vld [vmem:[#allocation3 + $0x27] sm:$0xff]
        %v7354 = vld [vmem:[#allocation3 + $0x2f] sm:$0xff]
        %v7355 = vld [vmem:[#allocation3 + $0x37] sm:$0xff]
        %v7356 = vld [vmem:[#allocation3 + $0x3f] sm:$0xff]
        %v7357 = vld [vmem:[#allocation3 + $0x47] sm:$0xff]
        %v7358 = vld [vmem:[#allocation3 + $0x4f] sm:$0xff]
        %v7359 = vld [vmem:[#allocation3 + $0x57] sm:$0xff]
        %v7360 = vld [vmem:[#allocation3 + $0x5f] sm:$0xff]
        %v7361 = vld [vmem:[#allocation3 + $0x67] sm:$0xff]
        %v7362 = vld [vmem:[#allocation3 + $0x6f] sm:$0xff]
        %v7363 = vld [vmem:[#allocation3 + $0x77] sm:$0xff]
        %v7364 = vld [vmem:[#allocation3 + $0x7f] sm:$0xff]
        %v7365 = vld [vmem:[#allocation3 + $0x87] sm:$0xff]
        %v7366 = vld [vmem:[#allocation3 + $0x8f] sm:$0xff]
        %v7367 = vld [vmem:[#allocation3 + $0x97] sm:$0xff]
        %v7368 = vld [vmem:[#allocation3 + $0x9f] sm:$0xff]
        %v7369 = vld [vmem:[#allocation3 + $0xa7] sm:$0xff]
        %v7370 = vld [vmem:[#allocation3 + $0xaf] sm:$0xff]
        %v7371 = vld [vmem:[#allocation3 + $0xb7] sm:$0xff]
        %v7372 = vld [vmem:[#allocation3 + $0xbf] sm:$0xff]
        %v7373 = vld [vmem:[#allocation3 + $0xc7] sm:$0xff]
        %v7374 = vld [vmem:[#allocation3 + $0xcf] sm:$0xff]
        %v7375 = vld [vmem:[#allocation3 + $0xd7] sm:$0xff]
        %v7376 = vld [vmem:[#allocation3 + $0xdf] sm:$0xff]
        %v7377 = vld [vmem:[#allocation3 + $0xe7] sm:$0xff]
        %v7378 = vld [vmem:[#allocation3 + $0xef] sm:$0xff]
        %v7379 = vld [vmem:[#allocation3 + $0xf7] sm:$0xff]
        %v7380 = vld [vmem:[#allocation3 + $0xff] sm:$0xff]
        %v7381 = vld [vmem:[#allocation3 + $0x107] sm:$0xff]
        %v7382 = vld [vmem:[#allocation3 + $0x10f] sm:$0xff]
        %7383 = vset.pattern.permute.xlu0 6
        %7384 = vperm.xlu0 %7383, %v4660
        %v7385 = vpop.permute.xlu0 %7384
        %7387 = vset.pattern.permute.xlu0 6
        %7388 = vperm.xlu0 %7387, %v4661
        %v7389 = vpop.permute.xlu0 %7388
        %7391 = vset.pattern.permute.xlu0 6
        %7392 = vperm.xlu0 %7391, %v4662
        %v7393 = vpop.permute.xlu0 %7392
        %7395 = vset.pattern.permute.xlu0 6
        %7396 = vperm.xlu0 %7395, %v4663
        %v7397 = vpop.permute.xlu0 %7396
        %7399 = vset.pattern.permute.xlu0 6
        %7400 = vperm.xlu0 %7399, %v4664
        %v7401 = vpop.permute.xlu0 %7400
        %7403 = vset.pattern.permute.xlu0 6
        %7404 = vperm.xlu0 %7403, %v4665
        %v7405 = vpop.permute.xlu0 %7404
        %7407 = vset.pattern.permute.xlu0 6
        %7408 = vperm.xlu0 %7407, %v4666
        %v7409 = vpop.permute.xlu0 %7408
        %7411 = vset.pattern.permute.xlu0 6
        %7412 = vperm.xlu0 %7411, %v4667
        %v7413 = vpop.permute.xlu0 %7412
        %7415 = vset.pattern.permute.xlu0 6
        %7416 = vperm.xlu0 %7415, %v4668
        %v7417 = vpop.permute.xlu0 %7416
        %7419 = vset.pattern.permute.xlu0 6
        %7420 = vperm.xlu0 %7419, %v4669
        %v7421 = vpop.permute.xlu0 %7420
        %7423 = vset.pattern.permute.xlu0 6
        %7424 = vperm.xlu0 %7423, %v4670
        %v7425 = vpop.permute.xlu0 %7424
        %7427 = vset.pattern.permute.xlu0 6
        %7428 = vperm.xlu0 %7427, %v4671
        %v7429 = vpop.permute.xlu0 %7428
        %7431 = vset.pattern.permute.xlu0 6
        %7432 = vperm.xlu0 %7431, %v4672
        %v7433 = vpop.permute.xlu0 %7432
        %7435 = vset.pattern.permute.xlu0 6
        %7436 = vperm.xlu0 %7435, %v4673
        %v7437 = vpop.permute.xlu0 %7436
        %7439 = vset.pattern.permute.xlu0 6
        %7440 = vperm.xlu0 %7439, %v4674
        %v7441 = vpop.permute.xlu0 %7440
        %7443 = vset.pattern.permute.xlu0 6
        %7444 = vperm.xlu0 %7443, %v4675
        %v7445 = vpop.permute.xlu0 %7444
        %7447 = vset.pattern.permute.xlu0 6
        %7448 = vperm.xlu0 %7447, %v4676
        %v7449 = vpop.permute.xlu0 %7448
        %7451 = vset.pattern.permute.xlu0 6
        %7452 = vperm.xlu0 %7451, %v4677
        %v7453 = vpop.permute.xlu0 %7452
        %7455 = vset.pattern.permute.xlu0 6
        %7456 = vperm.xlu0 %7455, %v4678
        %v7457 = vpop.permute.xlu0 %7456
        %7459 = vset.pattern.permute.xlu0 6
        %7460 = vperm.xlu0 %7459, %v4679
        %v7461 = vpop.permute.xlu0 %7460
        %7463 = vset.pattern.permute.xlu0 6
        %7464 = vperm.xlu0 %7463, %v4680
        %v7465 = vpop.permute.xlu0 %7464
        %7467 = vset.pattern.permute.xlu0 6
        %7468 = vperm.xlu0 %7467, %v4681
        %v7469 = vpop.permute.xlu0 %7468
        %7471 = vset.pattern.permute.xlu0 6
        %7472 = vperm.xlu0 %7471, %v4682
        %v7473 = vpop.permute.xlu0 %7472
        %7475 = vset.pattern.permute.xlu0 6
        %7476 = vperm.xlu0 %7475, %v4683
        %v7477 = vpop.permute.xlu0 %7476
        %7479 = vset.pattern.permute.xlu0 6
        %7480 = vperm.xlu0 %7479, %v4684
        %v7481 = vpop.permute.xlu0 %7480
        %7483 = vset.pattern.permute.xlu0 6
        %7484 = vperm.xlu0 %7483, %v4685
        %v7485 = vpop.permute.xlu0 %7484
        %7487 = vset.pattern.permute.xlu0 6
        %7488 = vperm.xlu0 %7487, %v4686
        %v7489 = vpop.permute.xlu0 %7488
        %7491 = vset.pattern.permute.xlu0 6
        %7492 = vperm.xlu0 %7491, %v4687
        %v7493 = vpop.permute.xlu0 %7492
        %7495 = vset.pattern.permute.xlu0 6
        %7496 = vperm.xlu0 %7495, %v4688
        %v7497 = vpop.permute.xlu0 %7496
        %7499 = vset.pattern.permute.xlu0 6
        %7500 = vperm.xlu0 %7499, %v4689
        %v7501 = vpop.permute.xlu0 %7500
        %7503 = vset.pattern.permute.xlu0 6
        %7504 = vperm.xlu0 %7503, %v4690
        %v7505 = vpop.permute.xlu0 %7504
        %7507 = vset.pattern.permute.xlu0 6
        %7508 = vperm.xlu0 %7507, %v4691
        %v7509 = vpop.permute.xlu0 %7508
        %v7511 = vmul.f32 %v7351, %v7385
        %v7512 = vmul.f32 %v7352, %v7389
        %v7513 = vmul.f32 %v7353, %v7393
        %v7514 = vmul.f32 %v7354, %v7397
        %v7515 = vmul.f32 %v7355, %v7401
        %v7516 = vmul.f32 %v7356, %v7405
        %v7517 = vmul.f32 %v7357, %v7409
        %v7518 = vmul.f32 %v7358, %v7413
        %v7519 = vmul.f32 %v7359, %v7417
        %v7520 = vmul.f32 %v7360, %v7421
        %v7521 = vmul.f32 %v7361, %v7425
        %v7522 = vmul.f32 %v7362, %v7429
        %v7523 = vmul.f32 %v7363, %v7433
        %v7524 = vmul.f32 %v7364, %v7437
        %v7525 = vmul.f32 %v7365, %v7441
        %v7526 = vmul.f32 %v7366, %v7445
        %v7527 = vmul.f32 %v7367, %v7449
        %v7528 = vmul.f32 %v7368, %v7453
        %v7529 = vmul.f32 %v7369, %v7457
        %v7530 = vmul.f32 %v7370, %v7461
        %v7531 = vmul.f32 %v7371, %v7465
        %v7532 = vmul.f32 %v7372, %v7469
        %v7533 = vmul.f32 %v7373, %v7473
        %v7534 = vmul.f32 %v7374, %v7477
        %v7535 = vmul.f32 %v7375, %v7481
        %v7536 = vmul.f32 %v7376, %v7485
        %v7537 = vmul.f32 %v7377, %v7489
        %v7538 = vmul.f32 %v7378, %v7493
        %v7539 = vmul.f32 %v7379, %v7497
        %v7540 = vmul.f32 %v7380, %v7501
        %v7541 = vmul.f32 %v7381, %v7505
        %v7542 = vmul.f32 %v7382, %v7509
        %v7543 = vpack.c.bf16 %v7512, %v7511
        %v7544 = vpack.c.bf16 %v7514, %v7513
        %v7545 = vpack.c.bf16 %v7516, %v7515
        %v7546 = vpack.c.bf16 %v7518, %v7517
        %v7547 = vpack.c.bf16 %v7520, %v7519
        %v7548 = vpack.c.bf16 %v7522, %v7521
        %v7549 = vpack.c.bf16 %v7524, %v7523
        %v7550 = vpack.c.bf16 %v7526, %v7525
        %v7551 = vpack.c.bf16 %v7528, %v7527
        %v7552 = vpack.c.bf16 %v7530, %v7529
        %v7553 = vpack.c.bf16 %v7532, %v7531
        %v7554 = vpack.c.bf16 %v7534, %v7533
        %v7555 = vpack.c.bf16 %v7536, %v7535
        %v7556 = vpack.c.bf16 %v7538, %v7537
        %v7557 = vpack.c.bf16 %v7540, %v7539
        %v7558 = vpack.c.bf16 %v7542, %v7541
        %s7559 = scalar_lea.vmem %s2, 24
        %v7560 = vld [vmem:[%s7559] sm:$0xf]
        %v7562 = vsel %vm371, %v7543, 0
        %v7565 = vsel %vm371, %v7544, 0
        %v7568 = vsel %vm371, %v7545, 0
        %v7571 = vsel %vm371, %v7546, 0
        %v7574 = vsel %vm371, %v7547, 0
        %v7577 = vsel %vm371, %v7548, 0
        %v7580 = vsel %vm371, %v7549, 0
        %v7583 = vsel %vm371, %v7550, 0
        %v7586 = vsel %vm371, %v7551, 0
        %v7589 = vsel %vm371, %v7552, 0
        %v7592 = vsel %vm371, %v7553, 0
        %v7595 = vsel %vm371, %v7554, 0
        %v7598 = vsel %vm371, %v7555, 0
        %v7601 = vsel %vm371, %v7556, 0
        %v7604 = vsel %vm371, %v7557, 0
        %v7607 = vsel %vm371, %v7558, 0
        %v7610 = vsel %vm935, %v7560, 0
        %7612 = vmatprep.subr.bf16.mxu0 0
        %7613 = vmatpush1.bf16.msra.mxu0 0
        %7614 = vmatprep.subr.bf16.mxu0 0
        %7615 = vmatpush1.bf16.msra.mxu0 0
        %7616 = vmatprep.subr.bf16.mxu0 0
        %7617 = vmatpush1.bf16.msra.mxu0 0
        %7618 = vmatprep.subr.bf16.mxu0 0
        %7619 = vmatpush1.bf16.msra.mxu0 0
        %7620 = vmatprep.subr.bf16.mxu0 0
        %7621 = vmatpush1.bf16.msra.mxu0 0
        %7622 = vmatprep.subr.bf16.mxu0 0
        %7623 = vmatpush1.bf16.msra.mxu0 0
        %7624 = vmatprep.subr.bf16.mxu0 0
        %7625 = vmatpush1.bf16.msra.mxu0 0
        %7626 = vmatprep.subr.bf16.mxu0 0
        %7627 = vmatpush1.bf16.msra.mxu0 %v7610
        %7628 = vmatprep.subr.bf16.mxu0 0
        %7629 = vmatpush2.bf16.msra.mxu0 0
        %7630 = vmatprep.subr.bf16.mxu0 0
        %7631 = vmatpush2.bf16.msra.mxu0 0
        %7632 = vmatprep.subr.bf16.mxu0 0
        %7633 = vmatpush2.bf16.msra.mxu0 0
        %7634 = vmatprep.subr.bf16.mxu0 0
        %7635 = vmatpush2.bf16.msra.mxu0 0
        %7636 = vmatprep.subr.bf16.mxu0 0
        %7637 = vmatpush2.bf16.msra.mxu0 0
        %7638 = vmatprep.subr.bf16.mxu0 0
        %7639 = vmatpush2.bf16.msra.mxu0 0
        %7640 = vmatprep.subr.bf16.mxu0 0
        %7641 = vmatpush2.bf16.msra.mxu0 0
        %7642 = vmatprep.subr.bf16.mxu0 0
        %7643 = vmatpush2.bf16.msra.mxu0 0
        %7644 = vmatprep.mubr.bf16.mxu0 0
        %7645 = vmatmul.mubr.bf16.gmra.mxu0 %v7562
        %v7646 = vpop.f32.mrf.mxu0
        %v7647 = vadd.f32 0.0, %v7646
        %v7648 = vpop.f32.mrf.mxu0
        %v7649 = vpop.f32.mrf.mxu0
        %v7650 = vadd.f32 0.0, %v7649
        %v7651 = vpop.f32.mrf.mxu0
        %7652 = vmatprep.mubr.bf16.mxu0 0
        %7653 = vmatmul.mubr.bf16.gmra.mxu0 %v7565
        %v7654 = vpop.f32.mrf.mxu0
        %v7655 = vadd.f32 0.0, %v7654
        %v7656 = vpop.f32.mrf.mxu0
        %v7657 = vpop.f32.mrf.mxu0
        %v7658 = vadd.f32 0.0, %v7657
        %v7659 = vpop.f32.mrf.mxu0
        %7660 = vmatprep.mubr.bf16.mxu0 0
        %7661 = vmatmul.mubr.bf16.gmra.mxu0 %v7568
        %v7662 = vpop.f32.mrf.mxu0
        %v7663 = vadd.f32 0.0, %v7662
        %v7664 = vpop.f32.mrf.mxu0
        %v7665 = vpop.f32.mrf.mxu0
        %v7666 = vadd.f32 0.0, %v7665
        %v7667 = vpop.f32.mrf.mxu0
        %7668 = vmatprep.mubr.bf16.mxu0 0
        %7669 = vmatmul.mubr.bf16.gmra.mxu0 %v7571
        %v7670 = vpop.f32.mrf.mxu0
        %v7671 = vadd.f32 0.0, %v7670
        %v7672 = vpop.f32.mrf.mxu0
        %v7673 = vpop.f32.mrf.mxu0
        %v7674 = vadd.f32 0.0, %v7673
        %v7675 = vpop.f32.mrf.mxu0
        %7676 = vmatprep.mubr.bf16.mxu0 0
        %7677 = vmatmul.mubr.bf16.gmra.mxu0 %v7574
        %v7678 = vpop.f32.mrf.mxu0
        %v7679 = vadd.f32 0.0, %v7678
        %v7680 = vpop.f32.mrf.mxu0
        %v7681 = vpop.f32.mrf.mxu0
        %v7682 = vadd.f32 0.0, %v7681
        %v7683 = vpop.f32.mrf.mxu0
        %7684 = vmatprep.mubr.bf16.mxu0 0
        %7685 = vmatmul.mubr.bf16.gmra.mxu0 %v7577
        %v7686 = vpop.f32.mrf.mxu0
        %v7687 = vadd.f32 0.0, %v7686
        %v7688 = vpop.f32.mrf.mxu0
        %v7689 = vpop.f32.mrf.mxu0
        %v7690 = vadd.f32 0.0, %v7689
        %v7691 = vpop.f32.mrf.mxu0
        %7692 = vmatprep.mubr.bf16.mxu0 0
        %7693 = vmatmul.mubr.bf16.gmra.mxu0 %v7580
        %v7694 = vpop.f32.mrf.mxu0
        %v7695 = vadd.f32 0.0, %v7694
        %v7696 = vpop.f32.mrf.mxu0
        %v7697 = vpop.f32.mrf.mxu0
        %v7698 = vadd.f32 0.0, %v7697
        %v7699 = vpop.f32.mrf.mxu0
        %7700 = vmatprep.mubr.bf16.mxu0 0
        %7701 = vmatmul.mubr.bf16.gmra.mxu0 %v7583
        %v7702 = vpop.f32.mrf.mxu0
        %v7703 = vadd.f32 0.0, %v7702
        %v7704 = vpop.f32.mrf.mxu0
        %v7705 = vpop.f32.mrf.mxu0
        %v7706 = vadd.f32 0.0, %v7705
        %v7707 = vpop.f32.mrf.mxu0
        %7708 = vmatprep.mubr.bf16.mxu0 0
        %7709 = vmatmul.mubr.bf16.gmra.mxu0 %v7586
        %v7710 = vpop.f32.mrf.mxu0
        %v7711 = vadd.f32 0.0, %v7710
        %v7712 = vpop.f32.mrf.mxu0
        %v7713 = vpop.f32.mrf.mxu0
        %v7714 = vadd.f32 0.0, %v7713
        %v7715 = vpop.f32.mrf.mxu0
        %7716 = vmatprep.mubr.bf16.mxu0 0
        %7717 = vmatmul.mubr.bf16.gmra.mxu0 %v7589
        %v7718 = vpop.f32.mrf.mxu0
        %v7719 = vadd.f32 0.0, %v7718
        %v7720 = vpop.f32.mrf.mxu0
        %v7721 = vpop.f32.mrf.mxu0
        %v7722 = vadd.f32 0.0, %v7721
        %v7723 = vpop.f32.mrf.mxu0
        %7724 = vmatprep.mubr.bf16.mxu0 0
        %7725 = vmatmul.mubr.bf16.gmra.mxu0 %v7592
        %v7726 = vpop.f32.mrf.mxu0
        %v7727 = vadd.f32 0.0, %v7726
        %v7728 = vpop.f32.mrf.mxu0
        %v7729 = vpop.f32.mrf.mxu0
        %v7730 = vadd.f32 0.0, %v7729
        %v7731 = vpop.f32.mrf.mxu0
        %7732 = vmatprep.mubr.bf16.mxu0 0
        %7733 = vmatmul.mubr.bf16.gmra.mxu0 %v7595
        %v7734 = vpop.f32.mrf.mxu0
        %v7735 = vadd.f32 0.0, %v7734
        %v7736 = vpop.f32.mrf.mxu0
        %v7737 = vpop.f32.mrf.mxu0
        %v7738 = vadd.f32 0.0, %v7737
        %v7739 = vpop.f32.mrf.mxu0
        %7740 = vmatprep.mubr.bf16.mxu0 0
        %7741 = vmatmul.mubr.bf16.gmra.mxu0 %v7598
        %v7742 = vpop.f32.mrf.mxu0
        %v7743 = vadd.f32 0.0, %v7742
        %v7744 = vpop.f32.mrf.mxu0
        %v7745 = vpop.f32.mrf.mxu0
        %v7746 = vadd.f32 0.0, %v7745
        %v7747 = vpop.f32.mrf.mxu0
        %7748 = vmatprep.mubr.bf16.mxu0 0
        %7749 = vmatmul.mubr.bf16.gmra.mxu0 %v7601
        %v7750 = vpop.f32.mrf.mxu0
        %v7751 = vadd.f32 0.0, %v7750
        %v7752 = vpop.f32.mrf.mxu0
        %v7753 = vpop.f32.mrf.mxu0
        %v7754 = vadd.f32 0.0, %v7753
        %v7755 = vpop.f32.mrf.mxu0
        %7756 = vmatprep.mubr.bf16.mxu0 0
        %7757 = vmatmul.mubr.bf16.gmra.mxu0 %v7604
        %v7758 = vpop.f32.mrf.mxu0
        %v7759 = vadd.f32 0.0, %v7758
        %v7760 = vpop.f32.mrf.mxu0
        %v7761 = vpop.f32.mrf.mxu0
        %v7762 = vadd.f32 0.0, %v7761
        %v7763 = vpop.f32.mrf.mxu0
        %7764 = vmatprep.mubr.bf16.mxu0 0
        %7765 = vmatmul.mubr.bf16.gmra.mxu0 %v7607
        %v7766 = vpop.f32.mrf.mxu0
        %v7767 = vadd.f32 0.0, %v7766
        %v7768 = vpop.f32.mrf.mxu0
        %v7769 = vpop.f32.mrf.mxu0
        %v7770 = vadd.f32 0.0, %v7769
        %v7771 = vpop.f32.mrf.mxu0
        %7772 = vdwg.mxu0
        %v7773 = vadd.f32 %v7319, %v7647
        %v7774 = vadd.f32 %v7320, %v7650
        %v7775 = vadd.f32 %v7321, %v7655
        %v7776 = vadd.f32 %v7322, %v7658
        %v7777 = vadd.f32 %v7323, %v7663
        %v7778 = vadd.f32 %v7324, %v7666
        %v7779 = vadd.f32 %v7325, %v7671
        %v7780 = vadd.f32 %v7326, %v7674
        %v7781 = vadd.f32 %v7327, %v7679
        %v7782 = vadd.f32 %v7328, %v7682
        %v7783 = vadd.f32 %v7329, %v7687
        %v7784 = vadd.f32 %v7330, %v7690
        %v7785 = vadd.f32 %v7331, %v7695
        %v7786 = vadd.f32 %v7332, %v7698
        %v7787 = vadd.f32 %v7333, %v7703
        %v7788 = vadd.f32 %v7334, %v7706
        %v7789 = vadd.f32 %v7335, %v7711
        %v7790 = vadd.f32 %v7336, %v7714
        %v7791 = vadd.f32 %v7337, %v7719
        %v7792 = vadd.f32 %v7338, %v7722
        %v7793 = vadd.f32 %v7339, %v7727
        %v7794 = vadd.f32 %v7340, %v7730
        %v7795 = vadd.f32 %v7341, %v7735
        %v7796 = vadd.f32 %v7342, %v7738
        %v7797 = vadd.f32 %v7343, %v7743
        %v7798 = vadd.f32 %v7344, %v7746
        %v7799 = vadd.f32 %v7345, %v7751
        %v7800 = vadd.f32 %v7346, %v7754
        %v7801 = vadd.f32 %v7347, %v7759
        %v7802 = vadd.f32 %v7348, %v7762
        %v7803 = vadd.f32 %v7349, %v7767
        %v7804 = vadd.f32 %v7350, %v7770
        %v7805 = vld [vmem:[#allocation3 + $0x18] sm:$0xff]
        %v7806 = vld [vmem:[#allocation3 + $0x20] sm:$0xff]
        %v7807 = vld [vmem:[#allocation3 + $0x28] sm:$0xff]
        %v7808 = vld [vmem:[#allocation3 + $0x30] sm:$0xff]
        %v7809 = vld [vmem:[#allocation3 + $0x38] sm:$0xff]
        %v7810 = vld [vmem:[#allocation3 + $0x40] sm:$0xff]
        %v7811 = vld [vmem:[#allocation3 + $0x48] sm:$0xff]
        %v7812 = vld [vmem:[#allocation3 + $0x50] sm:$0xff]
        %v7813 = vld [vmem:[#allocation3 + $0x58] sm:$0xff]
        %v7814 = vld [vmem:[#allocation3 + $0x60] sm:$0xff]
        %v7815 = vld [vmem:[#allocation3 + $0x68] sm:$0xff]
        %v7816 = vld [vmem:[#allocation3 + $0x70] sm:$0xff]
        %v7817 = vld [vmem:[#allocation3 + $0x78] sm:$0xff]
        %v7818 = vld [vmem:[#allocation3 + $0x80] sm:$0xff]
        %v7819 = vld [vmem:[#allocation3 + $0x88] sm:$0xff]
        %v7820 = vld [vmem:[#allocation3 + $0x90] sm:$0xff]
        %v7821 = vld [vmem:[#allocation3 + $0x98] sm:$0xff]
        %v7822 = vld [vmem:[#allocation3 + $0xa0] sm:$0xff]
        %v7823 = vld [vmem:[#allocation3 + $0xa8] sm:$0xff]
        %v7824 = vld [vmem:[#allocation3 + $0xb0] sm:$0xff]
        %v7825 = vld [vmem:[#allocation3 + $0xb8] sm:$0xff]
        %v7826 = vld [vmem:[#allocation3 + $0xc0] sm:$0xff]
        %v7827 = vld [vmem:[#allocation3 + $0xc8] sm:$0xff]
        %v7828 = vld [vmem:[#allocation3 + $0xd0] sm:$0xff]
        %v7829 = vld [vmem:[#allocation3 + $0xd8] sm:$0xff]
        %v7830 = vld [vmem:[#allocation3 + $0xe0] sm:$0xff]
        %v7831 = vld [vmem:[#allocation3 + $0xe8] sm:$0xff]
        %v7832 = vld [vmem:[#allocation3 + $0xf0] sm:$0xff]
        %v7833 = vld [vmem:[#allocation3 + $0xf8] sm:$0xff]
        %v7834 = vld [vmem:[#allocation3 + $0x100] sm:$0xff]
        %v7835 = vld [vmem:[#allocation3 + $0x108] sm:$0xff]
        %v7836 = vld [vmem:[#allocation3 + $0x110] sm:$0xff]
        %7837 = vset.pattern.permute.xlu0 7
        %7838 = vperm.xlu0 %7837, %v4660
        %v7839 = vpop.permute.xlu0 %7838
        %7841 = vset.pattern.permute.xlu0 7
        %7842 = vperm.xlu0 %7841, %v4661
        %v7843 = vpop.permute.xlu0 %7842
        %7845 = vset.pattern.permute.xlu0 7
        %7846 = vperm.xlu0 %7845, %v4662
        %v7847 = vpop.permute.xlu0 %7846
        %7849 = vset.pattern.permute.xlu0 7
        %7850 = vperm.xlu0 %7849, %v4663
        %v7851 = vpop.permute.xlu0 %7850
        %7853 = vset.pattern.permute.xlu0 7
        %7854 = vperm.xlu0 %7853, %v4664
        %v7855 = vpop.permute.xlu0 %7854
        %7857 = vset.pattern.permute.xlu0 7
        %7858 = vperm.xlu0 %7857, %v4665
        %v7859 = vpop.permute.xlu0 %7858
        %7861 = vset.pattern.permute.xlu0 7
        %7862 = vperm.xlu0 %7861, %v4666
        %v7863 = vpop.permute.xlu0 %7862
        %7865 = vset.pattern.permute.xlu0 7
        %7866 = vperm.xlu0 %7865, %v4667
        %v7867 = vpop.permute.xlu0 %7866
        %7869 = vset.pattern.permute.xlu0 7
        %7870 = vperm.xlu0 %7869, %v4668
        %v7871 = vpop.permute.xlu0 %7870
        %7873 = vset.pattern.permute.xlu0 7
        %7874 = vperm.xlu0 %7873, %v4669
        %v7875 = vpop.permute.xlu0 %7874
        %7877 = vset.pattern.permute.xlu0 7
        %7878 = vperm.xlu0 %7877, %v4670
        %v7879 = vpop.permute.xlu0 %7878
        %7881 = vset.pattern.permute.xlu0 7
        %7882 = vperm.xlu0 %7881, %v4671
        %v7883 = vpop.permute.xlu0 %7882
        %7885 = vset.pattern.permute.xlu0 7
        %7886 = vperm.xlu0 %7885, %v4672
        %v7887 = vpop.permute.xlu0 %7886
        %7889 = vset.pattern.permute.xlu0 7
        %7890 = vperm.xlu0 %7889, %v4673
        %v7891 = vpop.permute.xlu0 %7890
        %7893 = vset.pattern.permute.xlu0 7
        %7894 = vperm.xlu0 %7893, %v4674
        %v7895 = vpop.permute.xlu0 %7894
        %7897 = vset.pattern.permute.xlu0 7
        %7898 = vperm.xlu0 %7897, %v4675
        %v7899 = vpop.permute.xlu0 %7898
        %7901 = vset.pattern.permute.xlu0 7
        %7902 = vperm.xlu0 %7901, %v4676
        %v7903 = vpop.permute.xlu0 %7902
        %7905 = vset.pattern.permute.xlu0 7
        %7906 = vperm.xlu0 %7905, %v4677
        %v7907 = vpop.permute.xlu0 %7906
        %7909 = vset.pattern.permute.xlu0 7
        %7910 = vperm.xlu0 %7909, %v4678
        %v7911 = vpop.permute.xlu0 %7910
        %7913 = vset.pattern.permute.xlu0 7
        %7914 = vperm.xlu0 %7913, %v4679
        %v7915 = vpop.permute.xlu0 %7914
        %7917 = vset.pattern.permute.xlu0 7
        %7918 = vperm.xlu0 %7917, %v4680
        %v7919 = vpop.permute.xlu0 %7918
        %7921 = vset.pattern.permute.xlu0 7
        %7922 = vperm.xlu0 %7921, %v4681
        %v7923 = vpop.permute.xlu0 %7922
        %7925 = vset.pattern.permute.xlu0 7
        %7926 = vperm.xlu0 %7925, %v4682
        %v7927 = vpop.permute.xlu0 %7926
        %7929 = vset.pattern.permute.xlu0 7
        %7930 = vperm.xlu0 %7929, %v4683
        %v7931 = vpop.permute.xlu0 %7930
        %7933 = vset.pattern.permute.xlu0 7
        %7934 = vperm.xlu0 %7933, %v4684
        %v7935 = vpop.permute.xlu0 %7934
        %7937 = vset.pattern.permute.xlu0 7
        %7938 = vperm.xlu0 %7937, %v4685
        %v7939 = vpop.permute.xlu0 %7938
        %7941 = vset.pattern.permute.xlu0 7
        %7942 = vperm.xlu0 %7941, %v4686
        %v7943 = vpop.permute.xlu0 %7942
        %7945 = vset.pattern.permute.xlu0 7
        %7946 = vperm.xlu0 %7945, %v4687
        %v7947 = vpop.permute.xlu0 %7946
        %7949 = vset.pattern.permute.xlu0 7
        %7950 = vperm.xlu0 %7949, %v4688
        %v7951 = vpop.permute.xlu0 %7950
        %7953 = vset.pattern.permute.xlu0 7
        %7954 = vperm.xlu0 %7953, %v4689
        %v7955 = vpop.permute.xlu0 %7954
        %7957 = vset.pattern.permute.xlu0 7
        %7958 = vperm.xlu0 %7957, %v4690
        %v7959 = vpop.permute.xlu0 %7958
        %7961 = vset.pattern.permute.xlu0 7
        %7962 = vperm.xlu0 %7961, %v4691
        %v7963 = vpop.permute.xlu0 %7962
        %v7965 = vmul.f32 %v7805, %v7839
        %v7966 = vmul.f32 %v7806, %v7843
        %v7967 = vmul.f32 %v7807, %v7847
        %v7968 = vmul.f32 %v7808, %v7851
        %v7969 = vmul.f32 %v7809, %v7855
        %v7970 = vmul.f32 %v7810, %v7859
        %v7971 = vmul.f32 %v7811, %v7863
        %v7972 = vmul.f32 %v7812, %v7867
        %v7973 = vmul.f32 %v7813, %v7871
        %v7974 = vmul.f32 %v7814, %v7875
        %v7975 = vmul.f32 %v7815, %v7879
        %v7976 = vmul.f32 %v7816, %v7883
        %v7977 = vmul.f32 %v7817, %v7887
        %v7978 = vmul.f32 %v7818, %v7891
        %v7979 = vmul.f32 %v7819, %v7895
        %v7980 = vmul.f32 %v7820, %v7899
        %v7981 = vmul.f32 %v7821, %v7903
        %v7982 = vmul.f32 %v7822, %v7907
        %v7983 = vmul.f32 %v7823, %v7911
        %v7984 = vmul.f32 %v7824, %v7915
        %v7985 = vmul.f32 %v7825, %v7919
        %v7986 = vmul.f32 %v7826, %v7923
        %v7987 = vmul.f32 %v7827, %v7927
        %v7988 = vmul.f32 %v7828, %v7931
        %v7989 = vmul.f32 %v7829, %v7935
        %v7990 = vmul.f32 %v7830, %v7939
        %v7991 = vmul.f32 %v7831, %v7943
        %v7992 = vmul.f32 %v7832, %v7947
        %v7993 = vmul.f32 %v7833, %v7951
        %v7994 = vmul.f32 %v7834, %v7955
        %v7995 = vmul.f32 %v7835, %v7959
        %v7996 = vmul.f32 %v7836, %v7963
        %v7997 = vpack.c.bf16 %v7966, %v7965
        %v7998 = vpack.c.bf16 %v7968, %v7967
        %v7999 = vpack.c.bf16 %v7970, %v7969
        %v8000 = vpack.c.bf16 %v7972, %v7971
        %v8001 = vpack.c.bf16 %v7974, %v7973
        %v8002 = vpack.c.bf16 %v7976, %v7975
        %v8003 = vpack.c.bf16 %v7978, %v7977
        %v8004 = vpack.c.bf16 %v7980, %v7979
        %v8005 = vpack.c.bf16 %v7982, %v7981
        %v8006 = vpack.c.bf16 %v7984, %v7983
        %v8007 = vpack.c.bf16 %v7986, %v7985
        %v8008 = vpack.c.bf16 %v7988, %v7987
        %v8009 = vpack.c.bf16 %v7990, %v7989
        %v8010 = vpack.c.bf16 %v7992, %v7991
        %v8011 = vpack.c.bf16 %v7994, %v7993
        %v8012 = vpack.c.bf16 %v7996, %v7995
        %s8013 = scalar_lea.vmem %s2, 28
        %v8014 = vld [vmem:[%s8013] sm:$0xf]
        %v8016 = vsel %vm371, %v7997, 0
        %v8019 = vsel %vm371, %v7998, 0
        %v8022 = vsel %vm371, %v7999, 0
        %v8025 = vsel %vm371, %v8000, 0
        %v8028 = vsel %vm371, %v8001, 0
        %v8031 = vsel %vm371, %v8002, 0
        %v8034 = vsel %vm371, %v8003, 0
        %v8037 = vsel %vm371, %v8004, 0
        %v8040 = vsel %vm371, %v8005, 0
        %v8043 = vsel %vm371, %v8006, 0
        %v8046 = vsel %vm371, %v8007, 0
        %v8049 = vsel %vm371, %v8008, 0
        %v8052 = vsel %vm371, %v8009, 0
        %v8055 = vsel %vm371, %v8010, 0
        %v8058 = vsel %vm371, %v8011, 0
        %v8061 = vsel %vm371, %v8012, 0
        %v8064 = vsel %vm935, %v8014, 0
        %8066 = vmatprep.subr.bf16.mxu0 0
        %8067 = vmatpush1.bf16.msra.mxu0 0
        %8068 = vmatprep.subr.bf16.mxu0 0
        %8069 = vmatpush1.bf16.msra.mxu0 0
        %8070 = vmatprep.subr.bf16.mxu0 0
        %8071 = vmatpush1.bf16.msra.mxu0 0
        %8072 = vmatprep.subr.bf16.mxu0 0
        %8073 = vmatpush1.bf16.msra.mxu0 0
        %8074 = vmatprep.subr.bf16.mxu0 0
        %8075 = vmatpush1.bf16.msra.mxu0 0
        %8076 = vmatprep.subr.bf16.mxu0 0
        %8077 = vmatpush1.bf16.msra.mxu0 0
        %8078 = vmatprep.subr.bf16.mxu0 0
        %8079 = vmatpush1.bf16.msra.mxu0 0
        %8080 = vmatprep.subr.bf16.mxu0 0
        %8081 = vmatpush1.bf16.msra.mxu0 %v8064
        %8082 = vmatprep.subr.bf16.mxu0 0
        %8083 = vmatpush2.bf16.msra.mxu0 0
        %8084 = vmatprep.subr.bf16.mxu0 0
        %8085 = vmatpush2.bf16.msra.mxu0 0
        %8086 = vmatprep.subr.bf16.mxu0 0
        %8087 = vmatpush2.bf16.msra.mxu0 0
        %8088 = vmatprep.subr.bf16.mxu0 0
        %8089 = vmatpush2.bf16.msra.mxu0 0
        %8090 = vmatprep.subr.bf16.mxu0 0
        %8091 = vmatpush2.bf16.msra.mxu0 0
        %8092 = vmatprep.subr.bf16.mxu0 0
        %8093 = vmatpush2.bf16.msra.mxu0 0
        %8094 = vmatprep.subr.bf16.mxu0 0
        %8095 = vmatpush2.bf16.msra.mxu0 0
        %8096 = vmatprep.subr.bf16.mxu0 0
        %8097 = vmatpush2.bf16.msra.mxu0 0
        %8098 = vmatprep.mubr.bf16.mxu0 0
        %8099 = vmatmul.mubr.bf16.gmra.mxu0 %v8016
        %v8100 = vpop.f32.mrf.mxu0
        %v8101 = vadd.f32 0.0, %v8100
        %v8102 = vpop.f32.mrf.mxu0
        %v8103 = vpop.f32.mrf.mxu0
        %v8104 = vadd.f32 0.0, %v8103
        %v8105 = vpop.f32.mrf.mxu0
        %8106 = vmatprep.mubr.bf16.mxu0 0
        %8107 = vmatmul.mubr.bf16.gmra.mxu0 %v8019
        %v8108 = vpop.f32.mrf.mxu0
        %v8109 = vadd.f32 0.0, %v8108
        %v8110 = vpop.f32.mrf.mxu0
        %v8111 = vpop.f32.mrf.mxu0
        %v8112 = vadd.f32 0.0, %v8111
        %v8113 = vpop.f32.mrf.mxu0
        %8114 = vmatprep.mubr.bf16.mxu0 0
        %8115 = vmatmul.mubr.bf16.gmra.mxu0 %v8022
        %v8116 = vpop.f32.mrf.mxu0
        %v8117 = vadd.f32 0.0, %v8116
        %v8118 = vpop.f32.mrf.mxu0
        %v8119 = vpop.f32.mrf.mxu0
        %v8120 = vadd.f32 0.0, %v8119
        %v8121 = vpop.f32.mrf.mxu0
        %8122 = vmatprep.mubr.bf16.mxu0 0
        %8123 = vmatmul.mubr.bf16.gmra.mxu0 %v8025
        %v8124 = vpop.f32.mrf.mxu0
        %v8125 = vadd.f32 0.0, %v8124
        %v8126 = vpop.f32.mrf.mxu0
        %v8127 = vpop.f32.mrf.mxu0
        %v8128 = vadd.f32 0.0, %v8127
        %v8129 = vpop.f32.mrf.mxu0
        %8130 = vmatprep.mubr.bf16.mxu0 0
        %8131 = vmatmul.mubr.bf16.gmra.mxu0 %v8028
        %v8132 = vpop.f32.mrf.mxu0
        %v8133 = vadd.f32 0.0, %v8132
        %v8134 = vpop.f32.mrf.mxu0
        %v8135 = vpop.f32.mrf.mxu0
        %v8136 = vadd.f32 0.0, %v8135
        %v8137 = vpop.f32.mrf.mxu0
        %8138 = vmatprep.mubr.bf16.mxu0 0
        %8139 = vmatmul.mubr.bf16.gmra.mxu0 %v8031
        %v8140 = vpop.f32.mrf.mxu0
        %v8141 = vadd.f32 0.0, %v8140
        %v8142 = vpop.f32.mrf.mxu0
        %v8143 = vpop.f32.mrf.mxu0
        %v8144 = vadd.f32 0.0, %v8143
        %v8145 = vpop.f32.mrf.mxu0
        %8146 = vmatprep.mubr.bf16.mxu0 0
        %8147 = vmatmul.mubr.bf16.gmra.mxu0 %v8034
        %v8148 = vpop.f32.mrf.mxu0
        %v8149 = vadd.f32 0.0, %v8148
        %v8150 = vpop.f32.mrf.mxu0
        %v8151 = vpop.f32.mrf.mxu0
        %v8152 = vadd.f32 0.0, %v8151
        %v8153 = vpop.f32.mrf.mxu0
        %8154 = vmatprep.mubr.bf16.mxu0 0
        %8155 = vmatmul.mubr.bf16.gmra.mxu0 %v8037
        %v8156 = vpop.f32.mrf.mxu0
        %v8157 = vadd.f32 0.0, %v8156
        %v8158 = vpop.f32.mrf.mxu0
        %v8159 = vpop.f32.mrf.mxu0
        %v8160 = vadd.f32 0.0, %v8159
        %v8161 = vpop.f32.mrf.mxu0
        %8162 = vmatprep.mubr.bf16.mxu0 0
        %8163 = vmatmul.mubr.bf16.gmra.mxu0 %v8040
        %v8164 = vpop.f32.mrf.mxu0
        %v8165 = vadd.f32 0.0, %v8164
        %v8166 = vpop.f32.mrf.mxu0
        %v8167 = vpop.f32.mrf.mxu0
        %v8168 = vadd.f32 0.0, %v8167
        %v8169 = vpop.f32.mrf.mxu0
        %8170 = vmatprep.mubr.bf16.mxu0 0
        %8171 = vmatmul.mubr.bf16.gmra.mxu0 %v8043
        %v8172 = vpop.f32.mrf.mxu0
        %v8173 = vadd.f32 0.0, %v8172
        %v8174 = vpop.f32.mrf.mxu0
        %v8175 = vpop.f32.mrf.mxu0
        %v8176 = vadd.f32 0.0, %v8175
        %v8177 = vpop.f32.mrf.mxu0
        %8178 = vmatprep.mubr.bf16.mxu0 0
        %8179 = vmatmul.mubr.bf16.gmra.mxu0 %v8046
        %v8180 = vpop.f32.mrf.mxu0
        %v8181 = vadd.f32 0.0, %v8180
        %v8182 = vpop.f32.mrf.mxu0
        %v8183 = vpop.f32.mrf.mxu0
        %v8184 = vadd.f32 0.0, %v8183
        %v8185 = vpop.f32.mrf.mxu0
        %8186 = vmatprep.mubr.bf16.mxu0 0
        %8187 = vmatmul.mubr.bf16.gmra.mxu0 %v8049
        %v8188 = vpop.f32.mrf.mxu0
        %v8189 = vadd.f32 0.0, %v8188
        %v8190 = vpop.f32.mrf.mxu0
        %v8191 = vpop.f32.mrf.mxu0
        %v8192 = vadd.f32 0.0, %v8191
        %v8193 = vpop.f32.mrf.mxu0
        %8194 = vmatprep.mubr.bf16.mxu0 0
        %8195 = vmatmul.mubr.bf16.gmra.mxu0 %v8052
        %v8196 = vpop.f32.mrf.mxu0
        %v8197 = vadd.f32 0.0, %v8196
        %v8198 = vpop.f32.mrf.mxu0
        %v8199 = vpop.f32.mrf.mxu0
        %v8200 = vadd.f32 0.0, %v8199
        %v8201 = vpop.f32.mrf.mxu0
        %8202 = vmatprep.mubr.bf16.mxu0 0
        %8203 = vmatmul.mubr.bf16.gmra.mxu0 %v8055
        %v8204 = vpop.f32.mrf.mxu0
        %v8205 = vadd.f32 0.0, %v8204
        %v8206 = vpop.f32.mrf.mxu0
        %v8207 = vpop.f32.mrf.mxu0
        %v8208 = vadd.f32 0.0, %v8207
        %v8209 = vpop.f32.mrf.mxu0
        %8210 = vmatprep.mubr.bf16.mxu0 0
        %8211 = vmatmul.mubr.bf16.gmra.mxu0 %v8058
        %v8212 = vpop.f32.mrf.mxu0
        %v8213 = vadd.f32 0.0, %v8212
        %v8214 = vpop.f32.mrf.mxu0
        %v8215 = vpop.f32.mrf.mxu0
        %v8216 = vadd.f32 0.0, %v8215
        %v8217 = vpop.f32.mrf.mxu0
        %8218 = vmatprep.mubr.bf16.mxu0 0
        %8219 = vmatmul.mubr.bf16.gmra.mxu0 %v8061
        %v8220 = vpop.f32.mrf.mxu0
        %v8221 = vadd.f32 0.0, %v8220
        %v8222 = vpop.f32.mrf.mxu0
        %v8223 = vpop.f32.mrf.mxu0
        %v8224 = vadd.f32 0.0, %v8223
        %v8225 = vpop.f32.mrf.mxu0
        %8226 = vdwg.mxu0
        %v8227 = vadd.f32 %v7773, %v8101
        %v8228 = vadd.f32 %v7774, %v8104
        %v8229 = vadd.f32 %v7775, %v8109
        %v8230 = vadd.f32 %v7776, %v8112
        %v8231 = vadd.f32 %v7777, %v8117
        %v8232 = vadd.f32 %v7778, %v8120
        %v8233 = vadd.f32 %v7779, %v8125
        %v8234 = vadd.f32 %v7780, %v8128
        %v8235 = vadd.f32 %v7781, %v8133
        %v8236 = vadd.f32 %v7782, %v8136
        %v8237 = vadd.f32 %v7783, %v8141
        %v8238 = vadd.f32 %v7784, %v8144
        %v8239 = vadd.f32 %v7785, %v8149
        %v8240 = vadd.f32 %v7786, %v8152
        %v8241 = vadd.f32 %v7787, %v8157
        %v8242 = vadd.f32 %v7788, %v8160
        %v8243 = vadd.f32 %v7789, %v8165
        %v8244 = vadd.f32 %v7790, %v8168
        %v8245 = vadd.f32 %v7791, %v8173
        %v8246 = vadd.f32 %v7792, %v8176
        %v8247 = vadd.f32 %v7793, %v8181
        %v8248 = vadd.f32 %v7794, %v8184
        %v8249 = vadd.f32 %v7795, %v8189
        %v8250 = vadd.f32 %v7796, %v8192
        %v8251 = vadd.f32 %v7797, %v8197
        %v8252 = vadd.f32 %v7798, %v8200
        %v8253 = vadd.f32 %v7799, %v8205
        %v8254 = vadd.f32 %v7800, %v8208
        %v8255 = vadd.f32 %v7801, %v8213
        %v8256 = vadd.f32 %v7802, %v8216
        %v8257 = vadd.f32 %v7803, %v8221
        %v8258 = vadd.f32 %v7804, %v8224
        %v8259 = vld [vmem:[#allocation3 + $0x19] sm:$0xff]
        %v8260 = vld [vmem:[#allocation3 + $0x21] sm:$0xff]
        %v8261 = vld [vmem:[#allocation3 + $0x29] sm:$0xff]
        %v8262 = vld [vmem:[#allocation3 + $0x31] sm:$0xff]
        %v8263 = vld [vmem:[#allocation3 + $0x39] sm:$0xff]
        %v8264 = vld [vmem:[#allocation3 + $0x41] sm:$0xff]
        %v8265 = vld [vmem:[#allocation3 + $0x49] sm:$0xff]
        %v8266 = vld [vmem:[#allocation3 + $0x51] sm:$0xff]
        %v8267 = vld [vmem:[#allocation3 + $0x59] sm:$0xff]
        %v8268 = vld [vmem:[#allocation3 + $0x61] sm:$0xff]
        %v8269 = vld [vmem:[#allocation3 + $0x69] sm:$0xff]
        %v8270 = vld [vmem:[#allocation3 + $0x71] sm:$0xff]
        %v8271 = vld [vmem:[#allocation3 + $0x79] sm:$0xff]
        %v8272 = vld [vmem:[#allocation3 + $0x81] sm:$0xff]
        %v8273 = vld [vmem:[#allocation3 + $0x89] sm:$0xff]
        %v8274 = vld [vmem:[#allocation3 + $0x91] sm:$0xff]
        %v8275 = vld [vmem:[#allocation3 + $0x99] sm:$0xff]
        %v8276 = vld [vmem:[#allocation3 + $0xa1] sm:$0xff]
        %v8277 = vld [vmem:[#allocation3 + $0xa9] sm:$0xff]
        %v8278 = vld [vmem:[#allocation3 + $0xb1] sm:$0xff]
        %v8279 = vld [vmem:[#allocation3 + $0xb9] sm:$0xff]
        %v8280 = vld [vmem:[#allocation3 + $0xc1] sm:$0xff]
        %v8281 = vld [vmem:[#allocation3 + $0xc9] sm:$0xff]
        %v8282 = vld [vmem:[#allocation3 + $0xd1] sm:$0xff]
        %v8283 = vld [vmem:[#allocation3 + $0xd9] sm:$0xff]
        %v8284 = vld [vmem:[#allocation3 + $0xe1] sm:$0xff]
        %v8285 = vld [vmem:[#allocation3 + $0xe9] sm:$0xff]
        %v8286 = vld [vmem:[#allocation3 + $0xf1] sm:$0xff]
        %v8287 = vld [vmem:[#allocation3 + $0xf9] sm:$0xff]
        %v8288 = vld [vmem:[#allocation3 + $0x101] sm:$0xff]
        %v8289 = vld [vmem:[#allocation3 + $0x109] sm:$0xff]
        %v8290 = vld [vmem:[#allocation3 + $0x111] sm:$0xff]
        %8291 = vset.pattern.permute.xlu0 8
        %8292 = vperm.xlu0 %8291, %v4660
        %v8293 = vpop.permute.xlu0 %8292
        %8295 = vset.pattern.permute.xlu0 8
        %8296 = vperm.xlu0 %8295, %v4661
        %v8297 = vpop.permute.xlu0 %8296
        %8299 = vset.pattern.permute.xlu0 8
        %8300 = vperm.xlu0 %8299, %v4662
        %v8301 = vpop.permute.xlu0 %8300
        %8303 = vset.pattern.permute.xlu0 8
        %8304 = vperm.xlu0 %8303, %v4663
        %v8305 = vpop.permute.xlu0 %8304
        %8307 = vset.pattern.permute.xlu0 8
        %8308 = vperm.xlu0 %8307, %v4664
        %v8309 = vpop.permute.xlu0 %8308
        %8311 = vset.pattern.permute.xlu0 8
        %8312 = vperm.xlu0 %8311, %v4665
        %v8313 = vpop.permute.xlu0 %8312
        %8315 = vset.pattern.permute.xlu0 8
        %8316 = vperm.xlu0 %8315, %v4666
        %v8317 = vpop.permute.xlu0 %8316
        %8319 = vset.pattern.permute.xlu0 8
        %8320 = vperm.xlu0 %8319, %v4667
        %v8321 = vpop.permute.xlu0 %8320
        %8323 = vset.pattern.permute.xlu0 8
        %8324 = vperm.xlu0 %8323, %v4668
        %v8325 = vpop.permute.xlu0 %8324
        %8327 = vset.pattern.permute.xlu0 8
        %8328 = vperm.xlu0 %8327, %v4669
        %v8329 = vpop.permute.xlu0 %8328
        %8331 = vset.pattern.permute.xlu0 8
        %8332 = vperm.xlu0 %8331, %v4670
        %v8333 = vpop.permute.xlu0 %8332
        %8335 = vset.pattern.permute.xlu0 8
        %8336 = vperm.xlu0 %8335, %v4671
        %v8337 = vpop.permute.xlu0 %8336
        %8339 = vset.pattern.permute.xlu0 8
        %8340 = vperm.xlu0 %8339, %v4672
        %v8341 = vpop.permute.xlu0 %8340
        %8343 = vset.pattern.permute.xlu0 8
        %8344 = vperm.xlu0 %8343, %v4673
        %v8345 = vpop.permute.xlu0 %8344
        %8347 = vset.pattern.permute.xlu0 8
        %8348 = vperm.xlu0 %8347, %v4674
        %v8349 = vpop.permute.xlu0 %8348
        %8351 = vset.pattern.permute.xlu0 8
        %8352 = vperm.xlu0 %8351, %v4675
        %v8353 = vpop.permute.xlu0 %8352
        %8355 = vset.pattern.permute.xlu0 8
        %8356 = vperm.xlu0 %8355, %v4676
        %v8357 = vpop.permute.xlu0 %8356
        %8359 = vset.pattern.permute.xlu0 8
        %8360 = vperm.xlu0 %8359, %v4677
        %v8361 = vpop.permute.xlu0 %8360
        %8363 = vset.pattern.permute.xlu0 8
        %8364 = vperm.xlu0 %8363, %v4678
        %v8365 = vpop.permute.xlu0 %8364
        %8367 = vset.pattern.permute.xlu0 8
        %8368 = vperm.xlu0 %8367, %v4679
        %v8369 = vpop.permute.xlu0 %8368
        %8371 = vset.pattern.permute.xlu0 8
        %8372 = vperm.xlu0 %8371, %v4680
        %v8373 = vpop.permute.xlu0 %8372
        %8375 = vset.pattern.permute.xlu0 8
        %8376 = vperm.xlu0 %8375, %v4681
        %v8377 = vpop.permute.xlu0 %8376
        %8379 = vset.pattern.permute.xlu0 8
        %8380 = vperm.xlu0 %8379, %v4682
        %v8381 = vpop.permute.xlu0 %8380
        %8383 = vset.pattern.permute.xlu0 8
        %8384 = vperm.xlu0 %8383, %v4683
        %v8385 = vpop.permute.xlu0 %8384
        %8387 = vset.pattern.permute.xlu0 8
        %8388 = vperm.xlu0 %8387, %v4684
        %v8389 = vpop.permute.xlu0 %8388
        %8391 = vset.pattern.permute.xlu0 8
        %8392 = vperm.xlu0 %8391, %v4685
        %v8393 = vpop.permute.xlu0 %8392
        %8395 = vset.pattern.permute.xlu0 8
        %8396 = vperm.xlu0 %8395, %v4686
        %v8397 = vpop.permute.xlu0 %8396
        %8399 = vset.pattern.permute.xlu0 8
        %8400 = vperm.xlu0 %8399, %v4687
        %v8401 = vpop.permute.xlu0 %8400
        %8403 = vset.pattern.permute.xlu0 8
        %8404 = vperm.xlu0 %8403, %v4688
        %v8405 = vpop.permute.xlu0 %8404
        %8407 = vset.pattern.permute.xlu0 8
        %8408 = vperm.xlu0 %8407, %v4689
        %v8409 = vpop.permute.xlu0 %8408
        %8411 = vset.pattern.permute.xlu0 8
        %8412 = vperm.xlu0 %8411, %v4690
        %v8413 = vpop.permute.xlu0 %8412
        %8415 = vset.pattern.permute.xlu0 8
        %8416 = vperm.xlu0 %8415, %v4691
        %v8417 = vpop.permute.xlu0 %8416
        %v8419 = vmul.f32 %v8259, %v8293
        %v8420 = vmul.f32 %v8260, %v8297
        %v8421 = vmul.f32 %v8261, %v8301
        %v8422 = vmul.f32 %v8262, %v8305
        %v8423 = vmul.f32 %v8263, %v8309
        %v8424 = vmul.f32 %v8264, %v8313
        %v8425 = vmul.f32 %v8265, %v8317
        %v8426 = vmul.f32 %v8266, %v8321
        %v8427 = vmul.f32 %v8267, %v8325
        %v8428 = vmul.f32 %v8268, %v8329
        %v8429 = vmul.f32 %v8269, %v8333
        %v8430 = vmul.f32 %v8270, %v8337
        %v8431 = vmul.f32 %v8271, %v8341
        %v8432 = vmul.f32 %v8272, %v8345
        %v8433 = vmul.f32 %v8273, %v8349
        %v8434 = vmul.f32 %v8274, %v8353
        %v8435 = vmul.f32 %v8275, %v8357
        %v8436 = vmul.f32 %v8276, %v8361
        %v8437 = vmul.f32 %v8277, %v8365
        %v8438 = vmul.f32 %v8278, %v8369
        %v8439 = vmul.f32 %v8279, %v8373
        %v8440 = vmul.f32 %v8280, %v8377
        %v8441 = vmul.f32 %v8281, %v8381
        %v8442 = vmul.f32 %v8282, %v8385
        %v8443 = vmul.f32 %v8283, %v8389
        %v8444 = vmul.f32 %v8284, %v8393
        %v8445 = vmul.f32 %v8285, %v8397
        %v8446 = vmul.f32 %v8286, %v8401
        %v8447 = vmul.f32 %v8287, %v8405
        %v8448 = vmul.f32 %v8288, %v8409
        %v8449 = vmul.f32 %v8289, %v8413
        %v8450 = vmul.f32 %v8290, %v8417
        %v8451 = vpack.c.bf16 %v8420, %v8419
        %v8452 = vpack.c.bf16 %v8422, %v8421
        %v8453 = vpack.c.bf16 %v8424, %v8423
        %v8454 = vpack.c.bf16 %v8426, %v8425
        %v8455 = vpack.c.bf16 %v8428, %v8427
        %v8456 = vpack.c.bf16 %v8430, %v8429
        %v8457 = vpack.c.bf16 %v8432, %v8431
        %v8458 = vpack.c.bf16 %v8434, %v8433
        %v8459 = vpack.c.bf16 %v8436, %v8435
        %v8460 = vpack.c.bf16 %v8438, %v8437
        %v8461 = vpack.c.bf16 %v8440, %v8439
        %v8462 = vpack.c.bf16 %v8442, %v8441
        %v8463 = vpack.c.bf16 %v8444, %v8443
        %v8464 = vpack.c.bf16 %v8446, %v8445
        %v8465 = vpack.c.bf16 %v8448, %v8447
        %v8466 = vpack.c.bf16 %v8450, %v8449
        %s8467 = scalar_lea.vmem %s2, 32
        %v8468 = vld [vmem:[%s8467] sm:$0xf]
        %v8470 = vsel %vm371, %v8451, 0
        %v8473 = vsel %vm371, %v8452, 0
        %v8476 = vsel %vm371, %v8453, 0
        %v8479 = vsel %vm371, %v8454, 0
        %v8482 = vsel %vm371, %v8455, 0
        %v8485 = vsel %vm371, %v8456, 0
        %v8488 = vsel %vm371, %v8457, 0
        %v8491 = vsel %vm371, %v8458, 0
        %v8494 = vsel %vm371, %v8459, 0
        %v8497 = vsel %vm371, %v8460, 0
        %v8500 = vsel %vm371, %v8461, 0
        %v8503 = vsel %vm371, %v8462, 0
        %v8506 = vsel %vm371, %v8463, 0
        %v8509 = vsel %vm371, %v8464, 0
        %v8512 = vsel %vm371, %v8465, 0
        %v8515 = vsel %vm371, %v8466, 0
        %v8518 = vsel %vm935, %v8468, 0
        %8520 = vmatprep.subr.bf16.mxu0 0
        %8521 = vmatpush1.bf16.msra.mxu0 0
        %8522 = vmatprep.subr.bf16.mxu0 0
        %8523 = vmatpush1.bf16.msra.mxu0 0
        %8524 = vmatprep.subr.bf16.mxu0 0
        %8525 = vmatpush1.bf16.msra.mxu0 0
        %8526 = vmatprep.subr.bf16.mxu0 0
        %8527 = vmatpush1.bf16.msra.mxu0 0
        %8528 = vmatprep.subr.bf16.mxu0 0
        %8529 = vmatpush1.bf16.msra.mxu0 0
        %8530 = vmatprep.subr.bf16.mxu0 0
        %8531 = vmatpush1.bf16.msra.mxu0 0
        %8532 = vmatprep.subr.bf16.mxu0 0
        %8533 = vmatpush1.bf16.msra.mxu0 0
        %8534 = vmatprep.subr.bf16.mxu0 0
        %8535 = vmatpush1.bf16.msra.mxu0 %v8518
        %8536 = vmatprep.subr.bf16.mxu0 0
        %8537 = vmatpush2.bf16.msra.mxu0 0
        %8538 = vmatprep.subr.bf16.mxu0 0
        %8539 = vmatpush2.bf16.msra.mxu0 0
        %8540 = vmatprep.subr.bf16.mxu0 0
        %8541 = vmatpush2.bf16.msra.mxu0 0
        %8542 = vmatprep.subr.bf16.mxu0 0
        %8543 = vmatpush2.bf16.msra.mxu0 0
        %8544 = vmatprep.subr.bf16.mxu0 0
        %8545 = vmatpush2.bf16.msra.mxu0 0
        %8546 = vmatprep.subr.bf16.mxu0 0
        %8547 = vmatpush2.bf16.msra.mxu0 0
        %8548 = vmatprep.subr.bf16.mxu0 0
        %8549 = vmatpush2.bf16.msra.mxu0 0
        %8550 = vmatprep.subr.bf16.mxu0 0
        %8551 = vmatpush2.bf16.msra.mxu0 0
        %8552 = vmatprep.mubr.bf16.mxu0 0
        %8553 = vmatmul.mubr.bf16.gmra.mxu0 %v8470
        %v8554 = vpop.f32.mrf.mxu0
        %v8555 = vadd.f32 0.0, %v8554
        %v8556 = vpop.f32.mrf.mxu0
        %v8557 = vpop.f32.mrf.mxu0
        %v8558 = vadd.f32 0.0, %v8557
        %v8559 = vpop.f32.mrf.mxu0
        %8560 = vmatprep.mubr.bf16.mxu0 0
        %8561 = vmatmul.mubr.bf16.gmra.mxu0 %v8473
        %v8562 = vpop.f32.mrf.mxu0
        %v8563 = vadd.f32 0.0, %v8562
        %v8564 = vpop.f32.mrf.mxu0
        %v8565 = vpop.f32.mrf.mxu0
        %v8566 = vadd.f32 0.0, %v8565
        %v8567 = vpop.f32.mrf.mxu0
        %8568 = vmatprep.mubr.bf16.mxu0 0
        %8569 = vmatmul.mubr.bf16.gmra.mxu0 %v8476
        %v8570 = vpop.f32.mrf.mxu0
        %v8571 = vadd.f32 0.0, %v8570
        %v8572 = vpop.f32.mrf.mxu0
        %v8573 = vpop.f32.mrf.mxu0
        %v8574 = vadd.f32 0.0, %v8573
        %v8575 = vpop.f32.mrf.mxu0
        %8576 = vmatprep.mubr.bf16.mxu0 0
        %8577 = vmatmul.mubr.bf16.gmra.mxu0 %v8479
        %v8578 = vpop.f32.mrf.mxu0
        %v8579 = vadd.f32 0.0, %v8578
        %v8580 = vpop.f32.mrf.mxu0
        %v8581 = vpop.f32.mrf.mxu0
        %v8582 = vadd.f32 0.0, %v8581
        %v8583 = vpop.f32.mrf.mxu0
        %8584 = vmatprep.mubr.bf16.mxu0 0
        %8585 = vmatmul.mubr.bf16.gmra.mxu0 %v8482
        %v8586 = vpop.f32.mrf.mxu0
        %v8587 = vadd.f32 0.0, %v8586
        %v8588 = vpop.f32.mrf.mxu0
        %v8589 = vpop.f32.mrf.mxu0
        %v8590 = vadd.f32 0.0, %v8589
        %v8591 = vpop.f32.mrf.mxu0
        %8592 = vmatprep.mubr.bf16.mxu0 0
        %8593 = vmatmul.mubr.bf16.gmra.mxu0 %v8485
        %v8594 = vpop.f32.mrf.mxu0
        %v8595 = vadd.f32 0.0, %v8594
        %v8596 = vpop.f32.mrf.mxu0
        %v8597 = vpop.f32.mrf.mxu0
        %v8598 = vadd.f32 0.0, %v8597
        %v8599 = vpop.f32.mrf.mxu0
        %8600 = vmatprep.mubr.bf16.mxu0 0
        %8601 = vmatmul.mubr.bf16.gmra.mxu0 %v8488
        %v8602 = vpop.f32.mrf.mxu0
        %v8603 = vadd.f32 0.0, %v8602
        %v8604 = vpop.f32.mrf.mxu0
        %v8605 = vpop.f32.mrf.mxu0
        %v8606 = vadd.f32 0.0, %v8605
        %v8607 = vpop.f32.mrf.mxu0
        %8608 = vmatprep.mubr.bf16.mxu0 0
        %8609 = vmatmul.mubr.bf16.gmra.mxu0 %v8491
        %v8610 = vpop.f32.mrf.mxu0
        %v8611 = vadd.f32 0.0, %v8610
        %v8612 = vpop.f32.mrf.mxu0
        %v8613 = vpop.f32.mrf.mxu0
        %v8614 = vadd.f32 0.0, %v8613
        %v8615 = vpop.f32.mrf.mxu0
        %8616 = vmatprep.mubr.bf16.mxu0 0
        %8617 = vmatmul.mubr.bf16.gmra.mxu0 %v8494
        %v8618 = vpop.f32.mrf.mxu0
        %v8619 = vadd.f32 0.0, %v8618
        %v8620 = vpop.f32.mrf.mxu0
        %v8621 = vpop.f32.mrf.mxu0
        %v8622 = vadd.f32 0.0, %v8621
        %v8623 = vpop.f32.mrf.mxu0
        %8624 = vmatprep.mubr.bf16.mxu0 0
        %8625 = vmatmul.mubr.bf16.gmra.mxu0 %v8497
        %v8626 = vpop.f32.mrf.mxu0
        %v8627 = vadd.f32 0.0, %v8626
        %v8628 = vpop.f32.mrf.mxu0
        %v8629 = vpop.f32.mrf.mxu0
        %v8630 = vadd.f32 0.0, %v8629
        %v8631 = vpop.f32.mrf.mxu0
        %8632 = vmatprep.mubr.bf16.mxu0 0
        %8633 = vmatmul.mubr.bf16.gmra.mxu0 %v8500
        %v8634 = vpop.f32.mrf.mxu0
        %v8635 = vadd.f32 0.0, %v8634
        %v8636 = vpop.f32.mrf.mxu0
        %v8637 = vpop.f32.mrf.mxu0
        %v8638 = vadd.f32 0.0, %v8637
        %v8639 = vpop.f32.mrf.mxu0
        %8640 = vmatprep.mubr.bf16.mxu0 0
        %8641 = vmatmul.mubr.bf16.gmra.mxu0 %v8503
        %v8642 = vpop.f32.mrf.mxu0
        %v8643 = vadd.f32 0.0, %v8642
        %v8644 = vpop.f32.mrf.mxu0
        %v8645 = vpop.f32.mrf.mxu0
        %v8646 = vadd.f32 0.0, %v8645
        %v8647 = vpop.f32.mrf.mxu0
        %8648 = vmatprep.mubr.bf16.mxu0 0
        %8649 = vmatmul.mubr.bf16.gmra.mxu0 %v8506
        %v8650 = vpop.f32.mrf.mxu0
        %v8651 = vadd.f32 0.0, %v8650
        %v8652 = vpop.f32.mrf.mxu0
        %v8653 = vpop.f32.mrf.mxu0
        %v8654 = vadd.f32 0.0, %v8653
        %v8655 = vpop.f32.mrf.mxu0
        %8656 = vmatprep.mubr.bf16.mxu0 0
        %8657 = vmatmul.mubr.bf16.gmra.mxu0 %v8509
        %v8658 = vpop.f32.mrf.mxu0
        %v8659 = vadd.f32 0.0, %v8658
        %v8660 = vpop.f32.mrf.mxu0
        %v8661 = vpop.f32.mrf.mxu0
        %v8662 = vadd.f32 0.0, %v8661
        %v8663 = vpop.f32.mrf.mxu0
        %8664 = vmatprep.mubr.bf16.mxu0 0
        %8665 = vmatmul.mubr.bf16.gmra.mxu0 %v8512
        %v8666 = vpop.f32.mrf.mxu0
        %v8667 = vadd.f32 0.0, %v8666
        %v8668 = vpop.f32.mrf.mxu0
        %v8669 = vpop.f32.mrf.mxu0
        %v8670 = vadd.f32 0.0, %v8669
        %v8671 = vpop.f32.mrf.mxu0
        %8672 = vmatprep.mubr.bf16.mxu0 0
        %8673 = vmatmul.mubr.bf16.gmra.mxu0 %v8515
        %v8674 = vpop.f32.mrf.mxu0
        %v8675 = vadd.f32 0.0, %v8674
        %v8676 = vpop.f32.mrf.mxu0
        %v8677 = vpop.f32.mrf.mxu0
        %v8678 = vadd.f32 0.0, %v8677
        %v8679 = vpop.f32.mrf.mxu0
        %8680 = vdwg.mxu0
        %v8681 = vadd.f32 %v8227, %v8555
        %v8682 = vadd.f32 %v8228, %v8558
        %v8683 = vadd.f32 %v8229, %v8563
        %v8684 = vadd.f32 %v8230, %v8566
        %v8685 = vadd.f32 %v8231, %v8571
        %v8686 = vadd.f32 %v8232, %v8574
        %v8687 = vadd.f32 %v8233, %v8579
        %v8688 = vadd.f32 %v8234, %v8582
        %v8689 = vadd.f32 %v8235, %v8587
        %v8690 = vadd.f32 %v8236, %v8590
        %v8691 = vadd.f32 %v8237, %v8595
        %v8692 = vadd.f32 %v8238, %v8598
        %v8693 = vadd.f32 %v8239, %v8603
        %v8694 = vadd.f32 %v8240, %v8606
        %v8695 = vadd.f32 %v8241, %v8611
        %v8696 = vadd.f32 %v8242, %v8614
        %v8697 = vadd.f32 %v8243, %v8619
        %v8698 = vadd.f32 %v8244, %v8622
        %v8699 = vadd.f32 %v8245, %v8627
        %v8700 = vadd.f32 %v8246, %v8630
        %v8701 = vadd.f32 %v8247, %v8635
        %v8702 = vadd.f32 %v8248, %v8638
        %v8703 = vadd.f32 %v8249, %v8643
        %v8704 = vadd.f32 %v8250, %v8646
        %v8705 = vadd.f32 %v8251, %v8651
        %v8706 = vadd.f32 %v8252, %v8654
        %v8707 = vadd.f32 %v8253, %v8659
        %v8708 = vadd.f32 %v8254, %v8662
        %v8709 = vadd.f32 %v8255, %v8667
        %v8710 = vadd.f32 %v8256, %v8670
        %v8711 = vadd.f32 %v8257, %v8675
        %v8712 = vadd.f32 %v8258, %v8678
        %v8713 = vld [vmem:[#allocation2 + $0x10] sm:$0xff]
        %v8714 = vld [vmem:[#allocation2 + $0x18] sm:$0xff]
        %v8715 = vld [vmem:[#allocation2 + $0x20] sm:$0xff]
        %v8716 = vld [vmem:[#allocation2 + $0x28] sm:$0xff]
        %v8717 = vld [vmem:[#allocation2 + $0x30] sm:$0xff]
        %v8718 = vld [vmem:[#allocation2 + $0x38] sm:$0xff]
        %v8719 = vld [vmem:[#allocation2 + $0x40] sm:$0xff]
        %v8720 = vld [vmem:[#allocation2 + $0x48] sm:$0xff]
        %v8721 = vld [vmem:[#allocation2 + $0x50] sm:$0xff]
        %v8722 = vld [vmem:[#allocation2 + $0x58] sm:$0xff]
        %v8723 = vld [vmem:[#allocation2 + $0x60] sm:$0xff]
        %v8724 = vld [vmem:[#allocation2 + $0x68] sm:$0xff]
        %v8725 = vld [vmem:[#allocation2 + $0x70] sm:$0xff]
        %v8726 = vld [vmem:[#allocation2 + $0x78] sm:$0xff]
        %v8727 = vld [vmem:[#allocation2 + $0x80] sm:$0xff]
        %v8728 = vld [vmem:[#allocation2 + $0x88] sm:$0xff]
        %v8729 = vld [vmem:[#allocation2 + $0x90] sm:$0xff]
        %v8730 = vld [vmem:[#allocation2 + $0x98] sm:$0xff]
        %v8731 = vld [vmem:[#allocation2 + $0xa0] sm:$0xff]
        %v8732 = vld [vmem:[#allocation2 + $0xa8] sm:$0xff]
        %v8733 = vld [vmem:[#allocation2 + $0xb0] sm:$0xff]
        %v8734 = vld [vmem:[#allocation2 + $0xb8] sm:$0xff]
        %v8735 = vld [vmem:[#allocation2 + $0xc0] sm:$0xff]
        %v8736 = vld [vmem:[#allocation2 + $0xc8] sm:$0xff]
        %v8737 = vld [vmem:[#allocation2 + $0xd0] sm:$0xff]
        %v8738 = vld [vmem:[#allocation2 + $0xd8] sm:$0xff]
        %v8739 = vld [vmem:[#allocation2 + $0xe0] sm:$0xff]
        %v8740 = vld [vmem:[#allocation2 + $0xe8] sm:$0xff]
        %v8741 = vld [vmem:[#allocation2 + $0xf0] sm:$0xff]
        %v8742 = vld [vmem:[#allocation2 + $0xf8] sm:$0xff]
        %v8743 = vld [vmem:[#allocation2 + $0x100] sm:$0xff]
        %v8744 = vld [vmem:[#allocation2 + $0x108] sm:$0xff]
        %v8745 = vld [vmem:[%s3 + $0x2] sm:$0x1]
        %v8746 = vlaneseq
        %v8747 = vshrl.u32 %v8746, 7
        %v8748 = vsub.s32 0, %v8747
        %v8749 = vrot.slane %v8745, %v8748
        %v8750 = vmul.f32 %v8681, %v8749
        %v8751 = vmul.f32 %v8682, %v8749
        %v8752 = vmul.f32 %v8683, %v8749
        %v8753 = vmul.f32 %v8684, %v8749
        %v8754 = vmul.f32 %v8685, %v8749
        %v8755 = vmul.f32 %v8686, %v8749
        %v8756 = vmul.f32 %v8687, %v8749
        %v8757 = vmul.f32 %v8688, %v8749
        %v8758 = vmul.f32 %v8689, %v8749
        %v8759 = vmul.f32 %v8690, %v8749
        %v8760 = vmul.f32 %v8691, %v8749
        %v8761 = vmul.f32 %v8692, %v8749
        %v8762 = vmul.f32 %v8693, %v8749
        %v8763 = vmul.f32 %v8694, %v8749
        %v8764 = vmul.f32 %v8695, %v8749
        %v8765 = vmul.f32 %v8696, %v8749
        %v8766 = vmul.f32 %v8697, %v8749
        %v8767 = vmul.f32 %v8698, %v8749
        %v8768 = vmul.f32 %v8699, %v8749
        %v8769 = vmul.f32 %v8700, %v8749
        %v8770 = vmul.f32 %v8701, %v8749
        %v8771 = vmul.f32 %v8702, %v8749
        %v8772 = vmul.f32 %v8703, %v8749
        %v8773 = vmul.f32 %v8704, %v8749
        %v8774 = vmul.f32 %v8705, %v8749
        %v8775 = vmul.f32 %v8706, %v8749
        %v8776 = vmul.f32 %v8707, %v8749
        %v8777 = vmul.f32 %v8708, %v8749
        %v8778 = vmul.f32 %v8709, %v8749
        %v8779 = vmul.f32 %v8710, %v8749
        %v8780 = vmul.f32 %v8711, %v8749
        %v8781 = vmul.f32 %v8712, %v8749
        %v8782 = vld [vmem:[%s3 + $0x3] sm:$0x1]
        %v8783 = vlaneseq
        %v8784 = vshrl.u32 %v8783, 7
        %v8785 = vsub.s32 0, %v8784
        %v8786 = vrot.slane %v8782, %v8785
        %v8787 = vadd.f32 %v8750, %v8786
        %v8788 = vadd.f32 %v8751, %v8786
        %v8789 = vadd.f32 %v8752, %v8786
        %v8790 = vadd.f32 %v8753, %v8786
        %v8791 = vadd.f32 %v8754, %v8786
        %v8792 = vadd.f32 %v8755, %v8786
        %v8793 = vadd.f32 %v8756, %v8786
        %v8794 = vadd.f32 %v8757, %v8786
        %v8795 = vadd.f32 %v8758, %v8786
        %v8796 = vadd.f32 %v8759, %v8786
        %v8797 = vadd.f32 %v8760, %v8786
        %v8798 = vadd.f32 %v8761, %v8786
        %v8799 = vadd.f32 %v8762, %v8786
        %v8800 = vadd.f32 %v8763, %v8786
        %v8801 = vadd.f32 %v8764, %v8786
        %v8802 = vadd.f32 %v8765, %v8786
        %v8803 = vadd.f32 %v8766, %v8786
        %v8804 = vadd.f32 %v8767, %v8786
        %v8805 = vadd.f32 %v8768, %v8786
        %v8806 = vadd.f32 %v8769, %v8786
        %v8807 = vadd.f32 %v8770, %v8786
        %v8808 = vadd.f32 %v8771, %v8786
        %v8809 = vadd.f32 %v8772, %v8786
        %v8810 = vadd.f32 %v8773, %v8786
        %v8811 = vadd.f32 %v8774, %v8786
        %v8812 = vadd.f32 %v8775, %v8786
        %v8813 = vadd.f32 %v8776, %v8786
        %v8814 = vadd.f32 %v8777, %v8786
        %v8815 = vadd.f32 %v8778, %v8786
        %v8816 = vadd.f32 %v8779, %v8786
        %v8817 = vadd.f32 %v8780, %v8786
        %v8818 = vadd.f32 %v8781, %v8786
        %v8819 = vadd.f32 %v8787, %v8713
        %v8820 = vadd.f32 %v8788, %v8714
        %v8821 = vadd.f32 %v8789, %v8715
        %v8822 = vadd.f32 %v8790, %v8716
        %v8823 = vadd.f32 %v8791, %v8717
        %v8824 = vadd.f32 %v8792, %v8718
        %v8825 = vadd.f32 %v8793, %v8719
        %v8826 = vadd.f32 %v8794, %v8720
        %v8827 = vadd.f32 %v8795, %v8721
        %v8828 = vadd.f32 %v8796, %v8722
        %v8829 = vadd.f32 %v8797, %v8723
        %v8830 = vadd.f32 %v8798, %v8724
        %v8831 = vadd.f32 %v8799, %v8725
        %v8832 = vadd.f32 %v8800, %v8726
        %v8833 = vadd.f32 %v8801, %v8727
        %v8834 = vadd.f32 %v8802, %v8728
        %v8835 = vadd.f32 %v8803, %v8729
        %v8836 = vadd.f32 %v8804, %v8730
        %v8837 = vadd.f32 %v8805, %v8731
        %v8838 = vadd.f32 %v8806, %v8732
        %v8839 = vadd.f32 %v8807, %v8733
        %v8840 = vadd.f32 %v8808, %v8734
        %v8841 = vadd.f32 %v8809, %v8735
        %v8842 = vadd.f32 %v8810, %v8736
        %v8843 = vadd.f32 %v8811, %v8737
        %v8844 = vadd.f32 %v8812, %v8738
        %v8845 = vadd.f32 %v8813, %v8739
        %v8846 = vadd.f32 %v8814, %v8740
        %v8847 = vadd.f32 %v8815, %v8741
        %v8848 = vadd.f32 %v8816, %v8742
        %v8849 = vadd.f32 %v8817, %v8743
        %v8850 = vadd.f32 %v8818, %v8744
        %v8851 = vmax.f32 %v8819, 0.0
        %v8852 = vmax.f32 %v8820, 0.0
        %v8853 = vmax.f32 %v8821, 0.0
        %v8854 = vmax.f32 %v8822, 0.0
        %v8855 = vmax.f32 %v8823, 0.0
        %v8856 = vmax.f32 %v8824, 0.0
        %v8857 = vmax.f32 %v8825, 0.0
        %v8858 = vmax.f32 %v8826, 0.0
        %v8859 = vmax.f32 %v8827, 0.0
        %v8860 = vmax.f32 %v8828, 0.0
        %v8861 = vmax.f32 %v8829, 0.0
        %v8862 = vmax.f32 %v8830, 0.0
        %v8863 = vmax.f32 %v8831, 0.0
        %v8864 = vmax.f32 %v8832, 0.0
        %v8865 = vmax.f32 %v8833, 0.0
        %v8866 = vmax.f32 %v8834, 0.0
        %v8867 = vmax.f32 %v8835, 0.0
        %v8868 = vmax.f32 %v8836, 0.0
        %v8869 = vmax.f32 %v8837, 0.0
        %v8870 = vmax.f32 %v8838, 0.0
        %v8871 = vmax.f32 %v8839, 0.0
        %v8872 = vmax.f32 %v8840, 0.0
        %v8873 = vmax.f32 %v8841, 0.0
        %v8874 = vmax.f32 %v8842, 0.0
        %v8875 = vmax.f32 %v8843, 0.0
        %v8876 = vmax.f32 %v8844, 0.0
        %v8877 = vmax.f32 %v8845, 0.0
        %v8878 = vmax.f32 %v8846, 0.0
        %v8879 = vmax.f32 %v8847, 0.0
        %v8880 = vmax.f32 %v8848, 0.0
        %v8881 = vmax.f32 %v8849, 0.0
        %v8882 = vmax.f32 %v8850, 0.0
        %8883 = vst.msk [vmem:[%s258] sm:$0xff] %vm371, %v8851
        %8884 = vst.msk [vmem:[%s258 + $0x8] sm:$0xff] %vm371, %v8852
        %8885 = vst.msk [vmem:[%s258 + $0x10] sm:$0xff] %vm371, %v8853
        %8886 = vst.msk [vmem:[%s258 + $0x18] sm:$0xff] %vm371, %v8854
        %8887 = vst.msk [vmem:[%s258 + $0x20] sm:$0xff] %vm371, %v8855
        %8888 = vst.msk [vmem:[%s258 + $0x28] sm:$0xff] %vm371, %v8856
        %8889 = vst.msk [vmem:[%s258 + $0x30] sm:$0xff] %vm371, %v8857
        %8890 = vst.msk [vmem:[%s258 + $0x38] sm:$0xff] %vm371, %v8858
        %8891 = vst.msk [vmem:[%s258 + $0x40] sm:$0xff] %vm371, %v8859
        %8892 = vst.msk [vmem:[%s258 + $0x48] sm:$0xff] %vm371, %v8860
        %8893 = vst.msk [vmem:[%s258 + $0x50] sm:$0xff] %vm371, %v8861
        %8894 = vst.msk [vmem:[%s258 + $0x58] sm:$0xff] %vm371, %v8862
        %8895 = vst.msk [vmem:[%s258 + $0x60] sm:$0xff] %vm371, %v8863
        %8896 = vst.msk [vmem:[%s258 + $0x68] sm:$0xff] %vm371, %v8864
        %8897 = vst.msk [vmem:[%s258 + $0x70] sm:$0xff] %vm371, %v8865
        %8898 = vst.msk [vmem:[%s258 + $0x78] sm:$0xff] %vm371, %v8866
        %8899 = vst.msk [vmem:[%s258 + $0x80] sm:$0xff] %vm371, %v8867
        %8900 = vst.msk [vmem:[%s258 + $0x88] sm:$0xff] %vm371, %v8868
        %8901 = vst.msk [vmem:[%s258 + $0x90] sm:$0xff] %vm371, %v8869
        %8902 = vst.msk [vmem:[%s258 + $0x98] sm:$0xff] %vm371, %v8870
        %8903 = vst.msk [vmem:[%s258 + $0xa0] sm:$0xff] %vm371, %v8871
        %8904 = vst.msk [vmem:[%s258 + $0xa8] sm:$0xff] %vm371, %v8872
        %8905 = vst.msk [vmem:[%s258 + $0xb0] sm:$0xff] %vm371, %v8873
        %8906 = vst.msk [vmem:[%s258 + $0xb8] sm:$0xff] %vm371, %v8874
        %8907 = vst.msk [vmem:[%s258 + $0xc0] sm:$0xff] %vm371, %v8875
        %8908 = vst.msk [vmem:[%s258 + $0xc8] sm:$0xff] %vm371, %v8876
        %8909 = vst.msk [vmem:[%s258 + $0xd0] sm:$0xff] %vm371, %v8877
        %8910 = vst.msk [vmem:[%s258 + $0xd8] sm:$0xff] %vm371, %v8878
        %8911 = vst.msk [vmem:[%s258 + $0xe0] sm:$0xff] %vm371, %v8879
        %8912 = vst.msk [vmem:[%s258 + $0xe8] sm:$0xff] %vm371, %v8880
        %8913 = vst.msk [vmem:[%s258 + $0xf0] sm:$0xff] %vm371, %v8881
        %8914 = vst.msk [vmem:[%s258 + $0xf8] sm:$0xff] %vm371, %v8882
        %s8915 = sand.u32 %s141, 1
        %s8916 = scalar_lea.sflag [#allocation6], %s8915
        %s8917 = sand.u32 %s141, 1
        %s8918 = smul.addr %s8917, 256
        %s8919 = scalar_lea.vmem [#allocation9], %s8918
        // Predicated region
        $region53: #{basic_block_forward.1} parent=39 // pred_check
          %p8920 = pneg %p151
        $region54: #{basic_block_forward.1} parent=39 // pred_check_branch
          %8922 = sbr.rel (%p8920) target = $region56
        $region55: #{basic_block_forward.1} parent=39 // pred_region
          %s8923 = smul.u32 4, %s23
          %s8925 = ssub.s32 4096, 4096
          %8926 = vsyncadd %s8916, %s8925
          %s8927 = smul.addr %s8923, 8
          %s8928 = smul.addr %s8927, 128
          %s8929 = scalar_lea.hbm %s5, %s8928
          %s8930 = sshll.u32 %s8919, 4
          %s8931 = int_to_ptr.vmem [resolvable:$true] %s8930
          %8936 = dma.vmem_to_hbm [thread:$0]  %s8931, 4096, %s8929, %s8916, 128, 128, 8
        $region56: #{basic_block_forward.1} parent=39 // pred_fallthru
          _
      $region40: #{basic_block_forward.1} parent=5 // pred_fallthru
        _
      %p8937 = scmp.le.s32.totalorder 2, %s18
      // Predicated region
      $region57: #{basic_block_forward.1} parent=5 // pred_check
        %p8938 = pneg %p8937
      $region58: #{basic_block_forward.1} parent=5 // pred_check_branch
        %8940 = sbr.rel (%p8938) target = $region60
      $region59: #{basic_block_forward.1} parent=5 // pred_region
        %s8941 = ssub.s32 %s18, 2
        // Predicated region
        $region61: #{basic_block_forward.1} parent=59 // pred_check
          %p8942 = pneg %p157
        $region62: #{basic_block_forward.1} parent=59 // pred_check_branch
          %8944 = sbr.rel (%p8942) target = $region64
        $region63: #{basic_block_forward.1} parent=59 // pred_region
          %s8945 = sand.u32 %s142, 1
          %s8946 = scalar_lea.sflag [#allocation6], %s8945
          %s8947 = sand.u32 %s142, 1
          %s8948 = smul.addr %s8947, 256
          %s8949 = scalar_lea.vmem [#allocation9], %s8948
          %8950 = dma.done %s8946, 4096
        $region64: #{basic_block_forward.1} parent=59 // pred_fallthru
          _
      $region60: #{basic_block_forward.1} parent=5 // pred_fallthru
        _
    $region6: #{basic_block_forward.1} parent=1 // loop_footer
      %s22 = sadd.s32 1, %s18
    $region7: #{basic_block_forward.1} parent=1 // loop_footer_branch
      %17 = sbr.rel target = $region3
    $region8: #{basic_block_forward.1} parent=1 // loop_exit
      _
    %8951 = vsyncpa [#allocation5], 1
    %s8952 = scalar_lea.sflag [#allocation5], 1
    %8953 = vsyncpa %s8952, 1
    %8954 = vsyncpa [#allocation8], 1
    %8955 = vsyncpa [#allocation6], 1
    %s8956 = scalar_lea.sflag [#allocation6], 1
    %8957 = vsyncpa %s8956, 1

</llo_original>
